<compile_context>
chip_gen: v5e
topology: v5e:2x2
jax: 0.10.0
libtpu: 0.0.40
codegen_flags: <defaults>
</compile_context>

<pallas_src>
import functools

import jax
import jax.numpy as jnp
from jax.experimental import pallas as pl
from jax.experimental.pallas import tpu as pltpu

KSIZE = 4
STRIDE = 2


def _conv_out(size):
    return (size - KSIZE) // STRIDE + 1


def _round_up(x, m):
    return (x + m - 1) // m * m


# ----------------------------------------------------------------------------
# Pallas kernel: all three conv blocks fused, activations resident in VMEM.
# ----------------------------------------------------------------------------
def _conv_level(a, w_ref, b_ref, h_out, slope):
    """One Conv2d(k=4, s=2, no pad) + bias + LeakyReLU level.

    a      : (1, h_in, 1, K) value; lane dim K = W_in*C_in (zero-padded).
    w_ref  : (4, K, M) bf16 ref; block-Toeplitz weight (one matrix per dy).
    b_ref  : (1, M) f32 ref; bias tiled over W_out (zero-padded).
    returns: (1, h_out, 1, M) f32 value; lane dim M = W_out*C_out (padded).
    """
    n, _, _, k = a.shape
    m = w_ref.shape[-1]
    hh = h_out + 1                       # super-rows touched by the 4 H-taps
    # H-parity split: logical row 2*s + r -> ap[:, s, r]  (leading-dim reshape)
    ap = a[:, :2 * hh, :, :].reshape(n, hh, 2, 1, k)
    acc = jnp.zeros((n * h_out, m), jnp.float32)
    for dy in range(KSIZE):
        ey, ry = dy // 2, dy % 2
        lhs = ap[:, ey:ey + h_out, ry, :, :].reshape(n * h_out, k)
        acc = acc + jnp.dot(lhs.astype(jnp.bfloat16), w_ref[dy],
                            preferred_element_type=jnp.float32)
    y = acc + b_ref[...]
    if slope != 1.0:                     # last block uses slope=1.0 == identity
        y = jnp.where(y >= 0, y, slope * y)
    return y.reshape(n, h_out, 1, m)


def _basic_d_kernel(a0_ref, w1_ref, b1_ref, w2_ref, b2_ref, w3_ref, b3_ref,
                    o_ref, *, h_outs):
    h1, h2, h3 = h_outs
    a0 = a0_ref[...]                                  # (1, H0, 1, L0) bf16
    a1 = _conv_level(a0, w1_ref, b1_ref, h1, 0.2)     # (1, H1, 1, L1) f32
    a2 = _conv_level(a1, w2_ref, b2_ref, h2, 0.2)     # (1, H2, 1, L2) f32
    a3 = _conv_level(a2, w3_ref, b3_ref, h3, 1.0)     # (1, H3, 1, L3) f32
    o_ref[...] = a3.reshape(o_ref.shape).astype(o_ref.dtype)


# ----------------------------------------------------------------------------
# One-time parameter preprocessing (plain JAX, outside the kernel).
# ----------------------------------------------------------------------------
def _spectral_normalize(w_oihw, key, n_iter=30, eps=1e-12):
    # torch spectral_norm semantics: weight / sigma(weight.reshape(Cout, -1)).
    # Converged power iteration instead of torch's stateful 1-step u/v update.
    cout = w_oihw.shape[0]
    wm = w_oihw.reshape(cout, -1)
    u = jax.random.normal(key, (cout,), jnp.float32)
    u = u / (jnp.linalg.norm(u) + eps)
    v = wm.T @ u
    v = v / (jnp.linalg.norm(v) + eps)
    for _ in range(n_iter):
        v = wm.T @ u
        v = v / (jnp.linalg.norm(v) + eps)
        u = wm @ v
        u = u / (jnp.linalg.norm(u) + eps)
    sigma = u @ (wm @ v)
    return w_oihw / sigma


def _toeplitz_weight(w_hwio, w_in, w_out, k_pad, m_pad):
    """(4,4,Cin,Cout) -> (4, k_pad, m_pad) bf16 with
    big[dy][wpos*Cin+ci, ow*Cout+co] = w[dy, wpos-2*ow, ci, co] (0<=wpos-2*ow<4),
    i.e. the W-direction taps and the stride are folded into the weight."""
    kh, kw, cin, cout = w_hwio.shape
    mats = []
    for dy in range(kh):
        wd = w_hwio[dy].reshape(kw * cin, cout)          # rows: dx*cin + ci
        cols = []
        for ow in range(w_out):
            top = STRIDE * ow * cin
            bot = (w_in - STRIDE * ow - kw) * cin
            cols.append(jnp.pad(wd, ((top, bot), (0, 0))))
        mats.append(jnp.concatenate(cols, axis=1))       # (w_in*cin, w_out*cout)
    big = jnp.stack(mats, axis=0)
    big = jnp.pad(big, ((0, 0),
                        (0, k_pad - big.shape[1]),
                        (0, m_pad - big.shape[2])))
    return big.astype(jnp.bfloat16)


def _toeplitz_bias(b, w_out, m_pad):
    bb = jnp.tile(b, w_out)
    return jnp.pad(bb, (0, m_pad - bb.shape[0])).reshape(1, m_pad).astype(
        jnp.float32)


def _calc_grad(x_nchw):
    # Matches BasicD.calc_grad (GLOBAL min/max normalization to [-1, 1]).
    x0 = x_nchw[:, 0:1]
    gx = x0[:, :, :-1, :] - x0[:, :, 1:, :]
    gy = x0[:, :, :, :-1] - x0[:, :, :, 1:]
    gx = jnp.pad(gx, ((0, 0), (0, 0), (1, 0), (0, 0)))
    gy = jnp.pad(gy, ((0, 0), (0, 0), (0, 0), (0, 1)))
    g = gx + gy
    gmin = jnp.min(g)
    gmax = jnp.max(g)
    return (g - gmin) / (gmax - gmin) * 2.0 - 1.0


# ----------------------------------------------------------------------------
# Forward wrapper.
# ----------------------------------------------------------------------------
def basic_d_forward(x_nchw, params):
    """x_nchw: (N, 2, H, W); params: 3 dicts with 'w' (Cout,Cin,4,4), 'b' (Cout,)."""
    n, _, h0, w0 = x_nchw.shape

    # Input feature prep (one-time, on the 2-channel input).
    grad = _calc_grad(x_nchw)
    xcat = jnp.concatenate([x_nchw, grad], axis=1)       # (N, 3, H, W)
    cin0 = xcat.shape[1]
    a0 = jnp.transpose(xcat, (0, 2, 3, 1)).reshape(n, h0, 1, w0 * cin0)

    # Per-level spatial sizes and lane-dense padded widths.
    h1, w1 = _conv_out(h0), _conv_out(w0)
    h2, w2 = _conv_out(h1), _conv_out(w1)
    h3, w3 = _conv_out(h2), _conv_out(w2)
    c1 = params[0]["w"].shape[0]
    c2 = params[1]["w"].shape[0]
    c3 = params[2]["w"].shape[0]
    l0 = _round_up(w0 * cin0, 128)
    l1 = _round_up(w1 * c1, 128)
    l2 = _round_up(w2 * c2, 128)
    l3 = _round_up(w3 * c3, 128)
    a0 = jnp.pad(a0, ((0, 0), (0, 0), (0, 0), (0, l0 - w0 * cin0)))
    a0 = a0.astype(jnp.bfloat16)                         # halve input DMA bytes

    # Spectral norm + block-Toeplitz expansion of the conv weights (bf16).
    keys = jax.random.split(jax.random.PRNGKey(123), 3)
    whwio = []
    for i, p in enumerate(params):
        wsn = _spectral_normalize(p["w"].astype(jnp.float32), keys[i])
        whwio.append(jnp.transpose(wsn, (2, 3, 1, 0)))   # OIHW -> HWIO
    w1b = _toeplitz_weight(whwio[0], w0, w1, l0, l1)
    w2b = _toeplitz_weight(whwio[1], w1, w2, l1, l2)
    w3b = _toeplitz_weight(whwio[2], w2, w3, l2, l3)
    b1b = _toeplitz_bias(params[0]["b"], w1, l1)
    b2b = _toeplitz_bias(params[1]["b"], w2, l2)
    b3b = _toeplitz_bias(params[2]["b"], w3, l3)

    kernel = functools.partial(_basic_d_kernel, h_outs=(h1, h2, h3))
    out = pl.pallas_call(
        kernel,
        grid=(n,),
        in_specs=[
            pl.BlockSpec((1, h0, 1, l0), lambda i: (i, 0, 0, 0)),
            pl.BlockSpec((4, l0, l1), lambda i: (0, 0, 0)),
            pl.BlockSpec((1, l1), lambda i: (0, 0)),
            pl.BlockSpec((4, l1, l2), lambda i: (0, 0, 0)),
            pl.BlockSpec((1, l2), lambda i: (0, 0)),
            pl.BlockSpec((4, l2, l3), lambda i: (0, 0, 0)),
            pl.BlockSpec((1, l3), lambda i: (0, 0)),
        ],
        out_specs=pl.BlockSpec((1, h3, l3), lambda i: (i, 0, 0)),
        out_shape=jax.ShapeDtypeStruct((n, h3, l3), jnp.float32),
        compiler_params=pltpu.CompilerParams(
            dimension_semantics=("parallel",),
            vmem_limit_bytes=32 * 1024 * 1024),
    )(a0, w1b, b1b, w2b, b2b, w3b, b3b)

    # Lane layout of the last level is ow*Cout + co (real Cout == c3 == 1).
    feat = out[:, :, :w3 * c3]                           # (N, H3, W3*C3)
    # torch: flatten(start_dim=1) then mean over the last axis.
    return feat.reshape(n, -1).mean(axis=-1)


def init_params(key, in_channels=3, hidden=64, n_blocks=3):
    """Deterministic init matching the Conv2d shapes of BasicD (OIHW weights)."""
    params = []
    cin = in_channels
    for i in range(n_blocks):
        cout = 1 if i == n_blocks - 1 else hidden
        key, kw, kb = jax.random.split(key, 3)
        fan_in = cin * KSIZE * KSIZE
        bound = 1.0 / (fan_in ** 0.5)
        w = jax.random.uniform(kw, (cout, cin, KSIZE, KSIZE), jnp.float32,
                               -bound, bound)
        b = jax.random.uniform(kb, (cout,), jnp.float32, -bound, bound)
        params.append(dict(w=w, b=b))
        cin = cout
    return params


if __name__ == "__main__":
    key = jax.random.PRNGKey(0)
    kx, kp = jax.random.split(key)

    # The first conv has in_channels=3 = 2 input channels + 1 gradient channel,
    # so the module implies a 2-channel input image.  Spatial 32 is the
    # smallest power-of-two size that survives three stride-2 k=4 convs.
    x = jax.random.normal(kx, (2, 2, 32, 32), jnp.float32)
    params = init_params(kp, in_channels=3, hidden=64, n_blocks=3)

    fwd = jax.jit(basic_d_forward)
    out = jax.block_until_ready(fwd(x, params))

    assert out.shape == (2,), out.shape
    assert bool(jnp.all(jnp.isfinite(out)))
    print("KERNEL_OK")
</pallas_src>

<mosaic_0001>
module attributes {stable_mosaic.version = 11 : i64} {
  func.func @_basic_d_kernel(%arg0: i32, %arg1: memref<1x32x1x128xbf16, #tpu.memory_space<vmem>>, %arg2: memref<4x128x1024xbf16, #tpu.memory_space<vmem>>, %arg3: memref<1x1024xf32, #tpu.memory_space<vmem>>, %arg4: memref<4x1024x384xbf16, #tpu.memory_space<vmem>>, %arg5: memref<1x384xf32, #tpu.memory_space<vmem>>, %arg6: memref<4x384x128xbf16, #tpu.memory_space<vmem>>, %arg7: memref<1x128xf32, #tpu.memory_space<vmem>>, %arg8: memref<1x2x128xf32, #tpu.memory_space<vmem>>) attributes {dimension_semantics = [#tpu.dimension_semantics<parallel>], iteration_bounds = array<i64: 2>, scalar_prefetch = 0 : i64, scratch_operands = 0 : i64, tpu.core_type = #tpu.core_type<tc>, window_params = [{transform_indices = @transform_0, window_bounds = array<i64: 1, 32, 1, 128>}, {pipeline_mode = #tpu.pipeline_mode<synchronous>, transform_indices = @transform_1, window_bounds = array<i64: 4, 128, 1024>}, {pipeline_mode = #tpu.pipeline_mode<synchronous>, transform_indices = @transform_2, window_bounds = array<i64: 1, 1024>}, {pipeline_mode = #tpu.pipeline_mode<synchronous>, transform_indices = @transform_3, window_bounds = array<i64: 4, 1024, 384>}, {pipeline_mode = #tpu.pipeline_mode<synchronous>, transform_indices = @transform_4, window_bounds = array<i64: 1, 384>}, {pipeline_mode = #tpu.pipeline_mode<synchronous>, transform_indices = @transform_5, window_bounds = array<i64: 4, 384, 128>}, {pipeline_mode = #tpu.pipeline_mode<synchronous>, transform_indices = @transform_6, window_bounds = array<i64: 1, 128>}, {transform_indices = @transform_7, window_bounds = array<i64: 1, 2, 128>}]} {
    %c0 = arith.constant 0 : index
    %c0_0 = arith.constant 0 : index
    %c0_1 = arith.constant 0 : index
    %c0_2 = arith.constant 0 : index
    %0 = vector.load %arg1[%c0, %c0_0, %c0_1, %c0_2] : memref<1x32x1x128xbf16, #tpu.memory_space<vmem>>, vector<1x32x1x128xbf16>
    %1 = vector.shape_cast %0 : vector<1x32x1x128xbf16> to vector<1x16x2x1x128xbf16>
    %cst = arith.constant 0.000000e+00 : f32
    %2 = vector.broadcast %cst : f32 to vector<15x1024xf32>
    %3 = vector.extract_strided_slice %1 {offsets = [0, 0, 0, 0, 0], sizes = [1, 15, 1, 1, 128], strides = [1, 1, 1, 1, 1]} : vector<1x16x2x1x128xbf16> to vector<1x15x1x1x128xbf16>
    %4 = vector.shape_cast %3 : vector<1x15x1x1x128xbf16> to vector<1x15x1x128xbf16>
    %5 = vector.shape_cast %4 : vector<1x15x1x128xbf16> to vector<15x128xbf16>
    %c0_3 = arith.constant 0 : index
    %c0_4 = arith.constant 0 : index
    %c0_5 = arith.constant 0 : index
    %6 = vector.load %arg2[%c0_3, %c0_4, %c0_5] : memref<4x128x1024xbf16, #tpu.memory_space<vmem>>, vector<1x128x1024xbf16>
    %7 = vector.shape_cast %6 : vector<1x128x1024xbf16> to vector<128x1024xbf16>
    %cst_6 = arith.constant dense<0.000000e+00> : vector<15x1024xf32>
    %8 = tpu.matmul %5, %7, %cst_6 {dimension_numbers = #tpu.dot_dimension_numbers<[1], [0], [0], [1], [0, 0, 1, 1], [], []>} : vector<15x128xbf16>, vector<128x1024xbf16>, vector<15x1024xf32> -> vector<15x1024xf32>
    %9 = arith.addf %2, %8 : vector<15x1024xf32>
    %10 = vector.extract_strided_slice %1 {offsets = [0, 0, 1, 0, 0], sizes = [1, 15, 1, 1, 128], strides = [1, 1, 1, 1, 1]} : vector<1x16x2x1x128xbf16> to vector<1x15x1x1x128xbf16>
    %11 = vector.shape_cast %10 : vector<1x15x1x1x128xbf16> to vector<1x15x1x128xbf16>
    %12 = vector.shape_cast %11 : vector<1x15x1x128xbf16> to vector<15x128xbf16>
    %c1 = arith.constant 1 : index
    %c0_7 = arith.constant 0 : index
    %c0_8 = arith.constant 0 : index
    %13 = vector.load %arg2[%c1, %c0_7, %c0_8] : memref<4x128x1024xbf16, #tpu.memory_space<vmem>>, vector<1x128x1024xbf16>
    %14 = vector.shape_cast %13 : vector<1x128x1024xbf16> to vector<128x1024xbf16>
    %cst_9 = arith.constant dense<0.000000e+00> : vector<15x1024xf32>
    %15 = tpu.matmul %12, %14, %cst_9 {dimension_numbers = #tpu.dot_dimension_numbers<[1], [0], [0], [1], [0, 0, 1, 1], [], []>} : vector<15x128xbf16>, vector<128x1024xbf16>, vector<15x1024xf32> -> vector<15x1024xf32>
    %16 = arith.addf %9, %15 : vector<15x1024xf32>
    %17 = vector.extract_strided_slice %1 {offsets = [0, 1, 0, 0, 0], sizes = [1, 15, 1, 1, 128], strides = [1, 1, 1, 1, 1]} : vector<1x16x2x1x128xbf16> to vector<1x15x1x1x128xbf16>
    %18 = vector.shape_cast %17 : vector<1x15x1x1x128xbf16> to vector<1x15x1x128xbf16>
    %19 = vector.shape_cast %18 : vector<1x15x1x128xbf16> to vector<15x128xbf16>
    %c2 = arith.constant 2 : index
    %c0_10 = arith.constant 0 : index
    %c0_11 = arith.constant 0 : index
    %20 = vector.load %arg2[%c2, %c0_10, %c0_11] : memref<4x128x1024xbf16, #tpu.memory_space<vmem>>, vector<1x128x1024xbf16>
    %21 = vector.shape_cast %20 : vector<1x128x1024xbf16> to vector<128x1024xbf16>
    %cst_12 = arith.constant dense<0.000000e+00> : vector<15x1024xf32>
    %22 = tpu.matmul %19, %21, %cst_12 {dimension_numbers = #tpu.dot_dimension_numbers<[1], [0], [0], [1], [0, 0, 1, 1], [], []>} : vector<15x128xbf16>, vector<128x1024xbf16>, vector<15x1024xf32> -> vector<15x1024xf32>
    %23 = arith.addf %16, %22 : vector<15x1024xf32>
    %24 = vector.extract_strided_slice %1 {offsets = [0, 1, 1, 0, 0], sizes = [1, 15, 1, 1, 128], strides = [1, 1, 1, 1, 1]} : vector<1x16x2x1x128xbf16> to vector<1x15x1x1x128xbf16>
    %25 = vector.shape_cast %24 : vector<1x15x1x1x128xbf16> to vector<1x15x1x128xbf16>
    %26 = vector.shape_cast %25 : vector<1x15x1x128xbf16> to vector<15x128xbf16>
    %c3 = arith.constant 3 : index
    %c0_13 = arith.constant 0 : index
    %c0_14 = arith.constant 0 : index
    %27 = vector.load %arg2[%c3, %c0_13, %c0_14] : memref<4x128x1024xbf16, #tpu.memory_space<vmem>>, vector<1x128x1024xbf16>
    %28 = vector.shape_cast %27 : vector<1x128x1024xbf16> to vector<128x1024xbf16>
    %cst_15 = arith.constant dense<0.000000e+00> : vector<15x1024xf32>
    %29 = tpu.matmul %26, %28, %cst_15 {dimension_numbers = #tpu.dot_dimension_numbers<[1], [0], [0], [1], [0, 0, 1, 1], [], []>} : vector<15x128xbf16>, vector<128x1024xbf16>, vector<15x1024xf32> -> vector<15x1024xf32>
    %30 = arith.addf %23, %29 : vector<15x1024xf32>
    %c0_16 = arith.constant 0 : index
    %c0_17 = arith.constant 0 : index
    %31 = vector.load %arg3[%c0_16, %c0_17] : memref<1x1024xf32, #tpu.memory_space<vmem>>, vector<1x1024xf32>
    %32 = vector.broadcast %31 : vector<1x1024xf32> to vector<15x1024xf32>
    %33 = arith.addf %30, %32 : vector<15x1024xf32>
    %cst_18 = arith.constant 0.000000e+00 : f32
    %34 = vector.broadcast %cst_18 : f32 to vector<15x1024xf32>
    %35 = arith.cmpf oge, %33, %34 : vector<15x1024xf32>
    %cst_19 = arith.constant 2.000000e-01 : f32
    %36 = vector.broadcast %cst_19 : f32 to vector<15x1024xf32>
    %37 = arith.mulf %36, %33 : vector<15x1024xf32>
    %38 = arith.select %35, %33, %37 : vector<15x1024xi1>, vector<15x1024xf32>
    %39 = vector.shape_cast %38 : vector<15x1024xf32> to vector<1x15x1x1024xf32>
    %40 = vector.extract_strided_slice %39 {offsets = [0, 0, 0, 0], sizes = [1, 14, 1, 1024], strides = [1, 1, 1, 1]} : vector<1x15x1x1024xf32> to vector<1x14x1x1024xf32>
    %41 = vector.shape_cast %40 : vector<1x14x1x1024xf32> to vector<1x7x2x1x1024xf32>
    %cst_20 = arith.constant 0.000000e+00 : f32
    %42 = vector.broadcast %cst_20 : f32 to vector<6x384xf32>
    %43 = vector.extract_strided_slice %41 {offsets = [0, 0, 0, 0, 0], sizes = [1, 6, 1, 1, 1024], strides = [1, 1, 1, 1, 1]} : vector<1x7x2x1x1024xf32> to vector<1x6x1x1x1024xf32>
    %44 = vector.shape_cast %43 : vector<1x6x1x1x1024xf32> to vector<1x6x1x1024xf32>
    %45 = vector.shape_cast %44 : vector<1x6x1x1024xf32> to vector<6x1024xf32>
    %46 = arith.truncf %45 : vector<6x1024xf32> to vector<6x1024xbf16>
    %c0_21 = arith.constant 0 : index
    %c0_22 = arith.constant 0 : index
    %c0_23 = arith.constant 0 : index
    %47 = vector.load %arg4[%c0_21, %c0_22, %c0_23] : memref<4x1024x384xbf16, #tpu.memory_space<vmem>>, vector<1x1024x384xbf16>
    %48 = vector.shape_cast %47 : vector<1x1024x384xbf16> to vector<1024x384xbf16>
    %cst_24 = arith.constant dense<0.000000e+00> : vector<6x384xf32>
    %49 = tpu.matmul %46, %48, %cst_24 {dimension_numbers = #tpu.dot_dimension_numbers<[1], [0], [0], [1], [0, 0, 1, 1], [], []>} : vector<6x1024xbf16>, vector<1024x384xbf16>, vector<6x384xf32> -> vector<6x384xf32>
    %50 = arith.addf %42, %49 : vector<6x384xf32>
    %51 = vector.extract_strided_slice %41 {offsets = [0, 0, 1, 0, 0], sizes = [1, 6, 1, 1, 1024], strides = [1, 1, 1, 1, 1]} : vector<1x7x2x1x1024xf32> to vector<1x6x1x1x1024xf32>
    %52 = vector.shape_cast %51 : vector<1x6x1x1x1024xf32> to vector<1x6x1x1024xf32>
    %53 = vector.shape_cast %52 : vector<1x6x1x1024xf32> to vector<6x1024xf32>
    %54 = arith.truncf %53 : vector<6x1024xf32> to vector<6x1024xbf16>
    %c1_25 = arith.constant 1 : index
    %c0_26 = arith.constant 0 : index
    %c0_27 = arith.constant 0 : index
    %55 = vector.load %arg4[%c1_25, %c0_26, %c0_27] : memref<4x1024x384xbf16, #tpu.memory_space<vmem>>, vector<1x1024x384xbf16>
    %56 = vector.shape_cast %55 : vector<1x1024x384xbf16> to vector<1024x384xbf16>
    %cst_28 = arith.constant dense<0.000000e+00> : vector<6x384xf32>
    %57 = tpu.matmul %54, %56, %cst_28 {dimension_numbers = #tpu.dot_dimension_numbers<[1], [0], [0], [1], [0, 0, 1, 1], [], []>} : vector<6x1024xbf16>, vector<1024x384xbf16>, vector<6x384xf32> -> vector<6x384xf32>
    %58 = arith.addf %50, %57 : vector<6x384xf32>
    %59 = vector.extract_strided_slice %41 {offsets = [0, 1, 0, 0, 0], sizes = [1, 6, 1, 1, 1024], strides = [1, 1, 1, 1, 1]} : vector<1x7x2x1x1024xf32> to vector<1x6x1x1x1024xf32>
    %60 = vector.shape_cast %59 : vector<1x6x1x1x1024xf32> to vector<1x6x1x1024xf32>
    %61 = vector.shape_cast %60 : vector<1x6x1x1024xf32> to vector<6x1024xf32>
    %62 = arith.truncf %61 : vector<6x1024xf32> to vector<6x1024xbf16>
    %c2_29 = arith.constant 2 : index
    %c0_30 = arith.constant 0 : index
    %c0_31 = arith.constant 0 : index
    %63 = vector.load %arg4[%c2_29, %c0_30, %c0_31] : memref<4x1024x384xbf16, #tpu.memory_space<vmem>>, vector<1x1024x384xbf16>
    %64 = vector.shape_cast %63 : vector<1x1024x384xbf16> to vector<1024x384xbf16>
    %cst_32 = arith.constant dense<0.000000e+00> : vector<6x384xf32>
    %65 = tpu.matmul %62, %64, %cst_32 {dimension_numbers = #tpu.dot_dimension_numbers<[1], [0], [0], [1], [0, 0, 1, 1], [], []>} : vector<6x1024xbf16>, vector<1024x384xbf16>, vector<6x384xf32> -> vector<6x384xf32>
    %66 = arith.addf %58, %65 : vector<6x384xf32>
    %67 = vector.extract_strided_slice %41 {offsets = [0, 1, 1, 0, 0], sizes = [1, 6, 1, 1, 1024], strides = [1, 1, 1, 1, 1]} : vector<1x7x2x1x1024xf32> to vector<1x6x1x1x1024xf32>
    %68 = vector.shape_cast %67 : vector<1x6x1x1x1024xf32> to vector<1x6x1x1024xf32>
    %69 = vector.shape_cast %68 : vector<1x6x1x1024xf32> to vector<6x1024xf32>
    %70 = arith.truncf %69 : vector<6x1024xf32> to vector<6x1024xbf16>
    %c3_33 = arith.constant 3 : index
    %c0_34 = arith.constant 0 : index
    %c0_35 = arith.constant 0 : index
    %71 = vector.load %arg4[%c3_33, %c0_34, %c0_35] : memref<4x1024x384xbf16, #tpu.memory_space<vmem>>, vector<1x1024x384xbf16>
    %72 = vector.shape_cast %71 : vector<1x1024x384xbf16> to vector<1024x384xbf16>
    %cst_36 = arith.constant dense<0.000000e+00> : vector<6x384xf32>
    %73 = tpu.matmul %70, %72, %cst_36 {dimension_numbers = #tpu.dot_dimension_numbers<[1], [0], [0], [1], [0, 0, 1, 1], [], []>} : vector<6x1024xbf16>, vector<1024x384xbf16>, vector<6x384xf32> -> vector<6x384xf32>
    %74 = arith.addf %66, %73 : vector<6x384xf32>
    %c0_37 = arith.constant 0 : index
    %c0_38 = arith.constant 0 : index
    %75 = vector.load %arg5[%c0_37, %c0_38] : memref<1x384xf32, #tpu.memory_space<vmem>>, vector<1x384xf32>
    %76 = vector.broadcast %75 : vector<1x384xf32> to vector<6x384xf32>
    %77 = arith.addf %74, %76 : vector<6x384xf32>
    %cst_39 = arith.constant 0.000000e+00 : f32
    %78 = vector.broadcast %cst_39 : f32 to vector<6x384xf32>
    %79 = arith.cmpf oge, %77, %78 : vector<6x384xf32>
    %cst_40 = arith.constant 2.000000e-01 : f32
    %80 = vector.broadcast %cst_40 : f32 to vector<6x384xf32>
    %81 = arith.mulf %80, %77 : vector<6x384xf32>
    %82 = arith.select %79, %77, %81 : vector<6x384xi1>, vector<6x384xf32>
    %83 = vector.shape_cast %82 : vector<6x384xf32> to vector<1x6x1x384xf32>
    %84 = vector.shape_cast %83 : vector<1x6x1x384xf32> to vector<1x3x2x1x384xf32>
    %cst_41 = arith.constant 0.000000e+00 : f32
    %85 = vector.broadcast %cst_41 : f32 to vector<2x128xf32>
    %86 = vector.extract_strided_slice %84 {offsets = [0, 0, 0, 0, 0], sizes = [1, 2, 1, 1, 384], strides = [1, 1, 1, 1, 1]} : vector<1x3x2x1x384xf32> to vector<1x2x1x1x384xf32>
    %87 = vector.shape_cast %86 : vector<1x2x1x1x384xf32> to vector<1x2x1x384xf32>
    %88 = vector.shape_cast %87 : vector<1x2x1x384xf32> to vector<2x384xf32>
    %89 = arith.truncf %88 : vector<2x384xf32> to vector<2x384xbf16>
    %c0_42 = arith.constant 0 : index
    %c0_43 = arith.constant 0 : index
    %c0_44 = arith.constant 0 : index
    %90 = vector.load %arg6[%c0_42, %c0_43, %c0_44] : memref<4x384x128xbf16, #tpu.memory_space<vmem>>, vector<1x384x128xbf16>
    %91 = vector.shape_cast %90 : vector<1x384x128xbf16> to vector<384x128xbf16>
    %cst_45 = arith.constant dense<0.000000e+00> : vector<2x128xf32>
    %92 = tpu.matmul %89, %91, %cst_45 {dimension_numbers = #tpu.dot_dimension_numbers<[1], [0], [0], [1], [0, 0, 1, 1], [], []>} : vector<2x384xbf16>, vector<384x128xbf16>, vector<2x128xf32> -> vector<2x128xf32>
    %93 = arith.addf %85, %92 : vector<2x128xf32>
    %94 = vector.extract_strided_slice %84 {offsets = [0, 0, 1, 0, 0], sizes = [1, 2, 1, 1, 384], strides = [1, 1, 1, 1, 1]} : vector<1x3x2x1x384xf32> to vector<1x2x1x1x384xf32>
    %95 = vector.shape_cast %94 : vector<1x2x1x1x384xf32> to vector<1x2x1x384xf32>
    %96 = vector.shape_cast %95 : vector<1x2x1x384xf32> to vector<2x384xf32>
    %97 = arith.truncf %96 : vector<2x384xf32> to vector<2x384xbf16>
    %c1_46 = arith.constant 1 : index
    %c0_47 = arith.constant 0 : index
    %c0_48 = arith.constant 0 : index
    %98 = vector.load %arg6[%c1_46, %c0_47, %c0_48] : memref<4x384x128xbf16, #tpu.memory_space<vmem>>, vector<1x384x128xbf16>
    %99 = vector.shape_cast %98 : vector<1x384x128xbf16> to vector<384x128xbf16>
    %cst_49 = arith.constant dense<0.000000e+00> : vector<2x128xf32>
    %100 = tpu.matmul %97, %99, %cst_49 {dimension_numbers = #tpu.dot_dimension_numbers<[1], [0], [0], [1], [0, 0, 1, 1], [], []>} : vector<2x384xbf16>, vector<384x128xbf16>, vector<2x128xf32> -> vector<2x128xf32>
    %101 = arith.addf %93, %100 : vector<2x128xf32>
    %102 = vector.extract_strided_slice %84 {offsets = [0, 1, 0, 0, 0], sizes = [1, 2, 1, 1, 384], strides = [1, 1, 1, 1, 1]} : vector<1x3x2x1x384xf32> to vector<1x2x1x1x384xf32>
    %103 = vector.shape_cast %102 : vector<1x2x1x1x384xf32> to vector<1x2x1x384xf32>
    %104 = vector.shape_cast %103 : vector<1x2x1x384xf32> to vector<2x384xf32>
    %105 = arith.truncf %104 : vector<2x384xf32> to vector<2x384xbf16>
    %c2_50 = arith.constant 2 : index
    %c0_51 = arith.constant 0 : index
    %c0_52 = arith.constant 0 : index
    %106 = vector.load %arg6[%c2_50, %c0_51, %c0_52] : memref<4x384x128xbf16, #tpu.memory_space<vmem>>, vector<1x384x128xbf16>
    %107 = vector.shape_cast %106 : vector<1x384x128xbf16> to vector<384x128xbf16>
    %cst_53 = arith.constant dense<0.000000e+00> : vector<2x128xf32>
    %108 = tpu.matmul %105, %107, %cst_53 {dimension_numbers = #tpu.dot_dimension_numbers<[1], [0], [0], [1], [0, 0, 1, 1], [], []>} : vector<2x384xbf16>, vector<384x128xbf16>, vector<2x128xf32> -> vector<2x128xf32>
    %109 = arith.addf %101, %108 : vector<2x128xf32>
    %110 = vector.extract_strided_slice %84 {offsets = [0, 1, 1, 0, 0], sizes = [1, 2, 1, 1, 384], strides = [1, 1, 1, 1, 1]} : vector<1x3x2x1x384xf32> to vector<1x2x1x1x384xf32>
    %111 = vector.shape_cast %110 : vector<1x2x1x1x384xf32> to vector<1x2x1x384xf32>
    %112 = vector.shape_cast %111 : vector<1x2x1x384xf32> to vector<2x384xf32>
    %113 = arith.truncf %112 : vector<2x384xf32> to vector<2x384xbf16>
    %c3_54 = arith.constant 3 : index
    %c0_55 = arith.constant 0 : index
    %c0_56 = arith.constant 0 : index
    %114 = vector.load %arg6[%c3_54, %c0_55, %c0_56] : memref<4x384x128xbf16, #tpu.memory_space<vmem>>, vector<1x384x128xbf16>
    %115 = vector.shape_cast %114 : vector<1x384x128xbf16> to vector<384x128xbf16>
    %cst_57 = arith.constant dense<0.000000e+00> : vector<2x128xf32>
    %116 = tpu.matmul %113, %115, %cst_57 {dimension_numbers = #tpu.dot_dimension_numbers<[1], [0], [0], [1], [0, 0, 1, 1], [], []>} : vector<2x384xbf16>, vector<384x128xbf16>, vector<2x128xf32> -> vector<2x128xf32>
    %117 = arith.addf %109, %116 : vector<2x128xf32>
    %c0_58 = arith.constant 0 : index
    %c0_59 = arith.constant 0 : index
    %118 = vector.load %arg7[%c0_58, %c0_59] : memref<1x128xf32, #tpu.memory_space<vmem>>, vector<1x128xf32>
    %119 = vector.broadcast %118 : vector<1x128xf32> to vector<2x128xf32>
    %120 = arith.addf %117, %119 : vector<2x128xf32>
    %121 = vector.shape_cast %120 : vector<2x128xf32> to vector<1x2x1x128xf32>
    %122 = vector.shape_cast %121 : vector<1x2x1x128xf32> to vector<1x2x128xf32>
    %c0_60 = arith.constant 0 : index
    %c0_61 = arith.constant 0 : index
    %c0_62 = arith.constant 0 : index
    %123 = vector.load %arg8[%c0_60, %c0_61, %c0_62] : memref<1x2x128xf32, #tpu.memory_space<vmem>>, vector<1x2x128xf32>
    tpu.vector_store %arg8[%c0_60, %c0_61, %c0_62], %122 {strides = array<i32>} : memref<1x2x128xf32, #tpu.memory_space<vmem>>, vector<1x2x128xf32>,
    return
  }
  func.func @transform_0(%arg0: i32) -> (i32, i32, i32, i32) {
    %c0_i32 = arith.constant 0 : i32
    %c0_i32_0 = arith.constant 0 : i32
    %c0_i32_1 = arith.constant 0 : i32
    %c0_i32_2 = arith.constant 0 : i32
    return %arg0, %c0_i32, %c0_i32_0, %c0_i32_1 : i32, i32, i32, i32
  }
  func.func @transform_1(%arg0: i32) -> (i32, i32, i32) {
    %c0_i32 = arith.constant 0 : i32
    %c0_i32_0 = arith.constant 0 : i32
    %c0_i32_1 = arith.constant 0 : i32
    %c0_i32_2 = arith.constant 0 : i32
    return %c0_i32, %c0_i32_0, %c0_i32_1 : i32, i32, i32
  }
  func.func @transform_2(%arg0: i32) -> (i32, i32) {
    %c0_i32 = arith.constant 0 : i32
    %c0_i32_0 = arith.constant 0 : i32
    %c0_i32_1 = arith.constant 0 : i32
    return %c0_i32, %c0_i32_0 : i32, i32
  }
  func.func @transform_3(%arg0: i32) -> (i32, i32, i32) {
    %c0_i32 = arith.constant 0 : i32
    %c0_i32_0 = arith.constant 0 : i32
    %c0_i32_1 = arith.constant 0 : i32
    %c0_i32_2 = arith.constant 0 : i32
    return %c0_i32, %c0_i32_0, %c0_i32_1 : i32, i32, i32
  }
  func.func @transform_4(%arg0: i32) -> (i32, i32) {
    %c0_i32 = arith.constant 0 : i32
    %c0_i32_0 = arith.constant 0 : i32
    %c0_i32_1 = arith.constant 0 : i32
    return %c0_i32, %c0_i32_0 : i32, i32
  }
  func.func @transform_5(%arg0: i32) -> (i32, i32, i32) {
    %c0_i32 = arith.constant 0 : i32
    %c0_i32_0 = arith.constant 0 : i32
    %c0_i32_1 = arith.constant 0 : i32
    %c0_i32_2 = arith.constant 0 : i32
    return %c0_i32, %c0_i32_0, %c0_i32_1 : i32, i32, i32
  }
  func.func @transform_6(%arg0: i32) -> (i32, i32) {
    %c0_i32 = arith.constant 0 : i32
    %c0_i32_0 = arith.constant 0 : i32
    %c0_i32_1 = arith.constant 0 : i32
    return %c0_i32, %c0_i32_0 : i32, i32
  }
  func.func @transform_7(%arg0: i32) -> (i32, i32, i32) {
    %c0_i32 = arith.constant 0 : i32
    %c0_i32_0 = arith.constant 0 : i32
    %c0_i32_1 = arith.constant 0 : i32
    return %arg0, %c0_i32, %c0_i32_0 : i32, i32, i32
  }
}

</mosaic_0001>

<llo_original>
// kernel: tile.18
$region0: #{tile.18}
  #allocation0 [shape = 's32[1]{0}', space=sflag, size = 0x4, scoped, tag = 'scoped memory for tile.18']
  %s0 = inlined_call_operand.vmem [shape: f32[64], index: 0, kind: input, shape index: {}]
  %s1 = inlined_call_operand.vmem [shape: f32[15,64], index: 1, kind: output, shape index: {}]
  // Predicated region
  $region2: #{tile.18} parent=0 // pred_check
    _
  $region3: #{tile.18} parent=0 // pred_check_branch
    %3 = sbr.rel (0) target = $region5
  $region4: #{tile.18} parent=0 // pred_region
    _
  $region5: #{tile.18} parent=0 // pred_fallthru
    _
  %v4 = vld [vmem:[%s0] ss:$0 sm:$0xff]
  %5 = vst [vmem:[%s1] sm:$0xff] %v4
  %s6 = scalar_lea.vmem %s1, 8
  %7 = vst [vmem:[%s6] sm:$0xff] %v4

// kernel: tile.19
$region0: #{tile.19}
  %s0 = inlined_call_operand.vmem [shape: f32[15,64], index: 0, kind: input, shape index: {}]
  %s1 = inlined_call_operand.vmem [shape: f32[960], index: 1, kind: output, shape index: {}]
  %v2 = vld [vmem:[%s0] ss:$2 sm:$0xff]
  %vm3 = vcmask 523264
  %4 = vst.msk [vmem:[%s1] sm:$0xff] %vm3, %v2
  %s5 = scalar_lea.vmem %s0, 1
  %v6 = vld [vmem:[%s5] ss:$2 sm:$0x7f]
  %7 = vrot.lane.b32.xlu0 %v6, 64
  %v8 = vpop.permute.xlu0 %7
  %vm9 = vcmask 1048064
  %10 = vst.msk [vmem:[%s1] sm:$0x7f] %vm9, %v8

// kernel: tile.23
$region0: #{tile.23}
  #allocation0 [shape = 's32[1]{0}', space=sflag, size = 0x4, scoped, tag = 'scoped memory for tile.23']
  %s0 = inlined_call_operand.vmem [shape: f32[64], index: 0, kind: input, shape index: {}]
  %s1 = inlined_call_operand.vmem [shape: f32[6,64], index: 1, kind: output, shape index: {}]
  // Predicated region
  $region2: #{tile.23} parent=0 // pred_check
    _
  $region3: #{tile.23} parent=0 // pred_check_branch
    %3 = sbr.rel (0) target = $region5
  $region4: #{tile.23} parent=0 // pred_region
    _
  $region5: #{tile.23} parent=0 // pred_fallthru
    _
  %v4 = vld [vmem:[%s0] ss:$0 sm:$0xff]
  %5 = vst [vmem:[%s1] sm:$0xff] %v4

// kernel: basic_d_forward.3
$region0: #{basic_d_forward.3}
  #allocation0 [shape = 'u32[]', space=smem, size = 0x4, offset = 0x4, fixed_abs, tag = 'smem constant byte address 0x4 - core index']
  #allocation1 [shape = 'u32[72,128]{1,0:T(1,128)}', space=vmem, size = 0x9000, scoped, tag = 'internal scratch']
  %s0 = inlined_call_operand.vmem [shape: bf16[2,32,1,128], index: 0, kind: input, shape index: {}]
  %s1 = inlined_call_operand.vmem [shape: bf16[4,128,1024], index: 1, kind: input, shape index: {}]
  %s2 = inlined_call_operand.vmem [shape: f32[1,1024], index: 2, kind: input, shape index: {}]
  %s3 = inlined_call_operand.vmem [shape: bf16[4,1024,384], index: 3, kind: input, shape index: {}]
  %s4 = inlined_call_operand.vmem [shape: f32[1,384], index: 4, kind: input, shape index: {}]
  %s5 = inlined_call_operand.vmem [shape: bf16[4,384,128], index: 5, kind: input, shape index: {}]
  %s6 = inlined_call_operand.vmem [shape: f32[1,128], index: 6, kind: input, shape index: {}]
  %s7 = inlined_call_operand.vmem [shape: f32[2,2,128], index: 7, kind: output, shape index: {}]
  %s8 = sld [smem:[#allocation0]]
  $region61: #{basic_d_forward.3} parent=0
    _
  %s10 = ssub.s32 1, %s8
  %s11 = scalar_select 0, %s10, %s8
  loop: start=0, step=1, limit=4
  $region2: #{basic_d_forward.3} parent=0 // loop_pre_header
    _
  $region3: #{basic_d_forward.3} parent=0 // loop_header
    %s13 = sphi 0, %s17
    %p14 = scmp.ge.s32.totalorder %s13, 4
    %s23 = sphi 0, %s25
    %s26 = sphi 0, %s23
    %s27 = sphi 0, %s26
    %s43 = sphi 0, %s27
    %s47 = sphi 0, %s47
    %s49 = sphi 0, %s47
    %s50 = sphi 0, %s49
    %s64 = sphi 0, %s50
    %s68 = sphi 0, %s68
    %s70 = sphi 0, %s68
    %s71 = sphi 0, %s70
    %s85 = sphi 0, %s71
    %s89 = sphi 0, %s89
    %s91 = sphi 0, %s89
    %s92 = sphi 0, %s91
    %s106 = sphi 0, %s92
    %s110 = sphi 0, %s110
    %s112 = sphi 0, %s110
    %s113 = sphi 0, %s112
    %s127 = sphi 0, %s113
    %s131 = sphi 0, %s131
    %s133 = sphi 0, %s131
    %s134 = sphi 0, %s133
    %s148 = sphi 0, %s134
    %s152 = sphi 0, %s152
    %s154 = sphi 0, %s152
    %s155 = sphi 0, %s154
    %s169 = sphi 0, %s155
    %s175 = sphi 0, %s177
    %s178 = sphi 0, %s175
    %s179 = sphi 0, %s178
    %s195 = sphi 0, %s179
  $region4: #{basic_d_forward.3} parent=0 // loop_header_branch
    %16 = sbr.rel (%p14) target = $region8
  $region5: #{basic_d_forward.3} parent=0 // loop_body
    %s18 = ssub.s32 %s13, 1
    %s19 = ssub.s32 %s13, 2
    %s20 = sadd.s32 %s13, 1
    %s21 = ssub.s32 %s13, %s20
    %p22 = scmp.eq.s32.totalorder %s21, 0
    %s24 = sadd.s32 %s23, 1
    %s25 = scalar_select %p22, %s23, %s24
    %p28 = pneg %p22
    %p29 = scmp.eq.s32.totalorder %s13, 1
    %p30 = por %p28, %p29
    %p31 = scmp.ne.s32.totalorder %s23, %s26
    %p32 = scmp.eq.s32.totalorder %s13, 0
    %p33 = por %p31, %p32
    %p34 = scmp.ne.s32.totalorder %s23, %s26
    %p35 = scmp.eq.s32.totalorder %s18, 1
    %p36 = por %p34, %p35
    %p37 = scmp.ne.s32.totalorder %s26, %s27
    %p38 = scmp.eq.s32.totalorder %s18, 0
    %p39 = por %p37, %p38
    %p40 = scmp.ne.s32.totalorder %s26, %s27
    %p41 = scmp.eq.s32.totalorder %s19, 1
    %p42 = por %p40, %p41
    %p44 = scmp.ne.s32.totalorder %s27, %s43
    %p45 = scmp.eq.s32.totalorder %s19, 0
    %p46 = por %p44, %p45
    %s48 = sadd.s32 %s47, 1
    %p51 = scmp.eq.s32.totalorder %s13, 1
    %p52 = scmp.ne.s32.totalorder %s47, %s49
    %p53 = scmp.eq.s32.totalorder %s13, 0
    %p54 = por %p52, %p53
    %p55 = scmp.ne.s32.totalorder %s47, %s49
    %p56 = scmp.eq.s32.totalorder %s18, 1
    %p57 = por %p55, %p56
    %p58 = scmp.ne.s32.totalorder %s49, %s50
    %p59 = scmp.eq.s32.totalorder %s18, 0
    %p60 = por %p58, %p59
    %p61 = scmp.ne.s32.totalorder %s49, %s50
    %p62 = scmp.eq.s32.totalorder %s19, 1
    %p63 = por %p61, %p62
    %p65 = scmp.ne.s32.totalorder %s50, %s64
    %p66 = scmp.eq.s32.totalorder %s19, 0
    %p67 = por %p65, %p66
    %s69 = sadd.s32 %s68, 1
    %p72 = scmp.eq.s32.totalorder %s13, 1
    %p73 = scmp.ne.s32.totalorder %s68, %s70
    %p74 = scmp.eq.s32.totalorder %s13, 0
    %p75 = por %p73, %p74
    %p76 = scmp.ne.s32.totalorder %s68, %s70
    %p77 = scmp.eq.s32.totalorder %s18, 1
    %p78 = por %p76, %p77
    %p79 = scmp.ne.s32.totalorder %s70, %s71
    %p80 = scmp.eq.s32.totalorder %s18, 0
    %p81 = por %p79, %p80
    %p82 = scmp.ne.s32.totalorder %s70, %s71
    %p83 = scmp.eq.s32.totalorder %s19, 1
    %p84 = por %p82, %p83
    %p86 = scmp.ne.s32.totalorder %s71, %s85
    %p87 = scmp.eq.s32.totalorder %s19, 0
    %p88 = por %p86, %p87
    %s90 = sadd.s32 %s89, 1
    %p93 = scmp.eq.s32.totalorder %s13, 1
    %p94 = scmp.ne.s32.totalorder %s89, %s91
    %p95 = scmp.eq.s32.totalorder %s13, 0
    %p96 = por %p94, %p95
    %p97 = scmp.ne.s32.totalorder %s89, %s91
    %p98 = scmp.eq.s32.totalorder %s18, 1
    %p99 = por %p97, %p98
    %p100 = scmp.ne.s32.totalorder %s91, %s92
    %p101 = scmp.eq.s32.totalorder %s18, 0
    %p102 = por %p100, %p101
    %p103 = scmp.ne.s32.totalorder %s91, %s92
    %p104 = scmp.eq.s32.totalorder %s19, 1
    %p105 = por %p103, %p104
    %p107 = scmp.ne.s32.totalorder %s92, %s106
    %p108 = scmp.eq.s32.totalorder %s19, 0
    %p109 = por %p107, %p108
    %s111 = sadd.s32 %s110, 1
    %p114 = scmp.eq.s32.totalorder %s13, 1
    %p115 = scmp.ne.s32.totalorder %s110, %s112
    %p116 = scmp.eq.s32.totalorder %s13, 0
    %p117 = por %p115, %p116
    %p118 = scmp.ne.s32.totalorder %s110, %s112
    %p119 = scmp.eq.s32.totalorder %s18, 1
    %p120 = por %p118, %p119
    %p121 = scmp.ne.s32.totalorder %s112, %s113
    %p122 = scmp.eq.s32.totalorder %s18, 0
    %p123 = por %p121, %p122
    %p124 = scmp.ne.s32.totalorder %s112, %s113
    %p125 = scmp.eq.s32.totalorder %s19, 1
    %p126 = por %p124, %p125
    %p128 = scmp.ne.s32.totalorder %s113, %s127
    %p129 = scmp.eq.s32.totalorder %s19, 0
    %p130 = por %p128, %p129
    %s132 = sadd.s32 %s131, 1
    %p135 = scmp.eq.s32.totalorder %s13, 1
    %p136 = scmp.ne.s32.totalorder %s131, %s133
    %p137 = scmp.eq.s32.totalorder %s13, 0
    %p138 = por %p136, %p137
    %p139 = scmp.ne.s32.totalorder %s131, %s133
    %p140 = scmp.eq.s32.totalorder %s18, 1
    %p141 = por %p139, %p140
    %p142 = scmp.ne.s32.totalorder %s133, %s134
    %p143 = scmp.eq.s32.totalorder %s18, 0
    %p144 = por %p142, %p143
    %p145 = scmp.ne.s32.totalorder %s133, %s134
    %p146 = scmp.eq.s32.totalorder %s19, 1
    %p147 = por %p145, %p146
    %p149 = scmp.ne.s32.totalorder %s134, %s148
    %p150 = scmp.eq.s32.totalorder %s19, 0
    %p151 = por %p149, %p150
    %s153 = sadd.s32 %s152, 1
    %p156 = scmp.eq.s32.totalorder %s13, 1
    %p157 = scmp.ne.s32.totalorder %s152, %s154
    %p158 = scmp.eq.s32.totalorder %s13, 0
    %p159 = por %p157, %p158
    %p160 = scmp.ne.s32.totalorder %s152, %s154
    %p161 = scmp.eq.s32.totalorder %s18, 1
    %p162 = por %p160, %p161
    %p163 = scmp.ne.s32.totalorder %s154, %s155
    %p164 = scmp.eq.s32.totalorder %s18, 0
    %p165 = por %p163, %p164
    %p166 = scmp.ne.s32.totalorder %s154, %s155
    %p167 = scmp.eq.s32.totalorder %s19, 1
    %p168 = por %p166, %p167
    %p170 = scmp.ne.s32.totalorder %s155, %s169
    %p171 = scmp.eq.s32.totalorder %s19, 0
    %p172 = por %p170, %p171
    %s173 = ssub.s32 %s13, %s20
    %p174 = scmp.eq.s32.totalorder %s173, 0
    %s176 = sadd.s32 %s175, 1
    %s177 = scalar_select %p174, %s175, %s176
    %p180 = pneg %p174
    %p181 = scmp.eq.s32.totalorder %s13, 1
    %p182 = por %p180, %p181
    %p183 = scmp.ne.s32.totalorder %s175, %s178
    %p184 = scmp.eq.s32.totalorder %s13, 0
    %p185 = por %p183, %p184
    %p186 = scmp.ne.s32.totalorder %s175, %s178
    %p187 = scmp.eq.s32.totalorder %s18, 1
    %p188 = por %p186, %p187
    %p189 = scmp.ne.s32.totalorder %s178, %s179
    %p190 = scmp.eq.s32.totalorder %s18, 0
    %p191 = por %p189, %p190
    %p192 = scmp.ne.s32.totalorder %s178, %s179
    %p193 = scmp.eq.s32.totalorder %s19, 1
    %p194 = por %p192, %p193
    %p196 = scmp.ne.s32.totalorder %s179, %s195
    %p197 = scmp.eq.s32.totalorder %s19, 0
    %p198 = por %p196, %p197
    %p199 = scmp.le.s32.totalorder 1, %s13
    %p200 = scmp.lt.s32.totalorder %s13, 3
    %p201 = pnand %p199, %p200
    %p202 = pneg %p201
    // Predicated region
    $region9: #{basic_d_forward.3} parent=5 // pred_check
      _
    $region10: #{basic_d_forward.3} parent=5 // pred_check_branch
      %204 = sbr.rel (%p201) target = $region12
    $region11: #{basic_d_forward.3} parent=5 // pred_region
      %s205 = ssub.s32 %s13, 1
      // Predicated region
      $region13: #{basic_d_forward.3} parent=11 // pred_check
        %p206 = pneg %p60
      $region14: #{basic_d_forward.3} parent=11 // pred_check_branch
        %208 = sbr.rel (%p206) target = $region16
      $region15: #{basic_d_forward.3} parent=11 // pred_region
        _
      $region16: #{basic_d_forward.3} parent=11 // pred_fallthru
        _
      // Predicated region
      $region17: #{basic_d_forward.3} parent=11 // pred_check
        %p209 = pneg %p81
      $region18: #{basic_d_forward.3} parent=11 // pred_check_branch
        %211 = sbr.rel (%p209) target = $region20
      $region19: #{basic_d_forward.3} parent=11 // pred_region
        _
      $region20: #{basic_d_forward.3} parent=11 // pred_fallthru
        _
      // Predicated region
      $region21: #{basic_d_forward.3} parent=11 // pred_check
        %p212 = pneg %p102
      $region22: #{basic_d_forward.3} parent=11 // pred_check_branch
        %214 = sbr.rel (%p212) target = $region24
      $region23: #{basic_d_forward.3} parent=11 // pred_region
        _
      $region24: #{basic_d_forward.3} parent=11 // pred_fallthru
        _
      // Predicated region
      $region25: #{basic_d_forward.3} parent=11 // pred_check
        %p215 = pneg %p123
      $region26: #{basic_d_forward.3} parent=11 // pred_check_branch
        %217 = sbr.rel (%p215) target = $region28
      $region27: #{basic_d_forward.3} parent=11 // pred_region
        _
      $region28: #{basic_d_forward.3} parent=11 // pred_fallthru
        _
      // Predicated region
      $region29: #{basic_d_forward.3} parent=11 // pred_check
        %p218 = pneg %p144
      $region30: #{basic_d_forward.3} parent=11 // pred_check_branch
        %220 = sbr.rel (%p218) target = $region32
      $region31: #{basic_d_forward.3} parent=11 // pred_region
        _
      $region32: #{basic_d_forward.3} parent=11 // pred_fallthru
        _
      // Predicated region
      $region33: #{basic_d_forward.3} parent=11 // pred_check
        %p221 = pneg %p165
      $region34: #{basic_d_forward.3} parent=11 // pred_check_branch
        %223 = sbr.rel (%p221) target = $region36
      $region35: #{basic_d_forward.3} parent=11 // pred_region
        _
      $region36: #{basic_d_forward.3} parent=11 // pred_fallthru
        _
    $region12: #{basic_d_forward.3} parent=5 // pred_fallthru
      _
    %p224 = scmp.lt.s32.totalorder %s13, 2
    // Predicated region
    $region37: #{basic_d_forward.3} parent=5 // pred_check
      %p225 = pneg %p224
    $region38: #{basic_d_forward.3} parent=5 // pred_check_branch
      %227 = sbr.rel (%p225) target = $region40
    $region39: #{basic_d_forward.3} parent=5 // pred_region
      // Predicated region
      $region41: #{basic_d_forward.3} parent=39 // pred_check
        %p228 = pneg %p33
      $region42: #{basic_d_forward.3} parent=39 // pred_check_branch
        %230 = sbr.rel (%p228) target = $region44
      $region43: #{basic_d_forward.3} parent=39 // pred_region
        %p231 = scmp.lt.s32.totalorder %s13, 1
        %s232 = scalar_select %p231, %s13, 1
        %s233 = smul.addr %s232, 32
        %s234 = scalar_lea.vmem %s0, %s233
      $region44: #{basic_d_forward.3} parent=39 // pred_fallthru
        _
    $region40: #{basic_d_forward.3} parent=5 // pred_fallthru
      _
    %p235 = scmp.le.s32.totalorder 1, %s13
    %p236 = scmp.lt.s32.totalorder %s13, 3
    %p237 = pnand %p235, %p236
    %p238 = pneg %p237
    // Predicated region
    $region45: #{basic_d_forward.3} parent=5 // pred_check
      _
    $region46: #{basic_d_forward.3} parent=5 // pred_check_branch
      %240 = sbr.rel (%p237) target = $region48
    $region47: #{basic_d_forward.3} parent=5 // pred_region
      %s241 = ssub.s32 %s13, 1
      %p242 = scmp.lt.s32.totalorder %s18, 1
      %s243 = scalar_select %p242, %s18, 1
      %s244 = smul.addr %s243, 32
      %s245 = scalar_lea.vmem %s0, %s244
      %p246 = pneg %p39
      %p247 = pneg %p36
      %p248 = pneg %p60
      %p249 = pneg %p57
      %p250 = pneg %p81
      %p251 = pneg %p78
      %p252 = pneg %p102
      %p253 = pneg %p99
      %p254 = pneg %p123
      %p255 = pneg %p120
      %p256 = pneg %p144
      %p257 = pneg %p141
      %p258 = pneg %p165
      %p259 = pneg %p162
      %p260 = pneg %p191
      %p261 = pneg %p188
      %p262 = scmp.lt.s32.totalorder %s18, 1
      %s263 = scalar_select %p262, %s18, 1
      %s264 = smul.addr %s263, 2
      %s265 = scalar_lea.vmem %s7, %s264
      %p266 = scmp.lt.s32.totalorder %s18, 1
      %s267 = scalar_select %p266, %s18, 1
      %s268 = smul.addr %s267, 32
      %s269 = scalar_lea.vmem %s0, %s268
      %p270 = scmp.lt.s32.totalorder %s18, 1
      %s271 = scalar_select %p270, %s18, 1
      %s272 = smul.addr %s271, 2
      %s273 = scalar_lea.vmem %s7, %s272
      %v274 = vld [vmem:[%s269] sm:$0x1]
      %v275 = vld [vmem:[%s269 + $0x1] sm:$0x1]
      %v276 = vld [vmem:[%s269 + $0x2] sm:$0x1]
      %v277 = vld [vmem:[%s269 + $0x3] sm:$0x1]
      %v278 = vld [vmem:[%s269 + $0x4] sm:$0x1]
      %v279 = vld [vmem:[%s269 + $0x5] sm:$0x1]
      %v280 = vld [vmem:[%s269 + $0x6] sm:$0x1]
      %v281 = vld [vmem:[%s269 + $0x7] sm:$0x1]
      %v282 = vld [vmem:[%s269 + $0x8] sm:$0x1]
      %v283 = vld [vmem:[%s269 + $0x9] sm:$0x1]
      %v284 = vld [vmem:[%s269 + $0xa] sm:$0x1]
      %v285 = vld [vmem:[%s269 + $0xb] sm:$0x1]
      %v286 = vld [vmem:[%s269 + $0xc] sm:$0x1]
      %v287 = vld [vmem:[%s269 + $0xd] sm:$0x1]
      %v288 = vld [vmem:[%s269 + $0xe] sm:$0x1]
      %v289 = vld [vmem:[%s269 + $0xf] sm:$0x1]
      %v290 = vld [vmem:[%s269 + $0x10] sm:$0x1]
      %v291 = vld [vmem:[%s269 + $0x11] sm:$0x1]
      %v292 = vld [vmem:[%s269 + $0x12] sm:$0x1]
      %v293 = vld [vmem:[%s269 + $0x13] sm:$0x1]
      %v294 = vld [vmem:[%s269 + $0x14] sm:$0x1]
      %v295 = vld [vmem:[%s269 + $0x15] sm:$0x1]
      %v296 = vld [vmem:[%s269 + $0x16] sm:$0x1]
      %v297 = vld [vmem:[%s269 + $0x17] sm:$0x1]
      %v298 = vld [vmem:[%s269 + $0x18] sm:$0x1]
      %v299 = vld [vmem:[%s269 + $0x19] sm:$0x1]
      %v300 = vld [vmem:[%s269 + $0x1a] sm:$0x1]
      %v301 = vld [vmem:[%s269 + $0x1b] sm:$0x1]
      %v302 = vld [vmem:[%s269 + $0x1c] sm:$0x1]
      %v303 = vld [vmem:[%s269 + $0x1d] sm:$0x1]
      %v304 = vld [vmem:[%s269 + $0x1e] sm:$0x1]
      %v305 = vld [vmem:[%s269 + $0x1f] sm:$0x1]
      %v306 = vld [vmem:[%s1] sm:$0xff]
      %v307 = vld [vmem:[%s1 + $0x8] sm:$0xff]
      %v308 = vld [vmem:[%s1 + $0x10] sm:$0xff]
      %v309 = vld [vmem:[%s1 + $0x18] sm:$0xff]
      %v310 = vld [vmem:[%s1 + $0x20] sm:$0xff]
      %v311 = vld [vmem:[%s1 + $0x28] sm:$0xff]
      %v312 = vld [vmem:[%s1 + $0x30] sm:$0xff]
      %v313 = vld [vmem:[%s1 + $0x38] sm:$0xff]
      %v314 = vld [vmem:[%s1 + $0x40] sm:$0xff]
      %v315 = vld [vmem:[%s1 + $0x48] sm:$0xff]
      %v316 = vld [vmem:[%s1 + $0x50] sm:$0xff]
      %v317 = vld [vmem:[%s1 + $0x58] sm:$0xff]
      %v318 = vld [vmem:[%s1 + $0x60] sm:$0xff]
      %v319 = vld [vmem:[%s1 + $0x68] sm:$0xff]
      %v320 = vld [vmem:[%s1 + $0x70] sm:$0xff]
      %v321 = vld [vmem:[%s1 + $0x78] sm:$0xff]
      %v322 = vld [vmem:[%s1 + $0x80] sm:$0xff]
      %v323 = vld [vmem:[%s1 + $0x88] sm:$0xff]
      %v324 = vld [vmem:[%s1 + $0x90] sm:$0xff]
      %v325 = vld [vmem:[%s1 + $0x98] sm:$0xff]
      %v326 = vld [vmem:[%s1 + $0xa0] sm:$0xff]
      %v327 = vld [vmem:[%s1 + $0xa8] sm:$0xff]
      %v328 = vld [vmem:[%s1 + $0xb0] sm:$0xff]
      %v329 = vld [vmem:[%s1 + $0xb8] sm:$0xff]
      %v330 = vld [vmem:[%s1 + $0xc0] sm:$0xff]
      %v331 = vld [vmem:[%s1 + $0xc8] sm:$0xff]
      %v332 = vld [vmem:[%s1 + $0xd0] sm:$0xff]
      %v333 = vld [vmem:[%s1 + $0xd8] sm:$0xff]
      %v334 = vld [vmem:[%s1 + $0xe0] sm:$0xff]
      %v335 = vld [vmem:[%s1 + $0xe8] sm:$0xff]
      %v336 = vld [vmem:[%s1 + $0xf0] sm:$0xff]
      %v337 = vld [vmem:[%s1 + $0xf8] sm:$0xff]
      %v338 = vld [vmem:[%s1 + $0x100] sm:$0xff]
      %v339 = vld [vmem:[%s1 + $0x108] sm:$0xff]
      %v340 = vld [vmem:[%s1 + $0x110] sm:$0xff]
      %v341 = vld [vmem:[%s1 + $0x118] sm:$0xff]
      %v342 = vld [vmem:[%s1 + $0x120] sm:$0xff]
      %v343 = vld [vmem:[%s1 + $0x128] sm:$0xff]
      %v344 = vld [vmem:[%s1 + $0x130] sm:$0xff]
      %v345 = vld [vmem:[%s1 + $0x138] sm:$0xff]
      %v346 = vld [vmem:[%s1 + $0x140] sm:$0xff]
      %v347 = vld [vmem:[%s1 + $0x148] sm:$0xff]
      %v348 = vld [vmem:[%s1 + $0x150] sm:$0xff]
      %v349 = vld [vmem:[%s1 + $0x158] sm:$0xff]
      %v350 = vld [vmem:[%s1 + $0x160] sm:$0xff]
      %v351 = vld [vmem:[%s1 + $0x168] sm:$0xff]
      %v352 = vld [vmem:[%s1 + $0x170] sm:$0xff]
      %v353 = vld [vmem:[%s1 + $0x178] sm:$0xff]
      %v354 = vld [vmem:[%s1 + $0x180] sm:$0xff]
      %v355 = vld [vmem:[%s1 + $0x188] sm:$0xff]
      %v356 = vld [vmem:[%s1 + $0x190] sm:$0xff]
      %v357 = vld [vmem:[%s1 + $0x198] sm:$0xff]
      %v358 = vld [vmem:[%s1 + $0x1a0] sm:$0xff]
      %v359 = vld [vmem:[%s1 + $0x1a8] sm:$0xff]
      %v360 = vld [vmem:[%s1 + $0x1b0] sm:$0xff]
      %v361 = vld [vmem:[%s1 + $0x1b8] sm:$0xff]
      %v362 = vld [vmem:[%s1 + $0x1c0] sm:$0xff]
      %v363 = vld [vmem:[%s1 + $0x1c8] sm:$0xff]
      %v364 = vld [vmem:[%s1 + $0x1d0] sm:$0xff]
      %v365 = vld [vmem:[%s1 + $0x1d8] sm:$0xff]
      %v366 = vld [vmem:[%s1 + $0x1e0] sm:$0xff]
      %v367 = vld [vmem:[%s1 + $0x1e8] sm:$0xff]
      %v368 = vld [vmem:[%s1 + $0x1f0] sm:$0xff]
      %v369 = vld [vmem:[%s1 + $0x1f8] sm:$0xff]
      %s370 = scalar_lea.vmem %s1, 512
      %v371 = vld [vmem:[%s370] sm:$0xff]
      %v372 = vld [vmem:[%s370 + $0x8] sm:$0xff]
      %v373 = vld [vmem:[%s370 + $0x10] sm:$0xff]
      %v374 = vld [vmem:[%s370 + $0x18] sm:$0xff]
      %v375 = vld [vmem:[%s370 + $0x20] sm:$0xff]
      %v376 = vld [vmem:[%s370 + $0x28] sm:$0xff]
      %v377 = vld [vmem:[%s370 + $0x30] sm:$0xff]
      %v378 = vld [vmem:[%s370 + $0x38] sm:$0xff]
      %v379 = vld [vmem:[%s370 + $0x40] sm:$0xff]
      %v380 = vld [vmem:[%s370 + $0x48] sm:$0xff]
      %v381 = vld [vmem:[%s370 + $0x50] sm:$0xff]
      %v382 = vld [vmem:[%s370 + $0x58] sm:$0xff]
      %v383 = vld [vmem:[%s370 + $0x60] sm:$0xff]
      %v384 = vld [vmem:[%s370 + $0x68] sm:$0xff]
      %v385 = vld [vmem:[%s370 + $0x70] sm:$0xff]
      %v386 = vld [vmem:[%s370 + $0x78] sm:$0xff]
      %v387 = vld [vmem:[%s370 + $0x80] sm:$0xff]
      %v388 = vld [vmem:[%s370 + $0x88] sm:$0xff]
      %v389 = vld [vmem:[%s370 + $0x90] sm:$0xff]
      %v390 = vld [vmem:[%s370 + $0x98] sm:$0xff]
      %v391 = vld [vmem:[%s370 + $0xa0] sm:$0xff]
      %v392 = vld [vmem:[%s370 + $0xa8] sm:$0xff]
      %v393 = vld [vmem:[%s370 + $0xb0] sm:$0xff]
      %v394 = vld [vmem:[%s370 + $0xb8] sm:$0xff]
      %v395 = vld [vmem:[%s370 + $0xc0] sm:$0xff]
      %v396 = vld [vmem:[%s370 + $0xc8] sm:$0xff]
      %v397 = vld [vmem:[%s370 + $0xd0] sm:$0xff]
      %v398 = vld [vmem:[%s370 + $0xd8] sm:$0xff]
      %v399 = vld [vmem:[%s370 + $0xe0] sm:$0xff]
      %v400 = vld [vmem:[%s370 + $0xe8] sm:$0xff]
      %v401 = vld [vmem:[%s370 + $0xf0] sm:$0xff]
      %v402 = vld [vmem:[%s370 + $0xf8] sm:$0xff]
      %v403 = vld [vmem:[%s370 + $0x100] sm:$0xff]
      %v404 = vld [vmem:[%s370 + $0x108] sm:$0xff]
      %v405 = vld [vmem:[%s370 + $0x110] sm:$0xff]
      %v406 = vld [vmem:[%s370 + $0x118] sm:$0xff]
      %v407 = vld [vmem:[%s370 + $0x120] sm:$0xff]
      %v408 = vld [vmem:[%s370 + $0x128] sm:$0xff]
      %v409 = vld [vmem:[%s370 + $0x130] sm:$0xff]
      %v410 = vld [vmem:[%s370 + $0x138] sm:$0xff]
      %v411 = vld [vmem:[%s370 + $0x140] sm:$0xff]
      %v412 = vld [vmem:[%s370 + $0x148] sm:$0xff]
      %v413 = vld [vmem:[%s370 + $0x150] sm:$0xff]
      %v414 = vld [vmem:[%s370 + $0x158] sm:$0xff]
      %v415 = vld [vmem:[%s370 + $0x160] sm:$0xff]
      %v416 = vld [vmem:[%s370 + $0x168] sm:$0xff]
      %v417 = vld [vmem:[%s370 + $0x170] sm:$0xff]
      %v418 = vld [vmem:[%s370 + $0x178] sm:$0xff]
      %v419 = vld [vmem:[%s370 + $0x180] sm:$0xff]
      %v420 = vld [vmem:[%s370 + $0x188] sm:$0xff]
      %v421 = vld [vmem:[%s370 + $0x190] sm:$0xff]
      %v422 = vld [vmem:[%s370 + $0x198] sm:$0xff]
      %v423 = vld [vmem:[%s370 + $0x1a0] sm:$0xff]
      %v424 = vld [vmem:[%s370 + $0x1a8] sm:$0xff]
      %v425 = vld [vmem:[%s370 + $0x1b0] sm:$0xff]
      %v426 = vld [vmem:[%s370 + $0x1b8] sm:$0xff]
      %v427 = vld [vmem:[%s370 + $0x1c0] sm:$0xff]
      %v428 = vld [vmem:[%s370 + $0x1c8] sm:$0xff]
      %v429 = vld [vmem:[%s370 + $0x1d0] sm:$0xff]
      %v430 = vld [vmem:[%s370 + $0x1d8] sm:$0xff]
      %v431 = vld [vmem:[%s370 + $0x1e0] sm:$0xff]
      %v432 = vld [vmem:[%s370 + $0x1e8] sm:$0xff]
      %v433 = vld [vmem:[%s370 + $0x1f0] sm:$0xff]
      %v434 = vld [vmem:[%s370 + $0x1f8] sm:$0xff]
      %436 = vst [vmem:[#allocation1] ss:$9 sm:$0xff] %v275
      %v437 = vld [vmem:[#allocation1] sm:$0xff]
      %440 = vst [vmem:[#allocation1] ss:$9 sm:$0xff] %v277
      %v441 = vld [vmem:[#allocation1] sm:$0xff]
      %444 = vst [vmem:[#allocation1] ss:$9 sm:$0xff] %v279
      %v445 = vld [vmem:[#allocation1] sm:$0xff]
      %448 = vst [vmem:[#allocation1] ss:$9 sm:$0xff] %v281
      %v449 = vld [vmem:[#allocation1] sm:$0xff]
      %452 = vst [vmem:[#allocation1] ss:$9 sm:$0xff] %v283
      %v453 = vld [vmem:[#allocation1] sm:$0xff]
      %456 = vst [vmem:[#allocation1] ss:$9 sm:$0xff] %v285
      %v457 = vld [vmem:[#allocation1] sm:$0xff]
      %460 = vst [vmem:[#allocation1] ss:$9 sm:$0xff] %v287
      %v461 = vld [vmem:[#allocation1] sm:$0xff]
      %464 = vst [vmem:[#allocation1] ss:$9 sm:$0xff] %v289
      %v465 = vld [vmem:[#allocation1] sm:$0xff]
      %468 = vst [vmem:[#allocation1] ss:$9 sm:$0xff] %v291
      %v469 = vld [vmem:[#allocation1] sm:$0xff]
      %472 = vst [vmem:[#allocation1] ss:$9 sm:$0xff] %v293
      %v473 = vld [vmem:[#allocation1] sm:$0xff]
      %476 = vst [vmem:[#allocation1] ss:$9 sm:$0xff] %v295
      %v477 = vld [vmem:[#allocation1] sm:$0xff]
      %480 = vst [vmem:[#allocation1] ss:$9 sm:$0xff] %v297
      %v481 = vld [vmem:[#allocation1] sm:$0xff]
      %484 = vst [vmem:[#allocation1] ss:$9 sm:$0xff] %v299
      %v485 = vld [vmem:[#allocation1] sm:$0xff]
      %488 = vst [vmem:[#allocation1] ss:$9 sm:$0xff] %v301
      %v489 = vld [vmem:[#allocation1] sm:$0xff]
      %492 = vst [vmem:[#allocation1] ss:$9 sm:$0xff] %v303
      %v493 = vld [vmem:[#allocation1] sm:$0xff]
      %v495 = vunpack.c.l.b16 %v437
      %v496 = vunpack.c.l.b16 %v441
      %v497 = vunpack.c.l.b16 %v445
      %v498 = vunpack.c.l.b16 %v449
      %v499 = vunpack.c.l.b16 %v453
      %v500 = vunpack.c.l.b16 %v457
      %v501 = vunpack.c.l.b16 %v461
      %v502 = vunpack.c.l.b16 %v465
      %v503 = vunpack.c.l.b16 %v469
      %v504 = vunpack.c.l.b16 %v473
      %v505 = vunpack.c.l.b16 %v477
      %v506 = vunpack.c.l.b16 %v481
      %v507 = vunpack.c.l.b16 %v485
      %v508 = vunpack.c.l.b16 %v489
      %v509 = vunpack.c.l.b16 %v493
      %v510 = vrot.slane %v496, 7
      %vm511 = vcmask 1041409
      %v512 = vsel %vm511, %v510, %v495
      %v513 = vrot.slane %v497, 6
      %vm514 = vcmask 1042434
      %v515 = vsel %vm514, %v513, %v512
      %v516 = vrot.slane %v498, 5
      %vm517 = vcmask 1043459
      %v518 = vsel %vm517, %v516, %v515
      %v519 = vrot.slane %v499, 4
      %vm520 = vcmask 1044484
      %v521 = vsel %vm520, %v519, %v518
      %v522 = vrot.slane %v500, 3
      %vm523 = vcmask 1045509
      %v524 = vsel %vm523, %v522, %v521
      %v525 = vrot.slane %v501, 2
      %vm526 = vcmask 1046534
      %v527 = vsel %vm526, %v525, %v524
      %v528 = vrot.slane %v502, 1
      %vm529 = vcmask 1047559
      %v530 = vsel %vm529, %v528, %v527
      %v531 = vrot.slane %v504, 7
      %v532 = vsel %vm511, %v531, %v503
      %v533 = vrot.slane %v505, 6
      %v534 = vsel %vm514, %v533, %v532
      %v535 = vrot.slane %v506, 5
      %v536 = vsel %vm517, %v535, %v534
      %v537 = vrot.slane %v507, 4
      %v538 = vsel %vm520, %v537, %v536
      %v539 = vrot.slane %v508, 3
      %v540 = vsel %vm523, %v539, %v538
      %v541 = vrot.slane %v509, 2
      %v542 = vsel %vm526, %v541, %v540
      %v543 = vpack.c.b16 %v542, %v530
      %v609 = vunpack.c.l.b16 %v371
      %v610 = vunpack.c.h.b16 %v371
      %v611 = vunpack.c.l.b16 %v372
      %v612 = vunpack.c.h.b16 %v372
      %v613 = vunpack.c.l.b16 %v373
      %v614 = vunpack.c.h.b16 %v373
      %v615 = vunpack.c.l.b16 %v374
      %v616 = vunpack.c.h.b16 %v374
      %v617 = vunpack.c.l.b16 %v375
      %v618 = vunpack.c.h.b16 %v375
      %v619 = vunpack.c.l.b16 %v376
      %v620 = vunpack.c.h.b16 %v376
      %v621 = vunpack.c.l.b16 %v377
      %v622 = vunpack.c.h.b16 %v377
      %v623 = vunpack.c.l.b16 %v378
      %v624 = vunpack.c.h.b16 %v378
      %v625 = vunpack.c.l.b16 %v379
      %v626 = vunpack.c.h.b16 %v379
      %v627 = vunpack.c.l.b16 %v380
      %v628 = vunpack.c.h.b16 %v380
      %v629 = vunpack.c.l.b16 %v381
      %v630 = vunpack.c.h.b16 %v381
      %v631 = vunpack.c.l.b16 %v382
      %v632 = vunpack.c.h.b16 %v382
      %v633 = vunpack.c.l.b16 %v383
      %v634 = vunpack.c.h.b16 %v383
      %v635 = vunpack.c.l.b16 %v384
      %v636 = vunpack.c.h.b16 %v384
      %v637 = vunpack.c.l.b16 %v385
      %v638 = vunpack.c.h.b16 %v385
      %v639 = vunpack.c.l.b16 %v386
      %v640 = vunpack.c.h.b16 %v386
      %v641 = vunpack.c.l.b16 %v387
      %v642 = vunpack.c.h.b16 %v387
      %v643 = vunpack.c.l.b16 %v388
      %v644 = vunpack.c.h.b16 %v388
      %v645 = vunpack.c.l.b16 %v389
      %v646 = vunpack.c.h.b16 %v389
      %v647 = vunpack.c.l.b16 %v390
      %v648 = vunpack.c.h.b16 %v390
      %v649 = vunpack.c.l.b16 %v391
      %v650 = vunpack.c.h.b16 %v391
      %v651 = vunpack.c.l.b16 %v392
      %v652 = vunpack.c.h.b16 %v392
      %v653 = vunpack.c.l.b16 %v393
      %v654 = vunpack.c.h.b16 %v393
      %v655 = vunpack.c.l.b16 %v394
      %v656 = vunpack.c.h.b16 %v394
      %v657 = vunpack.c.l.b16 %v395
      %v658 = vunpack.c.h.b16 %v395
      %v659 = vunpack.c.l.b16 %v396
      %v660 = vunpack.c.h.b16 %v396
      %v661 = vunpack.c.l.b16 %v397
      %v662 = vunpack.c.h.b16 %v397
      %v663 = vunpack.c.l.b16 %v398
      %v664 = vunpack.c.h.b16 %v398
      %v665 = vunpack.c.l.b16 %v399
      %v666 = vunpack.c.h.b16 %v399
      %v667 = vunpack.c.l.b16 %v400
      %v668 = vunpack.c.h.b16 %v400
      %v669 = vunpack.c.l.b16 %v401
      %v670 = vunpack.c.h.b16 %v401
      %v671 = vunpack.c.l.b16 %v402
      %v672 = vunpack.c.h.b16 %v402
      %v673 = vunpack.c.l.b16 %v403
      %v674 = vunpack.c.h.b16 %v403
      %v675 = vunpack.c.l.b16 %v404
      %v676 = vunpack.c.h.b16 %v404
      %v677 = vunpack.c.l.b16 %v405
      %v678 = vunpack.c.h.b16 %v405
      %v679 = vunpack.c.l.b16 %v406
      %v680 = vunpack.c.h.b16 %v406
      %v681 = vunpack.c.l.b16 %v407
      %v682 = vunpack.c.h.b16 %v407
      %v683 = vunpack.c.l.b16 %v408
      %v684 = vunpack.c.h.b16 %v408
      %v685 = vunpack.c.l.b16 %v409
      %v686 = vunpack.c.h.b16 %v409
      %v687 = vunpack.c.l.b16 %v410
      %v688 = vunpack.c.h.b16 %v410
      %v689 = vunpack.c.l.b16 %v411
      %v690 = vunpack.c.h.b16 %v411
      %v691 = vunpack.c.l.b16 %v412
      %v692 = vunpack.c.h.b16 %v412
      %v693 = vunpack.c.l.b16 %v413
      %v694 = vunpack.c.h.b16 %v413
      %v695 = vunpack.c.l.b16 %v414
      %v696 = vunpack.c.h.b16 %v414
      %v697 = vunpack.c.l.b16 %v415
      %v698 = vunpack.c.h.b16 %v415
      %v699 = vunpack.c.l.b16 %v416
      %v700 = vunpack.c.h.b16 %v416
      %v701 = vunpack.c.l.b16 %v417
      %v702 = vunpack.c.h.b16 %v417
      %v703 = vunpack.c.l.b16 %v418
      %v704 = vunpack.c.h.b16 %v418
      %v705 = vunpack.c.l.b16 %v419
      %v706 = vunpack.c.h.b16 %v419
      %v707 = vunpack.c.l.b16 %v420
      %v708 = vunpack.c.h.b16 %v420
      %v709 = vunpack.c.l.b16 %v421
      %v710 = vunpack.c.h.b16 %v421
      %v711 = vunpack.c.l.b16 %v422
      %v712 = vunpack.c.h.b16 %v422
      %v713 = vunpack.c.l.b16 %v423
      %v714 = vunpack.c.h.b16 %v423
      %v715 = vunpack.c.l.b16 %v424
      %v716 = vunpack.c.h.b16 %v424
      %v717 = vunpack.c.l.b16 %v425
      %v718 = vunpack.c.h.b16 %v425
      %v719 = vunpack.c.l.b16 %v426
      %v720 = vunpack.c.h.b16 %v426
      %v721 = vunpack.c.l.b16 %v427
      %v722 = vunpack.c.h.b16 %v427
      %v723 = vunpack.c.l.b16 %v428
      %v724 = vunpack.c.h.b16 %v428
      %v725 = vunpack.c.l.b16 %v429
      %v726 = vunpack.c.h.b16 %v429
      %v727 = vunpack.c.l.b16 %v430
      %v728 = vunpack.c.h.b16 %v430
      %v729 = vunpack.c.l.b16 %v431
      %v730 = vunpack.c.h.b16 %v431
      %v731 = vunpack.c.l.b16 %v432
      %v732 = vunpack.c.h.b16 %v432
      %v733 = vunpack.c.l.b16 %v433
      %v734 = vunpack.c.h.b16 %v433
      %v735 = vunpack.c.l.b16 %v434
      %v736 = vunpack.c.h.b16 %v434
      %v737 = vpack.c.b16 %v617, %v609
      %v738 = vpack.c.b16 %v618, %v610
      %v739 = vpack.c.b16 %v619, %v611
      %v740 = vpack.c.b16 %v620, %v612
      %v741 = vpack.c.b16 %v621, %v613
      %v742 = vpack.c.b16 %v622, %v614
      %v743 = vpack.c.b16 %v623, %v615
      %v744 = vpack.c.b16 %v624, %v616
      %v745 = vpack.c.b16 %v633, %v625
      %v746 = vpack.c.b16 %v634, %v626
      %v747 = vpack.c.b16 %v635, %v627
      %v748 = vpack.c.b16 %v636, %v628
      %v749 = vpack.c.b16 %v637, %v629
      %v750 = vpack.c.b16 %v638, %v630
      %v751 = vpack.c.b16 %v639, %v631
      %v752 = vpack.c.b16 %v640, %v632
      %v753 = vpack.c.b16 %v649, %v641
      %v754 = vpack.c.b16 %v650, %v642
      %v755 = vpack.c.b16 %v651, %v643
      %v756 = vpack.c.b16 %v652, %v644
      %v757 = vpack.c.b16 %v653, %v645
      %v758 = vpack.c.b16 %v654, %v646
      %v759 = vpack.c.b16 %v655, %v647
      %v760 = vpack.c.b16 %v656, %v648
      %v761 = vpack.c.b16 %v665, %v657
      %v762 = vpack.c.b16 %v666, %v658
      %v763 = vpack.c.b16 %v667, %v659
      %v764 = vpack.c.b16 %v668, %v660
      %v765 = vpack.c.b16 %v669, %v661
      %v766 = vpack.c.b16 %v670, %v662
      %v767 = vpack.c.b16 %v671, %v663
      %v768 = vpack.c.b16 %v672, %v664
      %v769 = vpack.c.b16 %v681, %v673
      %v770 = vpack.c.b16 %v682, %v674
      %v771 = vpack.c.b16 %v683, %v675
      %v772 = vpack.c.b16 %v684, %v676
      %v773 = vpack.c.b16 %v685, %v677
      %v774 = vpack.c.b16 %v686, %v678
      %v775 = vpack.c.b16 %v687, %v679
      %v776 = vpack.c.b16 %v688, %v680
      %v777 = vpack.c.b16 %v697, %v689
      %v778 = vpack.c.b16 %v698, %v690
      %v779 = vpack.c.b16 %v699, %v691
      %v780 = vpack.c.b16 %v700, %v692
      %v781 = vpack.c.b16 %v701, %v693
      %v782 = vpack.c.b16 %v702, %v694
      %v783 = vpack.c.b16 %v703, %v695
      %v784 = vpack.c.b16 %v704, %v696
      %v785 = vpack.c.b16 %v713, %v705
      %v786 = vpack.c.b16 %v714, %v706
      %v787 = vpack.c.b16 %v715, %v707
      %v788 = vpack.c.b16 %v716, %v708
      %v789 = vpack.c.b16 %v717, %v709
      %v790 = vpack.c.b16 %v718, %v710
      %v791 = vpack.c.b16 %v719, %v711
      %v792 = vpack.c.b16 %v720, %v712
      %v793 = vpack.c.b16 %v729, %v721
      %v794 = vpack.c.b16 %v730, %v722
      %v795 = vpack.c.b16 %v731, %v723
      %v796 = vpack.c.b16 %v732, %v724
      %v797 = vpack.c.b16 %v733, %v725
      %v798 = vpack.c.b16 %v734, %v726
      %v799 = vpack.c.b16 %v735, %v727
      %v800 = vpack.c.b16 %v736, %v728
      %865 = vmatpush.bf16.msra.mxu0 %v793
      %866 = vmatpush.bf16.msra.mxu0 %v785
      %867 = vmatpush.bf16.msra.mxu0 %v777
      %868 = vmatpush.bf16.msra.mxu0 %v769
      %869 = vmatpush.bf16.msra.mxu0 %v761
      %870 = vmatpush.bf16.msra.mxu0 %v753
      %871 = vmatpush.bf16.msra.mxu0 %v745
      %872 = vmatpush.bf16.msra.mxu0 %v737
      %873 = vmatmul.bf16.gmra.mxu0 %v543
      %v874 = vpop.f32.mrf.mxu0
      %v875 = vadd.f32 0.0, %v874
      %v876 = vpop.f32.mrf.mxu0
      %v877 = vadd.f32 0.0, %v876
      %878 = vdwg.mxu0
      %879 = vmatpush.bf16.msra.mxu0 %v794
      %880 = vmatpush.bf16.msra.mxu0 %v786
      %881 = vmatpush.bf16.msra.mxu0 %v778
      %882 = vmatpush.bf16.msra.mxu0 %v770
      %883 = vmatpush.bf16.msra.mxu0 %v762
      %884 = vmatpush.bf16.msra.mxu0 %v754
      %885 = vmatpush.bf16.msra.mxu0 %v746
      %886 = vmatpush.bf16.msra.mxu0 %v738
      %887 = vmatmul.bf16.gmra.mxu0 %v543
      %v888 = vpop.f32.mrf.mxu0
      %v889 = vadd.f32 0.0, %v888
      %v890 = vpop.f32.mrf.mxu0
      %v891 = vadd.f32 0.0, %v890
      %892 = vdwg.mxu0
      %893 = vmatpush.bf16.msra.mxu0 %v795
      %894 = vmatpush.bf16.msra.mxu0 %v787
      %895 = vmatpush.bf16.msra.mxu0 %v779
      %896 = vmatpush.bf16.msra.mxu0 %v771
      %897 = vmatpush.bf16.msra.mxu0 %v763
      %898 = vmatpush.bf16.msra.mxu0 %v755
      %899 = vmatpush.bf16.msra.mxu0 %v747
      %900 = vmatpush.bf16.msra.mxu0 %v739
      %901 = vmatmul.bf16.gmra.mxu0 %v543
      %v902 = vpop.f32.mrf.mxu0
      %v903 = vadd.f32 0.0, %v902
      %v904 = vpop.f32.mrf.mxu0
      %v905 = vadd.f32 0.0, %v904
      %906 = vdwg.mxu0
      %907 = vmatpush.bf16.msra.mxu0 %v796
      %908 = vmatpush.bf16.msra.mxu0 %v788
      %909 = vmatpush.bf16.msra.mxu0 %v780
      %910 = vmatpush.bf16.msra.mxu0 %v772
      %911 = vmatpush.bf16.msra.mxu0 %v764
      %912 = vmatpush.bf16.msra.mxu0 %v756
      %913 = vmatpush.bf16.msra.mxu0 %v748
      %914 = vmatpush.bf16.msra.mxu0 %v740
      %915 = vmatmul.bf16.gmra.mxu0 %v543
      %v916 = vpop.f32.mrf.mxu0
      %v917 = vadd.f32 0.0, %v916
      %v918 = vpop.f32.mrf.mxu0
      %v919 = vadd.f32 0.0, %v918
      %920 = vdwg.mxu0
      %921 = vmatpush.bf16.msra.mxu0 %v797
      %922 = vmatpush.bf16.msra.mxu0 %v789
      %923 = vmatpush.bf16.msra.mxu0 %v781
      %924 = vmatpush.bf16.msra.mxu0 %v773
      %925 = vmatpush.bf16.msra.mxu0 %v765
      %926 = vmatpush.bf16.msra.mxu0 %v757
      %927 = vmatpush.bf16.msra.mxu0 %v749
      %928 = vmatpush.bf16.msra.mxu0 %v741
      %929 = vmatmul.bf16.gmra.mxu0 %v543
      %v930 = vpop.f32.mrf.mxu0
      %v931 = vadd.f32 0.0, %v930
      %v932 = vpop.f32.mrf.mxu0
      %v933 = vadd.f32 0.0, %v932
      %934 = vdwg.mxu0
      %935 = vmatpush.bf16.msra.mxu0 %v798
      %936 = vmatpush.bf16.msra.mxu0 %v790
      %937 = vmatpush.bf16.msra.mxu0 %v782
      %938 = vmatpush.bf16.msra.mxu0 %v774
      %939 = vmatpush.bf16.msra.mxu0 %v766
      %940 = vmatpush.bf16.msra.mxu0 %v758
      %941 = vmatpush.bf16.msra.mxu0 %v750
      %942 = vmatpush.bf16.msra.mxu0 %v742
      %943 = vmatmul.bf16.gmra.mxu0 %v543
      %v944 = vpop.f32.mrf.mxu0
      %v945 = vadd.f32 0.0, %v944
      %v946 = vpop.f32.mrf.mxu0
      %v947 = vadd.f32 0.0, %v946
      %948 = vdwg.mxu0
      %949 = vmatpush.bf16.msra.mxu0 %v799
      %950 = vmatpush.bf16.msra.mxu0 %v791
      %951 = vmatpush.bf16.msra.mxu0 %v783
      %952 = vmatpush.bf16.msra.mxu0 %v775
      %953 = vmatpush.bf16.msra.mxu0 %v767
      %954 = vmatpush.bf16.msra.mxu0 %v759
      %955 = vmatpush.bf16.msra.mxu0 %v751
      %956 = vmatpush.bf16.msra.mxu0 %v743
      %957 = vmatmul.bf16.gmra.mxu0 %v543
      %v958 = vpop.f32.mrf.mxu0
      %v959 = vadd.f32 0.0, %v958
      %v960 = vpop.f32.mrf.mxu0
      %v961 = vadd.f32 0.0, %v960
      %962 = vdwg.mxu0
      %963 = vmatpush.bf16.msra.mxu0 %v800
      %964 = vmatpush.bf16.msra.mxu0 %v792
      %965 = vmatpush.bf16.msra.mxu0 %v784
      %966 = vmatpush.bf16.msra.mxu0 %v776
      %967 = vmatpush.bf16.msra.mxu0 %v768
      %968 = vmatpush.bf16.msra.mxu0 %v760
      %969 = vmatpush.bf16.msra.mxu0 %v752
      %970 = vmatpush.bf16.msra.mxu0 %v744
      %971 = vmatmul.bf16.gmra.mxu0 %v543
      %v972 = vpop.f32.mrf.mxu0
      %v973 = vadd.f32 0.0, %v972
      %v974 = vpop.f32.mrf.mxu0
      %v975 = vadd.f32 0.0, %v974
      %976 = vdwg.mxu0
      %978 = vst [vmem:[#allocation1] ss:$9 sm:$0xff] %v274
      %v979 = vld [vmem:[#allocation1] sm:$0xff]
      %982 = vst [vmem:[#allocation1] ss:$9 sm:$0xff] %v276
      %v983 = vld [vmem:[#allocation1] sm:$0xff]
      %986 = vst [vmem:[#allocation1] ss:$9 sm:$0xff] %v278
      %v987 = vld [vmem:[#allocation1] sm:$0xff]
      %990 = vst [vmem:[#allocation1] ss:$9 sm:$0xff] %v280
      %v991 = vld [vmem:[#allocation1] sm:$0xff]
      %994 = vst [vmem:[#allocation1] ss:$9 sm:$0xff] %v282
      %v995 = vld [vmem:[#allocation1] sm:$0xff]
      %998 = vst [vmem:[#allocation1] ss:$9 sm:$0xff] %v284
      %v999 = vld [vmem:[#allocation1] sm:$0xff]
      %1002 = vst [vmem:[#allocation1] ss:$9 sm:$0xff] %v286
      %v1003 = vld [vmem:[#allocation1] sm:$0xff]
      %1006 = vst [vmem:[#allocation1] ss:$9 sm:$0xff] %v288
      %v1007 = vld [vmem:[#allocation1] sm:$0xff]
      %1010 = vst [vmem:[#allocation1] ss:$9 sm:$0xff] %v290
      %v1011 = vld [vmem:[#allocation1] sm:$0xff]
      %1014 = vst [vmem:[#allocation1] ss:$9 sm:$0xff] %v292
      %v1015 = vld [vmem:[#allocation1] sm:$0xff]
      %1018 = vst [vmem:[#allocation1] ss:$9 sm:$0xff] %v294
      %v1019 = vld [vmem:[#allocation1] sm:$0xff]
      %1022 = vst [vmem:[#allocation1] ss:$9 sm:$0xff] %v296
      %v1023 = vld [vmem:[#allocation1] sm:$0xff]
      %1026 = vst [vmem:[#allocation1] ss:$9 sm:$0xff] %v298
      %v1027 = vld [vmem:[#allocation1] sm:$0xff]
      %1030 = vst [vmem:[#allocation1] ss:$9 sm:$0xff] %v300
      %v1031 = vld [vmem:[#allocation1] sm:$0xff]
      %1034 = vst [vmem:[#allocation1] ss:$9 sm:$0xff] %v302
      %v1035 = vld [vmem:[#allocation1] sm:$0xff]
      %v1037 = vunpack.c.l.b16 %v979
      %v1038 = vunpack.c.l.b16 %v983
      %v1039 = vunpack.c.l.b16 %v987
      %v1040 = vunpack.c.l.b16 %v991
      %v1041 = vunpack.c.l.b16 %v995
      %v1042 = vunpack.c.l.b16 %v999
      %v1043 = vunpack.c.l.b16 %v1003
      %v1044 = vunpack.c.l.b16 %v1007
      %v1045 = vunpack.c.l.b16 %v1011
      %v1046 = vunpack.c.l.b16 %v1015
      %v1047 = vunpack.c.l.b16 %v1019
      %v1048 = vunpack.c.l.b16 %v1023
      %v1049 = vunpack.c.l.b16 %v1027
      %v1050 = vunpack.c.l.b16 %v1031
      %v1051 = vunpack.c.l.b16 %v1035
      %v1052 = vrot.slane %v1038, 7
      %v1053 = vsel %vm511, %v1052, %v1037
      %v1054 = vrot.slane %v1039, 6
      %v1055 = vsel %vm514, %v1054, %v1053
      %v1056 = vrot.slane %v1040, 5
      %v1057 = vsel %vm517, %v1056, %v1055
      %v1058 = vrot.slane %v1041, 4
      %v1059 = vsel %vm520, %v1058, %v1057
      %v1060 = vrot.slane %v1042, 3
      %v1061 = vsel %vm523, %v1060, %v1059
      %v1062 = vrot.slane %v1043, 2
      %v1063 = vsel %vm526, %v1062, %v1061
      %v1064 = vrot.slane %v1044, 1
      %v1065 = vsel %vm529, %v1064, %v1063
      %v1066 = vrot.slane %v1046, 7
      %v1067 = vsel %vm511, %v1066, %v1045
      %v1068 = vrot.slane %v1047, 6
      %v1069 = vsel %vm514, %v1068, %v1067
      %v1070 = vrot.slane %v1048, 5
      %v1071 = vsel %vm517, %v1070, %v1069
      %v1072 = vrot.slane %v1049, 4
      %v1073 = vsel %vm520, %v1072, %v1071
      %v1074 = vrot.slane %v1050, 3
      %v1075 = vsel %vm523, %v1074, %v1073
      %v1076 = vrot.slane %v1051, 2
      %v1077 = vsel %vm526, %v1076, %v1075
      %v1078 = vpack.c.b16 %v1077, %v1065
      %v1144 = vunpack.c.l.b16 %v306
      %v1145 = vunpack.c.h.b16 %v306
      %v1146 = vunpack.c.l.b16 %v307
      %v1147 = vunpack.c.h.b16 %v307
      %v1148 = vunpack.c.l.b16 %v308
      %v1149 = vunpack.c.h.b16 %v308
      %v1150 = vunpack.c.l.b16 %v309
      %v1151 = vunpack.c.h.b16 %v309
      %v1152 = vunpack.c.l.b16 %v310
      %v1153 = vunpack.c.h.b16 %v310
      %v1154 = vunpack.c.l.b16 %v311
      %v1155 = vunpack.c.h.b16 %v311
      %v1156 = vunpack.c.l.b16 %v312
      %v1157 = vunpack.c.h.b16 %v312
      %v1158 = vunpack.c.l.b16 %v313
      %v1159 = vunpack.c.h.b16 %v313
      %v1160 = vunpack.c.l.b16 %v314
      %v1161 = vunpack.c.h.b16 %v314
      %v1162 = vunpack.c.l.b16 %v315
      %v1163 = vunpack.c.h.b16 %v315
      %v1164 = vunpack.c.l.b16 %v316
      %v1165 = vunpack.c.h.b16 %v316
      %v1166 = vunpack.c.l.b16 %v317
      %v1167 = vunpack.c.h.b16 %v317
      %v1168 = vunpack.c.l.b16 %v318
      %v1169 = vunpack.c.h.b16 %v318
      %v1170 = vunpack.c.l.b16 %v319
      %v1171 = vunpack.c.h.b16 %v319
      %v1172 = vunpack.c.l.b16 %v320
      %v1173 = vunpack.c.h.b16 %v320
      %v1174 = vunpack.c.l.b16 %v321
      %v1175 = vunpack.c.h.b16 %v321
      %v1176 = vunpack.c.l.b16 %v322
      %v1177 = vunpack.c.h.b16 %v322
      %v1178 = vunpack.c.l.b16 %v323
      %v1179 = vunpack.c.h.b16 %v323
      %v1180 = vunpack.c.l.b16 %v324
      %v1181 = vunpack.c.h.b16 %v324
      %v1182 = vunpack.c.l.b16 %v325
      %v1183 = vunpack.c.h.b16 %v325
      %v1184 = vunpack.c.l.b16 %v326
      %v1185 = vunpack.c.h.b16 %v326
      %v1186 = vunpack.c.l.b16 %v327
      %v1187 = vunpack.c.h.b16 %v327
      %v1188 = vunpack.c.l.b16 %v328
      %v1189 = vunpack.c.h.b16 %v328
      %v1190 = vunpack.c.l.b16 %v329
      %v1191 = vunpack.c.h.b16 %v329
      %v1192 = vunpack.c.l.b16 %v330
      %v1193 = vunpack.c.h.b16 %v330
      %v1194 = vunpack.c.l.b16 %v331
      %v1195 = vunpack.c.h.b16 %v331
      %v1196 = vunpack.c.l.b16 %v332
      %v1197 = vunpack.c.h.b16 %v332
      %v1198 = vunpack.c.l.b16 %v333
      %v1199 = vunpack.c.h.b16 %v333
      %v1200 = vunpack.c.l.b16 %v334
      %v1201 = vunpack.c.h.b16 %v334
      %v1202 = vunpack.c.l.b16 %v335
      %v1203 = vunpack.c.h.b16 %v335
      %v1204 = vunpack.c.l.b16 %v336
      %v1205 = vunpack.c.h.b16 %v336
      %v1206 = vunpack.c.l.b16 %v337
      %v1207 = vunpack.c.h.b16 %v337
      %v1208 = vunpack.c.l.b16 %v338
      %v1209 = vunpack.c.h.b16 %v338
      %v1210 = vunpack.c.l.b16 %v339
      %v1211 = vunpack.c.h.b16 %v339
      %v1212 = vunpack.c.l.b16 %v340
      %v1213 = vunpack.c.h.b16 %v340
      %v1214 = vunpack.c.l.b16 %v341
      %v1215 = vunpack.c.h.b16 %v341
      %v1216 = vunpack.c.l.b16 %v342
      %v1217 = vunpack.c.h.b16 %v342
      %v1218 = vunpack.c.l.b16 %v343
      %v1219 = vunpack.c.h.b16 %v343
      %v1220 = vunpack.c.l.b16 %v344
      %v1221 = vunpack.c.h.b16 %v344
      %v1222 = vunpack.c.l.b16 %v345
      %v1223 = vunpack.c.h.b16 %v345
      %v1224 = vunpack.c.l.b16 %v346
      %v1225 = vunpack.c.h.b16 %v346
      %v1226 = vunpack.c.l.b16 %v347
      %v1227 = vunpack.c.h.b16 %v347
      %v1228 = vunpack.c.l.b16 %v348
      %v1229 = vunpack.c.h.b16 %v348
      %v1230 = vunpack.c.l.b16 %v349
      %v1231 = vunpack.c.h.b16 %v349
      %v1232 = vunpack.c.l.b16 %v350
      %v1233 = vunpack.c.h.b16 %v350
      %v1234 = vunpack.c.l.b16 %v351
      %v1235 = vunpack.c.h.b16 %v351
      %v1236 = vunpack.c.l.b16 %v352
      %v1237 = vunpack.c.h.b16 %v352
      %v1238 = vunpack.c.l.b16 %v353
      %v1239 = vunpack.c.h.b16 %v353
      %v1240 = vunpack.c.l.b16 %v354
      %v1241 = vunpack.c.h.b16 %v354
      %v1242 = vunpack.c.l.b16 %v355
      %v1243 = vunpack.c.h.b16 %v355
      %v1244 = vunpack.c.l.b16 %v356
      %v1245 = vunpack.c.h.b16 %v356
      %v1246 = vunpack.c.l.b16 %v357
      %v1247 = vunpack.c.h.b16 %v357
      %v1248 = vunpack.c.l.b16 %v358
      %v1249 = vunpack.c.h.b16 %v358
      %v1250 = vunpack.c.l.b16 %v359
      %v1251 = vunpack.c.h.b16 %v359
      %v1252 = vunpack.c.l.b16 %v360
      %v1253 = vunpack.c.h.b16 %v360
      %v1254 = vunpack.c.l.b16 %v361
      %v1255 = vunpack.c.h.b16 %v361
      %v1256 = vunpack.c.l.b16 %v362
      %v1257 = vunpack.c.h.b16 %v362
      %v1258 = vunpack.c.l.b16 %v363
      %v1259 = vunpack.c.h.b16 %v363
      %v1260 = vunpack.c.l.b16 %v364
      %v1261 = vunpack.c.h.b16 %v364
      %v1262 = vunpack.c.l.b16 %v365
      %v1263 = vunpack.c.h.b16 %v365
      %v1264 = vunpack.c.l.b16 %v366
      %v1265 = vunpack.c.h.b16 %v366
      %v1266 = vunpack.c.l.b16 %v367
      %v1267 = vunpack.c.h.b16 %v367
      %v1268 = vunpack.c.l.b16 %v368
      %v1269 = vunpack.c.h.b16 %v368
      %v1270 = vunpack.c.l.b16 %v369
      %v1271 = vunpack.c.h.b16 %v369
      %v1272 = vpack.c.b16 %v1152, %v1144
      %v1273 = vpack.c.b16 %v1153, %v1145
      %v1274 = vpack.c.b16 %v1154, %v1146
      %v1275 = vpack.c.b16 %v1155, %v1147
      %v1276 = vpack.c.b16 %v1156, %v1148
      %v1277 = vpack.c.b16 %v1157, %v1149
      %v1278 = vpack.c.b16 %v1158, %v1150
      %v1279 = vpack.c.b16 %v1159, %v1151
      %v1280 = vpack.c.b16 %v1168, %v1160
      %v1281 = vpack.c.b16 %v1169, %v1161
      %v1282 = vpack.c.b16 %v1170, %v1162
      %v1283 = vpack.c.b16 %v1171, %v1163
      %v1284 = vpack.c.b16 %v1172, %v1164
      %v1285 = vpack.c.b16 %v1173, %v1165
      %v1286 = vpack.c.b16 %v1174, %v1166
      %v1287 = vpack.c.b16 %v1175, %v1167
      %v1288 = vpack.c.b16 %v1184, %v1176
      %v1289 = vpack.c.b16 %v1185, %v1177
      %v1290 = vpack.c.b16 %v1186, %v1178
      %v1291 = vpack.c.b16 %v1187, %v1179
      %v1292 = vpack.c.b16 %v1188, %v1180
      %v1293 = vpack.c.b16 %v1189, %v1181
      %v1294 = vpack.c.b16 %v1190, %v1182
      %v1295 = vpack.c.b16 %v1191, %v1183
      %v1296 = vpack.c.b16 %v1200, %v1192
      %v1297 = vpack.c.b16 %v1201, %v1193
      %v1298 = vpack.c.b16 %v1202, %v1194
      %v1299 = vpack.c.b16 %v1203, %v1195
      %v1300 = vpack.c.b16 %v1204, %v1196
      %v1301 = vpack.c.b16 %v1205, %v1197
      %v1302 = vpack.c.b16 %v1206, %v1198
      %v1303 = vpack.c.b16 %v1207, %v1199
      %v1304 = vpack.c.b16 %v1216, %v1208
      %v1305 = vpack.c.b16 %v1217, %v1209
      %v1306 = vpack.c.b16 %v1218, %v1210
      %v1307 = vpack.c.b16 %v1219, %v1211
      %v1308 = vpack.c.b16 %v1220, %v1212
      %v1309 = vpack.c.b16 %v1221, %v1213
      %v1310 = vpack.c.b16 %v1222, %v1214
      %v1311 = vpack.c.b16 %v1223, %v1215
      %v1312 = vpack.c.b16 %v1232, %v1224
      %v1313 = vpack.c.b16 %v1233, %v1225
      %v1314 = vpack.c.b16 %v1234, %v1226
      %v1315 = vpack.c.b16 %v1235, %v1227
      %v1316 = vpack.c.b16 %v1236, %v1228
      %v1317 = vpack.c.b16 %v1237, %v1229
      %v1318 = vpack.c.b16 %v1238, %v1230
      %v1319 = vpack.c.b16 %v1239, %v1231
      %v1320 = vpack.c.b16 %v1248, %v1240
      %v1321 = vpack.c.b16 %v1249, %v1241
      %v1322 = vpack.c.b16 %v1250, %v1242
      %v1323 = vpack.c.b16 %v1251, %v1243
      %v1324 = vpack.c.b16 %v1252, %v1244
      %v1325 = vpack.c.b16 %v1253, %v1245
      %v1326 = vpack.c.b16 %v1254, %v1246
      %v1327 = vpack.c.b16 %v1255, %v1247
      %v1328 = vpack.c.b16 %v1264, %v1256
      %v1329 = vpack.c.b16 %v1265, %v1257
      %v1330 = vpack.c.b16 %v1266, %v1258
      %v1331 = vpack.c.b16 %v1267, %v1259
      %v1332 = vpack.c.b16 %v1268, %v1260
      %v1333 = vpack.c.b16 %v1269, %v1261
      %v1334 = vpack.c.b16 %v1270, %v1262
      %v1335 = vpack.c.b16 %v1271, %v1263
      %1400 = vmatpush.bf16.msra.mxu0 %v1328
      %1401 = vmatpush.bf16.msra.mxu0 %v1320
      %1402 = vmatpush.bf16.msra.mxu0 %v1312
      %1403 = vmatpush.bf16.msra.mxu0 %v1304
      %1404 = vmatpush.bf16.msra.mxu0 %v1296
      %1405 = vmatpush.bf16.msra.mxu0 %v1288
      %1406 = vmatpush.bf16.msra.mxu0 %v1280
      %1407 = vmatpush.bf16.msra.mxu0 %v1272
      %1408 = vmatmul.bf16.gmra.mxu0 %v1078
      %v1409 = vpop.f32.mrf.mxu0
      %v1410 = vadd.f32 %v875, %v1409
      %v1411 = vpop.f32.mrf.mxu0
      %v1412 = vadd.f32 %v877, %v1411
      %1413 = vdwg.mxu0
      %1414 = vmatpush.bf16.msra.mxu0 %v1329
      %1415 = vmatpush.bf16.msra.mxu0 %v1321
      %1416 = vmatpush.bf16.msra.mxu0 %v1313
      %1417 = vmatpush.bf16.msra.mxu0 %v1305
      %1418 = vmatpush.bf16.msra.mxu0 %v1297
      %1419 = vmatpush.bf16.msra.mxu0 %v1289
      %1420 = vmatpush.bf16.msra.mxu0 %v1281
      %1421 = vmatpush.bf16.msra.mxu0 %v1273
      %1422 = vmatmul.bf16.gmra.mxu0 %v1078
      %v1423 = vpop.f32.mrf.mxu0
      %v1424 = vadd.f32 %v889, %v1423
      %v1425 = vpop.f32.mrf.mxu0
      %v1426 = vadd.f32 %v891, %v1425
      %1427 = vdwg.mxu0
      %1428 = vmatpush.bf16.msra.mxu0 %v1330
      %1429 = vmatpush.bf16.msra.mxu0 %v1322
      %1430 = vmatpush.bf16.msra.mxu0 %v1314
      %1431 = vmatpush.bf16.msra.mxu0 %v1306
      %1432 = vmatpush.bf16.msra.mxu0 %v1298
      %1433 = vmatpush.bf16.msra.mxu0 %v1290
      %1434 = vmatpush.bf16.msra.mxu0 %v1282
      %1435 = vmatpush.bf16.msra.mxu0 %v1274
      %1436 = vmatmul.bf16.gmra.mxu0 %v1078
      %v1437 = vpop.f32.mrf.mxu0
      %v1438 = vadd.f32 %v903, %v1437
      %v1439 = vpop.f32.mrf.mxu0
      %v1440 = vadd.f32 %v905, %v1439
      %1441 = vdwg.mxu0
      %1442 = vmatpush.bf16.msra.mxu0 %v1331
      %1443 = vmatpush.bf16.msra.mxu0 %v1323
      %1444 = vmatpush.bf16.msra.mxu0 %v1315
      %1445 = vmatpush.bf16.msra.mxu0 %v1307
      %1446 = vmatpush.bf16.msra.mxu0 %v1299
      %1447 = vmatpush.bf16.msra.mxu0 %v1291
      %1448 = vmatpush.bf16.msra.mxu0 %v1283
      %1449 = vmatpush.bf16.msra.mxu0 %v1275
      %1450 = vmatmul.bf16.gmra.mxu0 %v1078
      %v1451 = vpop.f32.mrf.mxu0
      %v1452 = vadd.f32 %v917, %v1451
      %v1453 = vpop.f32.mrf.mxu0
      %v1454 = vadd.f32 %v919, %v1453
      %1455 = vdwg.mxu0
      %1456 = vmatpush.bf16.msra.mxu0 %v1332
      %1457 = vmatpush.bf16.msra.mxu0 %v1324
      %1458 = vmatpush.bf16.msra.mxu0 %v1316
      %1459 = vmatpush.bf16.msra.mxu0 %v1308
      %1460 = vmatpush.bf16.msra.mxu0 %v1300
      %1461 = vmatpush.bf16.msra.mxu0 %v1292
      %1462 = vmatpush.bf16.msra.mxu0 %v1284
      %1463 = vmatpush.bf16.msra.mxu0 %v1276
      %1464 = vmatmul.bf16.gmra.mxu0 %v1078
      %v1465 = vpop.f32.mrf.mxu0
      %v1466 = vadd.f32 %v931, %v1465
      %v1467 = vpop.f32.mrf.mxu0
      %v1468 = vadd.f32 %v933, %v1467
      %1469 = vdwg.mxu0
      %1470 = vmatpush.bf16.msra.mxu0 %v1333
      %1471 = vmatpush.bf16.msra.mxu0 %v1325
      %1472 = vmatpush.bf16.msra.mxu0 %v1317
      %1473 = vmatpush.bf16.msra.mxu0 %v1309
      %1474 = vmatpush.bf16.msra.mxu0 %v1301
      %1475 = vmatpush.bf16.msra.mxu0 %v1293
      %1476 = vmatpush.bf16.msra.mxu0 %v1285
      %1477 = vmatpush.bf16.msra.mxu0 %v1277
      %1478 = vmatmul.bf16.gmra.mxu0 %v1078
      %v1479 = vpop.f32.mrf.mxu0
      %v1480 = vadd.f32 %v945, %v1479
      %v1481 = vpop.f32.mrf.mxu0
      %v1482 = vadd.f32 %v947, %v1481
      %1483 = vdwg.mxu0
      %1484 = vmatpush.bf16.msra.mxu0 %v1334
      %1485 = vmatpush.bf16.msra.mxu0 %v1326
      %1486 = vmatpush.bf16.msra.mxu0 %v1318
      %1487 = vmatpush.bf16.msra.mxu0 %v1310
      %1488 = vmatpush.bf16.msra.mxu0 %v1302
      %1489 = vmatpush.bf16.msra.mxu0 %v1294
      %1490 = vmatpush.bf16.msra.mxu0 %v1286
      %1491 = vmatpush.bf16.msra.mxu0 %v1278
      %1492 = vmatmul.bf16.gmra.mxu0 %v1078
      %v1493 = vpop.f32.mrf.mxu0
      %v1494 = vadd.f32 %v959, %v1493
      %v1495 = vpop.f32.mrf.mxu0
      %v1496 = vadd.f32 %v961, %v1495
      %1497 = vdwg.mxu0
      %1498 = vmatpush.bf16.msra.mxu0 %v1335
      %1499 = vmatpush.bf16.msra.mxu0 %v1327
      %1500 = vmatpush.bf16.msra.mxu0 %v1319
      %1501 = vmatpush.bf16.msra.mxu0 %v1311
      %1502 = vmatpush.bf16.msra.mxu0 %v1303
      %1503 = vmatpush.bf16.msra.mxu0 %v1295
      %1504 = vmatpush.bf16.msra.mxu0 %v1287
      %1505 = vmatpush.bf16.msra.mxu0 %v1279
      %1506 = vmatmul.bf16.gmra.mxu0 %v1078
      %v1507 = vpop.f32.mrf.mxu0
      %v1508 = vadd.f32 %v973, %v1507
      %v1509 = vpop.f32.mrf.mxu0
      %v1510 = vadd.f32 %v975, %v1509
      %1511 = vdwg.mxu0
      %s1512 = scalar_lea.vmem %s1, 1024
      %v1513 = vld [vmem:[%s1512] sm:$0xff]
      %v1514 = vld [vmem:[%s1512 + $0x8] sm:$0xff]
      %v1515 = vld [vmem:[%s1512 + $0x10] sm:$0xff]
      %v1516 = vld [vmem:[%s1512 + $0x18] sm:$0xff]
      %v1517 = vld [vmem:[%s1512 + $0x20] sm:$0xff]
      %v1518 = vld [vmem:[%s1512 + $0x28] sm:$0xff]
      %v1519 = vld [vmem:[%s1512 + $0x30] sm:$0xff]
      %v1520 = vld [vmem:[%s1512 + $0x38] sm:$0xff]
      %v1521 = vld [vmem:[%s1512 + $0x40] sm:$0xff]
      %v1522 = vld [vmem:[%s1512 + $0x48] sm:$0xff]
      %v1523 = vld [vmem:[%s1512 + $0x50] sm:$0xff]
      %v1524 = vld [vmem:[%s1512 + $0x58] sm:$0xff]
      %v1525 = vld [vmem:[%s1512 + $0x60] sm:$0xff]
      %v1526 = vld [vmem:[%s1512 + $0x68] sm:$0xff]
      %v1527 = vld [vmem:[%s1512 + $0x70] sm:$0xff]
      %v1528 = vld [vmem:[%s1512 + $0x78] sm:$0xff]
      %v1529 = vld [vmem:[%s1512 + $0x80] sm:$0xff]
      %v1530 = vld [vmem:[%s1512 + $0x88] sm:$0xff]
      %v1531 = vld [vmem:[%s1512 + $0x90] sm:$0xff]
      %v1532 = vld [vmem:[%s1512 + $0x98] sm:$0xff]
      %v1533 = vld [vmem:[%s1512 + $0xa0] sm:$0xff]
      %v1534 = vld [vmem:[%s1512 + $0xa8] sm:$0xff]
      %v1535 = vld [vmem:[%s1512 + $0xb0] sm:$0xff]
      %v1536 = vld [vmem:[%s1512 + $0xb8] sm:$0xff]
      %v1537 = vld [vmem:[%s1512 + $0xc0] sm:$0xff]
      %v1538 = vld [vmem:[%s1512 + $0xc8] sm:$0xff]
      %v1539 = vld [vmem:[%s1512 + $0xd0] sm:$0xff]
      %v1540 = vld [vmem:[%s1512 + $0xd8] sm:$0xff]
      %v1541 = vld [vmem:[%s1512 + $0xe0] sm:$0xff]
      %v1542 = vld [vmem:[%s1512 + $0xe8] sm:$0xff]
      %v1543 = vld [vmem:[%s1512 + $0xf0] sm:$0xff]
      %v1544 = vld [vmem:[%s1512 + $0xf8] sm:$0xff]
      %v1545 = vld [vmem:[%s1512 + $0x100] sm:$0xff]
      %v1546 = vld [vmem:[%s1512 + $0x108] sm:$0xff]
      %v1547 = vld [vmem:[%s1512 + $0x110] sm:$0xff]
      %v1548 = vld [vmem:[%s1512 + $0x118] sm:$0xff]
      %v1549 = vld [vmem:[%s1512 + $0x120] sm:$0xff]
      %v1550 = vld [vmem:[%s1512 + $0x128] sm:$0xff]
      %v1551 = vld [vmem:[%s1512 + $0x130] sm:$0xff]
      %v1552 = vld [vmem:[%s1512 + $0x138] sm:$0xff]
      %v1553 = vld [vmem:[%s1512 + $0x140] sm:$0xff]
      %v1554 = vld [vmem:[%s1512 + $0x148] sm:$0xff]
      %v1555 = vld [vmem:[%s1512 + $0x150] sm:$0xff]
      %v1556 = vld [vmem:[%s1512 + $0x158] sm:$0xff]
      %v1557 = vld [vmem:[%s1512 + $0x160] sm:$0xff]
      %v1558 = vld [vmem:[%s1512 + $0x168] sm:$0xff]
      %v1559 = vld [vmem:[%s1512 + $0x170] sm:$0xff]
      %v1560 = vld [vmem:[%s1512 + $0x178] sm:$0xff]
      %v1561 = vld [vmem:[%s1512 + $0x180] sm:$0xff]
      %v1562 = vld [vmem:[%s1512 + $0x188] sm:$0xff]
      %v1563 = vld [vmem:[%s1512 + $0x190] sm:$0xff]
      %v1564 = vld [vmem:[%s1512 + $0x198] sm:$0xff]
      %v1565 = vld [vmem:[%s1512 + $0x1a0] sm:$0xff]
      %v1566 = vld [vmem:[%s1512 + $0x1a8] sm:$0xff]
      %v1567 = vld [vmem:[%s1512 + $0x1b0] sm:$0xff]
      %v1568 = vld [vmem:[%s1512 + $0x1b8] sm:$0xff]
      %v1569 = vld [vmem:[%s1512 + $0x1c0] sm:$0xff]
      %v1570 = vld [vmem:[%s1512 + $0x1c8] sm:$0xff]
      %v1571 = vld [vmem:[%s1512 + $0x1d0] sm:$0xff]
      %v1572 = vld [vmem:[%s1512 + $0x1d8] sm:$0xff]
      %v1573 = vld [vmem:[%s1512 + $0x1e0] sm:$0xff]
      %v1574 = vld [vmem:[%s1512 + $0x1e8] sm:$0xff]
      %v1575 = vld [vmem:[%s1512 + $0x1f0] sm:$0xff]
      %v1576 = vld [vmem:[%s1512 + $0x1f8] sm:$0xff]
      %1577 = vst [vmem:[#allocation1] ss:$9 sm:$0xff] %v276
      %v1578 = vld [vmem:[#allocation1] sm:$0xff]
      %1580 = vst [vmem:[#allocation1] ss:$9 sm:$0xff] %v278
      %v1581 = vld [vmem:[#allocation1] sm:$0xff]
      %1583 = vst [vmem:[#allocation1] ss:$9 sm:$0xff] %v280
      %v1584 = vld [vmem:[#allocation1] sm:$0xff]
      %1586 = vst [vmem:[#allocation1] ss:$9 sm:$0xff] %v282
      %v1587 = vld [vmem:[#allocation1] sm:$0xff]
      %1589 = vst [vmem:[#allocation1] ss:$9 sm:$0xff] %v284
      %v1590 = vld [vmem:[#allocation1] sm:$0xff]
      %1592 = vst [vmem:[#allocation1] ss:$9 sm:$0xff] %v286
      %v1593 = vld [vmem:[#allocation1] sm:$0xff]
      %1595 = vst [vmem:[#allocation1] ss:$9 sm:$0xff] %v288
      %v1596 = vld [vmem:[#allocation1] sm:$0xff]
      %1598 = vst [vmem:[#allocation1] ss:$9 sm:$0xff] %v290
      %v1599 = vld [vmem:[#allocation1] sm:$0xff]
      %1601 = vst [vmem:[#allocation1] ss:$9 sm:$0xff] %v292
      %v1602 = vld [vmem:[#allocation1] sm:$0xff]
      %1604 = vst [vmem:[#allocation1] ss:$9 sm:$0xff] %v294
      %v1605 = vld [vmem:[#allocation1] sm:$0xff]
      %1607 = vst [vmem:[#allocation1] ss:$9 sm:$0xff] %v296
      %v1608 = vld [vmem:[#allocation1] sm:$0xff]
      %1610 = vst [vmem:[#allocation1] ss:$9 sm:$0xff] %v298
      %v1611 = vld [vmem:[#allocation1] sm:$0xff]
      %1613 = vst [vmem:[#allocation1] ss:$9 sm:$0xff] %v300
      %v1614 = vld [vmem:[#allocation1] sm:$0xff]
      %1616 = vst [vmem:[#allocation1] ss:$9 sm:$0xff] %v302
      %v1617 = vld [vmem:[#allocation1] sm:$0xff]
      %1620 = vst [vmem:[#allocation1] ss:$9 sm:$0xff] %v304
      %v1621 = vld [vmem:[#allocation1] sm:$0xff]
      %v1623 = vunpack.c.l.b16 %v1578
      %v1624 = vunpack.c.l.b16 %v1581
      %v1625 = vunpack.c.l.b16 %v1584
      %v1626 = vunpack.c.l.b16 %v1587
      %v1627 = vunpack.c.l.b16 %v1590
      %v1628 = vunpack.c.l.b16 %v1593
      %v1629 = vunpack.c.l.b16 %v1596
      %v1630 = vunpack.c.l.b16 %v1599
      %v1631 = vunpack.c.l.b16 %v1602
      %v1632 = vunpack.c.l.b16 %v1605
      %v1633 = vunpack.c.l.b16 %v1608
      %v1634 = vunpack.c.l.b16 %v1611
      %v1635 = vunpack.c.l.b16 %v1614
      %v1636 = vunpack.c.l.b16 %v1617
      %v1637 = vunpack.c.l.b16 %v1621
      %v1638 = vrot.slane %v1624, 7
      %v1639 = vsel %vm511, %v1638, %v1623
      %v1640 = vrot.slane %v1625, 6
      %v1641 = vsel %vm514, %v1640, %v1639
      %v1642 = vrot.slane %v1626, 5
      %v1643 = vsel %vm517, %v1642, %v1641
      %v1644 = vrot.slane %v1627, 4
      %v1645 = vsel %vm520, %v1644, %v1643
      %v1646 = vrot.slane %v1628, 3
      %v1647 = vsel %vm523, %v1646, %v1645
      %v1648 = vrot.slane %v1629, 2
      %v1649 = vsel %vm526, %v1648, %v1647
      %v1650 = vrot.slane %v1630, 1
      %v1651 = vsel %vm529, %v1650, %v1649
      %v1652 = vrot.slane %v1632, 7
      %v1653 = vsel %vm511, %v1652, %v1631
      %v1654 = vrot.slane %v1633, 6
      %v1655 = vsel %vm514, %v1654, %v1653
      %v1656 = vrot.slane %v1634, 5
      %v1657 = vsel %vm517, %v1656, %v1655
      %v1658 = vrot.slane %v1635, 4
      %v1659 = vsel %vm520, %v1658, %v1657
      %v1660 = vrot.slane %v1636, 3
      %v1661 = vsel %vm523, %v1660, %v1659
      %v1662 = vrot.slane %v1637, 2
      %v1663 = vsel %vm526, %v1662, %v1661
      %v1664 = vpack.c.b16 %v1663, %v1651
      %v1730 = vunpack.c.l.b16 %v1513
      %v1731 = vunpack.c.h.b16 %v1513
      %v1732 = vunpack.c.l.b16 %v1514
      %v1733 = vunpack.c.h.b16 %v1514
      %v1734 = vunpack.c.l.b16 %v1515
      %v1735 = vunpack.c.h.b16 %v1515
      %v1736 = vunpack.c.l.b16 %v1516
      %v1737 = vunpack.c.h.b16 %v1516
      %v1738 = vunpack.c.l.b16 %v1517
      %v1739 = vunpack.c.h.b16 %v1517
      %v1740 = vunpack.c.l.b16 %v1518
      %v1741 = vunpack.c.h.b16 %v1518
      %v1742 = vunpack.c.l.b16 %v1519
      %v1743 = vunpack.c.h.b16 %v1519
      %v1744 = vunpack.c.l.b16 %v1520
      %v1745 = vunpack.c.h.b16 %v1520
      %v1746 = vunpack.c.l.b16 %v1521
      %v1747 = vunpack.c.h.b16 %v1521
      %v1748 = vunpack.c.l.b16 %v1522
      %v1749 = vunpack.c.h.b16 %v1522
      %v1750 = vunpack.c.l.b16 %v1523
      %v1751 = vunpack.c.h.b16 %v1523
      %v1752 = vunpack.c.l.b16 %v1524
      %v1753 = vunpack.c.h.b16 %v1524
      %v1754 = vunpack.c.l.b16 %v1525
      %v1755 = vunpack.c.h.b16 %v1525
      %v1756 = vunpack.c.l.b16 %v1526
      %v1757 = vunpack.c.h.b16 %v1526
      %v1758 = vunpack.c.l.b16 %v1527
      %v1759 = vunpack.c.h.b16 %v1527
      %v1760 = vunpack.c.l.b16 %v1528
      %v1761 = vunpack.c.h.b16 %v1528
      %v1762 = vunpack.c.l.b16 %v1529
      %v1763 = vunpack.c.h.b16 %v1529
      %v1764 = vunpack.c.l.b16 %v1530
      %v1765 = vunpack.c.h.b16 %v1530
      %v1766 = vunpack.c.l.b16 %v1531
      %v1767 = vunpack.c.h.b16 %v1531
      %v1768 = vunpack.c.l.b16 %v1532
      %v1769 = vunpack.c.h.b16 %v1532
      %v1770 = vunpack.c.l.b16 %v1533
      %v1771 = vunpack.c.h.b16 %v1533
      %v1772 = vunpack.c.l.b16 %v1534
      %v1773 = vunpack.c.h.b16 %v1534
      %v1774 = vunpack.c.l.b16 %v1535
      %v1775 = vunpack.c.h.b16 %v1535
      %v1776 = vunpack.c.l.b16 %v1536
      %v1777 = vunpack.c.h.b16 %v1536
      %v1778 = vunpack.c.l.b16 %v1537
      %v1779 = vunpack.c.h.b16 %v1537
      %v1780 = vunpack.c.l.b16 %v1538
      %v1781 = vunpack.c.h.b16 %v1538
      %v1782 = vunpack.c.l.b16 %v1539
      %v1783 = vunpack.c.h.b16 %v1539
      %v1784 = vunpack.c.l.b16 %v1540
      %v1785 = vunpack.c.h.b16 %v1540
      %v1786 = vunpack.c.l.b16 %v1541
      %v1787 = vunpack.c.h.b16 %v1541
      %v1788 = vunpack.c.l.b16 %v1542
      %v1789 = vunpack.c.h.b16 %v1542
      %v1790 = vunpack.c.l.b16 %v1543
      %v1791 = vunpack.c.h.b16 %v1543
      %v1792 = vunpack.c.l.b16 %v1544
      %v1793 = vunpack.c.h.b16 %v1544
      %v1794 = vunpack.c.l.b16 %v1545
      %v1795 = vunpack.c.h.b16 %v1545
      %v1796 = vunpack.c.l.b16 %v1546
      %v1797 = vunpack.c.h.b16 %v1546
      %v1798 = vunpack.c.l.b16 %v1547
      %v1799 = vunpack.c.h.b16 %v1547
      %v1800 = vunpack.c.l.b16 %v1548
      %v1801 = vunpack.c.h.b16 %v1548
      %v1802 = vunpack.c.l.b16 %v1549
      %v1803 = vunpack.c.h.b16 %v1549
      %v1804 = vunpack.c.l.b16 %v1550
      %v1805 = vunpack.c.h.b16 %v1550
      %v1806 = vunpack.c.l.b16 %v1551
      %v1807 = vunpack.c.h.b16 %v1551
      %v1808 = vunpack.c.l.b16 %v1552
      %v1809 = vunpack.c.h.b16 %v1552
      %v1810 = vunpack.c.l.b16 %v1553
      %v1811 = vunpack.c.h.b16 %v1553
      %v1812 = vunpack.c.l.b16 %v1554
      %v1813 = vunpack.c.h.b16 %v1554
      %v1814 = vunpack.c.l.b16 %v1555
      %v1815 = vunpack.c.h.b16 %v1555
      %v1816 = vunpack.c.l.b16 %v1556
      %v1817 = vunpack.c.h.b16 %v1556
      %v1818 = vunpack.c.l.b16 %v1557
      %v1819 = vunpack.c.h.b16 %v1557
      %v1820 = vunpack.c.l.b16 %v1558
      %v1821 = vunpack.c.h.b16 %v1558
      %v1822 = vunpack.c.l.b16 %v1559
      %v1823 = vunpack.c.h.b16 %v1559
      %v1824 = vunpack.c.l.b16 %v1560
      %v1825 = vunpack.c.h.b16 %v1560
      %v1826 = vunpack.c.l.b16 %v1561
      %v1827 = vunpack.c.h.b16 %v1561
      %v1828 = vunpack.c.l.b16 %v1562
      %v1829 = vunpack.c.h.b16 %v1562
      %v1830 = vunpack.c.l.b16 %v1563
      %v1831 = vunpack.c.h.b16 %v1563
      %v1832 = vunpack.c.l.b16 %v1564
      %v1833 = vunpack.c.h.b16 %v1564
      %v1834 = vunpack.c.l.b16 %v1565
      %v1835 = vunpack.c.h.b16 %v1565
      %v1836 = vunpack.c.l.b16 %v1566
      %v1837 = vunpack.c.h.b16 %v1566
      %v1838 = vunpack.c.l.b16 %v1567
      %v1839 = vunpack.c.h.b16 %v1567
      %v1840 = vunpack.c.l.b16 %v1568
      %v1841 = vunpack.c.h.b16 %v1568
      %v1842 = vunpack.c.l.b16 %v1569
      %v1843 = vunpack.c.h.b16 %v1569
      %v1844 = vunpack.c.l.b16 %v1570
      %v1845 = vunpack.c.h.b16 %v1570
      %v1846 = vunpack.c.l.b16 %v1571
      %v1847 = vunpack.c.h.b16 %v1571
      %v1848 = vunpack.c.l.b16 %v1572
      %v1849 = vunpack.c.h.b16 %v1572
      %v1850 = vunpack.c.l.b16 %v1573
      %v1851 = vunpack.c.h.b16 %v1573
      %v1852 = vunpack.c.l.b16 %v1574
      %v1853 = vunpack.c.h.b16 %v1574
      %v1854 = vunpack.c.l.b16 %v1575
      %v1855 = vunpack.c.h.b16 %v1575
      %v1856 = vunpack.c.l.b16 %v1576
      %v1857 = vunpack.c.h.b16 %v1576
      %v1858 = vpack.c.b16 %v1738, %v1730
      %v1859 = vpack.c.b16 %v1739, %v1731
      %v1860 = vpack.c.b16 %v1740, %v1732
      %v1861 = vpack.c.b16 %v1741, %v1733
      %v1862 = vpack.c.b16 %v1742, %v1734
      %v1863 = vpack.c.b16 %v1743, %v1735
      %v1864 = vpack.c.b16 %v1744, %v1736
      %v1865 = vpack.c.b16 %v1745, %v1737
      %v1866 = vpack.c.b16 %v1754, %v1746
      %v1867 = vpack.c.b16 %v1755, %v1747
      %v1868 = vpack.c.b16 %v1756, %v1748
      %v1869 = vpack.c.b16 %v1757, %v1749
      %v1870 = vpack.c.b16 %v1758, %v1750
      %v1871 = vpack.c.b16 %v1759, %v1751
      %v1872 = vpack.c.b16 %v1760, %v1752
      %v1873 = vpack.c.b16 %v1761, %v1753
      %v1874 = vpack.c.b16 %v1770, %v1762
      %v1875 = vpack.c.b16 %v1771, %v1763
      %v1876 = vpack.c.b16 %v1772, %v1764
      %v1877 = vpack.c.b16 %v1773, %v1765
      %v1878 = vpack.c.b16 %v1774, %v1766
      %v1879 = vpack.c.b16 %v1775, %v1767
      %v1880 = vpack.c.b16 %v1776, %v1768
      %v1881 = vpack.c.b16 %v1777, %v1769
      %v1882 = vpack.c.b16 %v1786, %v1778
      %v1883 = vpack.c.b16 %v1787, %v1779
      %v1884 = vpack.c.b16 %v1788, %v1780
      %v1885 = vpack.c.b16 %v1789, %v1781
      %v1886 = vpack.c.b16 %v1790, %v1782
      %v1887 = vpack.c.b16 %v1791, %v1783
      %v1888 = vpack.c.b16 %v1792, %v1784
      %v1889 = vpack.c.b16 %v1793, %v1785
      %v1890 = vpack.c.b16 %v1802, %v1794
      %v1891 = vpack.c.b16 %v1803, %v1795
      %v1892 = vpack.c.b16 %v1804, %v1796
      %v1893 = vpack.c.b16 %v1805, %v1797
      %v1894 = vpack.c.b16 %v1806, %v1798
      %v1895 = vpack.c.b16 %v1807, %v1799
      %v1896 = vpack.c.b16 %v1808, %v1800
      %v1897 = vpack.c.b16 %v1809, %v1801
      %v1898 = vpack.c.b16 %v1818, %v1810
      %v1899 = vpack.c.b16 %v1819, %v1811
      %v1900 = vpack.c.b16 %v1820, %v1812
      %v1901 = vpack.c.b16 %v1821, %v1813
      %v1902 = vpack.c.b16 %v1822, %v1814
      %v1903 = vpack.c.b16 %v1823, %v1815
      %v1904 = vpack.c.b16 %v1824, %v1816
      %v1905 = vpack.c.b16 %v1825, %v1817
      %v1906 = vpack.c.b16 %v1834, %v1826
      %v1907 = vpack.c.b16 %v1835, %v1827
      %v1908 = vpack.c.b16 %v1836, %v1828
      %v1909 = vpack.c.b16 %v1837, %v1829
      %v1910 = vpack.c.b16 %v1838, %v1830
      %v1911 = vpack.c.b16 %v1839, %v1831
      %v1912 = vpack.c.b16 %v1840, %v1832
      %v1913 = vpack.c.b16 %v1841, %v1833
      %v1914 = vpack.c.b16 %v1850, %v1842
      %v1915 = vpack.c.b16 %v1851, %v1843
      %v1916 = vpack.c.b16 %v1852, %v1844
      %v1917 = vpack.c.b16 %v1853, %v1845
      %v1918 = vpack.c.b16 %v1854, %v1846
      %v1919 = vpack.c.b16 %v1855, %v1847
      %v1920 = vpack.c.b16 %v1856, %v1848
      %v1921 = vpack.c.b16 %v1857, %v1849
      %1986 = vmatpush.bf16.msra.mxu0 %v1914
      %1987 = vmatpush.bf16.msra.mxu0 %v1906
      %1988 = vmatpush.bf16.msra.mxu0 %v1898
      %1989 = vmatpush.bf16.msra.mxu0 %v1890
      %1990 = vmatpush.bf16.msra.mxu0 %v1882
      %1991 = vmatpush.bf16.msra.mxu0 %v1874
      %1992 = vmatpush.bf16.msra.mxu0 %v1866
      %1993 = vmatpush.bf16.msra.mxu0 %v1858
      %1994 = vmatmul.bf16.gmra.mxu0 %v1664
      %v1995 = vpop.f32.mrf.mxu0
      %v1996 = vadd.f32 0.0, %v1995
      %v1997 = vpop.f32.mrf.mxu0
      %v1998 = vadd.f32 0.0, %v1997
      %1999 = vdwg.mxu0
      %2000 = vmatpush.bf16.msra.mxu0 %v1915
      %2001 = vmatpush.bf16.msra.mxu0 %v1907
      %2002 = vmatpush.bf16.msra.mxu0 %v1899
      %2003 = vmatpush.bf16.msra.mxu0 %v1891
      %2004 = vmatpush.bf16.msra.mxu0 %v1883
      %2005 = vmatpush.bf16.msra.mxu0 %v1875
      %2006 = vmatpush.bf16.msra.mxu0 %v1867
      %2007 = vmatpush.bf16.msra.mxu0 %v1859
      %2008 = vmatmul.bf16.gmra.mxu0 %v1664
      %v2009 = vpop.f32.mrf.mxu0
      %v2010 = vadd.f32 0.0, %v2009
      %v2011 = vpop.f32.mrf.mxu0
      %v2012 = vadd.f32 0.0, %v2011
      %2013 = vdwg.mxu0
      %2014 = vmatpush.bf16.msra.mxu0 %v1916
      %2015 = vmatpush.bf16.msra.mxu0 %v1908
      %2016 = vmatpush.bf16.msra.mxu0 %v1900
      %2017 = vmatpush.bf16.msra.mxu0 %v1892
      %2018 = vmatpush.bf16.msra.mxu0 %v1884
      %2019 = vmatpush.bf16.msra.mxu0 %v1876
      %2020 = vmatpush.bf16.msra.mxu0 %v1868
      %2021 = vmatpush.bf16.msra.mxu0 %v1860
      %2022 = vmatmul.bf16.gmra.mxu0 %v1664
      %v2023 = vpop.f32.mrf.mxu0
      %v2024 = vadd.f32 0.0, %v2023
      %v2025 = vpop.f32.mrf.mxu0
      %v2026 = vadd.f32 0.0, %v2025
      %2027 = vdwg.mxu0
      %2028 = vmatpush.bf16.msra.mxu0 %v1917
      %2029 = vmatpush.bf16.msra.mxu0 %v1909
      %2030 = vmatpush.bf16.msra.mxu0 %v1901
      %2031 = vmatpush.bf16.msra.mxu0 %v1893
      %2032 = vmatpush.bf16.msra.mxu0 %v1885
      %2033 = vmatpush.bf16.msra.mxu0 %v1877
      %2034 = vmatpush.bf16.msra.mxu0 %v1869
      %2035 = vmatpush.bf16.msra.mxu0 %v1861
      %2036 = vmatmul.bf16.gmra.mxu0 %v1664
      %v2037 = vpop.f32.mrf.mxu0
      %v2038 = vadd.f32 0.0, %v2037
      %v2039 = vpop.f32.mrf.mxu0
      %v2040 = vadd.f32 0.0, %v2039
      %2041 = vdwg.mxu0
      %2042 = vmatpush.bf16.msra.mxu0 %v1918
      %2043 = vmatpush.bf16.msra.mxu0 %v1910
      %2044 = vmatpush.bf16.msra.mxu0 %v1902
      %2045 = vmatpush.bf16.msra.mxu0 %v1894
      %2046 = vmatpush.bf16.msra.mxu0 %v1886
      %2047 = vmatpush.bf16.msra.mxu0 %v1878
      %2048 = vmatpush.bf16.msra.mxu0 %v1870
      %2049 = vmatpush.bf16.msra.mxu0 %v1862
      %2050 = vmatmul.bf16.gmra.mxu0 %v1664
      %v2051 = vpop.f32.mrf.mxu0
      %v2052 = vadd.f32 0.0, %v2051
      %v2053 = vpop.f32.mrf.mxu0
      %v2054 = vadd.f32 0.0, %v2053
      %2055 = vdwg.mxu0
      %2056 = vmatpush.bf16.msra.mxu0 %v1919
      %2057 = vmatpush.bf16.msra.mxu0 %v1911
      %2058 = vmatpush.bf16.msra.mxu0 %v1903
      %2059 = vmatpush.bf16.msra.mxu0 %v1895
      %2060 = vmatpush.bf16.msra.mxu0 %v1887
      %2061 = vmatpush.bf16.msra.mxu0 %v1879
      %2062 = vmatpush.bf16.msra.mxu0 %v1871
      %2063 = vmatpush.bf16.msra.mxu0 %v1863
      %2064 = vmatmul.bf16.gmra.mxu0 %v1664
      %v2065 = vpop.f32.mrf.mxu0
      %v2066 = vadd.f32 0.0, %v2065
      %v2067 = vpop.f32.mrf.mxu0
      %v2068 = vadd.f32 0.0, %v2067
      %2069 = vdwg.mxu0
      %2070 = vmatpush.bf16.msra.mxu0 %v1920
      %2071 = vmatpush.bf16.msra.mxu0 %v1912
      %2072 = vmatpush.bf16.msra.mxu0 %v1904
      %2073 = vmatpush.bf16.msra.mxu0 %v1896
      %2074 = vmatpush.bf16.msra.mxu0 %v1888
      %2075 = vmatpush.bf16.msra.mxu0 %v1880
      %2076 = vmatpush.bf16.msra.mxu0 %v1872
      %2077 = vmatpush.bf16.msra.mxu0 %v1864
      %2078 = vmatmul.bf16.gmra.mxu0 %v1664
      %v2079 = vpop.f32.mrf.mxu0
      %v2080 = vadd.f32 0.0, %v2079
      %v2081 = vpop.f32.mrf.mxu0
      %v2082 = vadd.f32 0.0, %v2081
      %2083 = vdwg.mxu0
      %2084 = vmatpush.bf16.msra.mxu0 %v1921
      %2085 = vmatpush.bf16.msra.mxu0 %v1913
      %2086 = vmatpush.bf16.msra.mxu0 %v1905
      %2087 = vmatpush.bf16.msra.mxu0 %v1897
      %2088 = vmatpush.bf16.msra.mxu0 %v1889
      %2089 = vmatpush.bf16.msra.mxu0 %v1881
      %2090 = vmatpush.bf16.msra.mxu0 %v1873
      %2091 = vmatpush.bf16.msra.mxu0 %v1865
      %2092 = vmatmul.bf16.gmra.mxu0 %v1664
      %v2093 = vpop.f32.mrf.mxu0
      %v2094 = vadd.f32 0.0, %v2093
      %v2095 = vpop.f32.mrf.mxu0
      %v2096 = vadd.f32 0.0, %v2095
      %2097 = vdwg.mxu0
      %v2098 = vadd.f32 %v1410, %v1996
      %v2099 = vadd.f32 %v1424, %v2010
      %v2100 = vadd.f32 %v1438, %v2024
      %v2101 = vadd.f32 %v1452, %v2038
      %v2102 = vadd.f32 %v1466, %v2052
      %v2103 = vadd.f32 %v1480, %v2066
      %v2104 = vadd.f32 %v1494, %v2080
      %v2105 = vadd.f32 %v1508, %v2094
      %v2106 = vadd.f32 %v1412, %v1998
      %v2107 = vadd.f32 %v1426, %v2012
      %v2108 = vadd.f32 %v1440, %v2026
      %v2109 = vadd.f32 %v1454, %v2040
      %v2110 = vadd.f32 %v1468, %v2054
      %v2111 = vadd.f32 %v1482, %v2068
      %v2112 = vadd.f32 %v1496, %v2082
      %v2113 = vadd.f32 %v1510, %v2096
      %s2114 = scalar_lea.vmem %s1, 1536
      %v2115 = vld [vmem:[%s2114] sm:$0xff]
      %v2116 = vld [vmem:[%s2114 + $0x8] sm:$0xff]
      %v2117 = vld [vmem:[%s2114 + $0x10] sm:$0xff]
      %v2118 = vld [vmem:[%s2114 + $0x18] sm:$0xff]
      %v2119 = vld [vmem:[%s2114 + $0x20] sm:$0xff]
      %v2120 = vld [vmem:[%s2114 + $0x28] sm:$0xff]
      %v2121 = vld [vmem:[%s2114 + $0x30] sm:$0xff]
      %v2122 = vld [vmem:[%s2114 + $0x38] sm:$0xff]
      %v2123 = vld [vmem:[%s2114 + $0x40] sm:$0xff]
      %v2124 = vld [vmem:[%s2114 + $0x48] sm:$0xff]
      %v2125 = vld [vmem:[%s2114 + $0x50] sm:$0xff]
      %v2126 = vld [vmem:[%s2114 + $0x58] sm:$0xff]
      %v2127 = vld [vmem:[%s2114 + $0x60] sm:$0xff]
      %v2128 = vld [vmem:[%s2114 + $0x68] sm:$0xff]
      %v2129 = vld [vmem:[%s2114 + $0x70] sm:$0xff]
      %v2130 = vld [vmem:[%s2114 + $0x78] sm:$0xff]
      %v2131 = vld [vmem:[%s2114 + $0x80] sm:$0xff]
      %v2132 = vld [vmem:[%s2114 + $0x88] sm:$0xff]
      %v2133 = vld [vmem:[%s2114 + $0x90] sm:$0xff]
      %v2134 = vld [vmem:[%s2114 + $0x98] sm:$0xff]
      %v2135 = vld [vmem:[%s2114 + $0xa0] sm:$0xff]
      %v2136 = vld [vmem:[%s2114 + $0xa8] sm:$0xff]
      %v2137 = vld [vmem:[%s2114 + $0xb0] sm:$0xff]
      %v2138 = vld [vmem:[%s2114 + $0xb8] sm:$0xff]
      %v2139 = vld [vmem:[%s2114 + $0xc0] sm:$0xff]
      %v2140 = vld [vmem:[%s2114 + $0xc8] sm:$0xff]
      %v2141 = vld [vmem:[%s2114 + $0xd0] sm:$0xff]
      %v2142 = vld [vmem:[%s2114 + $0xd8] sm:$0xff]
      %v2143 = vld [vmem:[%s2114 + $0xe0] sm:$0xff]
      %v2144 = vld [vmem:[%s2114 + $0xe8] sm:$0xff]
      %v2145 = vld [vmem:[%s2114 + $0xf0] sm:$0xff]
      %v2146 = vld [vmem:[%s2114 + $0xf8] sm:$0xff]
      %v2147 = vld [vmem:[%s2114 + $0x100] sm:$0xff]
      %v2148 = vld [vmem:[%s2114 + $0x108] sm:$0xff]
      %v2149 = vld [vmem:[%s2114 + $0x110] sm:$0xff]
      %v2150 = vld [vmem:[%s2114 + $0x118] sm:$0xff]
      %v2151 = vld [vmem:[%s2114 + $0x120] sm:$0xff]
      %v2152 = vld [vmem:[%s2114 + $0x128] sm:$0xff]
      %v2153 = vld [vmem:[%s2114 + $0x130] sm:$0xff]
      %v2154 = vld [vmem:[%s2114 + $0x138] sm:$0xff]
      %v2155 = vld [vmem:[%s2114 + $0x140] sm:$0xff]
      %v2156 = vld [vmem:[%s2114 + $0x148] sm:$0xff]
      %v2157 = vld [vmem:[%s2114 + $0x150] sm:$0xff]
      %v2158 = vld [vmem:[%s2114 + $0x158] sm:$0xff]
      %v2159 = vld [vmem:[%s2114 + $0x160] sm:$0xff]
      %v2160 = vld [vmem:[%s2114 + $0x168] sm:$0xff]
      %v2161 = vld [vmem:[%s2114 + $0x170] sm:$0xff]
      %v2162 = vld [vmem:[%s2114 + $0x178] sm:$0xff]
      %v2163 = vld [vmem:[%s2114 + $0x180] sm:$0xff]
      %v2164 = vld [vmem:[%s2114 + $0x188] sm:$0xff]
      %v2165 = vld [vmem:[%s2114 + $0x190] sm:$0xff]
      %v2166 = vld [vmem:[%s2114 + $0x198] sm:$0xff]
      %v2167 = vld [vmem:[%s2114 + $0x1a0] sm:$0xff]
      %v2168 = vld [vmem:[%s2114 + $0x1a8] sm:$0xff]
      %v2169 = vld [vmem:[%s2114 + $0x1b0] sm:$0xff]
      %v2170 = vld [vmem:[%s2114 + $0x1b8] sm:$0xff]
      %v2171 = vld [vmem:[%s2114 + $0x1c0] sm:$0xff]
      %v2172 = vld [vmem:[%s2114 + $0x1c8] sm:$0xff]
      %v2173 = vld [vmem:[%s2114 + $0x1d0] sm:$0xff]
      %v2174 = vld [vmem:[%s2114 + $0x1d8] sm:$0xff]
      %v2175 = vld [vmem:[%s2114 + $0x1e0] sm:$0xff]
      %v2176 = vld [vmem:[%s2114 + $0x1e8] sm:$0xff]
      %v2177 = vld [vmem:[%s2114 + $0x1f0] sm:$0xff]
      %v2178 = vld [vmem:[%s2114 + $0x1f8] sm:$0xff]
      %2179 = vst [vmem:[#allocation1] ss:$9 sm:$0xff] %v277
      %v2180 = vld [vmem:[#allocation1] sm:$0xff]
      %2182 = vst [vmem:[#allocation1] ss:$9 sm:$0xff] %v279
      %v2183 = vld [vmem:[#allocation1] sm:$0xff]
      %2185 = vst [vmem:[#allocation1] ss:$9 sm:$0xff] %v281
      %v2186 = vld [vmem:[#allocation1] sm:$0xff]
      %2188 = vst [vmem:[#allocation1] ss:$9 sm:$0xff] %v283
      %v2189 = vld [vmem:[#allocation1] sm:$0xff]
      %2191 = vst [vmem:[#allocation1] ss:$9 sm:$0xff] %v285
      %v2192 = vld [vmem:[#allocation1] sm:$0xff]
      %2194 = vst [vmem:[#allocation1] ss:$9 sm:$0xff] %v287
      %v2195 = vld [vmem:[#allocation1] sm:$0xff]
      %2197 = vst [vmem:[#allocation1] ss:$9 sm:$0xff] %v289
      %v2198 = vld [vmem:[#allocation1] sm:$0xff]
      %2200 = vst [vmem:[#allocation1] ss:$9 sm:$0xff] %v291
      %v2201 = vld [vmem:[#allocation1] sm:$0xff]
      %2203 = vst [vmem:[#allocation1] ss:$9 sm:$0xff] %v293
      %v2204 = vld [vmem:[#allocation1] sm:$0xff]
      %2206 = vst [vmem:[#allocation1] ss:$9 sm:$0xff] %v295
      %v2207 = vld [vmem:[#allocation1] sm:$0xff]
      %2209 = vst [vmem:[#allocation1] ss:$9 sm:$0xff] %v297
      %v2210 = vld [vmem:[#allocation1] sm:$0xff]
      %2212 = vst [vmem:[#allocation1] ss:$9 sm:$0xff] %v299
      %v2213 = vld [vmem:[#allocation1] sm:$0xff]
      %2215 = vst [vmem:[#allocation1] ss:$9 sm:$0xff] %v301
      %v2216 = vld [vmem:[#allocation1] sm:$0xff]
      %2218 = vst [vmem:[#allocation1] ss:$9 sm:$0xff] %v303
      %v2219 = vld [vmem:[#allocation1] sm:$0xff]
      %2222 = vst [vmem:[#allocation1] ss:$9 sm:$0xff] %v305
      %v2223 = vld [vmem:[#allocation1] sm:$0xff]
      %v2225 = vunpack.c.l.b16 %v2180
      %v2226 = vunpack.c.l.b16 %v2183
      %v2227 = vunpack.c.l.b16 %v2186
      %v2228 = vunpack.c.l.b16 %v2189
      %v2229 = vunpack.c.l.b16 %v2192
      %v2230 = vunpack.c.l.b16 %v2195
      %v2231 = vunpack.c.l.b16 %v2198
      %v2232 = vunpack.c.l.b16 %v2201
      %v2233 = vunpack.c.l.b16 %v2204
      %v2234 = vunpack.c.l.b16 %v2207
      %v2235 = vunpack.c.l.b16 %v2210
      %v2236 = vunpack.c.l.b16 %v2213
      %v2237 = vunpack.c.l.b16 %v2216
      %v2238 = vunpack.c.l.b16 %v2219
      %v2239 = vunpack.c.l.b16 %v2223
      %v2240 = vrot.slane %v2226, 7
      %v2241 = vsel %vm511, %v2240, %v2225
      %v2242 = vrot.slane %v2227, 6
      %v2243 = vsel %vm514, %v2242, %v2241
      %v2244 = vrot.slane %v2228, 5
      %v2245 = vsel %vm517, %v2244, %v2243
      %v2246 = vrot.slane %v2229, 4
      %v2247 = vsel %vm520, %v2246, %v2245
      %v2248 = vrot.slane %v2230, 3
      %v2249 = vsel %vm523, %v2248, %v2247
      %v2250 = vrot.slane %v2231, 2
      %v2251 = vsel %vm526, %v2250, %v2249
      %v2252 = vrot.slane %v2232, 1
      %v2253 = vsel %vm529, %v2252, %v2251
      %v2254 = vrot.slane %v2234, 7
      %v2255 = vsel %vm511, %v2254, %v2233
      %v2256 = vrot.slane %v2235, 6
      %v2257 = vsel %vm514, %v2256, %v2255
      %v2258 = vrot.slane %v2236, 5
      %v2259 = vsel %vm517, %v2258, %v2257
      %v2260 = vrot.slane %v2237, 4
      %v2261 = vsel %vm520, %v2260, %v2259
      %v2262 = vrot.slane %v2238, 3
      %v2263 = vsel %vm523, %v2262, %v2261
      %v2264 = vrot.slane %v2239, 2
      %v2265 = vsel %vm526, %v2264, %v2263
      %v2266 = vpack.c.b16 %v2265, %v2253
      %v2332 = vunpack.c.l.b16 %v2115
      %v2333 = vunpack.c.h.b16 %v2115
      %v2334 = vunpack.c.l.b16 %v2116
      %v2335 = vunpack.c.h.b16 %v2116
      %v2336 = vunpack.c.l.b16 %v2117
      %v2337 = vunpack.c.h.b16 %v2117
      %v2338 = vunpack.c.l.b16 %v2118
      %v2339 = vunpack.c.h.b16 %v2118
      %v2340 = vunpack.c.l.b16 %v2119
      %v2341 = vunpack.c.h.b16 %v2119
      %v2342 = vunpack.c.l.b16 %v2120
      %v2343 = vunpack.c.h.b16 %v2120
      %v2344 = vunpack.c.l.b16 %v2121
      %v2345 = vunpack.c.h.b16 %v2121
      %v2346 = vunpack.c.l.b16 %v2122
      %v2347 = vunpack.c.h.b16 %v2122
      %v2348 = vunpack.c.l.b16 %v2123
      %v2349 = vunpack.c.h.b16 %v2123
      %v2350 = vunpack.c.l.b16 %v2124
      %v2351 = vunpack.c.h.b16 %v2124
      %v2352 = vunpack.c.l.b16 %v2125
      %v2353 = vunpack.c.h.b16 %v2125
      %v2354 = vunpack.c.l.b16 %v2126
      %v2355 = vunpack.c.h.b16 %v2126
      %v2356 = vunpack.c.l.b16 %v2127
      %v2357 = vunpack.c.h.b16 %v2127
      %v2358 = vunpack.c.l.b16 %v2128
      %v2359 = vunpack.c.h.b16 %v2128
      %v2360 = vunpack.c.l.b16 %v2129
      %v2361 = vunpack.c.h.b16 %v2129
      %v2362 = vunpack.c.l.b16 %v2130
      %v2363 = vunpack.c.h.b16 %v2130
      %v2364 = vunpack.c.l.b16 %v2131
      %v2365 = vunpack.c.h.b16 %v2131
      %v2366 = vunpack.c.l.b16 %v2132
      %v2367 = vunpack.c.h.b16 %v2132
      %v2368 = vunpack.c.l.b16 %v2133
      %v2369 = vunpack.c.h.b16 %v2133
      %v2370 = vunpack.c.l.b16 %v2134
      %v2371 = vunpack.c.h.b16 %v2134
      %v2372 = vunpack.c.l.b16 %v2135
      %v2373 = vunpack.c.h.b16 %v2135
      %v2374 = vunpack.c.l.b16 %v2136
      %v2375 = vunpack.c.h.b16 %v2136
      %v2376 = vunpack.c.l.b16 %v2137
      %v2377 = vunpack.c.h.b16 %v2137
      %v2378 = vunpack.c.l.b16 %v2138
      %v2379 = vunpack.c.h.b16 %v2138
      %v2380 = vunpack.c.l.b16 %v2139
      %v2381 = vunpack.c.h.b16 %v2139
      %v2382 = vunpack.c.l.b16 %v2140
      %v2383 = vunpack.c.h.b16 %v2140
      %v2384 = vunpack.c.l.b16 %v2141
      %v2385 = vunpack.c.h.b16 %v2141
      %v2386 = vunpack.c.l.b16 %v2142
      %v2387 = vunpack.c.h.b16 %v2142
      %v2388 = vunpack.c.l.b16 %v2143
      %v2389 = vunpack.c.h.b16 %v2143
      %v2390 = vunpack.c.l.b16 %v2144
      %v2391 = vunpack.c.h.b16 %v2144
      %v2392 = vunpack.c.l.b16 %v2145
      %v2393 = vunpack.c.h.b16 %v2145
      %v2394 = vunpack.c.l.b16 %v2146
      %v2395 = vunpack.c.h.b16 %v2146
      %v2396 = vunpack.c.l.b16 %v2147
      %v2397 = vunpack.c.h.b16 %v2147
      %v2398 = vunpack.c.l.b16 %v2148
      %v2399 = vunpack.c.h.b16 %v2148
      %v2400 = vunpack.c.l.b16 %v2149
      %v2401 = vunpack.c.h.b16 %v2149
      %v2402 = vunpack.c.l.b16 %v2150
      %v2403 = vunpack.c.h.b16 %v2150
      %v2404 = vunpack.c.l.b16 %v2151
      %v2405 = vunpack.c.h.b16 %v2151
      %v2406 = vunpack.c.l.b16 %v2152
      %v2407 = vunpack.c.h.b16 %v2152
      %v2408 = vunpack.c.l.b16 %v2153
      %v2409 = vunpack.c.h.b16 %v2153
      %v2410 = vunpack.c.l.b16 %v2154
      %v2411 = vunpack.c.h.b16 %v2154
      %v2412 = vunpack.c.l.b16 %v2155
      %v2413 = vunpack.c.h.b16 %v2155
      %v2414 = vunpack.c.l.b16 %v2156
      %v2415 = vunpack.c.h.b16 %v2156
      %v2416 = vunpack.c.l.b16 %v2157
      %v2417 = vunpack.c.h.b16 %v2157
      %v2418 = vunpack.c.l.b16 %v2158
      %v2419 = vunpack.c.h.b16 %v2158
      %v2420 = vunpack.c.l.b16 %v2159
      %v2421 = vunpack.c.h.b16 %v2159
      %v2422 = vunpack.c.l.b16 %v2160
      %v2423 = vunpack.c.h.b16 %v2160
      %v2424 = vunpack.c.l.b16 %v2161
      %v2425 = vunpack.c.h.b16 %v2161
      %v2426 = vunpack.c.l.b16 %v2162
      %v2427 = vunpack.c.h.b16 %v2162
      %v2428 = vunpack.c.l.b16 %v2163
      %v2429 = vunpack.c.h.b16 %v2163
      %v2430 = vunpack.c.l.b16 %v2164
      %v2431 = vunpack.c.h.b16 %v2164
      %v2432 = vunpack.c.l.b16 %v2165
      %v2433 = vunpack.c.h.b16 %v2165
      %v2434 = vunpack.c.l.b16 %v2166
      %v2435 = vunpack.c.h.b16 %v2166
      %v2436 = vunpack.c.l.b16 %v2167
      %v2437 = vunpack.c.h.b16 %v2167
      %v2438 = vunpack.c.l.b16 %v2168
      %v2439 = vunpack.c.h.b16 %v2168
      %v2440 = vunpack.c.l.b16 %v2169
      %v2441 = vunpack.c.h.b16 %v2169
      %v2442 = vunpack.c.l.b16 %v2170
      %v2443 = vunpack.c.h.b16 %v2170
      %v2444 = vunpack.c.l.b16 %v2171
      %v2445 = vunpack.c.h.b16 %v2171
      %v2446 = vunpack.c.l.b16 %v2172
      %v2447 = vunpack.c.h.b16 %v2172
      %v2448 = vunpack.c.l.b16 %v2173
      %v2449 = vunpack.c.h.b16 %v2173
      %v2450 = vunpack.c.l.b16 %v2174
      %v2451 = vunpack.c.h.b16 %v2174
      %v2452 = vunpack.c.l.b16 %v2175
      %v2453 = vunpack.c.h.b16 %v2175
      %v2454 = vunpack.c.l.b16 %v2176
      %v2455 = vunpack.c.h.b16 %v2176
      %v2456 = vunpack.c.l.b16 %v2177
      %v2457 = vunpack.c.h.b16 %v2177
      %v2458 = vunpack.c.l.b16 %v2178
      %v2459 = vunpack.c.h.b16 %v2178
      %v2460 = vpack.c.b16 %v2340, %v2332
      %v2461 = vpack.c.b16 %v2341, %v2333
      %v2462 = vpack.c.b16 %v2342, %v2334
      %v2463 = vpack.c.b16 %v2343, %v2335
      %v2464 = vpack.c.b16 %v2344, %v2336
      %v2465 = vpack.c.b16 %v2345, %v2337
      %v2466 = vpack.c.b16 %v2346, %v2338
      %v2467 = vpack.c.b16 %v2347, %v2339
      %v2468 = vpack.c.b16 %v2356, %v2348
      %v2469 = vpack.c.b16 %v2357, %v2349
      %v2470 = vpack.c.b16 %v2358, %v2350
      %v2471 = vpack.c.b16 %v2359, %v2351
      %v2472 = vpack.c.b16 %v2360, %v2352
      %v2473 = vpack.c.b16 %v2361, %v2353
      %v2474 = vpack.c.b16 %v2362, %v2354
      %v2475 = vpack.c.b16 %v2363, %v2355
      %v2476 = vpack.c.b16 %v2372, %v2364
      %v2477 = vpack.c.b16 %v2373, %v2365
      %v2478 = vpack.c.b16 %v2374, %v2366
      %v2479 = vpack.c.b16 %v2375, %v2367
      %v2480 = vpack.c.b16 %v2376, %v2368
      %v2481 = vpack.c.b16 %v2377, %v2369
      %v2482 = vpack.c.b16 %v2378, %v2370
      %v2483 = vpack.c.b16 %v2379, %v2371
      %v2484 = vpack.c.b16 %v2388, %v2380
      %v2485 = vpack.c.b16 %v2389, %v2381
      %v2486 = vpack.c.b16 %v2390, %v2382
      %v2487 = vpack.c.b16 %v2391, %v2383
      %v2488 = vpack.c.b16 %v2392, %v2384
      %v2489 = vpack.c.b16 %v2393, %v2385
      %v2490 = vpack.c.b16 %v2394, %v2386
      %v2491 = vpack.c.b16 %v2395, %v2387
      %v2492 = vpack.c.b16 %v2404, %v2396
      %v2493 = vpack.c.b16 %v2405, %v2397
      %v2494 = vpack.c.b16 %v2406, %v2398
      %v2495 = vpack.c.b16 %v2407, %v2399
      %v2496 = vpack.c.b16 %v2408, %v2400
      %v2497 = vpack.c.b16 %v2409, %v2401
      %v2498 = vpack.c.b16 %v2410, %v2402
      %v2499 = vpack.c.b16 %v2411, %v2403
      %v2500 = vpack.c.b16 %v2420, %v2412
      %v2501 = vpack.c.b16 %v2421, %v2413
      %v2502 = vpack.c.b16 %v2422, %v2414
      %v2503 = vpack.c.b16 %v2423, %v2415
      %v2504 = vpack.c.b16 %v2424, %v2416
      %v2505 = vpack.c.b16 %v2425, %v2417
      %v2506 = vpack.c.b16 %v2426, %v2418
      %v2507 = vpack.c.b16 %v2427, %v2419
      %v2508 = vpack.c.b16 %v2436, %v2428
      %v2509 = vpack.c.b16 %v2437, %v2429
      %v2510 = vpack.c.b16 %v2438, %v2430
      %v2511 = vpack.c.b16 %v2439, %v2431
      %v2512 = vpack.c.b16 %v2440, %v2432
      %v2513 = vpack.c.b16 %v2441, %v2433
      %v2514 = vpack.c.b16 %v2442, %v2434
      %v2515 = vpack.c.b16 %v2443, %v2435
      %v2516 = vpack.c.b16 %v2452, %v2444
      %v2517 = vpack.c.b16 %v2453, %v2445
      %v2518 = vpack.c.b16 %v2454, %v2446
      %v2519 = vpack.c.b16 %v2455, %v2447
      %v2520 = vpack.c.b16 %v2456, %v2448
      %v2521 = vpack.c.b16 %v2457, %v2449
      %v2522 = vpack.c.b16 %v2458, %v2450
      %v2523 = vpack.c.b16 %v2459, %v2451
      %2588 = vmatpush.bf16.msra.mxu0 %v2516
      %2589 = vmatpush.bf16.msra.mxu0 %v2508
      %2590 = vmatpush.bf16.msra.mxu0 %v2500
      %2591 = vmatpush.bf16.msra.mxu0 %v2492
      %2592 = vmatpush.bf16.msra.mxu0 %v2484
      %2593 = vmatpush.bf16.msra.mxu0 %v2476
      %2594 = vmatpush.bf16.msra.mxu0 %v2468
      %2595 = vmatpush.bf16.msra.mxu0 %v2460
      %2596 = vmatmul.bf16.gmra.mxu0 %v2266
      %v2597 = vpop.f32.mrf.mxu0
      %v2598 = vadd.f32 0.0, %v2597
      %v2599 = vpop.f32.mrf.mxu0
      %v2600 = vadd.f32 0.0, %v2599
      %2601 = vdwg.mxu0
      %2602 = vmatpush.bf16.msra.mxu0 %v2517
      %2603 = vmatpush.bf16.msra.mxu0 %v2509
      %2604 = vmatpush.bf16.msra.mxu0 %v2501
      %2605 = vmatpush.bf16.msra.mxu0 %v2493
      %2606 = vmatpush.bf16.msra.mxu0 %v2485
      %2607 = vmatpush.bf16.msra.mxu0 %v2477
      %2608 = vmatpush.bf16.msra.mxu0 %v2469
      %2609 = vmatpush.bf16.msra.mxu0 %v2461
      %2610 = vmatmul.bf16.gmra.mxu0 %v2266
      %v2611 = vpop.f32.mrf.mxu0
      %v2612 = vadd.f32 0.0, %v2611
      %v2613 = vpop.f32.mrf.mxu0
      %v2614 = vadd.f32 0.0, %v2613
      %2615 = vdwg.mxu0
      %2616 = vmatpush.bf16.msra.mxu0 %v2518
      %2617 = vmatpush.bf16.msra.mxu0 %v2510
      %2618 = vmatpush.bf16.msra.mxu0 %v2502
      %2619 = vmatpush.bf16.msra.mxu0 %v2494
      %2620 = vmatpush.bf16.msra.mxu0 %v2486
      %2621 = vmatpush.bf16.msra.mxu0 %v2478
      %2622 = vmatpush.bf16.msra.mxu0 %v2470
      %2623 = vmatpush.bf16.msra.mxu0 %v2462
      %2624 = vmatmul.bf16.gmra.mxu0 %v2266
      %v2625 = vpop.f32.mrf.mxu0
      %v2626 = vadd.f32 0.0, %v2625
      %v2627 = vpop.f32.mrf.mxu0
      %v2628 = vadd.f32 0.0, %v2627
      %2629 = vdwg.mxu0
      %2630 = vmatpush.bf16.msra.mxu0 %v2519
      %2631 = vmatpush.bf16.msra.mxu0 %v2511
      %2632 = vmatpush.bf16.msra.mxu0 %v2503
      %2633 = vmatpush.bf16.msra.mxu0 %v2495
      %2634 = vmatpush.bf16.msra.mxu0 %v2487
      %2635 = vmatpush.bf16.msra.mxu0 %v2479
      %2636 = vmatpush.bf16.msra.mxu0 %v2471
      %2637 = vmatpush.bf16.msra.mxu0 %v2463
      %2638 = vmatmul.bf16.gmra.mxu0 %v2266
      %v2639 = vpop.f32.mrf.mxu0
      %v2640 = vadd.f32 0.0, %v2639
      %v2641 = vpop.f32.mrf.mxu0
      %v2642 = vadd.f32 0.0, %v2641
      %2643 = vdwg.mxu0
      %2644 = vmatpush.bf16.msra.mxu0 %v2520
      %2645 = vmatpush.bf16.msra.mxu0 %v2512
      %2646 = vmatpush.bf16.msra.mxu0 %v2504
      %2647 = vmatpush.bf16.msra.mxu0 %v2496
      %2648 = vmatpush.bf16.msra.mxu0 %v2488
      %2649 = vmatpush.bf16.msra.mxu0 %v2480
      %2650 = vmatpush.bf16.msra.mxu0 %v2472
      %2651 = vmatpush.bf16.msra.mxu0 %v2464
      %2652 = vmatmul.bf16.gmra.mxu0 %v2266
      %v2653 = vpop.f32.mrf.mxu0
      %v2654 = vadd.f32 0.0, %v2653
      %v2655 = vpop.f32.mrf.mxu0
      %v2656 = vadd.f32 0.0, %v2655
      %2657 = vdwg.mxu0
      %2658 = vmatpush.bf16.msra.mxu0 %v2521
      %2659 = vmatpush.bf16.msra.mxu0 %v2513
      %2660 = vmatpush.bf16.msra.mxu0 %v2505
      %2661 = vmatpush.bf16.msra.mxu0 %v2497
      %2662 = vmatpush.bf16.msra.mxu0 %v2489
      %2663 = vmatpush.bf16.msra.mxu0 %v2481
      %2664 = vmatpush.bf16.msra.mxu0 %v2473
      %2665 = vmatpush.bf16.msra.mxu0 %v2465
      %2666 = vmatmul.bf16.gmra.mxu0 %v2266
      %v2667 = vpop.f32.mrf.mxu0
      %v2668 = vadd.f32 0.0, %v2667
      %v2669 = vpop.f32.mrf.mxu0
      %v2670 = vadd.f32 0.0, %v2669
      %2671 = vdwg.mxu0
      %2672 = vmatpush.bf16.msra.mxu0 %v2522
      %2673 = vmatpush.bf16.msra.mxu0 %v2514
      %2674 = vmatpush.bf16.msra.mxu0 %v2506
      %2675 = vmatpush.bf16.msra.mxu0 %v2498
      %2676 = vmatpush.bf16.msra.mxu0 %v2490
      %2677 = vmatpush.bf16.msra.mxu0 %v2482
      %2678 = vmatpush.bf16.msra.mxu0 %v2474
      %2679 = vmatpush.bf16.msra.mxu0 %v2466
      %2680 = vmatmul.bf16.gmra.mxu0 %v2266
      %v2681 = vpop.f32.mrf.mxu0
      %v2682 = vadd.f32 0.0, %v2681
      %v2683 = vpop.f32.mrf.mxu0
      %v2684 = vadd.f32 0.0, %v2683
      %2685 = vdwg.mxu0
      %2686 = vmatpush.bf16.msra.mxu0 %v2523
      %2687 = vmatpush.bf16.msra.mxu0 %v2515
      %2688 = vmatpush.bf16.msra.mxu0 %v2507
      %2689 = vmatpush.bf16.msra.mxu0 %v2499
      %2690 = vmatpush.bf16.msra.mxu0 %v2491
      %2691 = vmatpush.bf16.msra.mxu0 %v2483
      %2692 = vmatpush.bf16.msra.mxu0 %v2475
      %2693 = vmatpush.bf16.msra.mxu0 %v2467
      %2694 = vmatmul.bf16.gmra.mxu0 %v2266
      %v2695 = vpop.f32.mrf.mxu0
      %v2696 = vadd.f32 0.0, %v2695
      %v2697 = vpop.f32.mrf.mxu0
      %v2698 = vadd.f32 0.0, %v2697
      %2699 = vdwg.mxu0
      %v2700 = vadd.f32 %v2098, %v2598
      %v2701 = vadd.f32 %v2099, %v2612
      %v2702 = vadd.f32 %v2100, %v2626
      %v2703 = vadd.f32 %v2101, %v2640
      %v2704 = vadd.f32 %v2102, %v2654
      %v2705 = vadd.f32 %v2103, %v2668
      %v2706 = vadd.f32 %v2104, %v2682
      %v2707 = vadd.f32 %v2105, %v2696
      %v2708 = vadd.f32 %v2106, %v2600
      %v2709 = vadd.f32 %v2107, %v2614
      %v2710 = vadd.f32 %v2108, %v2628
      %v2711 = vadd.f32 %v2109, %v2642
      %v2712 = vadd.f32 %v2110, %v2656
      %v2713 = vadd.f32 %v2111, %v2670
      %v2714 = vadd.f32 %v2112, %v2684
      %v2715 = vadd.f32 %v2113, %v2698
      %v2716 = vld [vmem:[%s2] sm:$0xff]
      %v2718 = vperm.slane %v2716, 0
      %v2719 = vperm.slane %v2716, 1
      %v2720 = vperm.slane %v2716, 2
      %v2721 = vperm.slane %v2716, 3
      %v2722 = vperm.slane %v2716, 4
      %v2723 = vperm.slane %v2716, 5
      %v2724 = vperm.slane %v2716, 6
      %v2725 = vperm.slane %v2716, 7
      %v2734 = vadd.f32 %v2700, %v2718
      %v2735 = vadd.f32 %v2701, %v2719
      %v2736 = vadd.f32 %v2702, %v2720
      %v2737 = vadd.f32 %v2703, %v2721
      %v2738 = vadd.f32 %v2704, %v2722
      %v2739 = vadd.f32 %v2705, %v2723
      %v2740 = vadd.f32 %v2706, %v2724
      %v2741 = vadd.f32 %v2707, %v2725
      %v2742 = vadd.f32 %v2708, %v2718
      %v2743 = vadd.f32 %v2709, %v2719
      %v2744 = vadd.f32 %v2710, %v2720
      %v2745 = vadd.f32 %v2711, %v2721
      %v2746 = vadd.f32 %v2712, %v2722
      %v2747 = vadd.f32 %v2713, %v2723
      %v2748 = vadd.f32 %v2714, %v2724
      %v2749 = vadd.f32 %v2715, %v2725
      %vm2750 = vcmp.ge.f32.partialorder %v2734, 0.0
      %vm2751 = vcmp.ge.f32.partialorder %v2735, 0.0
      %vm2752 = vcmp.ge.f32.partialorder %v2736, 0.0
      %vm2753 = vcmp.ge.f32.partialorder %v2737, 0.0
      %vm2754 = vcmp.ge.f32.partialorder %v2738, 0.0
      %vm2755 = vcmp.ge.f32.partialorder %v2739, 0.0
      %vm2756 = vcmp.ge.f32.partialorder %v2740, 0.0
      %vm2757 = vcmp.ge.f32.partialorder %v2741, 0.0
      %vm2758 = vcmp.ge.f32.partialorder %v2742, 0.0
      %vm2759 = vcmp.ge.f32.partialorder %v2743, 0.0
      %vm2760 = vcmp.ge.f32.partialorder %v2744, 0.0
      %vm2761 = vcmp.ge.f32.partialorder %v2745, 0.0
      %vm2762 = vcmp.ge.f32.partialorder %v2746, 0.0
      %vm2763 = vcmp.ge.f32.partialorder %v2747, 0.0
      %vm2764 = vcmp.ge.f32.partialorder %v2748, 0.0
      %vm2765 = vcmp.ge.f32.partialorder %v2749, 0.0
      %v2766 = vmul.f32 %v2734, 0.2
      %v2767 = vmul.f32 %v2735, 0.2
      %v2768 = vmul.f32 %v2736, 0.2
      %v2769 = vmul.f32 %v2737, 0.2
      %v2770 = vmul.f32 %v2738, 0.2
      %v2771 = vmul.f32 %v2739, 0.2
      %v2772 = vmul.f32 %v2740, 0.2
      %v2773 = vmul.f32 %v2741, 0.2
      %v2774 = vmul.f32 %v2742, 0.2
      %v2775 = vmul.f32 %v2743, 0.2
      %v2776 = vmul.f32 %v2744, 0.2
      %v2777 = vmul.f32 %v2745, 0.2
      %v2778 = vmul.f32 %v2746, 0.2
      %v2779 = vmul.f32 %v2747, 0.2
      %v2780 = vmul.f32 %v2748, 0.2
      %v2781 = vmul.f32 %v2749, 0.2
      %v2782 = vsel %vm2750, %v2734, %v2766
      %v2783 = vsel %vm2751, %v2735, %v2767
      %v2784 = vsel %vm2752, %v2736, %v2768
      %v2785 = vsel %vm2753, %v2737, %v2769
      %v2786 = vsel %vm2754, %v2738, %v2770
      %v2787 = vsel %vm2755, %v2739, %v2771
      %v2788 = vsel %vm2756, %v2740, %v2772
      %v2789 = vsel %vm2757, %v2741, %v2773
      %v2790 = vsel %vm2758, %v2742, %v2774
      %v2791 = vsel %vm2759, %v2743, %v2775
      %v2792 = vsel %vm2760, %v2744, %v2776
      %v2793 = vsel %vm2761, %v2745, %v2777
      %v2794 = vsel %vm2762, %v2746, %v2778
      %v2795 = vsel %vm2763, %v2747, %v2779
      %v2796 = vsel %vm2764, %v2748, %v2780
      %v2797 = vsel %vm2765, %v2749, %v2781
      %v2814 = vrot.slane %v2783, 7
      %v2815 = vrot.slane %v2784, 6
      %v2816 = vrot.slane %v2785, 5
      %v2817 = vrot.slane %v2786, 4
      %v2818 = vrot.slane %v2787, 3
      %v2819 = vrot.slane %v2788, 2
      %v2820 = vrot.slane %v2789, 1
      %v2821 = vrot.slane %v2791, 7
      %v2822 = vrot.slane %v2792, 6
      %v2823 = vrot.slane %v2793, 5
      %v2824 = vrot.slane %v2794, 4
      %v2825 = vrot.slane %v2795, 3
      %v2826 = vrot.slane %v2796, 2
      %v2827 = vrot.slane %v2797, 1
      %vm2828 = vcmask 1040384
      %v2829 = vsel %vm2828, %v2782, %v2814
      %v2830 = vsel %vm514, %v2815, %v2816
      %vm2831 = vcmask 1041408
      %v2832 = vsel %vm2831, %v2829, %v2830
      %v2833 = vsel %vm520, %v2817, %v2818
      %v2834 = vsel %vm526, %v2819, %v2820
      %vm2835 = vcmask 1045508
      %v2836 = vsel %vm2835, %v2833, %v2834
      %vm2837 = vcmask 1043456
      %v2838 = vsel %vm2837, %v2832, %v2836
      %v2839 = vsel %vm511, %v2782, %v2814
      %v2840 = vsel %vm517, %v2815, %v2816
      %vm2841 = vcmask 1042433
      %v2842 = vsel %vm2841, %v2839, %v2840
      %v2843 = vsel %vm523, %v2817, %v2818
      %vm2844 = vcmask 1046528
      %v2845 = vsel %vm2844, %v2820, %v2819
      %vm2846 = vcmask 1046533
      %v2847 = vsel %vm2846, %v2843, %v2845
      %vm2848 = vcmask 1044481
      %v2849 = vsel %vm2848, %v2842, %v2847
      %v2850 = vrot.slane %v2849, 1
      %v2851 = vsel %vm514, %v2782, %v2814
      %v2852 = vsel %vm520, %v2815, %v2816
      %vm2853 = vcmask 1043458
      %v2854 = vsel %vm2853, %v2851, %v2852
      %v2855 = vsel %vm526, %v2817, %v2818
      %v2856 = vsel %vm2828, %v2819, %v2820
      %vm2857 = vcmask 1045504
      %v2858 = vsel %vm2857, %v2856, %v2855
      %vm2859 = vcmask 1045506
      %v2860 = vsel %vm2859, %v2854, %v2858
      %v2861 = vrot.slane %v2860, 2
      %v2862 = vsel %vm517, %v2782, %v2814
      %v2863 = vsel %vm523, %v2815, %v2816
      %vm2864 = vcmask 1044483
      %v2865 = vsel %vm2864, %v2862, %v2863
      %v2866 = vsel %vm2844, %v2818, %v2817
      %v2867 = vsel %vm511, %v2819, %v2820
      %vm2868 = vcmask 1046529
      %v2869 = vsel %vm2868, %v2867, %v2866
      %vm2870 = vcmask 1046531
      %v2871 = vsel %vm2870, %v2865, %v2869
      %v2872 = vrot.slane %v2871, 3
      %v2873 = vsel %vm520, %v2782, %v2814
      %v2874 = vsel %vm526, %v2815, %v2816
      %v2875 = vsel %vm2835, %v2873, %v2874
      %v2876 = vsel %vm2828, %v2817, %v2818
      %v2877 = vsel %vm514, %v2819, %v2820
      %v2878 = vsel %vm2831, %v2876, %v2877
      %v2879 = vsel %vm2837, %v2878, %v2875
      %v2880 = vrot.slane %v2879, 4
      %v2881 = vsel %vm523, %v2782, %v2814
      %v2882 = vsel %vm2844, %v2816, %v2815
      %v2883 = vsel %vm2846, %v2881, %v2882
      %v2884 = vsel %vm511, %v2817, %v2818
      %v2885 = vsel %vm517, %v2819, %v2820
      %v2886 = vsel %vm2841, %v2884, %v2885
      %v2887 = vsel %vm2848, %v2886, %v2883
      %v2888 = vrot.slane %v2887, 5
      %v2889 = vsel %vm526, %v2782, %v2814
      %v2890 = vsel %vm2828, %v2815, %v2816
      %v2891 = vsel %vm2857, %v2890, %v2889
      %v2892 = vsel %vm514, %v2817, %v2818
      %v2893 = vsel %vm520, %v2819, %v2820
      %v2894 = vsel %vm2853, %v2892, %v2893
      %v2895 = vsel %vm2859, %v2894, %v2891
      %v2896 = vrot.slane %v2895, 6
      %v2897 = vsel %vm2844, %v2814, %v2782
      %v2898 = vsel %vm511, %v2815, %v2816
      %v2899 = vsel %vm2868, %v2898, %v2897
      %v2900 = vsel %vm517, %v2817, %v2818
      %v2901 = vsel %vm523, %v2819, %v2820
      %v2902 = vsel %vm2864, %v2900, %v2901
      %v2903 = vsel %vm2870, %v2902, %v2899
      %v2904 = vrot.slane %v2903, 7
      %v2905 = vsel %vm2828, %v2790, %v2821
      %v2906 = vsel %vm514, %v2822, %v2823
      %v2907 = vsel %vm2831, %v2905, %v2906
      %v2908 = vsel %vm520, %v2824, %v2825
      %v2909 = vsel %vm526, %v2826, %v2827
      %v2910 = vsel %vm2835, %v2908, %v2909
      %v2911 = vsel %vm2837, %v2907, %v2910
      %v2912 = vsel %vm511, %v2790, %v2821
      %v2913 = vsel %vm517, %v2822, %v2823
      %v2914 = vsel %vm2841, %v2912, %v2913
      %v2915 = vsel %vm523, %v2824, %v2825
      %v2916 = vsel %vm2844, %v2827, %v2826
      %v2917 = vsel %vm2846, %v2915, %v2916
      %v2918 = vsel %vm2848, %v2914, %v2917
      %v2919 = vrot.slane %v2918, 1
      %v2920 = vsel %vm514, %v2790, %v2821
      %v2921 = vsel %vm520, %v2822, %v2823
      %v2922 = vsel %vm2853, %v2920, %v2921
      %v2923 = vsel %vm526, %v2824, %v2825
      %v2924 = vsel %vm2828, %v2826, %v2827
      %v2925 = vsel %vm2857, %v2924, %v2923
      %v2926 = vsel %vm2859, %v2922, %v2925
      %v2927 = vrot.slane %v2926, 2
      %v2928 = vsel %vm517, %v2790, %v2821
      %v2929 = vsel %vm523, %v2822, %v2823
      %v2930 = vsel %vm2864, %v2928, %v2929
      %v2931 = vsel %vm2844, %v2825, %v2824
      %v2932 = vsel %vm511, %v2826, %v2827
      %v2933 = vsel %vm2868, %v2932, %v2931
      %v2934 = vsel %vm2870, %v2930, %v2933
      %v2935 = vrot.slane %v2934, 3
      %v2936 = vsel %vm520, %v2790, %v2821
      %v2937 = vsel %vm526, %v2822, %v2823
      %v2938 = vsel %vm2835, %v2936, %v2937
      %v2939 = vsel %vm2828, %v2824, %v2825
      %v2940 = vsel %vm514, %v2826, %v2827
      %v2941 = vsel %vm2831, %v2939, %v2940
      %v2942 = vsel %vm2837, %v2941, %v2938
      %v2943 = vrot.slane %v2942, 4
      %v2944 = vsel %vm523, %v2790, %v2821
      %v2945 = vsel %vm2844, %v2823, %v2822
      %v2946 = vsel %vm2846, %v2944, %v2945
      %v2947 = vsel %vm511, %v2824, %v2825
      %v2948 = vsel %vm517, %v2826, %v2827
      %v2949 = vsel %vm2841, %v2947, %v2948
      %v2950 = vsel %vm2848, %v2949, %v2946
      %v2951 = vrot.slane %v2950, 5
      %v2952 = vperm.slane %v2838, 0
      %v2953 = vperm.slane %v2838, 1
      %v2954 = vperm.slane %v2838, 2
      %v2955 = vperm.slane %v2838, 3
      %v2956 = vperm.slane %v2838, 4
      %v2957 = vperm.slane %v2838, 5
      %v2958 = vperm.slane %v2838, 6
      %v2959 = vperm.slane %v2838, 7
      %v2960 = vperm.slane %v2861, 0
      %v2961 = vperm.slane %v2861, 1
      %v2962 = vperm.slane %v2861, 2
      %v2963 = vperm.slane %v2861, 3
      %v2964 = vperm.slane %v2861, 4
      %v2965 = vperm.slane %v2861, 5
      %v2966 = vperm.slane %v2861, 6
      %v2967 = vperm.slane %v2861, 7
      %v2968 = vperm.slane %v2880, 0
      %v2969 = vperm.slane %v2880, 1
      %v2970 = vperm.slane %v2880, 2
      %v2971 = vperm.slane %v2880, 3
      %v2972 = vperm.slane %v2880, 4
      %v2973 = vperm.slane %v2880, 5
      %v2974 = vperm.slane %v2880, 6
      %v2975 = vperm.slane %v2880, 7
      %v2976 = vperm.slane %v2896, 0
      %v2977 = vperm.slane %v2896, 1
      %v2978 = vperm.slane %v2896, 2
      %v2979 = vperm.slane %v2896, 3
      %v2980 = vperm.slane %v2896, 4
      %v2981 = vperm.slane %v2896, 5
      %v2982 = vperm.slane %v2896, 6
      %v2983 = vperm.slane %v2896, 7
      %v2984 = vperm.slane %v2911, 0
      %v2985 = vperm.slane %v2911, 1
      %v2986 = vperm.slane %v2911, 2
      %v2987 = vperm.slane %v2911, 3
      %v2988 = vperm.slane %v2911, 4
      %v2989 = vperm.slane %v2911, 5
      %v2990 = vperm.slane %v2911, 6
      %v2991 = vperm.slane %v2911, 7
      %v2992 = vperm.slane %v2927, 0
      %v2993 = vperm.slane %v2927, 1
      %v2994 = vperm.slane %v2927, 2
      %v2995 = vperm.slane %v2927, 3
      %v2996 = vperm.slane %v2927, 4
      %v2997 = vperm.slane %v2927, 5
      %v2998 = vperm.slane %v2927, 6
      %v2999 = vperm.slane %v2927, 7
      %v3048 = vpack.c.bf16 %v2952, %v2952
      %v3049 = vpack.c.bf16 %v2953, %v2953
      %v3050 = vpack.c.bf16 %v2954, %v2954
      %v3051 = vpack.c.bf16 %v2955, %v2955
      %v3052 = vpack.c.bf16 %v2956, %v2956
      %v3053 = vpack.c.bf16 %v2957, %v2957
      %v3054 = vpack.c.bf16 %v2958, %v2958
      %v3055 = vpack.c.bf16 %v2959, %v2959
      %v3056 = vpack.c.bf16 %v2960, %v2960
      %v3057 = vpack.c.bf16 %v2961, %v2961
      %v3058 = vpack.c.bf16 %v2962, %v2962
      %v3059 = vpack.c.bf16 %v2963, %v2963
      %v3060 = vpack.c.bf16 %v2964, %v2964
      %v3061 = vpack.c.bf16 %v2965, %v2965
      %v3062 = vpack.c.bf16 %v2966, %v2966
      %v3063 = vpack.c.bf16 %v2967, %v2967
      %v3064 = vpack.c.bf16 %v2968, %v2968
      %v3065 = vpack.c.bf16 %v2969, %v2969
      %v3066 = vpack.c.bf16 %v2970, %v2970
      %v3067 = vpack.c.bf16 %v2971, %v2971
      %v3068 = vpack.c.bf16 %v2972, %v2972
      %v3069 = vpack.c.bf16 %v2973, %v2973
      %v3070 = vpack.c.bf16 %v2974, %v2974
      %v3071 = vpack.c.bf16 %v2975, %v2975
      %v3072 = vpack.c.bf16 %v2976, %v2976
      %v3073 = vpack.c.bf16 %v2977, %v2977
      %v3074 = vpack.c.bf16 %v2978, %v2978
      %v3075 = vpack.c.bf16 %v2979, %v2979
      %v3076 = vpack.c.bf16 %v2980, %v2980
      %v3077 = vpack.c.bf16 %v2981, %v2981
      %v3078 = vpack.c.bf16 %v2982, %v2982
      %v3079 = vpack.c.bf16 %v2983, %v2983
      %v3080 = vpack.c.bf16 %v2984, %v2984
      %v3081 = vpack.c.bf16 %v2985, %v2985
      %v3082 = vpack.c.bf16 %v2986, %v2986
      %v3083 = vpack.c.bf16 %v2987, %v2987
      %v3084 = vpack.c.bf16 %v2988, %v2988
      %v3085 = vpack.c.bf16 %v2989, %v2989
      %v3086 = vpack.c.bf16 %v2990, %v2990
      %v3087 = vpack.c.bf16 %v2991, %v2991
      %v3088 = vpack.c.bf16 %v2992, %v2992
      %v3089 = vpack.c.bf16 %v2993, %v2993
      %v3090 = vpack.c.bf16 %v2994, %v2994
      %v3091 = vpack.c.bf16 %v2995, %v2995
      %v3092 = vpack.c.bf16 %v2996, %v2996
      %v3093 = vpack.c.bf16 %v2997, %v2997
      %v3094 = vpack.c.bf16 %v2998, %v2998
      %v3095 = vpack.c.bf16 %v2999, %v2999
      %v3096 = vld [vmem:[%s3] sm:$0xff]
      %v3097 = vld [vmem:[%s3 + $0x8] sm:$0xf]
      %v3098 = vld [vmem:[%s3 + $0xc] sm:$0xff]
      %v3099 = vld [vmem:[%s3 + $0x14] sm:$0xf]
      %v3100 = vld [vmem:[%s3 + $0x18] sm:$0xff]
      %v3101 = vld [vmem:[%s3 + $0x20] sm:$0xf]
      %v3102 = vld [vmem:[%s3 + $0x24] sm:$0xff]
      %v3103 = vld [vmem:[%s3 + $0x2c] sm:$0xf]
      %v3104 = vld [vmem:[%s3 + $0x30] sm:$0xff]
      %v3105 = vld [vmem:[%s3 + $0x38] sm:$0xf]
      %v3106 = vld [vmem:[%s3 + $0x3c] sm:$0xff]
      %v3107 = vld [vmem:[%s3 + $0x44] sm:$0xf]
      %v3108 = vld [vmem:[%s3 + $0x48] sm:$0xff]
      %v3109 = vld [vmem:[%s3 + $0x50] sm:$0xf]
      %v3110 = vld [vmem:[%s3 + $0x54] sm:$0xff]
      %v3111 = vld [vmem:[%s3 + $0x5c] sm:$0xf]
      %v3112 = vld [vmem:[%s3 + $0x60] sm:$0xff]
      %v3113 = vld [vmem:[%s3 + $0x68] sm:$0xf]
      %v3114 = vld [vmem:[%s3 + $0x6c] sm:$0xff]
      %v3115 = vld [vmem:[%s3 + $0x74] sm:$0xf]
      %v3116 = vld [vmem:[%s3 + $0x78] sm:$0xff]
      %v3117 = vld [vmem:[%s3 + $0x80] sm:$0xf]
      %v3118 = vld [vmem:[%s3 + $0x84] sm:$0xff]
      %v3119 = vld [vmem:[%s3 + $0x8c] sm:$0xf]
      %v3120 = vld [vmem:[%s3 + $0x90] sm:$0xff]
      %v3121 = vld [vmem:[%s3 + $0x98] sm:$0xf]
      %v3122 = vld [vmem:[%s3 + $0x9c] sm:$0xff]
      %v3123 = vld [vmem:[%s3 + $0xa4] sm:$0xf]
      %v3124 = vld [vmem:[%s3 + $0xa8] sm:$0xff]
      %v3125 = vld [vmem:[%s3 + $0xb0] sm:$0xf]
      %v3126 = vld [vmem:[%s3 + $0xb4] sm:$0xff]
      %v3127 = vld [vmem:[%s3 + $0xbc] sm:$0xf]
      %v3128 = vld [vmem:[%s3 + $0xc0] sm:$0xff]
      %v3129 = vld [vmem:[%s3 + $0xc8] sm:$0xf]
      %v3130 = vld [vmem:[%s3 + $0xcc] sm:$0xff]
      %v3131 = vld [vmem:[%s3 + $0xd4] sm:$0xf]
      %v3132 = vld [vmem:[%s3 + $0xd8] sm:$0xff]
      %v3133 = vld [vmem:[%s3 + $0xe0] sm:$0xf]
      %v3134 = vld [vmem:[%s3 + $0xe4] sm:$0xff]
      %v3135 = vld [vmem:[%s3 + $0xec] sm:$0xf]
      %v3136 = vld [vmem:[%s3 + $0xf0] sm:$0xff]
      %v3137 = vld [vmem:[%s3 + $0xf8] sm:$0xf]
      %v3138 = vld [vmem:[%s3 + $0xfc] sm:$0xff]
      %v3139 = vld [vmem:[%s3 + $0x104] sm:$0xf]
      %v3140 = vld [vmem:[%s3 + $0x108] sm:$0xff]
      %v3141 = vld [vmem:[%s3 + $0x110] sm:$0xf]
      %v3142 = vld [vmem:[%s3 + $0x114] sm:$0xff]
      %v3143 = vld [vmem:[%s3 + $0x11c] sm:$0xf]
      %v3144 = vld [vmem:[%s3 + $0x120] sm:$0xff]
      %v3145 = vld [vmem:[%s3 + $0x128] sm:$0xf]
      %v3146 = vld [vmem:[%s3 + $0x12c] sm:$0xff]
      %v3147 = vld [vmem:[%s3 + $0x134] sm:$0xf]
      %v3148 = vld [vmem:[%s3 + $0x138] sm:$0xff]
      %v3149 = vld [vmem:[%s3 + $0x140] sm:$0xf]
      %v3150 = vld [vmem:[%s3 + $0x144] sm:$0xff]
      %v3151 = vld [vmem:[%s3 + $0x14c] sm:$0xf]
      %v3152 = vld [vmem:[%s3 + $0x150] sm:$0xff]
      %v3153 = vld [vmem:[%s3 + $0x158] sm:$0xf]
      %v3154 = vld [vmem:[%s3 + $0x15c] sm:$0xff]
      %v3155 = vld [vmem:[%s3 + $0x164] sm:$0xf]
      %v3156 = vld [vmem:[%s3 + $0x168] sm:$0xff]
      %v3157 = vld [vmem:[%s3 + $0x170] sm:$0xf]
      %v3158 = vld [vmem:[%s3 + $0x174] sm:$0xff]
      %v3159 = vld [vmem:[%s3 + $0x17c] sm:$0xf]
      %v3160 = vld [vmem:[%s3 + $0x180] sm:$0xff]
      %v3161 = vld [vmem:[%s3 + $0x188] sm:$0xf]
      %v3162 = vld [vmem:[%s3 + $0x18c] sm:$0xff]
      %v3163 = vld [vmem:[%s3 + $0x194] sm:$0xf]
      %v3164 = vld [vmem:[%s3 + $0x198] sm:$0xff]
      %v3165 = vld [vmem:[%s3 + $0x1a0] sm:$0xf]
      %v3166 = vld [vmem:[%s3 + $0x1a4] sm:$0xff]
      %v3167 = vld [vmem:[%s3 + $0x1ac] sm:$0xf]
      %v3168 = vld [vmem:[%s3 + $0x1b0] sm:$0xff]
      %v3169 = vld [vmem:[%s3 + $0x1b8] sm:$0xf]
      %v3170 = vld [vmem:[%s3 + $0x1bc] sm:$0xff]
      %v3171 = vld [vmem:[%s3 + $0x1c4] sm:$0xf]
      %v3172 = vld [vmem:[%s3 + $0x1c8] sm:$0xff]
      %v3173 = vld [vmem:[%s3 + $0x1d0] sm:$0xf]
      %v3174 = vld [vmem:[%s3 + $0x1d4] sm:$0xff]
      %v3175 = vld [vmem:[%s3 + $0x1dc] sm:$0xf]
      %v3176 = vld [vmem:[%s3 + $0x1e0] sm:$0xff]
      %v3177 = vld [vmem:[%s3 + $0x1e8] sm:$0xf]
      %v3178 = vld [vmem:[%s3 + $0x1ec] sm:$0xff]
      %v3179 = vld [vmem:[%s3 + $0x1f4] sm:$0xf]
      %v3180 = vld [vmem:[%s3 + $0x1f8] sm:$0xff]
      %v3181 = vld [vmem:[%s3 + $0x200] sm:$0xf]
      %v3182 = vld [vmem:[%s3 + $0x204] sm:$0xff]
      %v3183 = vld [vmem:[%s3 + $0x20c] sm:$0xf]
      %v3184 = vld [vmem:[%s3 + $0x210] sm:$0xff]
      %v3185 = vld [vmem:[%s3 + $0x218] sm:$0xf]
      %v3186 = vld [vmem:[%s3 + $0x21c] sm:$0xff]
      %v3187 = vld [vmem:[%s3 + $0x224] sm:$0xf]
      %v3188 = vld [vmem:[%s3 + $0x228] sm:$0xff]
      %v3189 = vld [vmem:[%s3 + $0x230] sm:$0xf]
      %v3190 = vld [vmem:[%s3 + $0x234] sm:$0xff]
      %v3191 = vld [vmem:[%s3 + $0x23c] sm:$0xf]
      %v3192 = vld [vmem:[%s3 + $0x240] sm:$0xff]
      %v3193 = vld [vmem:[%s3 + $0x248] sm:$0xf]
      %v3194 = vld [vmem:[%s3 + $0x24c] sm:$0xff]
      %v3195 = vld [vmem:[%s3 + $0x254] sm:$0xf]
      %v3196 = vld [vmem:[%s3 + $0x258] sm:$0xff]
      %v3197 = vld [vmem:[%s3 + $0x260] sm:$0xf]
      %v3198 = vld [vmem:[%s3 + $0x264] sm:$0xff]
      %v3199 = vld [vmem:[%s3 + $0x26c] sm:$0xf]
      %v3200 = vld [vmem:[%s3 + $0x270] sm:$0xff]
      %v3201 = vld [vmem:[%s3 + $0x278] sm:$0xf]
      %v3202 = vld [vmem:[%s3 + $0x27c] sm:$0xff]
      %v3203 = vld [vmem:[%s3 + $0x284] sm:$0xf]
      %v3204 = vld [vmem:[%s3 + $0x288] sm:$0xff]
      %v3205 = vld [vmem:[%s3 + $0x290] sm:$0xf]
      %v3206 = vld [vmem:[%s3 + $0x294] sm:$0xff]
      %v3207 = vld [vmem:[%s3 + $0x29c] sm:$0xf]
      %v3208 = vld [vmem:[%s3 + $0x2a0] sm:$0xff]
      %v3209 = vld [vmem:[%s3 + $0x2a8] sm:$0xf]
      %v3210 = vld [vmem:[%s3 + $0x2ac] sm:$0xff]
      %v3211 = vld [vmem:[%s3 + $0x2b4] sm:$0xf]
      %v3212 = vld [vmem:[%s3 + $0x2b8] sm:$0xff]
      %v3213 = vld [vmem:[%s3 + $0x2c0] sm:$0xf]
      %v3214 = vld [vmem:[%s3 + $0x2c4] sm:$0xff]
      %v3215 = vld [vmem:[%s3 + $0x2cc] sm:$0xf]
      %v3216 = vld [vmem:[%s3 + $0x2d0] sm:$0xff]
      %v3217 = vld [vmem:[%s3 + $0x2d8] sm:$0xf]
      %v3218 = vld [vmem:[%s3 + $0x2dc] sm:$0xff]
      %v3219 = vld [vmem:[%s3 + $0x2e4] sm:$0xf]
      %v3220 = vld [vmem:[%s3 + $0x2e8] sm:$0xff]
      %v3221 = vld [vmem:[%s3 + $0x2f0] sm:$0xf]
      %v3222 = vld [vmem:[%s3 + $0x2f4] sm:$0xff]
      %v3223 = vld [vmem:[%s3 + $0x2fc] sm:$0xf]
      %v3224 = vld [vmem:[%s3 + $0x300] sm:$0xff]
      %v3225 = vld [vmem:[%s3 + $0x308] sm:$0xf]
      %v3226 = vld [vmem:[%s3 + $0x30c] sm:$0xff]
      %v3227 = vld [vmem:[%s3 + $0x314] sm:$0xf]
      %v3228 = vld [vmem:[%s3 + $0x318] sm:$0xff]
      %v3229 = vld [vmem:[%s3 + $0x320] sm:$0xf]
      %v3230 = vld [vmem:[%s3 + $0x324] sm:$0xff]
      %v3231 = vld [vmem:[%s3 + $0x32c] sm:$0xf]
      %v3232 = vld [vmem:[%s3 + $0x330] sm:$0xff]
      %v3233 = vld [vmem:[%s3 + $0x338] sm:$0xf]
      %v3234 = vld [vmem:[%s3 + $0x33c] sm:$0xff]
      %v3235 = vld [vmem:[%s3 + $0x344] sm:$0xf]
      %v3236 = vld [vmem:[%s3 + $0x348] sm:$0xff]
      %v3237 = vld [vmem:[%s3 + $0x350] sm:$0xf]
      %v3238 = vld [vmem:[%s3 + $0x354] sm:$0xff]
      %v3239 = vld [vmem:[%s3 + $0x35c] sm:$0xf]
      %v3240 = vld [vmem:[%s3 + $0x360] sm:$0xff]
      %v3241 = vld [vmem:[%s3 + $0x368] sm:$0xf]
      %v3242 = vld [vmem:[%s3 + $0x36c] sm:$0xff]
      %v3243 = vld [vmem:[%s3 + $0x374] sm:$0xf]
      %v3244 = vld [vmem:[%s3 + $0x378] sm:$0xff]
      %v3245 = vld [vmem:[%s3 + $0x380] sm:$0xf]
      %v3246 = vld [vmem:[%s3 + $0x384] sm:$0xff]
      %v3247 = vld [vmem:[%s3 + $0x38c] sm:$0xf]
      %v3248 = vld [vmem:[%s3 + $0x390] sm:$0xff]
      %v3249 = vld [vmem:[%s3 + $0x398] sm:$0xf]
      %v3250 = vld [vmem:[%s3 + $0x39c] sm:$0xff]
      %v3251 = vld [vmem:[%s3 + $0x3a4] sm:$0xf]
      %v3252 = vld [vmem:[%s3 + $0x3a8] sm:$0xff]
      %v3253 = vld [vmem:[%s3 + $0x3b0] sm:$0xf]
      %v3254 = vld [vmem:[%s3 + $0x3b4] sm:$0xff]
      %v3255 = vld [vmem:[%s3 + $0x3bc] sm:$0xf]
      %v3256 = vld [vmem:[%s3 + $0x3c0] sm:$0xff]
      %v3257 = vld [vmem:[%s3 + $0x3c8] sm:$0xf]
      %v3258 = vld [vmem:[%s3 + $0x3cc] sm:$0xff]
      %v3259 = vld [vmem:[%s3 + $0x3d4] sm:$0xf]
      %v3260 = vld [vmem:[%s3 + $0x3d8] sm:$0xff]
      %v3261 = vld [vmem:[%s3 + $0x3e0] sm:$0xf]
      %v3262 = vld [vmem:[%s3 + $0x3e4] sm:$0xff]
      %v3263 = vld [vmem:[%s3 + $0x3ec] sm:$0xf]
      %v3264 = vld [vmem:[%s3 + $0x3f0] sm:$0xff]
      %v3265 = vld [vmem:[%s3 + $0x3f8] sm:$0xf]
      %v3266 = vld [vmem:[%s3 + $0x3fc] sm:$0xff]
      %v3267 = vld [vmem:[%s3 + $0x404] sm:$0xf]
      %v3268 = vld [vmem:[%s3 + $0x408] sm:$0xff]
      %v3269 = vld [vmem:[%s3 + $0x410] sm:$0xf]
      %v3270 = vld [vmem:[%s3 + $0x414] sm:$0xff]
      %v3271 = vld [vmem:[%s3 + $0x41c] sm:$0xf]
      %v3272 = vld [vmem:[%s3 + $0x420] sm:$0xff]
      %v3273 = vld [vmem:[%s3 + $0x428] sm:$0xf]
      %v3274 = vld [vmem:[%s3 + $0x42c] sm:$0xff]
      %v3275 = vld [vmem:[%s3 + $0x434] sm:$0xf]
      %v3276 = vld [vmem:[%s3 + $0x438] sm:$0xff]
      %v3277 = vld [vmem:[%s3 + $0x440] sm:$0xf]
      %v3278 = vld [vmem:[%s3 + $0x444] sm:$0xff]
      %v3279 = vld [vmem:[%s3 + $0x44c] sm:$0xf]
      %v3280 = vld [vmem:[%s3 + $0x450] sm:$0xff]
      %v3281 = vld [vmem:[%s3 + $0x458] sm:$0xf]
      %v3282 = vld [vmem:[%s3 + $0x45c] sm:$0xff]
      %v3283 = vld [vmem:[%s3 + $0x464] sm:$0xf]
      %v3284 = vld [vmem:[%s3 + $0x468] sm:$0xff]
      %v3285 = vld [vmem:[%s3 + $0x470] sm:$0xf]
      %v3286 = vld [vmem:[%s3 + $0x474] sm:$0xff]
      %v3287 = vld [vmem:[%s3 + $0x47c] sm:$0xf]
      %v3288 = vld [vmem:[%s3 + $0x480] sm:$0xff]
      %v3289 = vld [vmem:[%s3 + $0x488] sm:$0xf]
      %v3290 = vld [vmem:[%s3 + $0x48c] sm:$0xff]
      %v3291 = vld [vmem:[%s3 + $0x494] sm:$0xf]
      %v3292 = vld [vmem:[%s3 + $0x498] sm:$0xff]
      %v3293 = vld [vmem:[%s3 + $0x4a0] sm:$0xf]
      %v3294 = vld [vmem:[%s3 + $0x4a4] sm:$0xff]
      %v3295 = vld [vmem:[%s3 + $0x4ac] sm:$0xf]
      %v3296 = vld [vmem:[%s3 + $0x4b0] sm:$0xff]
      %v3297 = vld [vmem:[%s3 + $0x4b8] sm:$0xf]
      %v3298 = vld [vmem:[%s3 + $0x4bc] sm:$0xff]
      %v3299 = vld [vmem:[%s3 + $0x4c4] sm:$0xf]
      %v3300 = vld [vmem:[%s3 + $0x4c8] sm:$0xff]
      %v3301 = vld [vmem:[%s3 + $0x4d0] sm:$0xf]
      %v3302 = vld [vmem:[%s3 + $0x4d4] sm:$0xff]
      %v3303 = vld [vmem:[%s3 + $0x4dc] sm:$0xf]
      %v3304 = vld [vmem:[%s3 + $0x4e0] sm:$0xff]
      %v3305 = vld [vmem:[%s3 + $0x4e8] sm:$0xf]
      %v3306 = vld [vmem:[%s3 + $0x4ec] sm:$0xff]
      %v3307 = vld [vmem:[%s3 + $0x4f4] sm:$0xf]
      %v3308 = vld [vmem:[%s3 + $0x4f8] sm:$0xff]
      %v3309 = vld [vmem:[%s3 + $0x500] sm:$0xf]
      %v3310 = vld [vmem:[%s3 + $0x504] sm:$0xff]
      %v3311 = vld [vmem:[%s3 + $0x50c] sm:$0xf]
      %v3312 = vld [vmem:[%s3 + $0x510] sm:$0xff]
      %v3313 = vld [vmem:[%s3 + $0x518] sm:$0xf]
      %v3314 = vld [vmem:[%s3 + $0x51c] sm:$0xff]
      %v3315 = vld [vmem:[%s3 + $0x524] sm:$0xf]
      %v3316 = vld [vmem:[%s3 + $0x528] sm:$0xff]
      %v3317 = vld [vmem:[%s3 + $0x530] sm:$0xf]
      %v3318 = vld [vmem:[%s3 + $0x534] sm:$0xff]
      %v3319 = vld [vmem:[%s3 + $0x53c] sm:$0xf]
      %v3320 = vld [vmem:[%s3 + $0x540] sm:$0xff]
      %v3321 = vld [vmem:[%s3 + $0x548] sm:$0xf]
      %v3322 = vld [vmem:[%s3 + $0x54c] sm:$0xff]
      %v3323 = vld [vmem:[%s3 + $0x554] sm:$0xf]
      %v3324 = vld [vmem:[%s3 + $0x558] sm:$0xff]
      %v3325 = vld [vmem:[%s3 + $0x560] sm:$0xf]
      %v3326 = vld [vmem:[%s3 + $0x564] sm:$0xff]
      %v3327 = vld [vmem:[%s3 + $0x56c] sm:$0xf]
      %v3328 = vld [vmem:[%s3 + $0x570] sm:$0xff]
      %v3329 = vld [vmem:[%s3 + $0x578] sm:$0xf]
      %v3330 = vld [vmem:[%s3 + $0x57c] sm:$0xff]
      %v3331 = vld [vmem:[%s3 + $0x584] sm:$0xf]
      %v3332 = vld [vmem:[%s3 + $0x588] sm:$0xff]
      %v3333 = vld [vmem:[%s3 + $0x590] sm:$0xf]
      %v3334 = vld [vmem:[%s3 + $0x594] sm:$0xff]
      %v3335 = vld [vmem:[%s3 + $0x59c] sm:$0xf]
      %v3336 = vld [vmem:[%s3 + $0x5a0] sm:$0xff]
      %v3337 = vld [vmem:[%s3 + $0x5a8] sm:$0xf]
      %v3338 = vld [vmem:[%s3 + $0x5ac] sm:$0xff]
      %v3339 = vld [vmem:[%s3 + $0x5b4] sm:$0xf]
      %v3340 = vld [vmem:[%s3 + $0x5b8] sm:$0xff]
      %v3341 = vld [vmem:[%s3 + $0x5c0] sm:$0xf]
      %v3342 = vld [vmem:[%s3 + $0x5c4] sm:$0xff]
      %v3343 = vld [vmem:[%s3 + $0x5cc] sm:$0xf]
      %v3344 = vld [vmem:[%s3 + $0x5d0] sm:$0xff]
      %v3345 = vld [vmem:[%s3 + $0x5d8] sm:$0xf]
      %v3346 = vld [vmem:[%s3 + $0x5dc] sm:$0xff]
      %v3347 = vld [vmem:[%s3 + $0x5e4] sm:$0xf]
      %v3348 = vld [vmem:[%s3 + $0x5e8] sm:$0xff]
      %v3349 = vld [vmem:[%s3 + $0x5f0] sm:$0xf]
      %v3350 = vld [vmem:[%s3 + $0x5f4] sm:$0xff]
      %v3351 = vld [vmem:[%s3 + $0x5fc] sm:$0xf]
      %v3352 = vperm.slane %v2850, 0
      %v3353 = vperm.slane %v2850, 1
      %v3354 = vperm.slane %v2850, 2
      %v3355 = vperm.slane %v2850, 3
      %v3356 = vperm.slane %v2850, 4
      %v3357 = vperm.slane %v2850, 5
      %v3358 = vperm.slane %v2850, 6
      %v3359 = vperm.slane %v2850, 7
      %v3360 = vperm.slane %v2872, 0
      %v3361 = vperm.slane %v2872, 1
      %v3362 = vperm.slane %v2872, 2
      %v3363 = vperm.slane %v2872, 3
      %v3364 = vperm.slane %v2872, 4
      %v3365 = vperm.slane %v2872, 5
      %v3366 = vperm.slane %v2872, 6
      %v3367 = vperm.slane %v2872, 7
      %v3368 = vperm.slane %v2888, 0
      %v3369 = vperm.slane %v2888, 1
      %v3370 = vperm.slane %v2888, 2
      %v3371 = vperm.slane %v2888, 3
      %v3372 = vperm.slane %v2888, 4
      %v3373 = vperm.slane %v2888, 5
      %v3374 = vperm.slane %v2888, 6
      %v3375 = vperm.slane %v2888, 7
      %v3376 = vperm.slane %v2904, 0
      %v3377 = vperm.slane %v2904, 1
      %v3378 = vperm.slane %v2904, 2
      %v3379 = vperm.slane %v2904, 3
      %v3380 = vperm.slane %v2904, 4
      %v3381 = vperm.slane %v2904, 5
      %v3382 = vperm.slane %v2904, 6
      %v3383 = vperm.slane %v2904, 7
      %v3384 = vperm.slane %v2919, 0
      %v3385 = vperm.slane %v2919, 1
      %v3386 = vperm.slane %v2919, 2
      %v3387 = vperm.slane %v2919, 3
      %v3388 = vperm.slane %v2919, 4
      %v3389 = vperm.slane %v2919, 5
      %v3390 = vperm.slane %v2919, 6
      %v3391 = vperm.slane %v2919, 7
      %v3392 = vperm.slane %v2935, 0
      %v3393 = vperm.slane %v2935, 1
      %v3394 = vperm.slane %v2935, 2
      %v3395 = vperm.slane %v2935, 3
      %v3396 = vperm.slane %v2935, 4
      %v3397 = vperm.slane %v2935, 5
      %v3398 = vperm.slane %v2935, 6
      %v3399 = vperm.slane %v2935, 7
      %v3448 = vpack.c.bf16 %v3352, %v3352
      %v3449 = vpack.c.bf16 %v3353, %v3353
      %v3450 = vpack.c.bf16 %v3354, %v3354
      %v3451 = vpack.c.bf16 %v3355, %v3355
      %v3452 = vpack.c.bf16 %v3356, %v3356
      %v3453 = vpack.c.bf16 %v3357, %v3357
      %v3454 = vpack.c.bf16 %v3358, %v3358
      %v3455 = vpack.c.bf16 %v3359, %v3359
      %v3456 = vpack.c.bf16 %v3360, %v3360
      %v3457 = vpack.c.bf16 %v3361, %v3361
      %v3458 = vpack.c.bf16 %v3362, %v3362
      %v3459 = vpack.c.bf16 %v3363, %v3363
      %v3460 = vpack.c.bf16 %v3364, %v3364
      %v3461 = vpack.c.bf16 %v3365, %v3365
      %v3462 = vpack.c.bf16 %v3366, %v3366
      %v3463 = vpack.c.bf16 %v3367, %v3367
      %v3464 = vpack.c.bf16 %v3368, %v3368
      %v3465 = vpack.c.bf16 %v3369, %v3369
      %v3466 = vpack.c.bf16 %v3370, %v3370
      %v3467 = vpack.c.bf16 %v3371, %v3371
      %v3468 = vpack.c.bf16 %v3372, %v3372
      %v3469 = vpack.c.bf16 %v3373, %v3373
      %v3470 = vpack.c.bf16 %v3374, %v3374
      %v3471 = vpack.c.bf16 %v3375, %v3375
      %v3472 = vpack.c.bf16 %v3376, %v3376
      %v3473 = vpack.c.bf16 %v3377, %v3377
      %v3474 = vpack.c.bf16 %v3378, %v3378
      %v3475 = vpack.c.bf16 %v3379, %v3379
      %v3476 = vpack.c.bf16 %v3380, %v3380
      %v3477 = vpack.c.bf16 %v3381, %v3381
      %v3478 = vpack.c.bf16 %v3382, %v3382
      %v3479 = vpack.c.bf16 %v3383, %v3383
      %v3480 = vpack.c.bf16 %v3384, %v3384
      %v3481 = vpack.c.bf16 %v3385, %v3385
      %v3482 = vpack.c.bf16 %v3386, %v3386
      %v3483 = vpack.c.bf16 %v3387, %v3387
      %v3484 = vpack.c.bf16 %v3388, %v3388
      %v3485 = vpack.c.bf16 %v3389, %v3389
      %v3486 = vpack.c.bf16 %v3390, %v3390
      %v3487 = vpack.c.bf16 %v3391, %v3391
      %v3488 = vpack.c.bf16 %v3392, %v3392
      %v3489 = vpack.c.bf16 %v3393, %v3393
      %v3490 = vpack.c.bf16 %v3394, %v3394
      %v3491 = vpack.c.bf16 %v3395, %v3395
      %v3492 = vpack.c.bf16 %v3396, %v3396
      %v3493 = vpack.c.bf16 %v3397, %v3397
      %v3494 = vpack.c.bf16 %v3398, %v3398
      %v3495 = vpack.c.bf16 %v3399, %v3399
      %s3496 = scalar_lea.vmem %s3, 1536
      %v3497 = vld [vmem:[%s3496] sm:$0xff]
      %v3498 = vld [vmem:[%s3496 + $0x8] sm:$0xf]
      %v3499 = vld [vmem:[%s3496 + $0xc] sm:$0xff]
      %v3500 = vld [vmem:[%s3496 + $0x14] sm:$0xf]
      %v3501 = vld [vmem:[%s3496 + $0x18] sm:$0xff]
      %v3502 = vld [vmem:[%s3496 + $0x20] sm:$0xf]
      %v3503 = vld [vmem:[%s3496 + $0x24] sm:$0xff]
      %v3504 = vld [vmem:[%s3496 + $0x2c] sm:$0xf]
      %v3505 = vld [vmem:[%s3496 + $0x30] sm:$0xff]
      %v3506 = vld [vmem:[%s3496 + $0x38] sm:$0xf]
      %v3507 = vld [vmem:[%s3496 + $0x3c] sm:$0xff]
      %v3508 = vld [vmem:[%s3496 + $0x44] sm:$0xf]
      %v3509 = vld [vmem:[%s3496 + $0x48] sm:$0xff]
      %v3510 = vld [vmem:[%s3496 + $0x50] sm:$0xf]
      %v3511 = vld [vmem:[%s3496 + $0x54] sm:$0xff]
      %v3512 = vld [vmem:[%s3496 + $0x5c] sm:$0xf]
      %v3513 = vld [vmem:[%s3496 + $0x60] sm:$0xff]
      %v3514 = vld [vmem:[%s3496 + $0x68] sm:$0xf]
      %v3515 = vld [vmem:[%s3496 + $0x6c] sm:$0xff]
      %v3516 = vld [vmem:[%s3496 + $0x74] sm:$0xf]
      %v3517 = vld [vmem:[%s3496 + $0x78] sm:$0xff]
      %v3518 = vld [vmem:[%s3496 + $0x80] sm:$0xf]
      %v3519 = vld [vmem:[%s3496 + $0x84] sm:$0xff]
      %v3520 = vld [vmem:[%s3496 + $0x8c] sm:$0xf]
      %v3521 = vld [vmem:[%s3496 + $0x90] sm:$0xff]
      %v3522 = vld [vmem:[%s3496 + $0x98] sm:$0xf]
      %v3523 = vld [vmem:[%s3496 + $0x9c] sm:$0xff]
      %v3524 = vld [vmem:[%s3496 + $0xa4] sm:$0xf]
      %v3525 = vld [vmem:[%s3496 + $0xa8] sm:$0xff]
      %v3526 = vld [vmem:[%s3496 + $0xb0] sm:$0xf]
      %v3527 = vld [vmem:[%s3496 + $0xb4] sm:$0xff]
      %v3528 = vld [vmem:[%s3496 + $0xbc] sm:$0xf]
      %v3529 = vld [vmem:[%s3496 + $0xc0] sm:$0xff]
      %v3530 = vld [vmem:[%s3496 + $0xc8] sm:$0xf]
      %v3531 = vld [vmem:[%s3496 + $0xcc] sm:$0xff]
      %v3532 = vld [vmem:[%s3496 + $0xd4] sm:$0xf]
      %v3533 = vld [vmem:[%s3496 + $0xd8] sm:$0xff]
      %v3534 = vld [vmem:[%s3496 + $0xe0] sm:$0xf]
      %v3535 = vld [vmem:[%s3496 + $0xe4] sm:$0xff]
      %v3536 = vld [vmem:[%s3496 + $0xec] sm:$0xf]
      %v3537 = vld [vmem:[%s3496 + $0xf0] sm:$0xff]
      %v3538 = vld [vmem:[%s3496 + $0xf8] sm:$0xf]
      %v3539 = vld [vmem:[%s3496 + $0xfc] sm:$0xff]
      %v3540 = vld [vmem:[%s3496 + $0x104] sm:$0xf]
      %v3541 = vld [vmem:[%s3496 + $0x108] sm:$0xff]
      %v3542 = vld [vmem:[%s3496 + $0x110] sm:$0xf]
      %v3543 = vld [vmem:[%s3496 + $0x114] sm:$0xff]
      %v3544 = vld [vmem:[%s3496 + $0x11c] sm:$0xf]
      %v3545 = vld [vmem:[%s3496 + $0x120] sm:$0xff]
      %v3546 = vld [vmem:[%s3496 + $0x128] sm:$0xf]
      %v3547 = vld [vmem:[%s3496 + $0x12c] sm:$0xff]
      %v3548 = vld [vmem:[%s3496 + $0x134] sm:$0xf]
      %v3549 = vld [vmem:[%s3496 + $0x138] sm:$0xff]
      %v3550 = vld [vmem:[%s3496 + $0x140] sm:$0xf]
      %v3551 = vld [vmem:[%s3496 + $0x144] sm:$0xff]
      %v3552 = vld [vmem:[%s3496 + $0x14c] sm:$0xf]
      %v3553 = vld [vmem:[%s3496 + $0x150] sm:$0xff]
      %v3554 = vld [vmem:[%s3496 + $0x158] sm:$0xf]
      %v3555 = vld [vmem:[%s3496 + $0x15c] sm:$0xff]
      %v3556 = vld [vmem:[%s3496 + $0x164] sm:$0xf]
      %v3557 = vld [vmem:[%s3496 + $0x168] sm:$0xff]
      %v3558 = vld [vmem:[%s3496 + $0x170] sm:$0xf]
      %v3559 = vld [vmem:[%s3496 + $0x174] sm:$0xff]
      %v3560 = vld [vmem:[%s3496 + $0x17c] sm:$0xf]
      %v3561 = vld [vmem:[%s3496 + $0x180] sm:$0xff]
      %v3562 = vld [vmem:[%s3496 + $0x188] sm:$0xf]
      %v3563 = vld [vmem:[%s3496 + $0x18c] sm:$0xff]
      %v3564 = vld [vmem:[%s3496 + $0x194] sm:$0xf]
      %v3565 = vld [vmem:[%s3496 + $0x198] sm:$0xff]
      %v3566 = vld [vmem:[%s3496 + $0x1a0] sm:$0xf]
      %v3567 = vld [vmem:[%s3496 + $0x1a4] sm:$0xff]
      %v3568 = vld [vmem:[%s3496 + $0x1ac] sm:$0xf]
      %v3569 = vld [vmem:[%s3496 + $0x1b0] sm:$0xff]
      %v3570 = vld [vmem:[%s3496 + $0x1b8] sm:$0xf]
      %v3571 = vld [vmem:[%s3496 + $0x1bc] sm:$0xff]
      %v3572 = vld [vmem:[%s3496 + $0x1c4] sm:$0xf]
      %v3573 = vld [vmem:[%s3496 + $0x1c8] sm:$0xff]
      %v3574 = vld [vmem:[%s3496 + $0x1d0] sm:$0xf]
      %v3575 = vld [vmem:[%s3496 + $0x1d4] sm:$0xff]
      %v3576 = vld [vmem:[%s3496 + $0x1dc] sm:$0xf]
      %v3577 = vld [vmem:[%s3496 + $0x1e0] sm:$0xff]
      %v3578 = vld [vmem:[%s3496 + $0x1e8] sm:$0xf]
      %v3579 = vld [vmem:[%s3496 + $0x1ec] sm:$0xff]
      %v3580 = vld [vmem:[%s3496 + $0x1f4] sm:$0xf]
      %v3581 = vld [vmem:[%s3496 + $0x1f8] sm:$0xff]
      %v3582 = vld [vmem:[%s3496 + $0x200] sm:$0xf]
      %v3583 = vld [vmem:[%s3496 + $0x204] sm:$0xff]
      %v3584 = vld [vmem:[%s3496 + $0x20c] sm:$0xf]
      %v3585 = vld [vmem:[%s3496 + $0x210] sm:$0xff]
      %v3586 = vld [vmem:[%s3496 + $0x218] sm:$0xf]
      %v3587 = vld [vmem:[%s3496 + $0x21c] sm:$0xff]
      %v3588 = vld [vmem:[%s3496 + $0x224] sm:$0xf]
      %v3589 = vld [vmem:[%s3496 + $0x228] sm:$0xff]
      %v3590 = vld [vmem:[%s3496 + $0x230] sm:$0xf]
      %v3591 = vld [vmem:[%s3496 + $0x234] sm:$0xff]
      %v3592 = vld [vmem:[%s3496 + $0x23c] sm:$0xf]
      %v3593 = vld [vmem:[%s3496 + $0x240] sm:$0xff]
      %v3594 = vld [vmem:[%s3496 + $0x248] sm:$0xf]
      %v3595 = vld [vmem:[%s3496 + $0x24c] sm:$0xff]
      %v3596 = vld [vmem:[%s3496 + $0x254] sm:$0xf]
      %v3597 = vld [vmem:[%s3496 + $0x258] sm:$0xff]
      %v3598 = vld [vmem:[%s3496 + $0x260] sm:$0xf]
      %v3599 = vld [vmem:[%s3496 + $0x264] sm:$0xff]
      %v3600 = vld [vmem:[%s3496 + $0x26c] sm:$0xf]
      %v3601 = vld [vmem:[%s3496 + $0x270] sm:$0xff]
      %v3602 = vld [vmem:[%s3496 + $0x278] sm:$0xf]
      %v3603 = vld [vmem:[%s3496 + $0x27c] sm:$0xff]
      %v3604 = vld [vmem:[%s3496 + $0x284] sm:$0xf]
      %v3605 = vld [vmem:[%s3496 + $0x288] sm:$0xff]
      %v3606 = vld [vmem:[%s3496 + $0x290] sm:$0xf]
      %v3607 = vld [vmem:[%s3496 + $0x294] sm:$0xff]
      %v3608 = vld [vmem:[%s3496 + $0x29c] sm:$0xf]
      %v3609 = vld [vmem:[%s3496 + $0x2a0] sm:$0xff]
      %v3610 = vld [vmem:[%s3496 + $0x2a8] sm:$0xf]
      %v3611 = vld [vmem:[%s3496 + $0x2ac] sm:$0xff]
      %v3612 = vld [vmem:[%s3496 + $0x2b4] sm:$0xf]
      %v3613 = vld [vmem:[%s3496 + $0x2b8] sm:$0xff]
      %v3614 = vld [vmem:[%s3496 + $0x2c0] sm:$0xf]
      %v3615 = vld [vmem:[%s3496 + $0x2c4] sm:$0xff]
      %v3616 = vld [vmem:[%s3496 + $0x2cc] sm:$0xf]
      %v3617 = vld [vmem:[%s3496 + $0x2d0] sm:$0xff]
      %v3618 = vld [vmem:[%s3496 + $0x2d8] sm:$0xf]
      %v3619 = vld [vmem:[%s3496 + $0x2dc] sm:$0xff]
      %v3620 = vld [vmem:[%s3496 + $0x2e4] sm:$0xf]
      %v3621 = vld [vmem:[%s3496 + $0x2e8] sm:$0xff]
      %v3622 = vld [vmem:[%s3496 + $0x2f0] sm:$0xf]
      %v3623 = vld [vmem:[%s3496 + $0x2f4] sm:$0xff]
      %v3624 = vld [vmem:[%s3496 + $0x2fc] sm:$0xf]
      %v3625 = vld [vmem:[%s3496 + $0x300] sm:$0xff]
      %v3626 = vld [vmem:[%s3496 + $0x308] sm:$0xf]
      %v3627 = vld [vmem:[%s3496 + $0x30c] sm:$0xff]
      %v3628 = vld [vmem:[%s3496 + $0x314] sm:$0xf]
      %v3629 = vld [vmem:[%s3496 + $0x318] sm:$0xff]
      %v3630 = vld [vmem:[%s3496 + $0x320] sm:$0xf]
      %v3631 = vld [vmem:[%s3496 + $0x324] sm:$0xff]
      %v3632 = vld [vmem:[%s3496 + $0x32c] sm:$0xf]
      %v3633 = vld [vmem:[%s3496 + $0x330] sm:$0xff]
      %v3634 = vld [vmem:[%s3496 + $0x338] sm:$0xf]
      %v3635 = vld [vmem:[%s3496 + $0x33c] sm:$0xff]
      %v3636 = vld [vmem:[%s3496 + $0x344] sm:$0xf]
      %v3637 = vld [vmem:[%s3496 + $0x348] sm:$0xff]
      %v3638 = vld [vmem:[%s3496 + $0x350] sm:$0xf]
      %v3639 = vld [vmem:[%s3496 + $0x354] sm:$0xff]
      %v3640 = vld [vmem:[%s3496 + $0x35c] sm:$0xf]
      %v3641 = vld [vmem:[%s3496 + $0x360] sm:$0xff]
      %v3642 = vld [vmem:[%s3496 + $0x368] sm:$0xf]
      %v3643 = vld [vmem:[%s3496 + $0x36c] sm:$0xff]
      %v3644 = vld [vmem:[%s3496 + $0x374] sm:$0xf]
      %v3645 = vld [vmem:[%s3496 + $0x378] sm:$0xff]
      %v3646 = vld [vmem:[%s3496 + $0x380] sm:$0xf]
      %v3647 = vld [vmem:[%s3496 + $0x384] sm:$0xff]
      %v3648 = vld [vmem:[%s3496 + $0x38c] sm:$0xf]
      %v3649 = vld [vmem:[%s3496 + $0x390] sm:$0xff]
      %v3650 = vld [vmem:[%s3496 + $0x398] sm:$0xf]
      %v3651 = vld [vmem:[%s3496 + $0x39c] sm:$0xff]
      %v3652 = vld [vmem:[%s3496 + $0x3a4] sm:$0xf]
      %v3653 = vld [vmem:[%s3496 + $0x3a8] sm:$0xff]
      %v3654 = vld [vmem:[%s3496 + $0x3b0] sm:$0xf]
      %v3655 = vld [vmem:[%s3496 + $0x3b4] sm:$0xff]
      %v3656 = vld [vmem:[%s3496 + $0x3bc] sm:$0xf]
      %v3657 = vld [vmem:[%s3496 + $0x3c0] sm:$0xff]
      %v3658 = vld [vmem:[%s3496 + $0x3c8] sm:$0xf]
      %v3659 = vld [vmem:[%s3496 + $0x3cc] sm:$0xff]
      %v3660 = vld [vmem:[%s3496 + $0x3d4] sm:$0xf]
      %v3661 = vld [vmem:[%s3496 + $0x3d8] sm:$0xff]
      %v3662 = vld [vmem:[%s3496 + $0x3e0] sm:$0xf]
      %v3663 = vld [vmem:[%s3496 + $0x3e4] sm:$0xff]
      %v3664 = vld [vmem:[%s3496 + $0x3ec] sm:$0xf]
      %v3665 = vld [vmem:[%s3496 + $0x3f0] sm:$0xff]
      %v3666 = vld [vmem:[%s3496 + $0x3f8] sm:$0xf]
      %v3667 = vld [vmem:[%s3496 + $0x3fc] sm:$0xff]
      %v3668 = vld [vmem:[%s3496 + $0x404] sm:$0xf]
      %v3669 = vld [vmem:[%s3496 + $0x408] sm:$0xff]
      %v3670 = vld [vmem:[%s3496 + $0x410] sm:$0xf]
      %v3671 = vld [vmem:[%s3496 + $0x414] sm:$0xff]
      %v3672 = vld [vmem:[%s3496 + $0x41c] sm:$0xf]
      %v3673 = vld [vmem:[%s3496 + $0x420] sm:$0xff]
      %v3674 = vld [vmem:[%s3496 + $0x428] sm:$0xf]
      %v3675 = vld [vmem:[%s3496 + $0x42c] sm:$0xff]
      %v3676 = vld [vmem:[%s3496 + $0x434] sm:$0xf]
      %v3677 = vld [vmem:[%s3496 + $0x438] sm:$0xff]
      %v3678 = vld [vmem:[%s3496 + $0x440] sm:$0xf]
      %v3679 = vld [vmem:[%s3496 + $0x444] sm:$0xff]
      %v3680 = vld [vmem:[%s3496 + $0x44c] sm:$0xf]
      %v3681 = vld [vmem:[%s3496 + $0x450] sm:$0xff]
      %v3682 = vld [vmem:[%s3496 + $0x458] sm:$0xf]
      %v3683 = vld [vmem:[%s3496 + $0x45c] sm:$0xff]
      %v3684 = vld [vmem:[%s3496 + $0x464] sm:$0xf]
      %v3685 = vld [vmem:[%s3496 + $0x468] sm:$0xff]
      %v3686 = vld [vmem:[%s3496 + $0x470] sm:$0xf]
      %v3687 = vld [vmem:[%s3496 + $0x474] sm:$0xff]
      %v3688 = vld [vmem:[%s3496 + $0x47c] sm:$0xf]
      %v3689 = vld [vmem:[%s3496 + $0x480] sm:$0xff]
      %v3690 = vld [vmem:[%s3496 + $0x488] sm:$0xf]
      %v3691 = vld [vmem:[%s3496 + $0x48c] sm:$0xff]
      %v3692 = vld [vmem:[%s3496 + $0x494] sm:$0xf]
      %v3693 = vld [vmem:[%s3496 + $0x498] sm:$0xff]
      %v3694 = vld [vmem:[%s3496 + $0x4a0] sm:$0xf]
      %v3695 = vld [vmem:[%s3496 + $0x4a4] sm:$0xff]
      %v3696 = vld [vmem:[%s3496 + $0x4ac] sm:$0xf]
      %v3697 = vld [vmem:[%s3496 + $0x4b0] sm:$0xff]
      %v3698 = vld [vmem:[%s3496 + $0x4b8] sm:$0xf]
      %v3699 = vld [vmem:[%s3496 + $0x4bc] sm:$0xff]
      %v3700 = vld [vmem:[%s3496 + $0x4c4] sm:$0xf]
      %v3701 = vld [vmem:[%s3496 + $0x4c8] sm:$0xff]
      %v3702 = vld [vmem:[%s3496 + $0x4d0] sm:$0xf]
      %v3703 = vld [vmem:[%s3496 + $0x4d4] sm:$0xff]
      %v3704 = vld [vmem:[%s3496 + $0x4dc] sm:$0xf]
      %v3705 = vld [vmem:[%s3496 + $0x4e0] sm:$0xff]
      %v3706 = vld [vmem:[%s3496 + $0x4e8] sm:$0xf]
      %v3707 = vld [vmem:[%s3496 + $0x4ec] sm:$0xff]
      %v3708 = vld [vmem:[%s3496 + $0x4f4] sm:$0xf]
      %v3709 = vld [vmem:[%s3496 + $0x4f8] sm:$0xff]
      %v3710 = vld [vmem:[%s3496 + $0x500] sm:$0xf]
      %v3711 = vld [vmem:[%s3496 + $0x504] sm:$0xff]
      %v3712 = vld [vmem:[%s3496 + $0x50c] sm:$0xf]
      %v3713 = vld [vmem:[%s3496 + $0x510] sm:$0xff]
      %v3714 = vld [vmem:[%s3496 + $0x518] sm:$0xf]
      %v3715 = vld [vmem:[%s3496 + $0x51c] sm:$0xff]
      %v3716 = vld [vmem:[%s3496 + $0x524] sm:$0xf]
      %v3717 = vld [vmem:[%s3496 + $0x528] sm:$0xff]
      %v3718 = vld [vmem:[%s3496 + $0x530] sm:$0xf]
      %v3719 = vld [vmem:[%s3496 + $0x534] sm:$0xff]
      %v3720 = vld [vmem:[%s3496 + $0x53c] sm:$0xf]
      %v3721 = vld [vmem:[%s3496 + $0x540] sm:$0xff]
      %v3722 = vld [vmem:[%s3496 + $0x548] sm:$0xf]
      %v3723 = vld [vmem:[%s3496 + $0x54c] sm:$0xff]
      %v3724 = vld [vmem:[%s3496 + $0x554] sm:$0xf]
      %v3725 = vld [vmem:[%s3496 + $0x558] sm:$0xff]
      %v3726 = vld [vmem:[%s3496 + $0x560] sm:$0xf]
      %v3727 = vld [vmem:[%s3496 + $0x564] sm:$0xff]
      %v3728 = vld [vmem:[%s3496 + $0x56c] sm:$0xf]
      %v3729 = vld [vmem:[%s3496 + $0x570] sm:$0xff]
      %v3730 = vld [vmem:[%s3496 + $0x578] sm:$0xf]
      %v3731 = vld [vmem:[%s3496 + $0x57c] sm:$0xff]
      %v3732 = vld [vmem:[%s3496 + $0x584] sm:$0xf]
      %v3733 = vld [vmem:[%s3496 + $0x588] sm:$0xff]
      %v3734 = vld [vmem:[%s3496 + $0x590] sm:$0xf]
      %v3735 = vld [vmem:[%s3496 + $0x594] sm:$0xff]
      %v3736 = vld [vmem:[%s3496 + $0x59c] sm:$0xf]
      %v3737 = vld [vmem:[%s3496 + $0x5a0] sm:$0xff]
      %v3738 = vld [vmem:[%s3496 + $0x5a8] sm:$0xf]
      %v3739 = vld [vmem:[%s3496 + $0x5ac] sm:$0xff]
      %v3740 = vld [vmem:[%s3496 + $0x5b4] sm:$0xf]
      %v3741 = vld [vmem:[%s3496 + $0x5b8] sm:$0xff]
      %v3742 = vld [vmem:[%s3496 + $0x5c0] sm:$0xf]
      %v3743 = vld [vmem:[%s3496 + $0x5c4] sm:$0xff]
      %v3744 = vld [vmem:[%s3496 + $0x5cc] sm:$0xf]
      %v3745 = vld [vmem:[%s3496 + $0x5d0] sm:$0xff]
      %v3746 = vld [vmem:[%s3496 + $0x5d8] sm:$0xf]
      %v3747 = vld [vmem:[%s3496 + $0x5dc] sm:$0xff]
      %v3748 = vld [vmem:[%s3496 + $0x5e4] sm:$0xf]
      %v3749 = vld [vmem:[%s3496 + $0x5e8] sm:$0xff]
      %v3750 = vld [vmem:[%s3496 + $0x5f0] sm:$0xf]
      %v3751 = vld [vmem:[%s3496 + $0x5f4] sm:$0xff]
      %v3752 = vld [vmem:[%s3496 + $0x5fc] sm:$0xf]
      %v3801 = vunpack.c.l.b16 %v3448
      %v3802 = vunpack.c.l.b16 %v3449
      %v3803 = vunpack.c.l.b16 %v3450
      %v3804 = vunpack.c.l.b16 %v3451
      %v3805 = vunpack.c.l.b16 %v3452
      %v3806 = vunpack.c.l.b16 %v3453
      %v3807 = vunpack.c.l.b16 %v3454
      %v3808 = vunpack.c.l.b16 %v3455
      %v3809 = vunpack.c.l.b16 %v3456
      %v3810 = vunpack.c.l.b16 %v3457
      %v3811 = vunpack.c.l.b16 %v3458
      %v3812 = vunpack.c.l.b16 %v3459
      %v3813 = vunpack.c.l.b16 %v3460
      %v3814 = vunpack.c.l.b16 %v3461
      %v3815 = vunpack.c.l.b16 %v3462
      %v3816 = vunpack.c.l.b16 %v3463
      %v3817 = vunpack.c.l.b16 %v3464
      %v3818 = vunpack.c.l.b16 %v3465
      %v3819 = vunpack.c.l.b16 %v3466
      %v3820 = vunpack.c.l.b16 %v3467
      %v3821 = vunpack.c.l.b16 %v3468
      %v3822 = vunpack.c.l.b16 %v3469
      %v3823 = vunpack.c.l.b16 %v3470
      %v3824 = vunpack.c.l.b16 %v3471
      %v3825 = vunpack.c.l.b16 %v3472
      %v3826 = vunpack.c.l.b16 %v3473
      %v3827 = vunpack.c.l.b16 %v3474
      %v3828 = vunpack.c.l.b16 %v3475
      %v3829 = vunpack.c.l.b16 %v3476
      %v3830 = vunpack.c.l.b16 %v3477
      %v3831 = vunpack.c.l.b16 %v3478
      %v3832 = vunpack.c.l.b16 %v3479
      %v3833 = vunpack.c.l.b16 %v3480
      %v3834 = vunpack.c.l.b16 %v3481
      %v3835 = vunpack.c.l.b16 %v3482
      %v3836 = vunpack.c.l.b16 %v3483
      %v3837 = vunpack.c.l.b16 %v3484
      %v3838 = vunpack.c.l.b16 %v3485
      %v3839 = vunpack.c.l.b16 %v3486
      %v3840 = vunpack.c.l.b16 %v3487
      %v3841 = vunpack.c.l.b16 %v3488
      %v3842 = vunpack.c.l.b16 %v3489
      %v3843 = vunpack.c.l.b16 %v3490
      %v3844 = vunpack.c.l.b16 %v3491
      %v3845 = vunpack.c.l.b16 %v3492
      %v3846 = vunpack.c.l.b16 %v3493
      %v3847 = vunpack.c.l.b16 %v3494
      %v3848 = vunpack.c.l.b16 %v3495
      %v3849 = vrot.slane %v3809, 7
      %v3850 = vsel %vm511, %v3849, %v3801
      %v3851 = vrot.slane %v3817, 6
      %v3852 = vsel %vm514, %v3851, %v3850
      %v3853 = vrot.slane %v3825, 5
      %v3854 = vsel %vm517, %v3853, %v3852
      %v3855 = vrot.slane %v3833, 4
      %v3856 = vsel %vm520, %v3855, %v3854
      %v3857 = vrot.slane %v3841, 3
      %v3858 = vsel %vm523, %v3857, %v3856
      %v3859 = vrot.slane %v3810, 7
      %v3860 = vsel %vm511, %v3859, %v3802
      %v3861 = vrot.slane %v3818, 6
      %v3862 = vsel %vm514, %v3861, %v3860
      %v3863 = vrot.slane %v3826, 5
      %v3864 = vsel %vm517, %v3863, %v3862
      %v3865 = vrot.slane %v3834, 4
      %v3866 = vsel %vm520, %v3865, %v3864
      %v3867 = vrot.slane %v3842, 3
      %v3868 = vsel %vm523, %v3867, %v3866
      %v3869 = vrot.slane %v3811, 7
      %v3870 = vsel %vm511, %v3869, %v3803
      %v3871 = vrot.slane %v3819, 6
      %v3872 = vsel %vm514, %v3871, %v3870
      %v3873 = vrot.slane %v3827, 5
      %v3874 = vsel %vm517, %v3873, %v3872
      %v3875 = vrot.slane %v3835, 4
      %v3876 = vsel %vm520, %v3875, %v3874
      %v3877 = vrot.slane %v3843, 3
      %v3878 = vsel %vm523, %v3877, %v3876
      %v3879 = vrot.slane %v3812, 7
      %v3880 = vsel %vm511, %v3879, %v3804
      %v3881 = vrot.slane %v3820, 6
      %v3882 = vsel %vm514, %v3881, %v3880
      %v3883 = vrot.slane %v3828, 5
      %v3884 = vsel %vm517, %v3883, %v3882
      %v3885 = vrot.slane %v3836, 4
      %v3886 = vsel %vm520, %v3885, %v3884
      %v3887 = vrot.slane %v3844, 3
      %v3888 = vsel %vm523, %v3887, %v3886
      %v3889 = vrot.slane %v3813, 7
      %v3890 = vsel %vm511, %v3889, %v3805
      %v3891 = vrot.slane %v3821, 6
      %v3892 = vsel %vm514, %v3891, %v3890
      %v3893 = vrot.slane %v3829, 5
      %v3894 = vsel %vm517, %v3893, %v3892
      %v3895 = vrot.slane %v3837, 4
      %v3896 = vsel %vm520, %v3895, %v3894
      %v3897 = vrot.slane %v3845, 3
      %v3898 = vsel %vm523, %v3897, %v3896
      %v3899 = vrot.slane %v3814, 7
      %v3900 = vsel %vm511, %v3899, %v3806
      %v3901 = vrot.slane %v3822, 6
      %v3902 = vsel %vm514, %v3901, %v3900
      %v3903 = vrot.slane %v3830, 5
      %v3904 = vsel %vm517, %v3903, %v3902
      %v3905 = vrot.slane %v3838, 4
      %v3906 = vsel %vm520, %v3905, %v3904
      %v3907 = vrot.slane %v3846, 3
      %v3908 = vsel %vm523, %v3907, %v3906
      %v3909 = vrot.slane %v3815, 7
      %v3910 = vsel %vm511, %v3909, %v3807
      %v3911 = vrot.slane %v3823, 6
      %v3912 = vsel %vm514, %v3911, %v3910
      %v3913 = vrot.slane %v3831, 5
      %v3914 = vsel %vm517, %v3913, %v3912
      %v3915 = vrot.slane %v3839, 4
      %v3916 = vsel %vm520, %v3915, %v3914
      %v3917 = vrot.slane %v3847, 3
      %v3918 = vsel %vm523, %v3917, %v3916
      %v3919 = vrot.slane %v3816, 7
      %v3920 = vsel %vm511, %v3919, %v3808
      %v3921 = vrot.slane %v3824, 6
      %v3922 = vsel %vm514, %v3921, %v3920
      %v3923 = vrot.slane %v3832, 5
      %v3924 = vsel %vm517, %v3923, %v3922
      %v3925 = vrot.slane %v3840, 4
      %v3926 = vsel %vm520, %v3925, %v3924
      %v3927 = vrot.slane %v3848, 3
      %v3928 = vsel %vm523, %v3927, %v3926
      %v3929 = vpack.c.b16 %v3858, %v3858
      %v3930 = vpack.c.b16 %v3868, %v3868
      %v3931 = vpack.c.b16 %v3878, %v3878
      %v3932 = vpack.c.b16 %v3888, %v3888
      %v3933 = vpack.c.b16 %v3898, %v3898
      %v3934 = vpack.c.b16 %v3908, %v3908
      %v3935 = vpack.c.b16 %v3918, %v3918
      %v3936 = vpack.c.b16 %v3928, %v3928
      %v4201 = vunpack.c.l.b16 %v3497
      %v4202 = vunpack.c.h.b16 %v3497
      %v4203 = vunpack.c.l.b16 %v3498
      %v4204 = vunpack.c.l.b16 %v3499
      %v4205 = vunpack.c.h.b16 %v3499
      %v4206 = vunpack.c.l.b16 %v3500
      %v4207 = vunpack.c.l.b16 %v3501
      %v4208 = vunpack.c.h.b16 %v3501
      %v4209 = vunpack.c.l.b16 %v3502
      %v4210 = vunpack.c.l.b16 %v3503
      %v4211 = vunpack.c.h.b16 %v3503
      %v4212 = vunpack.c.l.b16 %v3504
      %v4213 = vunpack.c.l.b16 %v3505
      %v4214 = vunpack.c.h.b16 %v3505
      %v4215 = vunpack.c.l.b16 %v3506
      %v4216 = vunpack.c.l.b16 %v3507
      %v4217 = vunpack.c.h.b16 %v3507
      %v4218 = vunpack.c.l.b16 %v3508
      %v4219 = vunpack.c.l.b16 %v3509
      %v4220 = vunpack.c.h.b16 %v3509
      %v4221 = vunpack.c.l.b16 %v3510
      %v4222 = vunpack.c.l.b16 %v3511
      %v4223 = vunpack.c.h.b16 %v3511
      %v4224 = vunpack.c.l.b16 %v3512
      %v4225 = vunpack.c.l.b16 %v3513
      %v4226 = vunpack.c.h.b16 %v3513
      %v4227 = vunpack.c.l.b16 %v3514
      %v4228 = vunpack.c.l.b16 %v3515
      %v4229 = vunpack.c.h.b16 %v3515
      %v4230 = vunpack.c.l.b16 %v3516
      %v4231 = vunpack.c.l.b16 %v3517
      %v4232 = vunpack.c.h.b16 %v3517
      %v4233 = vunpack.c.l.b16 %v3518
      %v4234 = vunpack.c.l.b16 %v3519
      %v4235 = vunpack.c.h.b16 %v3519
      %v4236 = vunpack.c.l.b16 %v3520
      %v4237 = vunpack.c.l.b16 %v3521
      %v4238 = vunpack.c.h.b16 %v3521
      %v4239 = vunpack.c.l.b16 %v3522
      %v4240 = vunpack.c.l.b16 %v3523
      %v4241 = vunpack.c.h.b16 %v3523
      %v4242 = vunpack.c.l.b16 %v3524
      %v4243 = vunpack.c.l.b16 %v3525
      %v4244 = vunpack.c.h.b16 %v3525
      %v4245 = vunpack.c.l.b16 %v3526
      %v4246 = vunpack.c.l.b16 %v3527
      %v4247 = vunpack.c.h.b16 %v3527
      %v4248 = vunpack.c.l.b16 %v3528
      %v4249 = vunpack.c.l.b16 %v3529
      %v4250 = vunpack.c.h.b16 %v3529
      %v4251 = vunpack.c.l.b16 %v3530
      %v4252 = vunpack.c.l.b16 %v3531
      %v4253 = vunpack.c.h.b16 %v3531
      %v4254 = vunpack.c.l.b16 %v3532
      %v4255 = vunpack.c.l.b16 %v3533
      %v4256 = vunpack.c.h.b16 %v3533
      %v4257 = vunpack.c.l.b16 %v3534
      %v4258 = vunpack.c.l.b16 %v3535
      %v4259 = vunpack.c.h.b16 %v3535
      %v4260 = vunpack.c.l.b16 %v3536
      %v4261 = vunpack.c.l.b16 %v3537
      %v4262 = vunpack.c.h.b16 %v3537
      %v4263 = vunpack.c.l.b16 %v3538
      %v4264 = vunpack.c.l.b16 %v3539
      %v4265 = vunpack.c.h.b16 %v3539
      %v4266 = vunpack.c.l.b16 %v3540
      %v4267 = vunpack.c.l.b16 %v3541
      %v4268 = vunpack.c.h.b16 %v3541
      %v4269 = vunpack.c.l.b16 %v3542
      %v4270 = vunpack.c.l.b16 %v3543
      %v4271 = vunpack.c.h.b16 %v3543
      %v4272 = vunpack.c.l.b16 %v3544
      %v4273 = vunpack.c.l.b16 %v3545
      %v4274 = vunpack.c.h.b16 %v3545
      %v4275 = vunpack.c.l.b16 %v3546
      %v4276 = vunpack.c.l.b16 %v3547
      %v4277 = vunpack.c.h.b16 %v3547
      %v4278 = vunpack.c.l.b16 %v3548
      %v4279 = vunpack.c.l.b16 %v3549
      %v4280 = vunpack.c.h.b16 %v3549
      %v4281 = vunpack.c.l.b16 %v3550
      %v4282 = vunpack.c.l.b16 %v3551
      %v4283 = vunpack.c.h.b16 %v3551
      %v4284 = vunpack.c.l.b16 %v3552
      %v4285 = vunpack.c.l.b16 %v3553
      %v4286 = vunpack.c.h.b16 %v3553
      %v4287 = vunpack.c.l.b16 %v3554
      %v4288 = vunpack.c.l.b16 %v3555
      %v4289 = vunpack.c.h.b16 %v3555
      %v4290 = vunpack.c.l.b16 %v3556
      %v4291 = vunpack.c.l.b16 %v3557
      %v4292 = vunpack.c.h.b16 %v3557
      %v4293 = vunpack.c.l.b16 %v3558
      %v4294 = vunpack.c.l.b16 %v3559
      %v4295 = vunpack.c.h.b16 %v3559
      %v4296 = vunpack.c.l.b16 %v3560
      %v4297 = vunpack.c.l.b16 %v3561
      %v4298 = vunpack.c.h.b16 %v3561
      %v4299 = vunpack.c.l.b16 %v3562
      %v4300 = vunpack.c.l.b16 %v3563
      %v4301 = vunpack.c.h.b16 %v3563
      %v4302 = vunpack.c.l.b16 %v3564
      %v4303 = vunpack.c.l.b16 %v3565
      %v4304 = vunpack.c.h.b16 %v3565
      %v4305 = vunpack.c.l.b16 %v3566
      %v4306 = vunpack.c.l.b16 %v3567
      %v4307 = vunpack.c.h.b16 %v3567
      %v4308 = vunpack.c.l.b16 %v3568
      %v4309 = vunpack.c.l.b16 %v3569
      %v4310 = vunpack.c.h.b16 %v3569
      %v4311 = vunpack.c.l.b16 %v3570
      %v4312 = vunpack.c.l.b16 %v3571
      %v4313 = vunpack.c.h.b16 %v3571
      %v4314 = vunpack.c.l.b16 %v3572
      %v4315 = vunpack.c.l.b16 %v3573
      %v4316 = vunpack.c.h.b16 %v3573
      %v4317 = vunpack.c.l.b16 %v3574
      %v4318 = vunpack.c.l.b16 %v3575
      %v4319 = vunpack.c.h.b16 %v3575
      %v4320 = vunpack.c.l.b16 %v3576
      %v4321 = vunpack.c.l.b16 %v3577
      %v4322 = vunpack.c.h.b16 %v3577
      %v4323 = vunpack.c.l.b16 %v3578
      %v4324 = vunpack.c.l.b16 %v3579
      %v4325 = vunpack.c.h.b16 %v3579
      %v4326 = vunpack.c.l.b16 %v3580
      %v4327 = vunpack.c.l.b16 %v3581
      %v4328 = vunpack.c.h.b16 %v3581
      %v4329 = vunpack.c.l.b16 %v3582
      %v4330 = vunpack.c.l.b16 %v3583
      %v4331 = vunpack.c.h.b16 %v3583
      %v4332 = vunpack.c.l.b16 %v3584
      %v4333 = vunpack.c.l.b16 %v3585
      %v4334 = vunpack.c.h.b16 %v3585
      %v4335 = vunpack.c.l.b16 %v3586
      %v4336 = vunpack.c.l.b16 %v3587
      %v4337 = vunpack.c.h.b16 %v3587
      %v4338 = vunpack.c.l.b16 %v3588
      %v4339 = vunpack.c.l.b16 %v3589
      %v4340 = vunpack.c.h.b16 %v3589
      %v4341 = vunpack.c.l.b16 %v3590
      %v4342 = vunpack.c.l.b16 %v3591
      %v4343 = vunpack.c.h.b16 %v3591
      %v4344 = vunpack.c.l.b16 %v3592
      %v4345 = vunpack.c.l.b16 %v3593
      %v4346 = vunpack.c.h.b16 %v3593
      %v4347 = vunpack.c.l.b16 %v3594
      %v4348 = vunpack.c.l.b16 %v3595
      %v4349 = vunpack.c.h.b16 %v3595
      %v4350 = vunpack.c.l.b16 %v3596
      %v4351 = vunpack.c.l.b16 %v3597
      %v4352 = vunpack.c.h.b16 %v3597
      %v4353 = vunpack.c.l.b16 %v3598
      %v4354 = vunpack.c.l.b16 %v3599
      %v4355 = vunpack.c.h.b16 %v3599
      %v4356 = vunpack.c.l.b16 %v3600
      %v4357 = vunpack.c.l.b16 %v3601
      %v4358 = vunpack.c.h.b16 %v3601
      %v4359 = vunpack.c.l.b16 %v3602
      %v4360 = vunpack.c.l.b16 %v3603
      %v4361 = vunpack.c.h.b16 %v3603
      %v4362 = vunpack.c.l.b16 %v3604
      %v4363 = vunpack.c.l.b16 %v3605
      %v4364 = vunpack.c.h.b16 %v3605
      %v4365 = vunpack.c.l.b16 %v3606
      %v4366 = vunpack.c.l.b16 %v3607
      %v4367 = vunpack.c.h.b16 %v3607
      %v4368 = vunpack.c.l.b16 %v3608
      %v4369 = vunpack.c.l.b16 %v3609
      %v4370 = vunpack.c.h.b16 %v3609
      %v4371 = vunpack.c.l.b16 %v3610
      %v4372 = vunpack.c.l.b16 %v3611
      %v4373 = vunpack.c.h.b16 %v3611
      %v4374 = vunpack.c.l.b16 %v3612
      %v4375 = vunpack.c.l.b16 %v3613
      %v4376 = vunpack.c.h.b16 %v3613
      %v4377 = vunpack.c.l.b16 %v3614
      %v4378 = vunpack.c.l.b16 %v3615
      %v4379 = vunpack.c.h.b16 %v3615
      %v4380 = vunpack.c.l.b16 %v3616
      %v4381 = vunpack.c.l.b16 %v3617
      %v4382 = vunpack.c.h.b16 %v3617
      %v4383 = vunpack.c.l.b16 %v3618
      %v4384 = vunpack.c.l.b16 %v3619
      %v4385 = vunpack.c.h.b16 %v3619
      %v4386 = vunpack.c.l.b16 %v3620
      %v4387 = vunpack.c.l.b16 %v3621
      %v4388 = vunpack.c.h.b16 %v3621
      %v4389 = vunpack.c.l.b16 %v3622
      %v4390 = vunpack.c.l.b16 %v3623
      %v4391 = vunpack.c.h.b16 %v3623
      %v4392 = vunpack.c.l.b16 %v3624
      %v4393 = vunpack.c.l.b16 %v3625
      %v4394 = vunpack.c.h.b16 %v3625
      %v4395 = vunpack.c.l.b16 %v3626
      %v4396 = vunpack.c.l.b16 %v3627
      %v4397 = vunpack.c.h.b16 %v3627
      %v4398 = vunpack.c.l.b16 %v3628
      %v4399 = vunpack.c.l.b16 %v3629
      %v4400 = vunpack.c.h.b16 %v3629
      %v4401 = vunpack.c.l.b16 %v3630
      %v4402 = vunpack.c.l.b16 %v3631
      %v4403 = vunpack.c.h.b16 %v3631
      %v4404 = vunpack.c.l.b16 %v3632
      %v4405 = vunpack.c.l.b16 %v3633
      %v4406 = vunpack.c.h.b16 %v3633
      %v4407 = vunpack.c.l.b16 %v3634
      %v4408 = vunpack.c.l.b16 %v3635
      %v4409 = vunpack.c.h.b16 %v3635
      %v4410 = vunpack.c.l.b16 %v3636
      %v4411 = vunpack.c.l.b16 %v3637
      %v4412 = vunpack.c.h.b16 %v3637
      %v4413 = vunpack.c.l.b16 %v3638
      %v4414 = vunpack.c.l.b16 %v3639
      %v4415 = vunpack.c.h.b16 %v3639
      %v4416 = vunpack.c.l.b16 %v3640
      %v4417 = vunpack.c.l.b16 %v3641
      %v4418 = vunpack.c.h.b16 %v3641
      %v4419 = vunpack.c.l.b16 %v3642
      %v4420 = vunpack.c.l.b16 %v3643
      %v4421 = vunpack.c.h.b16 %v3643
      %v4422 = vunpack.c.l.b16 %v3644
      %v4423 = vunpack.c.l.b16 %v3645
      %v4424 = vunpack.c.h.b16 %v3645
      %v4425 = vunpack.c.l.b16 %v3646
      %v4426 = vunpack.c.l.b16 %v3647
      %v4427 = vunpack.c.h.b16 %v3647
      %v4428 = vunpack.c.l.b16 %v3648
      %v4429 = vunpack.c.l.b16 %v3649
      %v4430 = vunpack.c.h.b16 %v3649
      %v4431 = vunpack.c.l.b16 %v3650
      %v4432 = vunpack.c.l.b16 %v3651
      %v4433 = vunpack.c.h.b16 %v3651
      %v4434 = vunpack.c.l.b16 %v3652
      %v4435 = vunpack.c.l.b16 %v3653
      %v4436 = vunpack.c.h.b16 %v3653
      %v4437 = vunpack.c.l.b16 %v3654
      %v4438 = vunpack.c.l.b16 %v3655
      %v4439 = vunpack.c.h.b16 %v3655
      %v4440 = vunpack.c.l.b16 %v3656
      %v4441 = vunpack.c.l.b16 %v3657
      %v4442 = vunpack.c.h.b16 %v3657
      %v4443 = vunpack.c.l.b16 %v3658
      %v4444 = vunpack.c.l.b16 %v3659
      %v4445 = vunpack.c.h.b16 %v3659
      %v4446 = vunpack.c.l.b16 %v3660
      %v4447 = vunpack.c.l.b16 %v3661
      %v4448 = vunpack.c.h.b16 %v3661
      %v4449 = vunpack.c.l.b16 %v3662
      %v4450 = vunpack.c.l.b16 %v3663
      %v4451 = vunpack.c.h.b16 %v3663
      %v4452 = vunpack.c.l.b16 %v3664
      %v4453 = vunpack.c.l.b16 %v3665
      %v4454 = vunpack.c.h.b16 %v3665
      %v4455 = vunpack.c.l.b16 %v3666
      %v4456 = vunpack.c.l.b16 %v3667
      %v4457 = vunpack.c.h.b16 %v3667
      %v4458 = vunpack.c.l.b16 %v3668
      %v4459 = vunpack.c.l.b16 %v3669
      %v4460 = vunpack.c.h.b16 %v3669
      %v4461 = vunpack.c.l.b16 %v3670
      %v4462 = vunpack.c.l.b16 %v3671
      %v4463 = vunpack.c.h.b16 %v3671
      %v4464 = vunpack.c.l.b16 %v3672
      %v4465 = vunpack.c.l.b16 %v3673
      %v4466 = vunpack.c.h.b16 %v3673
      %v4467 = vunpack.c.l.b16 %v3674
      %v4468 = vunpack.c.l.b16 %v3675
      %v4469 = vunpack.c.h.b16 %v3675
      %v4470 = vunpack.c.l.b16 %v3676
      %v4471 = vunpack.c.l.b16 %v3677
      %v4472 = vunpack.c.h.b16 %v3677
      %v4473 = vunpack.c.l.b16 %v3678
      %v4474 = vunpack.c.l.b16 %v3679
      %v4475 = vunpack.c.h.b16 %v3679
      %v4476 = vunpack.c.l.b16 %v3680
      %v4477 = vunpack.c.l.b16 %v3681
      %v4478 = vunpack.c.h.b16 %v3681
      %v4479 = vunpack.c.l.b16 %v3682
      %v4480 = vunpack.c.l.b16 %v3683
      %v4481 = vunpack.c.h.b16 %v3683
      %v4482 = vunpack.c.l.b16 %v3684
      %v4483 = vunpack.c.l.b16 %v3685
      %v4484 = vunpack.c.h.b16 %v3685
      %v4485 = vunpack.c.l.b16 %v3686
      %v4486 = vunpack.c.l.b16 %v3687
      %v4487 = vunpack.c.h.b16 %v3687
      %v4488 = vunpack.c.l.b16 %v3688
      %v4489 = vunpack.c.l.b16 %v3689
      %v4490 = vunpack.c.h.b16 %v3689
      %v4491 = vunpack.c.l.b16 %v3690
      %v4492 = vunpack.c.l.b16 %v3691
      %v4493 = vunpack.c.h.b16 %v3691
      %v4494 = vunpack.c.l.b16 %v3692
      %v4495 = vunpack.c.l.b16 %v3693
      %v4496 = vunpack.c.h.b16 %v3693
      %v4497 = vunpack.c.l.b16 %v3694
      %v4498 = vunpack.c.l.b16 %v3695
      %v4499 = vunpack.c.h.b16 %v3695
      %v4500 = vunpack.c.l.b16 %v3696
      %v4501 = vunpack.c.l.b16 %v3697
      %v4502 = vunpack.c.h.b16 %v3697
      %v4503 = vunpack.c.l.b16 %v3698
      %v4504 = vunpack.c.l.b16 %v3699
      %v4505 = vunpack.c.h.b16 %v3699
      %v4506 = vunpack.c.l.b16 %v3700
      %v4507 = vunpack.c.l.b16 %v3701
      %v4508 = vunpack.c.h.b16 %v3701
      %v4509 = vunpack.c.l.b16 %v3702
      %v4510 = vunpack.c.l.b16 %v3703
      %v4511 = vunpack.c.h.b16 %v3703
      %v4512 = vunpack.c.l.b16 %v3704
      %v4513 = vunpack.c.l.b16 %v3705
      %v4514 = vunpack.c.h.b16 %v3705
      %v4515 = vunpack.c.l.b16 %v3706
      %v4516 = vunpack.c.l.b16 %v3707
      %v4517 = vunpack.c.h.b16 %v3707
      %v4518 = vunpack.c.l.b16 %v3708
      %v4519 = vunpack.c.l.b16 %v3709
      %v4520 = vunpack.c.h.b16 %v3709
      %v4521 = vunpack.c.l.b16 %v3710
      %v4522 = vunpack.c.l.b16 %v3711
      %v4523 = vunpack.c.h.b16 %v3711
      %v4524 = vunpack.c.l.b16 %v3712
      %v4525 = vunpack.c.l.b16 %v3713
      %v4526 = vunpack.c.h.b16 %v3713
      %v4527 = vunpack.c.l.b16 %v3714
      %v4528 = vunpack.c.l.b16 %v3715
      %v4529 = vunpack.c.h.b16 %v3715
      %v4530 = vunpack.c.l.b16 %v3716
      %v4531 = vunpack.c.l.b16 %v3717
      %v4532 = vunpack.c.h.b16 %v3717
      %v4533 = vunpack.c.l.b16 %v3718
      %v4534 = vunpack.c.l.b16 %v3719
      %v4535 = vunpack.c.h.b16 %v3719
      %v4536 = vunpack.c.l.b16 %v3720
      %v4537 = vunpack.c.l.b16 %v3721
      %v4538 = vunpack.c.h.b16 %v3721
      %v4539 = vunpack.c.l.b16 %v3722
      %v4540 = vunpack.c.l.b16 %v3723
      %v4541 = vunpack.c.h.b16 %v3723
      %v4542 = vunpack.c.l.b16 %v3724
      %v4543 = vunpack.c.l.b16 %v3725
      %v4544 = vunpack.c.h.b16 %v3725
      %v4545 = vunpack.c.l.b16 %v3726
      %v4546 = vunpack.c.l.b16 %v3727
      %v4547 = vunpack.c.h.b16 %v3727
      %v4548 = vunpack.c.l.b16 %v3728
      %v4549 = vunpack.c.l.b16 %v3729
      %v4550 = vunpack.c.h.b16 %v3729
      %v4551 = vunpack.c.l.b16 %v3730
      %v4552 = vunpack.c.l.b16 %v3731
      %v4553 = vunpack.c.h.b16 %v3731
      %v4554 = vunpack.c.l.b16 %v3732
      %v4555 = vunpack.c.l.b16 %v3733
      %v4556 = vunpack.c.h.b16 %v3733
      %v4557 = vunpack.c.l.b16 %v3734
      %v4558 = vunpack.c.l.b16 %v3735
      %v4559 = vunpack.c.h.b16 %v3735
      %v4560 = vunpack.c.l.b16 %v3736
      %v4561 = vunpack.c.l.b16 %v3737
      %v4562 = vunpack.c.h.b16 %v3737
      %v4563 = vunpack.c.l.b16 %v3738
      %v4564 = vunpack.c.l.b16 %v3739
      %v4565 = vunpack.c.h.b16 %v3739
      %v4566 = vunpack.c.l.b16 %v3740
      %v4567 = vunpack.c.l.b16 %v3741
      %v4568 = vunpack.c.h.b16 %v3741
      %v4569 = vunpack.c.l.b16 %v3742
      %v4570 = vunpack.c.l.b16 %v3743
      %v4571 = vunpack.c.h.b16 %v3743
      %v4572 = vunpack.c.l.b16 %v3744
      %v4573 = vunpack.c.l.b16 %v3745
      %v4574 = vunpack.c.h.b16 %v3745
      %v4575 = vunpack.c.l.b16 %v3746
      %v4576 = vunpack.c.l.b16 %v3747
      %v4577 = vunpack.c.h.b16 %v3747
      %v4578 = vunpack.c.l.b16 %v3748
      %v4579 = vunpack.c.l.b16 %v3749
      %v4580 = vunpack.c.h.b16 %v3749
      %v4581 = vunpack.c.l.b16 %v3750
      %v4582 = vunpack.c.l.b16 %v3751
      %v4583 = vunpack.c.h.b16 %v3751
      %v4584 = vunpack.c.l.b16 %v3752
      %v4585 = vpack.c.b16 %v4204, %v4201
      %v4586 = vpack.c.b16 %v4205, %v4202
      %v4587 = vpack.c.b16 %v4206, %v4203
      %v4588 = vpack.c.b16 %v4210, %v4207
      %v4589 = vpack.c.b16 %v4211, %v4208
      %v4590 = vpack.c.b16 %v4212, %v4209
      %v4591 = vpack.c.b16 %v4216, %v4213
      %v4592 = vpack.c.b16 %v4217, %v4214
      %v4593 = vpack.c.b16 %v4218, %v4215
      %v4594 = vpack.c.b16 %v4222, %v4219
      %v4595 = vpack.c.b16 %v4223, %v4220
      %v4596 = vpack.c.b16 %v4224, %v4221
      %v4597 = vpack.c.b16 %v4228, %v4225
      %v4598 = vpack.c.b16 %v4229, %v4226
      %v4599 = vpack.c.b16 %v4230, %v4227
      %v4600 = vpack.c.b16 %v4234, %v4231
      %v4601 = vpack.c.b16 %v4235, %v4232
      %v4602 = vpack.c.b16 %v4236, %v4233
      %v4603 = vpack.c.b16 %v4240, %v4237
      %v4604 = vpack.c.b16 %v4241, %v4238
      %v4605 = vpack.c.b16 %v4242, %v4239
      %v4606 = vpack.c.b16 %v4246, %v4243
      %v4607 = vpack.c.b16 %v4247, %v4244
      %v4608 = vpack.c.b16 %v4248, %v4245
      %v4609 = vpack.c.b16 %v4252, %v4249
      %v4610 = vpack.c.b16 %v4253, %v4250
      %v4611 = vpack.c.b16 %v4254, %v4251
      %v4612 = vpack.c.b16 %v4258, %v4255
      %v4613 = vpack.c.b16 %v4259, %v4256
      %v4614 = vpack.c.b16 %v4260, %v4257
      %v4615 = vpack.c.b16 %v4264, %v4261
      %v4616 = vpack.c.b16 %v4265, %v4262
      %v4617 = vpack.c.b16 %v4266, %v4263
      %v4618 = vpack.c.b16 %v4270, %v4267
      %v4619 = vpack.c.b16 %v4271, %v4268
      %v4620 = vpack.c.b16 %v4272, %v4269
      %v4621 = vpack.c.b16 %v4276, %v4273
      %v4622 = vpack.c.b16 %v4277, %v4274
      %v4623 = vpack.c.b16 %v4278, %v4275
      %v4624 = vpack.c.b16 %v4282, %v4279
      %v4625 = vpack.c.b16 %v4283, %v4280
      %v4626 = vpack.c.b16 %v4284, %v4281
      %v4627 = vpack.c.b16 %v4288, %v4285
      %v4628 = vpack.c.b16 %v4289, %v4286
      %v4629 = vpack.c.b16 %v4290, %v4287
      %v4630 = vpack.c.b16 %v4294, %v4291
      %v4631 = vpack.c.b16 %v4295, %v4292
      %v4632 = vpack.c.b16 %v4296, %v4293
      %v4633 = vpack.c.b16 %v4300, %v4297
      %v4634 = vpack.c.b16 %v4301, %v4298
      %v4635 = vpack.c.b16 %v4302, %v4299
      %v4636 = vpack.c.b16 %v4306, %v4303
      %v4637 = vpack.c.b16 %v4307, %v4304
      %v4638 = vpack.c.b16 %v4308, %v4305
      %v4639 = vpack.c.b16 %v4312, %v4309
      %v4640 = vpack.c.b16 %v4313, %v4310
      %v4641 = vpack.c.b16 %v4314, %v4311
      %v4642 = vpack.c.b16 %v4318, %v4315
      %v4643 = vpack.c.b16 %v4319, %v4316
      %v4644 = vpack.c.b16 %v4320, %v4317
      %v4645 = vpack.c.b16 %v4324, %v4321
      %v4646 = vpack.c.b16 %v4325, %v4322
      %v4647 = vpack.c.b16 %v4326, %v4323
      %v4648 = vpack.c.b16 %v4330, %v4327
      %v4649 = vpack.c.b16 %v4331, %v4328
      %v4650 = vpack.c.b16 %v4332, %v4329
      %v4651 = vpack.c.b16 %v4336, %v4333
      %v4652 = vpack.c.b16 %v4337, %v4334
      %v4653 = vpack.c.b16 %v4338, %v4335
      %v4654 = vpack.c.b16 %v4342, %v4339
      %v4655 = vpack.c.b16 %v4343, %v4340
      %v4656 = vpack.c.b16 %v4344, %v4341
      %v4657 = vpack.c.b16 %v4348, %v4345
      %v4658 = vpack.c.b16 %v4349, %v4346
      %v4659 = vpack.c.b16 %v4350, %v4347
      %v4660 = vpack.c.b16 %v4354, %v4351
      %v4661 = vpack.c.b16 %v4355, %v4352
      %v4662 = vpack.c.b16 %v4356, %v4353
      %v4663 = vpack.c.b16 %v4360, %v4357
      %v4664 = vpack.c.b16 %v4361, %v4358
      %v4665 = vpack.c.b16 %v4362, %v4359
      %v4666 = vpack.c.b16 %v4366, %v4363
      %v4667 = vpack.c.b16 %v4367, %v4364
      %v4668 = vpack.c.b16 %v4368, %v4365
      %v4669 = vpack.c.b16 %v4372, %v4369
      %v4670 = vpack.c.b16 %v4373, %v4370
      %v4671 = vpack.c.b16 %v4374, %v4371
      %v4672 = vpack.c.b16 %v4378, %v4375
      %v4673 = vpack.c.b16 %v4379, %v4376
      %v4674 = vpack.c.b16 %v4380, %v4377
      %v4675 = vpack.c.b16 %v4384, %v4381
      %v4676 = vpack.c.b16 %v4385, %v4382
      %v4677 = vpack.c.b16 %v4386, %v4383
      %v4678 = vpack.c.b16 %v4390, %v4387
      %v4679 = vpack.c.b16 %v4391, %v4388
      %v4680 = vpack.c.b16 %v4392, %v4389
      %v4681 = vpack.c.b16 %v4396, %v4393
      %v4682 = vpack.c.b16 %v4397, %v4394
      %v4683 = vpack.c.b16 %v4398, %v4395
      %v4684 = vpack.c.b16 %v4402, %v4399
      %v4685 = vpack.c.b16 %v4403, %v4400
      %v4686 = vpack.c.b16 %v4404, %v4401
      %v4687 = vpack.c.b16 %v4408, %v4405
      %v4688 = vpack.c.b16 %v4409, %v4406
      %v4689 = vpack.c.b16 %v4410, %v4407
      %v4690 = vpack.c.b16 %v4414, %v4411
      %v4691 = vpack.c.b16 %v4415, %v4412
      %v4692 = vpack.c.b16 %v4416, %v4413
      %v4693 = vpack.c.b16 %v4420, %v4417
      %v4694 = vpack.c.b16 %v4421, %v4418
      %v4695 = vpack.c.b16 %v4422, %v4419
      %v4696 = vpack.c.b16 %v4426, %v4423
      %v4697 = vpack.c.b16 %v4427, %v4424
      %v4698 = vpack.c.b16 %v4428, %v4425
      %v4699 = vpack.c.b16 %v4432, %v4429
      %v4700 = vpack.c.b16 %v4433, %v4430
      %v4701 = vpack.c.b16 %v4434, %v4431
      %v4702 = vpack.c.b16 %v4438, %v4435
      %v4703 = vpack.c.b16 %v4439, %v4436
      %v4704 = vpack.c.b16 %v4440, %v4437
      %v4705 = vpack.c.b16 %v4444, %v4441
      %v4706 = vpack.c.b16 %v4445, %v4442
      %v4707 = vpack.c.b16 %v4446, %v4443
      %v4708 = vpack.c.b16 %v4450, %v4447
      %v4709 = vpack.c.b16 %v4451, %v4448
      %v4710 = vpack.c.b16 %v4452, %v4449
      %v4711 = vpack.c.b16 %v4456, %v4453
      %v4712 = vpack.c.b16 %v4457, %v4454
      %v4713 = vpack.c.b16 %v4458, %v4455
      %v4714 = vpack.c.b16 %v4462, %v4459
      %v4715 = vpack.c.b16 %v4463, %v4460
      %v4716 = vpack.c.b16 %v4464, %v4461
      %v4717 = vpack.c.b16 %v4468, %v4465
      %v4718 = vpack.c.b16 %v4469, %v4466
      %v4719 = vpack.c.b16 %v4470, %v4467
      %v4720 = vpack.c.b16 %v4474, %v4471
      %v4721 = vpack.c.b16 %v4475, %v4472
      %v4722 = vpack.c.b16 %v4476, %v4473
      %v4723 = vpack.c.b16 %v4480, %v4477
      %v4724 = vpack.c.b16 %v4481, %v4478
      %v4725 = vpack.c.b16 %v4482, %v4479
      %v4726 = vpack.c.b16 %v4486, %v4483
      %v4727 = vpack.c.b16 %v4487, %v4484
      %v4728 = vpack.c.b16 %v4488, %v4485
      %v4729 = vpack.c.b16 %v4492, %v4489
      %v4730 = vpack.c.b16 %v4493, %v4490
      %v4731 = vpack.c.b16 %v4494, %v4491
      %v4732 = vpack.c.b16 %v4498, %v4495
      %v4733 = vpack.c.b16 %v4499, %v4496
      %v4734 = vpack.c.b16 %v4500, %v4497
      %v4735 = vpack.c.b16 %v4504, %v4501
      %v4736 = vpack.c.b16 %v4505, %v4502
      %v4737 = vpack.c.b16 %v4506, %v4503
      %v4738 = vpack.c.b16 %v4510, %v4507
      %v4739 = vpack.c.b16 %v4511, %v4508
      %v4740 = vpack.c.b16 %v4512, %v4509
      %v4741 = vpack.c.b16 %v4516, %v4513
      %v4742 = vpack.c.b16 %v4517, %v4514
      %v4743 = vpack.c.b16 %v4518, %v4515
      %v4744 = vpack.c.b16 %v4522, %v4519
      %v4745 = vpack.c.b16 %v4523, %v4520
      %v4746 = vpack.c.b16 %v4524, %v4521
      %v4747 = vpack.c.b16 %v4528, %v4525
      %v4748 = vpack.c.b16 %v4529, %v4526
      %v4749 = vpack.c.b16 %v4530, %v4527
      %v4750 = vpack.c.b16 %v4534, %v4531
      %v4751 = vpack.c.b16 %v4535, %v4532
      %v4752 = vpack.c.b16 %v4536, %v4533
      %v4753 = vpack.c.b16 %v4540, %v4537
      %v4754 = vpack.c.b16 %v4541, %v4538
      %v4755 = vpack.c.b16 %v4542, %v4539
      %v4756 = vpack.c.b16 %v4546, %v4543
      %v4757 = vpack.c.b16 %v4547, %v4544
      %v4758 = vpack.c.b16 %v4548, %v4545
      %v4759 = vpack.c.b16 %v4552, %v4549
      %v4760 = vpack.c.b16 %v4553, %v4550
      %v4761 = vpack.c.b16 %v4554, %v4551
      %v4762 = vpack.c.b16 %v4558, %v4555
      %v4763 = vpack.c.b16 %v4559, %v4556
      %v4764 = vpack.c.b16 %v4560, %v4557
      %v4765 = vpack.c.b16 %v4564, %v4561
      %v4766 = vpack.c.b16 %v4565, %v4562
      %v4767 = vpack.c.b16 %v4566, %v4563
      %v4768 = vpack.c.b16 %v4570, %v4567
      %v4769 = vpack.c.b16 %v4571, %v4568
      %v4770 = vpack.c.b16 %v4572, %v4569
      %v4771 = vpack.c.b16 %v4576, %v4573
      %v4772 = vpack.c.b16 %v4577, %v4574
      %v4773 = vpack.c.b16 %v4578, %v4575
      %v4774 = vpack.c.b16 %v4582, %v4579
      %v4775 = vpack.c.b16 %v4583, %v4580
      %v4776 = vpack.c.b16 %v4584, %v4581
      %4969 = vmatpush.bf16.msra.mxu0 %v4606
      %4970 = vmatpush.bf16.msra.mxu0 %v4603
      %4971 = vmatpush.bf16.msra.mxu0 %v4600
      %4972 = vmatpush.bf16.msra.mxu0 %v4597
      %4973 = vmatpush.bf16.msra.mxu0 %v4594
      %4974 = vmatpush.bf16.msra.mxu0 %v4591
      %4975 = vmatpush.bf16.msra.mxu0 %v4588
      %4976 = vmatpush.bf16.msra.mxu0 %v4585
      %4977 = vmatmul.bf16.gmra.mxu0 %v3929
      %v4978 = vpop.f32.mrf.mxu0
      %v4979 = vadd.f32 0.0, %v4978
      %v4980 = vpop.f32.mrf.mxu0
      %4981 = vdwg.mxu0
      %4982 = vmatpush.bf16.msra.mxu0 %v4630
      %4983 = vmatpush.bf16.msra.mxu0 %v4627
      %4984 = vmatpush.bf16.msra.mxu0 %v4624
      %4985 = vmatpush.bf16.msra.mxu0 %v4621
      %4986 = vmatpush.bf16.msra.mxu0 %v4618
      %4987 = vmatpush.bf16.msra.mxu0 %v4615
      %4988 = vmatpush.bf16.msra.mxu0 %v4612
      %4989 = vmatpush.bf16.msra.mxu0 %v4609
      %4990 = vmatmul.bf16.gmra.mxu0 %v3930
      %v4991 = vpop.f32.mrf.mxu0
      %v4992 = vadd.f32 %v4979, %v4991
      %v4993 = vpop.f32.mrf.mxu0
      %4994 = vdwg.mxu0
      %4995 = vmatpush.bf16.msra.mxu0 %v4654
      %4996 = vmatpush.bf16.msra.mxu0 %v4651
      %4997 = vmatpush.bf16.msra.mxu0 %v4648
      %4998 = vmatpush.bf16.msra.mxu0 %v4645
      %4999 = vmatpush.bf16.msra.mxu0 %v4642
      %5000 = vmatpush.bf16.msra.mxu0 %v4639
      %5001 = vmatpush.bf16.msra.mxu0 %v4636
      %5002 = vmatpush.bf16.msra.mxu0 %v4633
      %5003 = vmatmul.bf16.gmra.mxu0 %v3931
      %v5004 = vpop.f32.mrf.mxu0
      %v5005 = vadd.f32 %v4992, %v5004
      %v5006 = vpop.f32.mrf.mxu0
      %5007 = vdwg.mxu0
      %5008 = vmatpush.bf16.msra.mxu0 %v4678
      %5009 = vmatpush.bf16.msra.mxu0 %v4675
      %5010 = vmatpush.bf16.msra.mxu0 %v4672
      %5011 = vmatpush.bf16.msra.mxu0 %v4669
      %5012 = vmatpush.bf16.msra.mxu0 %v4666
      %5013 = vmatpush.bf16.msra.mxu0 %v4663
      %5014 = vmatpush.bf16.msra.mxu0 %v4660
      %5015 = vmatpush.bf16.msra.mxu0 %v4657
      %5016 = vmatmul.bf16.gmra.mxu0 %v3932
      %v5017 = vpop.f32.mrf.mxu0
      %v5018 = vadd.f32 %v5005, %v5017
      %v5019 = vpop.f32.mrf.mxu0
      %5020 = vdwg.mxu0
      %5021 = vmatpush.bf16.msra.mxu0 %v4702
      %5022 = vmatpush.bf16.msra.mxu0 %v4699
      %5023 = vmatpush.bf16.msra.mxu0 %v4696
      %5024 = vmatpush.bf16.msra.mxu0 %v4693
      %5025 = vmatpush.bf16.msra.mxu0 %v4690
      %5026 = vmatpush.bf16.msra.mxu0 %v4687
      %5027 = vmatpush.bf16.msra.mxu0 %v4684
      %5028 = vmatpush.bf16.msra.mxu0 %v4681
      %5029 = vmatmul.bf16.gmra.mxu0 %v3933
      %v5030 = vpop.f32.mrf.mxu0
      %v5031 = vadd.f32 %v5018, %v5030
      %v5032 = vpop.f32.mrf.mxu0
      %5033 = vdwg.mxu0
      %5034 = vmatpush.bf16.msra.mxu0 %v4726
      %5035 = vmatpush.bf16.msra.mxu0 %v4723
      %5036 = vmatpush.bf16.msra.mxu0 %v4720
      %5037 = vmatpush.bf16.msra.mxu0 %v4717
      %5038 = vmatpush.bf16.msra.mxu0 %v4714
      %5039 = vmatpush.bf16.msra.mxu0 %v4711
      %5040 = vmatpush.bf16.msra.mxu0 %v4708
      %5041 = vmatpush.bf16.msra.mxu0 %v4705
      %5042 = vmatmul.bf16.gmra.mxu0 %v3934
      %v5043 = vpop.f32.mrf.mxu0
      %v5044 = vadd.f32 %v5031, %v5043
      %v5045 = vpop.f32.mrf.mxu0
      %5046 = vdwg.mxu0
      %5047 = vmatpush.bf16.msra.mxu0 %v4750
      %5048 = vmatpush.bf16.msra.mxu0 %v4747
      %5049 = vmatpush.bf16.msra.mxu0 %v4744
      %5050 = vmatpush.bf16.msra.mxu0 %v4741
      %5051 = vmatpush.bf16.msra.mxu0 %v4738
      %5052 = vmatpush.bf16.msra.mxu0 %v4735
      %5053 = vmatpush.bf16.msra.mxu0 %v4732
      %5054 = vmatpush.bf16.msra.mxu0 %v4729
      %5055 = vmatmul.bf16.gmra.mxu0 %v3935
      %v5056 = vpop.f32.mrf.mxu0
      %v5057 = vadd.f32 %v5044, %v5056
      %v5058 = vpop.f32.mrf.mxu0
      %5059 = vdwg.mxu0
      %5060 = vmatpush.bf16.msra.mxu0 %v4774
      %5061 = vmatpush.bf16.msra.mxu0 %v4771
      %5062 = vmatpush.bf16.msra.mxu0 %v4768
      %5063 = vmatpush.bf16.msra.mxu0 %v4765
      %5064 = vmatpush.bf16.msra.mxu0 %v4762
      %5065 = vmatpush.bf16.msra.mxu0 %v4759
      %5066 = vmatpush.bf16.msra.mxu0 %v4756
      %5067 = vmatpush.bf16.msra.mxu0 %v4753
      %5068 = vmatmul.bf16.gmra.mxu0 %v3936
      %v5069 = vpop.f32.mrf.mxu0
      %v5070 = vadd.f32 %v5057, %v5069
      %v5071 = vpop.f32.mrf.mxu0
      %5072 = vdwg.mxu0
      %5073 = vmatpush.bf16.msra.mxu0 %v4607
      %5074 = vmatpush.bf16.msra.mxu0 %v4604
      %5075 = vmatpush.bf16.msra.mxu0 %v4601
      %5076 = vmatpush.bf16.msra.mxu0 %v4598
      %5077 = vmatpush.bf16.msra.mxu0 %v4595
      %5078 = vmatpush.bf16.msra.mxu0 %v4592
      %5079 = vmatpush.bf16.msra.mxu0 %v4589
      %5080 = vmatpush.bf16.msra.mxu0 %v4586
      %5081 = vmatmul.bf16.gmra.mxu0 %v3929
      %v5082 = vpop.f32.mrf.mxu0
      %v5083 = vadd.f32 0.0, %v5082
      %v5084 = vpop.f32.mrf.mxu0
      %5085 = vdwg.mxu0
      %5086 = vmatpush.bf16.msra.mxu0 %v4631
      %5087 = vmatpush.bf16.msra.mxu0 %v4628
      %5088 = vmatpush.bf16.msra.mxu0 %v4625
      %5089 = vmatpush.bf16.msra.mxu0 %v4622
      %5090 = vmatpush.bf16.msra.mxu0 %v4619
      %5091 = vmatpush.bf16.msra.mxu0 %v4616
      %5092 = vmatpush.bf16.msra.mxu0 %v4613
      %5093 = vmatpush.bf16.msra.mxu0 %v4610
      %5094 = vmatmul.bf16.gmra.mxu0 %v3930
      %v5095 = vpop.f32.mrf.mxu0
      %v5096 = vadd.f32 %v5083, %v5095
      %v5097 = vpop.f32.mrf.mxu0
      %5098 = vdwg.mxu0
      %5099 = vmatpush.bf16.msra.mxu0 %v4655
      %5100 = vmatpush.bf16.msra.mxu0 %v4652
      %5101 = vmatpush.bf16.msra.mxu0 %v4649
      %5102 = vmatpush.bf16.msra.mxu0 %v4646
      %5103 = vmatpush.bf16.msra.mxu0 %v4643
      %5104 = vmatpush.bf16.msra.mxu0 %v4640
      %5105 = vmatpush.bf16.msra.mxu0 %v4637
      %5106 = vmatpush.bf16.msra.mxu0 %v4634
      %5107 = vmatmul.bf16.gmra.mxu0 %v3931
      %v5108 = vpop.f32.mrf.mxu0
      %v5109 = vadd.f32 %v5096, %v5108
      %v5110 = vpop.f32.mrf.mxu0
      %5111 = vdwg.mxu0
      %5112 = vmatpush.bf16.msra.mxu0 %v4679
      %5113 = vmatpush.bf16.msra.mxu0 %v4676
      %5114 = vmatpush.bf16.msra.mxu0 %v4673
      %5115 = vmatpush.bf16.msra.mxu0 %v4670
      %5116 = vmatpush.bf16.msra.mxu0 %v4667
      %5117 = vmatpush.bf16.msra.mxu0 %v4664
      %5118 = vmatpush.bf16.msra.mxu0 %v4661
      %5119 = vmatpush.bf16.msra.mxu0 %v4658
      %5120 = vmatmul.bf16.gmra.mxu0 %v3932
      %v5121 = vpop.f32.mrf.mxu0
      %v5122 = vadd.f32 %v5109, %v5121
      %v5123 = vpop.f32.mrf.mxu0
      %5124 = vdwg.mxu0
      %5125 = vmatpush.bf16.msra.mxu0 %v4703
      %5126 = vmatpush.bf16.msra.mxu0 %v4700
      %5127 = vmatpush.bf16.msra.mxu0 %v4697
      %5128 = vmatpush.bf16.msra.mxu0 %v4694
      %5129 = vmatpush.bf16.msra.mxu0 %v4691
      %5130 = vmatpush.bf16.msra.mxu0 %v4688
      %5131 = vmatpush.bf16.msra.mxu0 %v4685
      %5132 = vmatpush.bf16.msra.mxu0 %v4682
      %5133 = vmatmul.bf16.gmra.mxu0 %v3933
      %v5134 = vpop.f32.mrf.mxu0
      %v5135 = vadd.f32 %v5122, %v5134
      %v5136 = vpop.f32.mrf.mxu0
      %5137 = vdwg.mxu0
      %5138 = vmatpush.bf16.msra.mxu0 %v4727
      %5139 = vmatpush.bf16.msra.mxu0 %v4724
      %5140 = vmatpush.bf16.msra.mxu0 %v4721
      %5141 = vmatpush.bf16.msra.mxu0 %v4718
      %5142 = vmatpush.bf16.msra.mxu0 %v4715
      %5143 = vmatpush.bf16.msra.mxu0 %v4712
      %5144 = vmatpush.bf16.msra.mxu0 %v4709
      %5145 = vmatpush.bf16.msra.mxu0 %v4706
      %5146 = vmatmul.bf16.gmra.mxu0 %v3934
      %v5147 = vpop.f32.mrf.mxu0
      %v5148 = vadd.f32 %v5135, %v5147
      %v5149 = vpop.f32.mrf.mxu0
      %5150 = vdwg.mxu0
      %5151 = vmatpush.bf16.msra.mxu0 %v4751
      %5152 = vmatpush.bf16.msra.mxu0 %v4748
      %5153 = vmatpush.bf16.msra.mxu0 %v4745
      %5154 = vmatpush.bf16.msra.mxu0 %v4742
      %5155 = vmatpush.bf16.msra.mxu0 %v4739
      %5156 = vmatpush.bf16.msra.mxu0 %v4736
      %5157 = vmatpush.bf16.msra.mxu0 %v4733
      %5158 = vmatpush.bf16.msra.mxu0 %v4730
      %5159 = vmatmul.bf16.gmra.mxu0 %v3935
      %v5160 = vpop.f32.mrf.mxu0
      %v5161 = vadd.f32 %v5148, %v5160
      %v5162 = vpop.f32.mrf.mxu0
      %5163 = vdwg.mxu0
      %5164 = vmatpush.bf16.msra.mxu0 %v4775
      %5165 = vmatpush.bf16.msra.mxu0 %v4772
      %5166 = vmatpush.bf16.msra.mxu0 %v4769
      %5167 = vmatpush.bf16.msra.mxu0 %v4766
      %5168 = vmatpush.bf16.msra.mxu0 %v4763
      %5169 = vmatpush.bf16.msra.mxu0 %v4760
      %5170 = vmatpush.bf16.msra.mxu0 %v4757
      %5171 = vmatpush.bf16.msra.mxu0 %v4754
      %5172 = vmatmul.bf16.gmra.mxu0 %v3936
      %v5173 = vpop.f32.mrf.mxu0
      %v5174 = vadd.f32 %v5161, %v5173
      %v5175 = vpop.f32.mrf.mxu0
      %5176 = vdwg.mxu0
      %5177 = vmatpush.bf16.msra.mxu0 %v4608
      %5178 = vmatpush.bf16.msra.mxu0 %v4605
      %5179 = vmatpush.bf16.msra.mxu0 %v4602
      %5180 = vmatpush.bf16.msra.mxu0 %v4599
      %5181 = vmatpush.bf16.msra.mxu0 %v4596
      %5182 = vmatpush.bf16.msra.mxu0 %v4593
      %5183 = vmatpush.bf16.msra.mxu0 %v4590
      %5184 = vmatpush.bf16.msra.mxu0 %v4587
      %5185 = vmatmul.bf16.gmra.mxu0 %v3929
      %v5186 = vpop.f32.mrf.mxu0
      %v5187 = vadd.f32 0.0, %v5186
      %v5188 = vpop.f32.mrf.mxu0
      %5189 = vdwg.mxu0
      %5190 = vmatpush.bf16.msra.mxu0 %v4632
      %5191 = vmatpush.bf16.msra.mxu0 %v4629
      %5192 = vmatpush.bf16.msra.mxu0 %v4626
      %5193 = vmatpush.bf16.msra.mxu0 %v4623
      %5194 = vmatpush.bf16.msra.mxu0 %v4620
      %5195 = vmatpush.bf16.msra.mxu0 %v4617
      %5196 = vmatpush.bf16.msra.mxu0 %v4614
      %5197 = vmatpush.bf16.msra.mxu0 %v4611
      %5198 = vmatmul.bf16.gmra.mxu0 %v3930
      %v5199 = vpop.f32.mrf.mxu0
      %v5200 = vadd.f32 %v5187, %v5199
      %v5201 = vpop.f32.mrf.mxu0
      %5202 = vdwg.mxu0
      %5203 = vmatpush.bf16.msra.mxu0 %v4656
      %5204 = vmatpush.bf16.msra.mxu0 %v4653
      %5205 = vmatpush.bf16.msra.mxu0 %v4650
      %5206 = vmatpush.bf16.msra.mxu0 %v4647
      %5207 = vmatpush.bf16.msra.mxu0 %v4644
      %5208 = vmatpush.bf16.msra.mxu0 %v4641
      %5209 = vmatpush.bf16.msra.mxu0 %v4638
      %5210 = vmatpush.bf16.msra.mxu0 %v4635
      %5211 = vmatmul.bf16.gmra.mxu0 %v3931
      %v5212 = vpop.f32.mrf.mxu0
      %v5213 = vadd.f32 %v5200, %v5212
      %v5214 = vpop.f32.mrf.mxu0
      %5215 = vdwg.mxu0
      %5216 = vmatpush.bf16.msra.mxu0 %v4680
      %5217 = vmatpush.bf16.msra.mxu0 %v4677
      %5218 = vmatpush.bf16.msra.mxu0 %v4674
      %5219 = vmatpush.bf16.msra.mxu0 %v4671
      %5220 = vmatpush.bf16.msra.mxu0 %v4668
      %5221 = vmatpush.bf16.msra.mxu0 %v4665
      %5222 = vmatpush.bf16.msra.mxu0 %v4662
      %5223 = vmatpush.bf16.msra.mxu0 %v4659
      %5224 = vmatmul.bf16.gmra.mxu0 %v3932
      %v5225 = vpop.f32.mrf.mxu0
      %v5226 = vadd.f32 %v5213, %v5225
      %v5227 = vpop.f32.mrf.mxu0
      %5228 = vdwg.mxu0
      %5229 = vmatpush.bf16.msra.mxu0 %v4704
      %5230 = vmatpush.bf16.msra.mxu0 %v4701
      %5231 = vmatpush.bf16.msra.mxu0 %v4698
      %5232 = vmatpush.bf16.msra.mxu0 %v4695
      %5233 = vmatpush.bf16.msra.mxu0 %v4692
      %5234 = vmatpush.bf16.msra.mxu0 %v4689
      %5235 = vmatpush.bf16.msra.mxu0 %v4686
      %5236 = vmatpush.bf16.msra.mxu0 %v4683
      %5237 = vmatmul.bf16.gmra.mxu0 %v3933
      %v5238 = vpop.f32.mrf.mxu0
      %v5239 = vadd.f32 %v5226, %v5238
      %v5240 = vpop.f32.mrf.mxu0
      %5241 = vdwg.mxu0
      %5242 = vmatpush.bf16.msra.mxu0 %v4728
      %5243 = vmatpush.bf16.msra.mxu0 %v4725
      %5244 = vmatpush.bf16.msra.mxu0 %v4722
      %5245 = vmatpush.bf16.msra.mxu0 %v4719
      %5246 = vmatpush.bf16.msra.mxu0 %v4716
      %5247 = vmatpush.bf16.msra.mxu0 %v4713
      %5248 = vmatpush.bf16.msra.mxu0 %v4710
      %5249 = vmatpush.bf16.msra.mxu0 %v4707
      %5250 = vmatmul.bf16.gmra.mxu0 %v3934
      %v5251 = vpop.f32.mrf.mxu0
      %v5252 = vadd.f32 %v5239, %v5251
      %v5253 = vpop.f32.mrf.mxu0
      %5254 = vdwg.mxu0
      %5255 = vmatpush.bf16.msra.mxu0 %v4752
      %5256 = vmatpush.bf16.msra.mxu0 %v4749
      %5257 = vmatpush.bf16.msra.mxu0 %v4746
      %5258 = vmatpush.bf16.msra.mxu0 %v4743
      %5259 = vmatpush.bf16.msra.mxu0 %v4740
      %5260 = vmatpush.bf16.msra.mxu0 %v4737
      %5261 = vmatpush.bf16.msra.mxu0 %v4734
      %5262 = vmatpush.bf16.msra.mxu0 %v4731
      %5263 = vmatmul.bf16.gmra.mxu0 %v3935
      %v5264 = vpop.f32.mrf.mxu0
      %v5265 = vadd.f32 %v5252, %v5264
      %v5266 = vpop.f32.mrf.mxu0
      %5267 = vdwg.mxu0
      %5268 = vmatpush.bf16.msra.mxu0 %v4776
      %5269 = vmatpush.bf16.msra.mxu0 %v4773
      %5270 = vmatpush.bf16.msra.mxu0 %v4770
      %5271 = vmatpush.bf16.msra.mxu0 %v4767
      %5272 = vmatpush.bf16.msra.mxu0 %v4764
      %5273 = vmatpush.bf16.msra.mxu0 %v4761
      %5274 = vmatpush.bf16.msra.mxu0 %v4758
      %5275 = vmatpush.bf16.msra.mxu0 %v4755
      %5276 = vmatmul.bf16.gmra.mxu0 %v3936
      %v5277 = vpop.f32.mrf.mxu0
      %v5278 = vadd.f32 %v5265, %v5277
      %v5279 = vpop.f32.mrf.mxu0
      %5280 = vdwg.mxu0
      %v5329 = vunpack.c.l.b16 %v3048
      %v5330 = vunpack.c.l.b16 %v3049
      %v5331 = vunpack.c.l.b16 %v3050
      %v5332 = vunpack.c.l.b16 %v3051
      %v5333 = vunpack.c.l.b16 %v3052
      %v5334 = vunpack.c.l.b16 %v3053
      %v5335 = vunpack.c.l.b16 %v3054
      %v5336 = vunpack.c.l.b16 %v3055
      %v5337 = vunpack.c.l.b16 %v3056
      %v5338 = vunpack.c.l.b16 %v3057
      %v5339 = vunpack.c.l.b16 %v3058
      %v5340 = vunpack.c.l.b16 %v3059
      %v5341 = vunpack.c.l.b16 %v3060
      %v5342 = vunpack.c.l.b16 %v3061
      %v5343 = vunpack.c.l.b16 %v3062
      %v5344 = vunpack.c.l.b16 %v3063
      %v5345 = vunpack.c.l.b16 %v3064
      %v5346 = vunpack.c.l.b16 %v3065
      %v5347 = vunpack.c.l.b16 %v3066
      %v5348 = vunpack.c.l.b16 %v3067
      %v5349 = vunpack.c.l.b16 %v3068
      %v5350 = vunpack.c.l.b16 %v3069
      %v5351 = vunpack.c.l.b16 %v3070
      %v5352 = vunpack.c.l.b16 %v3071
      %v5353 = vunpack.c.l.b16 %v3072
      %v5354 = vunpack.c.l.b16 %v3073
      %v5355 = vunpack.c.l.b16 %v3074
      %v5356 = vunpack.c.l.b16 %v3075
      %v5357 = vunpack.c.l.b16 %v3076
      %v5358 = vunpack.c.l.b16 %v3077
      %v5359 = vunpack.c.l.b16 %v3078
      %v5360 = vunpack.c.l.b16 %v3079
      %v5361 = vunpack.c.l.b16 %v3080
      %v5362 = vunpack.c.l.b16 %v3081
      %v5363 = vunpack.c.l.b16 %v3082
      %v5364 = vunpack.c.l.b16 %v3083
      %v5365 = vunpack.c.l.b16 %v3084
      %v5366 = vunpack.c.l.b16 %v3085
      %v5367 = vunpack.c.l.b16 %v3086
      %v5368 = vunpack.c.l.b16 %v3087
      %v5369 = vunpack.c.l.b16 %v3088
      %v5370 = vunpack.c.l.b16 %v3089
      %v5371 = vunpack.c.l.b16 %v3090
      %v5372 = vunpack.c.l.b16 %v3091
      %v5373 = vunpack.c.l.b16 %v3092
      %v5374 = vunpack.c.l.b16 %v3093
      %v5375 = vunpack.c.l.b16 %v3094
      %v5376 = vunpack.c.l.b16 %v3095
      %v5377 = vrot.slane %v5337, 7
      %v5378 = vsel %vm511, %v5377, %v5329
      %v5379 = vrot.slane %v5345, 6
      %v5380 = vsel %vm514, %v5379, %v5378
      %v5381 = vrot.slane %v5353, 5
      %v5382 = vsel %vm517, %v5381, %v5380
      %v5383 = vrot.slane %v5361, 4
      %v5384 = vsel %vm520, %v5383, %v5382
      %v5385 = vrot.slane %v5369, 3
      %v5386 = vsel %vm523, %v5385, %v5384
      %v5387 = vrot.slane %v5338, 7
      %v5388 = vsel %vm511, %v5387, %v5330
      %v5389 = vrot.slane %v5346, 6
      %v5390 = vsel %vm514, %v5389, %v5388
      %v5391 = vrot.slane %v5354, 5
      %v5392 = vsel %vm517, %v5391, %v5390
      %v5393 = vrot.slane %v5362, 4
      %v5394 = vsel %vm520, %v5393, %v5392
      %v5395 = vrot.slane %v5370, 3
      %v5396 = vsel %vm523, %v5395, %v5394
      %v5397 = vrot.slane %v5339, 7
      %v5398 = vsel %vm511, %v5397, %v5331
      %v5399 = vrot.slane %v5347, 6
      %v5400 = vsel %vm514, %v5399, %v5398
      %v5401 = vrot.slane %v5355, 5
      %v5402 = vsel %vm517, %v5401, %v5400
      %v5403 = vrot.slane %v5363, 4
      %v5404 = vsel %vm520, %v5403, %v5402
      %v5405 = vrot.slane %v5371, 3
      %v5406 = vsel %vm523, %v5405, %v5404
      %v5407 = vrot.slane %v5340, 7
      %v5408 = vsel %vm511, %v5407, %v5332
      %v5409 = vrot.slane %v5348, 6
      %v5410 = vsel %vm514, %v5409, %v5408
      %v5411 = vrot.slane %v5356, 5
      %v5412 = vsel %vm517, %v5411, %v5410
      %v5413 = vrot.slane %v5364, 4
      %v5414 = vsel %vm520, %v5413, %v5412
      %v5415 = vrot.slane %v5372, 3
      %v5416 = vsel %vm523, %v5415, %v5414
      %v5417 = vrot.slane %v5341, 7
      %v5418 = vsel %vm511, %v5417, %v5333
      %v5419 = vrot.slane %v5349, 6
      %v5420 = vsel %vm514, %v5419, %v5418
      %v5421 = vrot.slane %v5357, 5
      %v5422 = vsel %vm517, %v5421, %v5420
      %v5423 = vrot.slane %v5365, 4
      %v5424 = vsel %vm520, %v5423, %v5422
      %v5425 = vrot.slane %v5373, 3
      %v5426 = vsel %vm523, %v5425, %v5424
      %v5427 = vrot.slane %v5342, 7
      %v5428 = vsel %vm511, %v5427, %v5334
      %v5429 = vrot.slane %v5350, 6
      %v5430 = vsel %vm514, %v5429, %v5428
      %v5431 = vrot.slane %v5358, 5
      %v5432 = vsel %vm517, %v5431, %v5430
      %v5433 = vrot.slane %v5366, 4
      %v5434 = vsel %vm520, %v5433, %v5432
      %v5435 = vrot.slane %v5374, 3
      %v5436 = vsel %vm523, %v5435, %v5434
      %v5437 = vrot.slane %v5343, 7
      %v5438 = vsel %vm511, %v5437, %v5335
      %v5439 = vrot.slane %v5351, 6
      %v5440 = vsel %vm514, %v5439, %v5438
      %v5441 = vrot.slane %v5359, 5
      %v5442 = vsel %vm517, %v5441, %v5440
      %v5443 = vrot.slane %v5367, 4
      %v5444 = vsel %vm520, %v5443, %v5442
      %v5445 = vrot.slane %v5375, 3
      %v5446 = vsel %vm523, %v5445, %v5444
      %v5447 = vrot.slane %v5344, 7
      %v5448 = vsel %vm511, %v5447, %v5336
      %v5449 = vrot.slane %v5352, 6
      %v5450 = vsel %vm514, %v5449, %v5448
      %v5451 = vrot.slane %v5360, 5
      %v5452 = vsel %vm517, %v5451, %v5450
      %v5453 = vrot.slane %v5368, 4
      %v5454 = vsel %vm520, %v5453, %v5452
      %v5455 = vrot.slane %v5376, 3
      %v5456 = vsel %vm523, %v5455, %v5454
      %v5457 = vpack.c.b16 %v5386, %v5386
      %v5458 = vpack.c.b16 %v5396, %v5396
      %v5459 = vpack.c.b16 %v5406, %v5406
      %v5460 = vpack.c.b16 %v5416, %v5416
      %v5461 = vpack.c.b16 %v5426, %v5426
      %v5462 = vpack.c.b16 %v5436, %v5436
      %v5463 = vpack.c.b16 %v5446, %v5446
      %v5464 = vpack.c.b16 %v5456, %v5456
      %v5729 = vunpack.c.l.b16 %v3096
      %v5730 = vunpack.c.h.b16 %v3096
      %v5731 = vunpack.c.l.b16 %v3097
      %v5732 = vunpack.c.l.b16 %v3098
      %v5733 = vunpack.c.h.b16 %v3098
      %v5734 = vunpack.c.l.b16 %v3099
      %v5735 = vunpack.c.l.b16 %v3100
      %v5736 = vunpack.c.h.b16 %v3100
      %v5737 = vunpack.c.l.b16 %v3101
      %v5738 = vunpack.c.l.b16 %v3102
      %v5739 = vunpack.c.h.b16 %v3102
      %v5740 = vunpack.c.l.b16 %v3103
      %v5741 = vunpack.c.l.b16 %v3104
      %v5742 = vunpack.c.h.b16 %v3104
      %v5743 = vunpack.c.l.b16 %v3105
      %v5744 = vunpack.c.l.b16 %v3106
      %v5745 = vunpack.c.h.b16 %v3106
      %v5746 = vunpack.c.l.b16 %v3107
      %v5747 = vunpack.c.l.b16 %v3108
      %v5748 = vunpack.c.h.b16 %v3108
      %v5749 = vunpack.c.l.b16 %v3109
      %v5750 = vunpack.c.l.b16 %v3110
      %v5751 = vunpack.c.h.b16 %v3110
      %v5752 = vunpack.c.l.b16 %v3111
      %v5753 = vunpack.c.l.b16 %v3112
      %v5754 = vunpack.c.h.b16 %v3112
      %v5755 = vunpack.c.l.b16 %v3113
      %v5756 = vunpack.c.l.b16 %v3114
      %v5757 = vunpack.c.h.b16 %v3114
      %v5758 = vunpack.c.l.b16 %v3115
      %v5759 = vunpack.c.l.b16 %v3116
      %v5760 = vunpack.c.h.b16 %v3116
      %v5761 = vunpack.c.l.b16 %v3117
      %v5762 = vunpack.c.l.b16 %v3118
      %v5763 = vunpack.c.h.b16 %v3118
      %v5764 = vunpack.c.l.b16 %v3119
      %v5765 = vunpack.c.l.b16 %v3120
      %v5766 = vunpack.c.h.b16 %v3120
      %v5767 = vunpack.c.l.b16 %v3121
      %v5768 = vunpack.c.l.b16 %v3122
      %v5769 = vunpack.c.h.b16 %v3122
      %v5770 = vunpack.c.l.b16 %v3123
      %v5771 = vunpack.c.l.b16 %v3124
      %v5772 = vunpack.c.h.b16 %v3124
      %v5773 = vunpack.c.l.b16 %v3125
      %v5774 = vunpack.c.l.b16 %v3126
      %v5775 = vunpack.c.h.b16 %v3126
      %v5776 = vunpack.c.l.b16 %v3127
      %v5777 = vunpack.c.l.b16 %v3128
      %v5778 = vunpack.c.h.b16 %v3128
      %v5779 = vunpack.c.l.b16 %v3129
      %v5780 = vunpack.c.l.b16 %v3130
      %v5781 = vunpack.c.h.b16 %v3130
      %v5782 = vunpack.c.l.b16 %v3131
      %v5783 = vunpack.c.l.b16 %v3132
      %v5784 = vunpack.c.h.b16 %v3132
      %v5785 = vunpack.c.l.b16 %v3133
      %v5786 = vunpack.c.l.b16 %v3134
      %v5787 = vunpack.c.h.b16 %v3134
      %v5788 = vunpack.c.l.b16 %v3135
      %v5789 = vunpack.c.l.b16 %v3136
      %v5790 = vunpack.c.h.b16 %v3136
      %v5791 = vunpack.c.l.b16 %v3137
      %v5792 = vunpack.c.l.b16 %v3138
      %v5793 = vunpack.c.h.b16 %v3138
      %v5794 = vunpack.c.l.b16 %v3139
      %v5795 = vunpack.c.l.b16 %v3140
      %v5796 = vunpack.c.h.b16 %v3140
      %v5797 = vunpack.c.l.b16 %v3141
      %v5798 = vunpack.c.l.b16 %v3142
      %v5799 = vunpack.c.h.b16 %v3142
      %v5800 = vunpack.c.l.b16 %v3143
      %v5801 = vunpack.c.l.b16 %v3144
      %v5802 = vunpack.c.h.b16 %v3144
      %v5803 = vunpack.c.l.b16 %v3145
      %v5804 = vunpack.c.l.b16 %v3146
      %v5805 = vunpack.c.h.b16 %v3146
      %v5806 = vunpack.c.l.b16 %v3147
      %v5807 = vunpack.c.l.b16 %v3148
      %v5808 = vunpack.c.h.b16 %v3148
      %v5809 = vunpack.c.l.b16 %v3149
      %v5810 = vunpack.c.l.b16 %v3150
      %v5811 = vunpack.c.h.b16 %v3150
      %v5812 = vunpack.c.l.b16 %v3151
      %v5813 = vunpack.c.l.b16 %v3152
      %v5814 = vunpack.c.h.b16 %v3152
      %v5815 = vunpack.c.l.b16 %v3153
      %v5816 = vunpack.c.l.b16 %v3154
      %v5817 = vunpack.c.h.b16 %v3154
      %v5818 = vunpack.c.l.b16 %v3155
      %v5819 = vunpack.c.l.b16 %v3156
      %v5820 = vunpack.c.h.b16 %v3156
      %v5821 = vunpack.c.l.b16 %v3157
      %v5822 = vunpack.c.l.b16 %v3158
      %v5823 = vunpack.c.h.b16 %v3158
      %v5824 = vunpack.c.l.b16 %v3159
      %v5825 = vunpack.c.l.b16 %v3160
      %v5826 = vunpack.c.h.b16 %v3160
      %v5827 = vunpack.c.l.b16 %v3161
      %v5828 = vunpack.c.l.b16 %v3162
      %v5829 = vunpack.c.h.b16 %v3162
      %v5830 = vunpack.c.l.b16 %v3163
      %v5831 = vunpack.c.l.b16 %v3164
      %v5832 = vunpack.c.h.b16 %v3164
      %v5833 = vunpack.c.l.b16 %v3165
      %v5834 = vunpack.c.l.b16 %v3166
      %v5835 = vunpack.c.h.b16 %v3166
      %v5836 = vunpack.c.l.b16 %v3167
      %v5837 = vunpack.c.l.b16 %v3168
      %v5838 = vunpack.c.h.b16 %v3168
      %v5839 = vunpack.c.l.b16 %v3169
      %v5840 = vunpack.c.l.b16 %v3170
      %v5841 = vunpack.c.h.b16 %v3170
      %v5842 = vunpack.c.l.b16 %v3171
      %v5843 = vunpack.c.l.b16 %v3172
      %v5844 = vunpack.c.h.b16 %v3172
      %v5845 = vunpack.c.l.b16 %v3173
      %v5846 = vunpack.c.l.b16 %v3174
      %v5847 = vunpack.c.h.b16 %v3174
      %v5848 = vunpack.c.l.b16 %v3175
      %v5849 = vunpack.c.l.b16 %v3176
      %v5850 = vunpack.c.h.b16 %v3176
      %v5851 = vunpack.c.l.b16 %v3177
      %v5852 = vunpack.c.l.b16 %v3178
      %v5853 = vunpack.c.h.b16 %v3178
      %v5854 = vunpack.c.l.b16 %v3179
      %v5855 = vunpack.c.l.b16 %v3180
      %v5856 = vunpack.c.h.b16 %v3180
      %v5857 = vunpack.c.l.b16 %v3181
      %v5858 = vunpack.c.l.b16 %v3182
      %v5859 = vunpack.c.h.b16 %v3182
      %v5860 = vunpack.c.l.b16 %v3183
      %v5861 = vunpack.c.l.b16 %v3184
      %v5862 = vunpack.c.h.b16 %v3184
      %v5863 = vunpack.c.l.b16 %v3185
      %v5864 = vunpack.c.l.b16 %v3186
      %v5865 = vunpack.c.h.b16 %v3186
      %v5866 = vunpack.c.l.b16 %v3187
      %v5867 = vunpack.c.l.b16 %v3188
      %v5868 = vunpack.c.h.b16 %v3188
      %v5869 = vunpack.c.l.b16 %v3189
      %v5870 = vunpack.c.l.b16 %v3190
      %v5871 = vunpack.c.h.b16 %v3190
      %v5872 = vunpack.c.l.b16 %v3191
      %v5873 = vunpack.c.l.b16 %v3192
      %v5874 = vunpack.c.h.b16 %v3192
      %v5875 = vunpack.c.l.b16 %v3193
      %v5876 = vunpack.c.l.b16 %v3194
      %v5877 = vunpack.c.h.b16 %v3194
      %v5878 = vunpack.c.l.b16 %v3195
      %v5879 = vunpack.c.l.b16 %v3196
      %v5880 = vunpack.c.h.b16 %v3196
      %v5881 = vunpack.c.l.b16 %v3197
      %v5882 = vunpack.c.l.b16 %v3198
      %v5883 = vunpack.c.h.b16 %v3198
      %v5884 = vunpack.c.l.b16 %v3199
      %v5885 = vunpack.c.l.b16 %v3200
      %v5886 = vunpack.c.h.b16 %v3200
      %v5887 = vunpack.c.l.b16 %v3201
      %v5888 = vunpack.c.l.b16 %v3202
      %v5889 = vunpack.c.h.b16 %v3202
      %v5890 = vunpack.c.l.b16 %v3203
      %v5891 = vunpack.c.l.b16 %v3204
      %v5892 = vunpack.c.h.b16 %v3204
      %v5893 = vunpack.c.l.b16 %v3205
      %v5894 = vunpack.c.l.b16 %v3206
      %v5895 = vunpack.c.h.b16 %v3206
      %v5896 = vunpack.c.l.b16 %v3207
      %v5897 = vunpack.c.l.b16 %v3208
      %v5898 = vunpack.c.h.b16 %v3208
      %v5899 = vunpack.c.l.b16 %v3209
      %v5900 = vunpack.c.l.b16 %v3210
      %v5901 = vunpack.c.h.b16 %v3210
      %v5902 = vunpack.c.l.b16 %v3211
      %v5903 = vunpack.c.l.b16 %v3212
      %v5904 = vunpack.c.h.b16 %v3212
      %v5905 = vunpack.c.l.b16 %v3213
      %v5906 = vunpack.c.l.b16 %v3214
      %v5907 = vunpack.c.h.b16 %v3214
      %v5908 = vunpack.c.l.b16 %v3215
      %v5909 = vunpack.c.l.b16 %v3216
      %v5910 = vunpack.c.h.b16 %v3216
      %v5911 = vunpack.c.l.b16 %v3217
      %v5912 = vunpack.c.l.b16 %v3218
      %v5913 = vunpack.c.h.b16 %v3218
      %v5914 = vunpack.c.l.b16 %v3219
      %v5915 = vunpack.c.l.b16 %v3220
      %v5916 = vunpack.c.h.b16 %v3220
      %v5917 = vunpack.c.l.b16 %v3221
      %v5918 = vunpack.c.l.b16 %v3222
      %v5919 = vunpack.c.h.b16 %v3222
      %v5920 = vunpack.c.l.b16 %v3223
      %v5921 = vunpack.c.l.b16 %v3224
      %v5922 = vunpack.c.h.b16 %v3224
      %v5923 = vunpack.c.l.b16 %v3225
      %v5924 = vunpack.c.l.b16 %v3226
      %v5925 = vunpack.c.h.b16 %v3226
      %v5926 = vunpack.c.l.b16 %v3227
      %v5927 = vunpack.c.l.b16 %v3228
      %v5928 = vunpack.c.h.b16 %v3228
      %v5929 = vunpack.c.l.b16 %v3229
      %v5930 = vunpack.c.l.b16 %v3230
      %v5931 = vunpack.c.h.b16 %v3230
      %v5932 = vunpack.c.l.b16 %v3231
      %v5933 = vunpack.c.l.b16 %v3232
      %v5934 = vunpack.c.h.b16 %v3232
      %v5935 = vunpack.c.l.b16 %v3233
      %v5936 = vunpack.c.l.b16 %v3234
      %v5937 = vunpack.c.h.b16 %v3234
      %v5938 = vunpack.c.l.b16 %v3235
      %v5939 = vunpack.c.l.b16 %v3236
      %v5940 = vunpack.c.h.b16 %v3236
      %v5941 = vunpack.c.l.b16 %v3237
      %v5942 = vunpack.c.l.b16 %v3238
      %v5943 = vunpack.c.h.b16 %v3238
      %v5944 = vunpack.c.l.b16 %v3239
      %v5945 = vunpack.c.l.b16 %v3240
      %v5946 = vunpack.c.h.b16 %v3240
      %v5947 = vunpack.c.l.b16 %v3241
      %v5948 = vunpack.c.l.b16 %v3242
      %v5949 = vunpack.c.h.b16 %v3242
      %v5950 = vunpack.c.l.b16 %v3243
      %v5951 = vunpack.c.l.b16 %v3244
      %v5952 = vunpack.c.h.b16 %v3244
      %v5953 = vunpack.c.l.b16 %v3245
      %v5954 = vunpack.c.l.b16 %v3246
      %v5955 = vunpack.c.h.b16 %v3246
      %v5956 = vunpack.c.l.b16 %v3247
      %v5957 = vunpack.c.l.b16 %v3248
      %v5958 = vunpack.c.h.b16 %v3248
      %v5959 = vunpack.c.l.b16 %v3249
      %v5960 = vunpack.c.l.b16 %v3250
      %v5961 = vunpack.c.h.b16 %v3250
      %v5962 = vunpack.c.l.b16 %v3251
      %v5963 = vunpack.c.l.b16 %v3252
      %v5964 = vunpack.c.h.b16 %v3252
      %v5965 = vunpack.c.l.b16 %v3253
      %v5966 = vunpack.c.l.b16 %v3254
      %v5967 = vunpack.c.h.b16 %v3254
      %v5968 = vunpack.c.l.b16 %v3255
      %v5969 = vunpack.c.l.b16 %v3256
      %v5970 = vunpack.c.h.b16 %v3256
      %v5971 = vunpack.c.l.b16 %v3257
      %v5972 = vunpack.c.l.b16 %v3258
      %v5973 = vunpack.c.h.b16 %v3258
      %v5974 = vunpack.c.l.b16 %v3259
      %v5975 = vunpack.c.l.b16 %v3260
      %v5976 = vunpack.c.h.b16 %v3260
      %v5977 = vunpack.c.l.b16 %v3261
      %v5978 = vunpack.c.l.b16 %v3262
      %v5979 = vunpack.c.h.b16 %v3262
      %v5980 = vunpack.c.l.b16 %v3263
      %v5981 = vunpack.c.l.b16 %v3264
      %v5982 = vunpack.c.h.b16 %v3264
      %v5983 = vunpack.c.l.b16 %v3265
      %v5984 = vunpack.c.l.b16 %v3266
      %v5985 = vunpack.c.h.b16 %v3266
      %v5986 = vunpack.c.l.b16 %v3267
      %v5987 = vunpack.c.l.b16 %v3268
      %v5988 = vunpack.c.h.b16 %v3268
      %v5989 = vunpack.c.l.b16 %v3269
      %v5990 = vunpack.c.l.b16 %v3270
      %v5991 = vunpack.c.h.b16 %v3270
      %v5992 = vunpack.c.l.b16 %v3271
      %v5993 = vunpack.c.l.b16 %v3272
      %v5994 = vunpack.c.h.b16 %v3272
      %v5995 = vunpack.c.l.b16 %v3273
      %v5996 = vunpack.c.l.b16 %v3274
      %v5997 = vunpack.c.h.b16 %v3274
      %v5998 = vunpack.c.l.b16 %v3275
      %v5999 = vunpack.c.l.b16 %v3276
      %v6000 = vunpack.c.h.b16 %v3276
      %v6001 = vunpack.c.l.b16 %v3277
      %v6002 = vunpack.c.l.b16 %v3278
      %v6003 = vunpack.c.h.b16 %v3278
      %v6004 = vunpack.c.l.b16 %v3279
      %v6005 = vunpack.c.l.b16 %v3280
      %v6006 = vunpack.c.h.b16 %v3280
      %v6007 = vunpack.c.l.b16 %v3281
      %v6008 = vunpack.c.l.b16 %v3282
      %v6009 = vunpack.c.h.b16 %v3282
      %v6010 = vunpack.c.l.b16 %v3283
      %v6011 = vunpack.c.l.b16 %v3284
      %v6012 = vunpack.c.h.b16 %v3284
      %v6013 = vunpack.c.l.b16 %v3285
      %v6014 = vunpack.c.l.b16 %v3286
      %v6015 = vunpack.c.h.b16 %v3286
      %v6016 = vunpack.c.l.b16 %v3287
      %v6017 = vunpack.c.l.b16 %v3288
      %v6018 = vunpack.c.h.b16 %v3288
      %v6019 = vunpack.c.l.b16 %v3289
      %v6020 = vunpack.c.l.b16 %v3290
      %v6021 = vunpack.c.h.b16 %v3290
      %v6022 = vunpack.c.l.b16 %v3291
      %v6023 = vunpack.c.l.b16 %v3292
      %v6024 = vunpack.c.h.b16 %v3292
      %v6025 = vunpack.c.l.b16 %v3293
      %v6026 = vunpack.c.l.b16 %v3294
      %v6027 = vunpack.c.h.b16 %v3294
      %v6028 = vunpack.c.l.b16 %v3295
      %v6029 = vunpack.c.l.b16 %v3296
      %v6030 = vunpack.c.h.b16 %v3296
      %v6031 = vunpack.c.l.b16 %v3297
      %v6032 = vunpack.c.l.b16 %v3298
      %v6033 = vunpack.c.h.b16 %v3298
      %v6034 = vunpack.c.l.b16 %v3299
      %v6035 = vunpack.c.l.b16 %v3300
      %v6036 = vunpack.c.h.b16 %v3300
      %v6037 = vunpack.c.l.b16 %v3301
      %v6038 = vunpack.c.l.b16 %v3302
      %v6039 = vunpack.c.h.b16 %v3302
      %v6040 = vunpack.c.l.b16 %v3303
      %v6041 = vunpack.c.l.b16 %v3304
      %v6042 = vunpack.c.h.b16 %v3304
      %v6043 = vunpack.c.l.b16 %v3305
      %v6044 = vunpack.c.l.b16 %v3306
      %v6045 = vunpack.c.h.b16 %v3306
      %v6046 = vunpack.c.l.b16 %v3307
      %v6047 = vunpack.c.l.b16 %v3308
      %v6048 = vunpack.c.h.b16 %v3308
      %v6049 = vunpack.c.l.b16 %v3309
      %v6050 = vunpack.c.l.b16 %v3310
      %v6051 = vunpack.c.h.b16 %v3310
      %v6052 = vunpack.c.l.b16 %v3311
      %v6053 = vunpack.c.l.b16 %v3312
      %v6054 = vunpack.c.h.b16 %v3312
      %v6055 = vunpack.c.l.b16 %v3313
      %v6056 = vunpack.c.l.b16 %v3314
      %v6057 = vunpack.c.h.b16 %v3314
      %v6058 = vunpack.c.l.b16 %v3315
      %v6059 = vunpack.c.l.b16 %v3316
      %v6060 = vunpack.c.h.b16 %v3316
      %v6061 = vunpack.c.l.b16 %v3317
      %v6062 = vunpack.c.l.b16 %v3318
      %v6063 = vunpack.c.h.b16 %v3318
      %v6064 = vunpack.c.l.b16 %v3319
      %v6065 = vunpack.c.l.b16 %v3320
      %v6066 = vunpack.c.h.b16 %v3320
      %v6067 = vunpack.c.l.b16 %v3321
      %v6068 = vunpack.c.l.b16 %v3322
      %v6069 = vunpack.c.h.b16 %v3322
      %v6070 = vunpack.c.l.b16 %v3323
      %v6071 = vunpack.c.l.b16 %v3324
      %v6072 = vunpack.c.h.b16 %v3324
      %v6073 = vunpack.c.l.b16 %v3325
      %v6074 = vunpack.c.l.b16 %v3326
      %v6075 = vunpack.c.h.b16 %v3326
      %v6076 = vunpack.c.l.b16 %v3327
      %v6077 = vunpack.c.l.b16 %v3328
      %v6078 = vunpack.c.h.b16 %v3328
      %v6079 = vunpack.c.l.b16 %v3329
      %v6080 = vunpack.c.l.b16 %v3330
      %v6081 = vunpack.c.h.b16 %v3330
      %v6082 = vunpack.c.l.b16 %v3331
      %v6083 = vunpack.c.l.b16 %v3332
      %v6084 = vunpack.c.h.b16 %v3332
      %v6085 = vunpack.c.l.b16 %v3333
      %v6086 = vunpack.c.l.b16 %v3334
      %v6087 = vunpack.c.h.b16 %v3334
      %v6088 = vunpack.c.l.b16 %v3335
      %v6089 = vunpack.c.l.b16 %v3336
      %v6090 = vunpack.c.h.b16 %v3336
      %v6091 = vunpack.c.l.b16 %v3337
      %v6092 = vunpack.c.l.b16 %v3338
      %v6093 = vunpack.c.h.b16 %v3338
      %v6094 = vunpack.c.l.b16 %v3339
      %v6095 = vunpack.c.l.b16 %v3340
      %v6096 = vunpack.c.h.b16 %v3340
      %v6097 = vunpack.c.l.b16 %v3341
      %v6098 = vunpack.c.l.b16 %v3342
      %v6099 = vunpack.c.h.b16 %v3342
      %v6100 = vunpack.c.l.b16 %v3343
      %v6101 = vunpack.c.l.b16 %v3344
      %v6102 = vunpack.c.h.b16 %v3344
      %v6103 = vunpack.c.l.b16 %v3345
      %v6104 = vunpack.c.l.b16 %v3346
      %v6105 = vunpack.c.h.b16 %v3346
      %v6106 = vunpack.c.l.b16 %v3347
      %v6107 = vunpack.c.l.b16 %v3348
      %v6108 = vunpack.c.h.b16 %v3348
      %v6109 = vunpack.c.l.b16 %v3349
      %v6110 = vunpack.c.l.b16 %v3350
      %v6111 = vunpack.c.h.b16 %v3350
      %v6112 = vunpack.c.l.b16 %v3351
      %v6113 = vpack.c.b16 %v5732, %v5729
      %v6114 = vpack.c.b16 %v5733, %v5730
      %v6115 = vpack.c.b16 %v5734, %v5731
      %v6116 = vpack.c.b16 %v5738, %v5735
      %v6117 = vpack.c.b16 %v5739, %v5736
      %v6118 = vpack.c.b16 %v5740, %v5737
      %v6119 = vpack.c.b16 %v5744, %v5741
      %v6120 = vpack.c.b16 %v5745, %v5742
      %v6121 = vpack.c.b16 %v5746, %v5743
      %v6122 = vpack.c.b16 %v5750, %v5747
      %v6123 = vpack.c.b16 %v5751, %v5748
      %v6124 = vpack.c.b16 %v5752, %v5749
      %v6125 = vpack.c.b16 %v5756, %v5753
      %v6126 = vpack.c.b16 %v5757, %v5754
      %v6127 = vpack.c.b16 %v5758, %v5755
      %v6128 = vpack.c.b16 %v5762, %v5759
      %v6129 = vpack.c.b16 %v5763, %v5760
      %v6130 = vpack.c.b16 %v5764, %v5761
      %v6131 = vpack.c.b16 %v5768, %v5765
      %v6132 = vpack.c.b16 %v5769, %v5766
      %v6133 = vpack.c.b16 %v5770, %v5767
      %v6134 = vpack.c.b16 %v5774, %v5771
      %v6135 = vpack.c.b16 %v5775, %v5772
      %v6136 = vpack.c.b16 %v5776, %v5773
      %v6137 = vpack.c.b16 %v5780, %v5777
      %v6138 = vpack.c.b16 %v5781, %v5778
      %v6139 = vpack.c.b16 %v5782, %v5779
      %v6140 = vpack.c.b16 %v5786, %v5783
      %v6141 = vpack.c.b16 %v5787, %v5784
      %v6142 = vpack.c.b16 %v5788, %v5785
      %v6143 = vpack.c.b16 %v5792, %v5789
      %v6144 = vpack.c.b16 %v5793, %v5790
      %v6145 = vpack.c.b16 %v5794, %v5791
      %v6146 = vpack.c.b16 %v5798, %v5795
      %v6147 = vpack.c.b16 %v5799, %v5796
      %v6148 = vpack.c.b16 %v5800, %v5797
      %v6149 = vpack.c.b16 %v5804, %v5801
      %v6150 = vpack.c.b16 %v5805, %v5802
      %v6151 = vpack.c.b16 %v5806, %v5803
      %v6152 = vpack.c.b16 %v5810, %v5807
      %v6153 = vpack.c.b16 %v5811, %v5808
      %v6154 = vpack.c.b16 %v5812, %v5809
      %v6155 = vpack.c.b16 %v5816, %v5813
      %v6156 = vpack.c.b16 %v5817, %v5814
      %v6157 = vpack.c.b16 %v5818, %v5815
      %v6158 = vpack.c.b16 %v5822, %v5819
      %v6159 = vpack.c.b16 %v5823, %v5820
      %v6160 = vpack.c.b16 %v5824, %v5821
      %v6161 = vpack.c.b16 %v5828, %v5825
      %v6162 = vpack.c.b16 %v5829, %v5826
      %v6163 = vpack.c.b16 %v5830, %v5827
      %v6164 = vpack.c.b16 %v5834, %v5831
      %v6165 = vpack.c.b16 %v5835, %v5832
      %v6166 = vpack.c.b16 %v5836, %v5833
      %v6167 = vpack.c.b16 %v5840, %v5837
      %v6168 = vpack.c.b16 %v5841, %v5838
      %v6169 = vpack.c.b16 %v5842, %v5839
      %v6170 = vpack.c.b16 %v5846, %v5843
      %v6171 = vpack.c.b16 %v5847, %v5844
      %v6172 = vpack.c.b16 %v5848, %v5845
      %v6173 = vpack.c.b16 %v5852, %v5849
      %v6174 = vpack.c.b16 %v5853, %v5850
      %v6175 = vpack.c.b16 %v5854, %v5851
      %v6176 = vpack.c.b16 %v5858, %v5855
      %v6177 = vpack.c.b16 %v5859, %v5856
      %v6178 = vpack.c.b16 %v5860, %v5857
      %v6179 = vpack.c.b16 %v5864, %v5861
      %v6180 = vpack.c.b16 %v5865, %v5862
      %v6181 = vpack.c.b16 %v5866, %v5863
      %v6182 = vpack.c.b16 %v5870, %v5867
      %v6183 = vpack.c.b16 %v5871, %v5868
      %v6184 = vpack.c.b16 %v5872, %v5869
      %v6185 = vpack.c.b16 %v5876, %v5873
      %v6186 = vpack.c.b16 %v5877, %v5874
      %v6187 = vpack.c.b16 %v5878, %v5875
      %v6188 = vpack.c.b16 %v5882, %v5879
      %v6189 = vpack.c.b16 %v5883, %v5880
      %v6190 = vpack.c.b16 %v5884, %v5881
      %v6191 = vpack.c.b16 %v5888, %v5885
      %v6192 = vpack.c.b16 %v5889, %v5886
      %v6193 = vpack.c.b16 %v5890, %v5887
      %v6194 = vpack.c.b16 %v5894, %v5891
      %v6195 = vpack.c.b16 %v5895, %v5892
      %v6196 = vpack.c.b16 %v5896, %v5893
      %v6197 = vpack.c.b16 %v5900, %v5897
      %v6198 = vpack.c.b16 %v5901, %v5898
      %v6199 = vpack.c.b16 %v5902, %v5899
      %v6200 = vpack.c.b16 %v5906, %v5903
      %v6201 = vpack.c.b16 %v5907, %v5904
      %v6202 = vpack.c.b16 %v5908, %v5905
      %v6203 = vpack.c.b16 %v5912, %v5909
      %v6204 = vpack.c.b16 %v5913, %v5910
      %v6205 = vpack.c.b16 %v5914, %v5911
      %v6206 = vpack.c.b16 %v5918, %v5915
      %v6207 = vpack.c.b16 %v5919, %v5916
      %v6208 = vpack.c.b16 %v5920, %v5917
      %v6209 = vpack.c.b16 %v5924, %v5921
      %v6210 = vpack.c.b16 %v5925, %v5922
      %v6211 = vpack.c.b16 %v5926, %v5923
      %v6212 = vpack.c.b16 %v5930, %v5927
      %v6213 = vpack.c.b16 %v5931, %v5928
      %v6214 = vpack.c.b16 %v5932, %v5929
      %v6215 = vpack.c.b16 %v5936, %v5933
      %v6216 = vpack.c.b16 %v5937, %v5934
      %v6217 = vpack.c.b16 %v5938, %v5935
      %v6218 = vpack.c.b16 %v5942, %v5939
      %v6219 = vpack.c.b16 %v5943, %v5940
      %v6220 = vpack.c.b16 %v5944, %v5941
      %v6221 = vpack.c.b16 %v5948, %v5945
      %v6222 = vpack.c.b16 %v5949, %v5946
      %v6223 = vpack.c.b16 %v5950, %v5947
      %v6224 = vpack.c.b16 %v5954, %v5951
      %v6225 = vpack.c.b16 %v5955, %v5952
      %v6226 = vpack.c.b16 %v5956, %v5953
      %v6227 = vpack.c.b16 %v5960, %v5957
      %v6228 = vpack.c.b16 %v5961, %v5958
      %v6229 = vpack.c.b16 %v5962, %v5959
      %v6230 = vpack.c.b16 %v5966, %v5963
      %v6231 = vpack.c.b16 %v5967, %v5964
      %v6232 = vpack.c.b16 %v5968, %v5965
      %v6233 = vpack.c.b16 %v5972, %v5969
      %v6234 = vpack.c.b16 %v5973, %v5970
      %v6235 = vpack.c.b16 %v5974, %v5971
      %v6236 = vpack.c.b16 %v5978, %v5975
      %v6237 = vpack.c.b16 %v5979, %v5976
      %v6238 = vpack.c.b16 %v5980, %v5977
      %v6239 = vpack.c.b16 %v5984, %v5981
      %v6240 = vpack.c.b16 %v5985, %v5982
      %v6241 = vpack.c.b16 %v5986, %v5983
      %v6242 = vpack.c.b16 %v5990, %v5987
      %v6243 = vpack.c.b16 %v5991, %v5988
      %v6244 = vpack.c.b16 %v5992, %v5989
      %v6245 = vpack.c.b16 %v5996, %v5993
      %v6246 = vpack.c.b16 %v5997, %v5994
      %v6247 = vpack.c.b16 %v5998, %v5995
      %v6248 = vpack.c.b16 %v6002, %v5999
      %v6249 = vpack.c.b16 %v6003, %v6000
      %v6250 = vpack.c.b16 %v6004, %v6001
      %v6251 = vpack.c.b16 %v6008, %v6005
      %v6252 = vpack.c.b16 %v6009, %v6006
      %v6253 = vpack.c.b16 %v6010, %v6007
      %v6254 = vpack.c.b16 %v6014, %v6011
      %v6255 = vpack.c.b16 %v6015, %v6012
      %v6256 = vpack.c.b16 %v6016, %v6013
      %v6257 = vpack.c.b16 %v6020, %v6017
      %v6258 = vpack.c.b16 %v6021, %v6018
      %v6259 = vpack.c.b16 %v6022, %v6019
      %v6260 = vpack.c.b16 %v6026, %v6023
      %v6261 = vpack.c.b16 %v6027, %v6024
      %v6262 = vpack.c.b16 %v6028, %v6025
      %v6263 = vpack.c.b16 %v6032, %v6029
      %v6264 = vpack.c.b16 %v6033, %v6030
      %v6265 = vpack.c.b16 %v6034, %v6031
      %v6266 = vpack.c.b16 %v6038, %v6035
      %v6267 = vpack.c.b16 %v6039, %v6036
      %v6268 = vpack.c.b16 %v6040, %v6037
      %v6269 = vpack.c.b16 %v6044, %v6041
      %v6270 = vpack.c.b16 %v6045, %v6042
      %v6271 = vpack.c.b16 %v6046, %v6043
      %v6272 = vpack.c.b16 %v6050, %v6047
      %v6273 = vpack.c.b16 %v6051, %v6048
      %v6274 = vpack.c.b16 %v6052, %v6049
      %v6275 = vpack.c.b16 %v6056, %v6053
      %v6276 = vpack.c.b16 %v6057, %v6054
      %v6277 = vpack.c.b16 %v6058, %v6055
      %v6278 = vpack.c.b16 %v6062, %v6059
      %v6279 = vpack.c.b16 %v6063, %v6060
      %v6280 = vpack.c.b16 %v6064, %v6061
      %v6281 = vpack.c.b16 %v6068, %v6065
      %v6282 = vpack.c.b16 %v6069, %v6066
      %v6283 = vpack.c.b16 %v6070, %v6067
      %v6284 = vpack.c.b16 %v6074, %v6071
      %v6285 = vpack.c.b16 %v6075, %v6072
      %v6286 = vpack.c.b16 %v6076, %v6073
      %v6287 = vpack.c.b16 %v6080, %v6077
      %v6288 = vpack.c.b16 %v6081, %v6078
      %v6289 = vpack.c.b16 %v6082, %v6079
      %v6290 = vpack.c.b16 %v6086, %v6083
      %v6291 = vpack.c.b16 %v6087, %v6084
      %v6292 = vpack.c.b16 %v6088, %v6085
      %v6293 = vpack.c.b16 %v6092, %v6089
      %v6294 = vpack.c.b16 %v6093, %v6090
      %v6295 = vpack.c.b16 %v6094, %v6091
      %v6296 = vpack.c.b16 %v6098, %v6095
      %v6297 = vpack.c.b16 %v6099, %v6096
      %v6298 = vpack.c.b16 %v6100, %v6097
      %v6299 = vpack.c.b16 %v6104, %v6101
      %v6300 = vpack.c.b16 %v6105, %v6102
      %v6301 = vpack.c.b16 %v6106, %v6103
      %v6302 = vpack.c.b16 %v6110, %v6107
      %v6303 = vpack.c.b16 %v6111, %v6108
      %v6304 = vpack.c.b16 %v6112, %v6109
      %6497 = vmatpush.bf16.msra.mxu0 %v6134
      %6498 = vmatpush.bf16.msra.mxu0 %v6131
      %6499 = vmatpush.bf16.msra.mxu0 %v6128
      %6500 = vmatpush.bf16.msra.mxu0 %v6125
      %6501 = vmatpush.bf16.msra.mxu0 %v6122
      %6502 = vmatpush.bf16.msra.mxu0 %v6119
      %6503 = vmatpush.bf16.msra.mxu0 %v6116
      %6504 = vmatpush.bf16.msra.mxu0 %v6113
      %6505 = vmatmul.bf16.gmra.mxu0 %v5457
      %v6506 = vpop.f32.mrf.mxu0
      %v6507 = vadd.f32 %v5070, %v6506
      %v6508 = vpop.f32.mrf.mxu0
      %6509 = vdwg.mxu0
      %6510 = vmatpush.bf16.msra.mxu0 %v6158
      %6511 = vmatpush.bf16.msra.mxu0 %v6155
      %6512 = vmatpush.bf16.msra.mxu0 %v6152
      %6513 = vmatpush.bf16.msra.mxu0 %v6149
      %6514 = vmatpush.bf16.msra.mxu0 %v6146
      %6515 = vmatpush.bf16.msra.mxu0 %v6143
      %6516 = vmatpush.bf16.msra.mxu0 %v6140
      %6517 = vmatpush.bf16.msra.mxu0 %v6137
      %6518 = vmatmul.bf16.gmra.mxu0 %v5458
      %v6519 = vpop.f32.mrf.mxu0
      %v6520 = vadd.f32 %v6507, %v6519
      %v6521 = vpop.f32.mrf.mxu0
      %6522 = vdwg.mxu0
      %6523 = vmatpush.bf16.msra.mxu0 %v6182
      %6524 = vmatpush.bf16.msra.mxu0 %v6179
      %6525 = vmatpush.bf16.msra.mxu0 %v6176
      %6526 = vmatpush.bf16.msra.mxu0 %v6173
      %6527 = vmatpush.bf16.msra.mxu0 %v6170
      %6528 = vmatpush.bf16.msra.mxu0 %v6167
      %6529 = vmatpush.bf16.msra.mxu0 %v6164
      %6530 = vmatpush.bf16.msra.mxu0 %v6161
      %6531 = vmatmul.bf16.gmra.mxu0 %v5459
      %v6532 = vpop.f32.mrf.mxu0
      %v6533 = vadd.f32 %v6520, %v6532
      %v6534 = vpop.f32.mrf.mxu0
      %6535 = vdwg.mxu0
      %6536 = vmatpush.bf16.msra.mxu0 %v6206
      %6537 = vmatpush.bf16.msra.mxu0 %v6203
      %6538 = vmatpush.bf16.msra.mxu0 %v6200
      %6539 = vmatpush.bf16.msra.mxu0 %v6197
      %6540 = vmatpush.bf16.msra.mxu0 %v6194
      %6541 = vmatpush.bf16.msra.mxu0 %v6191
      %6542 = vmatpush.bf16.msra.mxu0 %v6188
      %6543 = vmatpush.bf16.msra.mxu0 %v6185
      %6544 = vmatmul.bf16.gmra.mxu0 %v5460
      %v6545 = vpop.f32.mrf.mxu0
      %v6546 = vadd.f32 %v6533, %v6545
      %v6547 = vpop.f32.mrf.mxu0
      %6548 = vdwg.mxu0
      %6549 = vmatpush.bf16.msra.mxu0 %v6230
      %6550 = vmatpush.bf16.msra.mxu0 %v6227
      %6551 = vmatpush.bf16.msra.mxu0 %v6224
      %6552 = vmatpush.bf16.msra.mxu0 %v6221
      %6553 = vmatpush.bf16.msra.mxu0 %v6218
      %6554 = vmatpush.bf16.msra.mxu0 %v6215
      %6555 = vmatpush.bf16.msra.mxu0 %v6212
      %6556 = vmatpush.bf16.msra.mxu0 %v6209
      %6557 = vmatmul.bf16.gmra.mxu0 %v5461
      %v6558 = vpop.f32.mrf.mxu0
      %v6559 = vadd.f32 %v6546, %v6558
      %v6560 = vpop.f32.mrf.mxu0
      %6561 = vdwg.mxu0
      %6562 = vmatpush.bf16.msra.mxu0 %v6254
      %6563 = vmatpush.bf16.msra.mxu0 %v6251
      %6564 = vmatpush.bf16.msra.mxu0 %v6248
      %6565 = vmatpush.bf16.msra.mxu0 %v6245
      %6566 = vmatpush.bf16.msra.mxu0 %v6242
      %6567 = vmatpush.bf16.msra.mxu0 %v6239
      %6568 = vmatpush.bf16.msra.mxu0 %v6236
      %6569 = vmatpush.bf16.msra.mxu0 %v6233
      %6570 = vmatmul.bf16.gmra.mxu0 %v5462
      %v6571 = vpop.f32.mrf.mxu0
      %v6572 = vadd.f32 %v6559, %v6571
      %v6573 = vpop.f32.mrf.mxu0
      %6574 = vdwg.mxu0
      %6575 = vmatpush.bf16.msra.mxu0 %v6278
      %6576 = vmatpush.bf16.msra.mxu0 %v6275
      %6577 = vmatpush.bf16.msra.mxu0 %v6272
      %6578 = vmatpush.bf16.msra.mxu0 %v6269
      %6579 = vmatpush.bf16.msra.mxu0 %v6266
      %6580 = vmatpush.bf16.msra.mxu0 %v6263
      %6581 = vmatpush.bf16.msra.mxu0 %v6260
      %6582 = vmatpush.bf16.msra.mxu0 %v6257
      %6583 = vmatmul.bf16.gmra.mxu0 %v5463
      %v6584 = vpop.f32.mrf.mxu0
      %v6585 = vadd.f32 %v6572, %v6584
      %v6586 = vpop.f32.mrf.mxu0
      %6587 = vdwg.mxu0
      %6588 = vmatpush.bf16.msra.mxu0 %v6302
      %6589 = vmatpush.bf16.msra.mxu0 %v6299
      %6590 = vmatpush.bf16.msra.mxu0 %v6296
      %6591 = vmatpush.bf16.msra.mxu0 %v6293
      %6592 = vmatpush.bf16.msra.mxu0 %v6290
      %6593 = vmatpush.bf16.msra.mxu0 %v6287
      %6594 = vmatpush.bf16.msra.mxu0 %v6284
      %6595 = vmatpush.bf16.msra.mxu0 %v6281
      %6596 = vmatmul.bf16.gmra.mxu0 %v5464
      %v6597 = vpop.f32.mrf.mxu0
      %v6598 = vadd.f32 %v6585, %v6597
      %v6599 = vpop.f32.mrf.mxu0
      %6600 = vdwg.mxu0
      %6601 = vmatpush.bf16.msra.mxu0 %v6135
      %6602 = vmatpush.bf16.msra.mxu0 %v6132
      %6603 = vmatpush.bf16.msra.mxu0 %v6129
      %6604 = vmatpush.bf16.msra.mxu0 %v6126
      %6605 = vmatpush.bf16.msra.mxu0 %v6123
      %6606 = vmatpush.bf16.msra.mxu0 %v6120
      %6607 = vmatpush.bf16.msra.mxu0 %v6117
      %6608 = vmatpush.bf16.msra.mxu0 %v6114
      %6609 = vmatmul.bf16.gmra.mxu0 %v5457
      %v6610 = vpop.f32.mrf.mxu0
      %v6611 = vadd.f32 %v5174, %v6610
      %v6612 = vpop.f32.mrf.mxu0
      %6613 = vdwg.mxu0
      %6614 = vmatpush.bf16.msra.mxu0 %v6159
      %6615 = vmatpush.bf16.msra.mxu0 %v6156
      %6616 = vmatpush.bf16.msra.mxu0 %v6153
      %6617 = vmatpush.bf16.msra.mxu0 %v6150
      %6618 = vmatpush.bf16.msra.mxu0 %v6147
      %6619 = vmatpush.bf16.msra.mxu0 %v6144
      %6620 = vmatpush.bf16.msra.mxu0 %v6141
      %6621 = vmatpush.bf16.msra.mxu0 %v6138
      %6622 = vmatmul.bf16.gmra.mxu0 %v5458
      %v6623 = vpop.f32.mrf.mxu0
      %v6624 = vadd.f32 %v6611, %v6623
      %v6625 = vpop.f32.mrf.mxu0
      %6626 = vdwg.mxu0
      %6627 = vmatpush.bf16.msra.mxu0 %v6183
      %6628 = vmatpush.bf16.msra.mxu0 %v6180
      %6629 = vmatpush.bf16.msra.mxu0 %v6177
      %6630 = vmatpush.bf16.msra.mxu0 %v6174
      %6631 = vmatpush.bf16.msra.mxu0 %v6171
      %6632 = vmatpush.bf16.msra.mxu0 %v6168
      %6633 = vmatpush.bf16.msra.mxu0 %v6165
      %6634 = vmatpush.bf16.msra.mxu0 %v6162
      %6635 = vmatmul.bf16.gmra.mxu0 %v5459
      %v6636 = vpop.f32.mrf.mxu0
      %v6637 = vadd.f32 %v6624, %v6636
      %v6638 = vpop.f32.mrf.mxu0
      %6639 = vdwg.mxu0
      %6640 = vmatpush.bf16.msra.mxu0 %v6207
      %6641 = vmatpush.bf16.msra.mxu0 %v6204
      %6642 = vmatpush.bf16.msra.mxu0 %v6201
      %6643 = vmatpush.bf16.msra.mxu0 %v6198
      %6644 = vmatpush.bf16.msra.mxu0 %v6195
      %6645 = vmatpush.bf16.msra.mxu0 %v6192
      %6646 = vmatpush.bf16.msra.mxu0 %v6189
      %6647 = vmatpush.bf16.msra.mxu0 %v6186
      %6648 = vmatmul.bf16.gmra.mxu0 %v5460
      %v6649 = vpop.f32.mrf.mxu0
      %v6650 = vadd.f32 %v6637, %v6649
      %v6651 = vpop.f32.mrf.mxu0
      %6652 = vdwg.mxu0
      %6653 = vmatpush.bf16.msra.mxu0 %v6231
      %6654 = vmatpush.bf16.msra.mxu0 %v6228
      %6655 = vmatpush.bf16.msra.mxu0 %v6225
      %6656 = vmatpush.bf16.msra.mxu0 %v6222
      %6657 = vmatpush.bf16.msra.mxu0 %v6219
      %6658 = vmatpush.bf16.msra.mxu0 %v6216
      %6659 = vmatpush.bf16.msra.mxu0 %v6213
      %6660 = vmatpush.bf16.msra.mxu0 %v6210
      %6661 = vmatmul.bf16.gmra.mxu0 %v5461
      %v6662 = vpop.f32.mrf.mxu0
      %v6663 = vadd.f32 %v6650, %v6662
      %v6664 = vpop.f32.mrf.mxu0
      %6665 = vdwg.mxu0
      %6666 = vmatpush.bf16.msra.mxu0 %v6255
      %6667 = vmatpush.bf16.msra.mxu0 %v6252
      %6668 = vmatpush.bf16.msra.mxu0 %v6249
      %6669 = vmatpush.bf16.msra.mxu0 %v6246
      %6670 = vmatpush.bf16.msra.mxu0 %v6243
      %6671 = vmatpush.bf16.msra.mxu0 %v6240
      %6672 = vmatpush.bf16.msra.mxu0 %v6237
      %6673 = vmatpush.bf16.msra.mxu0 %v6234
      %6674 = vmatmul.bf16.gmra.mxu0 %v5462
      %v6675 = vpop.f32.mrf.mxu0
      %v6676 = vadd.f32 %v6663, %v6675
      %v6677 = vpop.f32.mrf.mxu0
      %6678 = vdwg.mxu0
      %6679 = vmatpush.bf16.msra.mxu0 %v6279
      %6680 = vmatpush.bf16.msra.mxu0 %v6276
      %6681 = vmatpush.bf16.msra.mxu0 %v6273
      %6682 = vmatpush.bf16.msra.mxu0 %v6270
      %6683 = vmatpush.bf16.msra.mxu0 %v6267
      %6684 = vmatpush.bf16.msra.mxu0 %v6264
      %6685 = vmatpush.bf16.msra.mxu0 %v6261
      %6686 = vmatpush.bf16.msra.mxu0 %v6258
      %6687 = vmatmul.bf16.gmra.mxu0 %v5463
      %v6688 = vpop.f32.mrf.mxu0
      %v6689 = vadd.f32 %v6676, %v6688
      %v6690 = vpop.f32.mrf.mxu0
      %6691 = vdwg.mxu0
      %6692 = vmatpush.bf16.msra.mxu0 %v6303
      %6693 = vmatpush.bf16.msra.mxu0 %v6300
      %6694 = vmatpush.bf16.msra.mxu0 %v6297
      %6695 = vmatpush.bf16.msra.mxu0 %v6294
      %6696 = vmatpush.bf16.msra.mxu0 %v6291
      %6697 = vmatpush.bf16.msra.mxu0 %v6288
      %6698 = vmatpush.bf16.msra.mxu0 %v6285
      %6699 = vmatpush.bf16.msra.mxu0 %v6282
      %6700 = vmatmul.bf16.gmra.mxu0 %v5464
      %v6701 = vpop.f32.mrf.mxu0
      %v6702 = vadd.f32 %v6689, %v6701
      %v6703 = vpop.f32.mrf.mxu0
      %6704 = vdwg.mxu0
      %6705 = vmatpush.bf16.msra.mxu0 %v6136
      %6706 = vmatpush.bf16.msra.mxu0 %v6133
      %6707 = vmatpush.bf16.msra.mxu0 %v6130
      %6708 = vmatpush.bf16.msra.mxu0 %v6127
      %6709 = vmatpush.bf16.msra.mxu0 %v6124
      %6710 = vmatpush.bf16.msra.mxu0 %v6121
      %6711 = vmatpush.bf16.msra.mxu0 %v6118
      %6712 = vmatpush.bf16.msra.mxu0 %v6115
      %6713 = vmatmul.bf16.gmra.mxu0 %v5457
      %v6714 = vpop.f32.mrf.mxu0
      %v6715 = vadd.f32 %v5278, %v6714
      %v6716 = vpop.f32.mrf.mxu0
      %6717 = vdwg.mxu0
      %6718 = vmatpush.bf16.msra.mxu0 %v6160
      %6719 = vmatpush.bf16.msra.mxu0 %v6157
      %6720 = vmatpush.bf16.msra.mxu0 %v6154
      %6721 = vmatpush.bf16.msra.mxu0 %v6151
      %6722 = vmatpush.bf16.msra.mxu0 %v6148
      %6723 = vmatpush.bf16.msra.mxu0 %v6145
      %6724 = vmatpush.bf16.msra.mxu0 %v6142
      %6725 = vmatpush.bf16.msra.mxu0 %v6139
      %6726 = vmatmul.bf16.gmra.mxu0 %v5458
      %v6727 = vpop.f32.mrf.mxu0
      %v6728 = vadd.f32 %v6715, %v6727
      %v6729 = vpop.f32.mrf.mxu0
      %6730 = vdwg.mxu0
      %6731 = vmatpush.bf16.msra.mxu0 %v6184
      %6732 = vmatpush.bf16.msra.mxu0 %v6181
      %6733 = vmatpush.bf16.msra.mxu0 %v6178
      %6734 = vmatpush.bf16.msra.mxu0 %v6175
      %6735 = vmatpush.bf16.msra.mxu0 %v6172
      %6736 = vmatpush.bf16.msra.mxu0 %v6169
      %6737 = vmatpush.bf16.msra.mxu0 %v6166
      %6738 = vmatpush.bf16.msra.mxu0 %v6163
      %6739 = vmatmul.bf16.gmra.mxu0 %v5459
      %v6740 = vpop.f32.mrf.mxu0
      %v6741 = vadd.f32 %v6728, %v6740
      %v6742 = vpop.f32.mrf.mxu0
      %6743 = vdwg.mxu0
      %6744 = vmatpush.bf16.msra.mxu0 %v6208
      %6745 = vmatpush.bf16.msra.mxu0 %v6205
      %6746 = vmatpush.bf16.msra.mxu0 %v6202
      %6747 = vmatpush.bf16.msra.mxu0 %v6199
      %6748 = vmatpush.bf16.msra.mxu0 %v6196
      %6749 = vmatpush.bf16.msra.mxu0 %v6193
      %6750 = vmatpush.bf16.msra.mxu0 %v6190
      %6751 = vmatpush.bf16.msra.mxu0 %v6187
      %6752 = vmatmul.bf16.gmra.mxu0 %v5460
      %v6753 = vpop.f32.mrf.mxu0
      %v6754 = vadd.f32 %v6741, %v6753
      %v6755 = vpop.f32.mrf.mxu0
      %6756 = vdwg.mxu0
      %6757 = vmatpush.bf16.msra.mxu0 %v6232
      %6758 = vmatpush.bf16.msra.mxu0 %v6229
      %6759 = vmatpush.bf16.msra.mxu0 %v6226
      %6760 = vmatpush.bf16.msra.mxu0 %v6223
      %6761 = vmatpush.bf16.msra.mxu0 %v6220
      %6762 = vmatpush.bf16.msra.mxu0 %v6217
      %6763 = vmatpush.bf16.msra.mxu0 %v6214
      %6764 = vmatpush.bf16.msra.mxu0 %v6211
      %6765 = vmatmul.bf16.gmra.mxu0 %v5461
      %v6766 = vpop.f32.mrf.mxu0
      %v6767 = vadd.f32 %v6754, %v6766
      %v6768 = vpop.f32.mrf.mxu0
      %6769 = vdwg.mxu0
      %6770 = vmatpush.bf16.msra.mxu0 %v6256
      %6771 = vmatpush.bf16.msra.mxu0 %v6253
      %6772 = vmatpush.bf16.msra.mxu0 %v6250
      %6773 = vmatpush.bf16.msra.mxu0 %v6247
      %6774 = vmatpush.bf16.msra.mxu0 %v6244
      %6775 = vmatpush.bf16.msra.mxu0 %v6241
      %6776 = vmatpush.bf16.msra.mxu0 %v6238
      %6777 = vmatpush.bf16.msra.mxu0 %v6235
      %6778 = vmatmul.bf16.gmra.mxu0 %v5462
      %v6779 = vpop.f32.mrf.mxu0
      %v6780 = vadd.f32 %v6767, %v6779
      %v6781 = vpop.f32.mrf.mxu0
      %6782 = vdwg.mxu0
      %6783 = vmatpush.bf16.msra.mxu0 %v6280
      %6784 = vmatpush.bf16.msra.mxu0 %v6277
      %6785 = vmatpush.bf16.msra.mxu0 %v6274
      %6786 = vmatpush.bf16.msra.mxu0 %v6271
      %6787 = vmatpush.bf16.msra.mxu0 %v6268
      %6788 = vmatpush.bf16.msra.mxu0 %v6265
      %6789 = vmatpush.bf16.msra.mxu0 %v6262
      %6790 = vmatpush.bf16.msra.mxu0 %v6259
      %6791 = vmatmul.bf16.gmra.mxu0 %v5463
      %v6792 = vpop.f32.mrf.mxu0
      %v6793 = vadd.f32 %v6780, %v6792
      %v6794 = vpop.f32.mrf.mxu0
      %6795 = vdwg.mxu0
      %6796 = vmatpush.bf16.msra.mxu0 %v6304
      %6797 = vmatpush.bf16.msra.mxu0 %v6301
      %6798 = vmatpush.bf16.msra.mxu0 %v6298
      %6799 = vmatpush.bf16.msra.mxu0 %v6295
      %6800 = vmatpush.bf16.msra.mxu0 %v6292
      %6801 = vmatpush.bf16.msra.mxu0 %v6289
      %6802 = vmatpush.bf16.msra.mxu0 %v6286
      %6803 = vmatpush.bf16.msra.mxu0 %v6283
      %6804 = vmatmul.bf16.gmra.mxu0 %v5464
      %v6805 = vpop.f32.mrf.mxu0
      %v6806 = vadd.f32 %v6793, %v6805
      %v6807 = vpop.f32.mrf.mxu0
      %6808 = vdwg.mxu0
      %v6809 = vperm.slane %v2943, 0
      %v6810 = vperm.slane %v2943, 1
      %v6811 = vperm.slane %v2943, 2
      %v6812 = vperm.slane %v2943, 3
      %v6813 = vperm.slane %v2943, 4
      %v6814 = vperm.slane %v2943, 5
      %v6815 = vperm.slane %v2943, 6
      %v6816 = vperm.slane %v2943, 7
      %v6825 = vpack.c.bf16 %v6809, %v6809
      %v6826 = vpack.c.bf16 %v6810, %v6810
      %v6827 = vpack.c.bf16 %v6811, %v6811
      %v6828 = vpack.c.bf16 %v6812, %v6812
      %v6829 = vpack.c.bf16 %v6813, %v6813
      %v6830 = vpack.c.bf16 %v6814, %v6814
      %v6831 = vpack.c.bf16 %v6815, %v6815
      %v6832 = vpack.c.bf16 %v6816, %v6816
      %s6833 = scalar_lea.vmem %s3, 3072
      %v6834 = vld [vmem:[%s6833] sm:$0xff]
      %v6835 = vld [vmem:[%s6833 + $0x8] sm:$0xf]
      %v6836 = vld [vmem:[%s6833 + $0xc] sm:$0xff]
      %v6837 = vld [vmem:[%s6833 + $0x14] sm:$0xf]
      %v6838 = vld [vmem:[%s6833 + $0x18] sm:$0xff]
      %v6839 = vld [vmem:[%s6833 + $0x20] sm:$0xf]
      %v6840 = vld [vmem:[%s6833 + $0x24] sm:$0xff]
      %v6841 = vld [vmem:[%s6833 + $0x2c] sm:$0xf]
      %v6842 = vld [vmem:[%s6833 + $0x30] sm:$0xff]
      %v6843 = vld [vmem:[%s6833 + $0x38] sm:$0xf]
      %v6844 = vld [vmem:[%s6833 + $0x3c] sm:$0xff]
      %v6845 = vld [vmem:[%s6833 + $0x44] sm:$0xf]
      %v6846 = vld [vmem:[%s6833 + $0x48] sm:$0xff]
      %v6847 = vld [vmem:[%s6833 + $0x50] sm:$0xf]
      %v6848 = vld [vmem:[%s6833 + $0x54] sm:$0xff]
      %v6849 = vld [vmem:[%s6833 + $0x5c] sm:$0xf]
      %v6850 = vld [vmem:[%s6833 + $0x60] sm:$0xff]
      %v6851 = vld [vmem:[%s6833 + $0x68] sm:$0xf]
      %v6852 = vld [vmem:[%s6833 + $0x6c] sm:$0xff]
      %v6853 = vld [vmem:[%s6833 + $0x74] sm:$0xf]
      %v6854 = vld [vmem:[%s6833 + $0x78] sm:$0xff]
      %v6855 = vld [vmem:[%s6833 + $0x80] sm:$0xf]
      %v6856 = vld [vmem:[%s6833 + $0x84] sm:$0xff]
      %v6857 = vld [vmem:[%s6833 + $0x8c] sm:$0xf]
      %v6858 = vld [vmem:[%s6833 + $0x90] sm:$0xff]
      %v6859 = vld [vmem:[%s6833 + $0x98] sm:$0xf]
      %v6860 = vld [vmem:[%s6833 + $0x9c] sm:$0xff]
      %v6861 = vld [vmem:[%s6833 + $0xa4] sm:$0xf]
      %v6862 = vld [vmem:[%s6833 + $0xa8] sm:$0xff]
      %v6863 = vld [vmem:[%s6833 + $0xb0] sm:$0xf]
      %v6864 = vld [vmem:[%s6833 + $0xb4] sm:$0xff]
      %v6865 = vld [vmem:[%s6833 + $0xbc] sm:$0xf]
      %v6866 = vld [vmem:[%s6833 + $0xc0] sm:$0xff]
      %v6867 = vld [vmem:[%s6833 + $0xc8] sm:$0xf]
      %v6868 = vld [vmem:[%s6833 + $0xcc] sm:$0xff]
      %v6869 = vld [vmem:[%s6833 + $0xd4] sm:$0xf]
      %v6870 = vld [vmem:[%s6833 + $0xd8] sm:$0xff]
      %v6871 = vld [vmem:[%s6833 + $0xe0] sm:$0xf]
      %v6872 = vld [vmem:[%s6833 + $0xe4] sm:$0xff]
      %v6873 = vld [vmem:[%s6833 + $0xec] sm:$0xf]
      %v6874 = vld [vmem:[%s6833 + $0xf0] sm:$0xff]
      %v6875 = vld [vmem:[%s6833 + $0xf8] sm:$0xf]
      %v6876 = vld [vmem:[%s6833 + $0xfc] sm:$0xff]
      %v6877 = vld [vmem:[%s6833 + $0x104] sm:$0xf]
      %v6878 = vld [vmem:[%s6833 + $0x108] sm:$0xff]
      %v6879 = vld [vmem:[%s6833 + $0x110] sm:$0xf]
      %v6880 = vld [vmem:[%s6833 + $0x114] sm:$0xff]
      %v6881 = vld [vmem:[%s6833 + $0x11c] sm:$0xf]
      %v6882 = vld [vmem:[%s6833 + $0x120] sm:$0xff]
      %v6883 = vld [vmem:[%s6833 + $0x128] sm:$0xf]
      %v6884 = vld [vmem:[%s6833 + $0x12c] sm:$0xff]
      %v6885 = vld [vmem:[%s6833 + $0x134] sm:$0xf]
      %v6886 = vld [vmem:[%s6833 + $0x138] sm:$0xff]
      %v6887 = vld [vmem:[%s6833 + $0x140] sm:$0xf]
      %v6888 = vld [vmem:[%s6833 + $0x144] sm:$0xff]
      %v6889 = vld [vmem:[%s6833 + $0x14c] sm:$0xf]
      %v6890 = vld [vmem:[%s6833 + $0x150] sm:$0xff]
      %v6891 = vld [vmem:[%s6833 + $0x158] sm:$0xf]
      %v6892 = vld [vmem:[%s6833 + $0x15c] sm:$0xff]
      %v6893 = vld [vmem:[%s6833 + $0x164] sm:$0xf]
      %v6894 = vld [vmem:[%s6833 + $0x168] sm:$0xff]
      %v6895 = vld [vmem:[%s6833 + $0x170] sm:$0xf]
      %v6896 = vld [vmem:[%s6833 + $0x174] sm:$0xff]
      %v6897 = vld [vmem:[%s6833 + $0x17c] sm:$0xf]
      %v6898 = vld [vmem:[%s6833 + $0x180] sm:$0xff]
      %v6899 = vld [vmem:[%s6833 + $0x188] sm:$0xf]
      %v6900 = vld [vmem:[%s6833 + $0x18c] sm:$0xff]
      %v6901 = vld [vmem:[%s6833 + $0x194] sm:$0xf]
      %v6902 = vld [vmem:[%s6833 + $0x198] sm:$0xff]
      %v6903 = vld [vmem:[%s6833 + $0x1a0] sm:$0xf]
      %v6904 = vld [vmem:[%s6833 + $0x1a4] sm:$0xff]
      %v6905 = vld [vmem:[%s6833 + $0x1ac] sm:$0xf]
      %v6906 = vld [vmem:[%s6833 + $0x1b0] sm:$0xff]
      %v6907 = vld [vmem:[%s6833 + $0x1b8] sm:$0xf]
      %v6908 = vld [vmem:[%s6833 + $0x1bc] sm:$0xff]
      %v6909 = vld [vmem:[%s6833 + $0x1c4] sm:$0xf]
      %v6910 = vld [vmem:[%s6833 + $0x1c8] sm:$0xff]
      %v6911 = vld [vmem:[%s6833 + $0x1d0] sm:$0xf]
      %v6912 = vld [vmem:[%s6833 + $0x1d4] sm:$0xff]
      %v6913 = vld [vmem:[%s6833 + $0x1dc] sm:$0xf]
      %v6914 = vld [vmem:[%s6833 + $0x1e0] sm:$0xff]
      %v6915 = vld [vmem:[%s6833 + $0x1e8] sm:$0xf]
      %v6916 = vld [vmem:[%s6833 + $0x1ec] sm:$0xff]
      %v6917 = vld [vmem:[%s6833 + $0x1f4] sm:$0xf]
      %v6918 = vld [vmem:[%s6833 + $0x1f8] sm:$0xff]
      %v6919 = vld [vmem:[%s6833 + $0x200] sm:$0xf]
      %v6920 = vld [vmem:[%s6833 + $0x204] sm:$0xff]
      %v6921 = vld [vmem:[%s6833 + $0x20c] sm:$0xf]
      %v6922 = vld [vmem:[%s6833 + $0x210] sm:$0xff]
      %v6923 = vld [vmem:[%s6833 + $0x218] sm:$0xf]
      %v6924 = vld [vmem:[%s6833 + $0x21c] sm:$0xff]
      %v6925 = vld [vmem:[%s6833 + $0x224] sm:$0xf]
      %v6926 = vld [vmem:[%s6833 + $0x228] sm:$0xff]
      %v6927 = vld [vmem:[%s6833 + $0x230] sm:$0xf]
      %v6928 = vld [vmem:[%s6833 + $0x234] sm:$0xff]
      %v6929 = vld [vmem:[%s6833 + $0x23c] sm:$0xf]
      %v6930 = vld [vmem:[%s6833 + $0x240] sm:$0xff]
      %v6931 = vld [vmem:[%s6833 + $0x248] sm:$0xf]
      %v6932 = vld [vmem:[%s6833 + $0x24c] sm:$0xff]
      %v6933 = vld [vmem:[%s6833 + $0x254] sm:$0xf]
      %v6934 = vld [vmem:[%s6833 + $0x258] sm:$0xff]
      %v6935 = vld [vmem:[%s6833 + $0x260] sm:$0xf]
      %v6936 = vld [vmem:[%s6833 + $0x264] sm:$0xff]
      %v6937 = vld [vmem:[%s6833 + $0x26c] sm:$0xf]
      %v6938 = vld [vmem:[%s6833 + $0x270] sm:$0xff]
      %v6939 = vld [vmem:[%s6833 + $0x278] sm:$0xf]
      %v6940 = vld [vmem:[%s6833 + $0x27c] sm:$0xff]
      %v6941 = vld [vmem:[%s6833 + $0x284] sm:$0xf]
      %v6942 = vld [vmem:[%s6833 + $0x288] sm:$0xff]
      %v6943 = vld [vmem:[%s6833 + $0x290] sm:$0xf]
      %v6944 = vld [vmem:[%s6833 + $0x294] sm:$0xff]
      %v6945 = vld [vmem:[%s6833 + $0x29c] sm:$0xf]
      %v6946 = vld [vmem:[%s6833 + $0x2a0] sm:$0xff]
      %v6947 = vld [vmem:[%s6833 + $0x2a8] sm:$0xf]
      %v6948 = vld [vmem:[%s6833 + $0x2ac] sm:$0xff]
      %v6949 = vld [vmem:[%s6833 + $0x2b4] sm:$0xf]
      %v6950 = vld [vmem:[%s6833 + $0x2b8] sm:$0xff]
      %v6951 = vld [vmem:[%s6833 + $0x2c0] sm:$0xf]
      %v6952 = vld [vmem:[%s6833 + $0x2c4] sm:$0xff]
      %v6953 = vld [vmem:[%s6833 + $0x2cc] sm:$0xf]
      %v6954 = vld [vmem:[%s6833 + $0x2d0] sm:$0xff]
      %v6955 = vld [vmem:[%s6833 + $0x2d8] sm:$0xf]
      %v6956 = vld [vmem:[%s6833 + $0x2dc] sm:$0xff]
      %v6957 = vld [vmem:[%s6833 + $0x2e4] sm:$0xf]
      %v6958 = vld [vmem:[%s6833 + $0x2e8] sm:$0xff]
      %v6959 = vld [vmem:[%s6833 + $0x2f0] sm:$0xf]
      %v6960 = vld [vmem:[%s6833 + $0x2f4] sm:$0xff]
      %v6961 = vld [vmem:[%s6833 + $0x2fc] sm:$0xf]
      %v6962 = vld [vmem:[%s6833 + $0x300] sm:$0xff]
      %v6963 = vld [vmem:[%s6833 + $0x308] sm:$0xf]
      %v6964 = vld [vmem:[%s6833 + $0x30c] sm:$0xff]
      %v6965 = vld [vmem:[%s6833 + $0x314] sm:$0xf]
      %v6966 = vld [vmem:[%s6833 + $0x318] sm:$0xff]
      %v6967 = vld [vmem:[%s6833 + $0x320] sm:$0xf]
      %v6968 = vld [vmem:[%s6833 + $0x324] sm:$0xff]
      %v6969 = vld [vmem:[%s6833 + $0x32c] sm:$0xf]
      %v6970 = vld [vmem:[%s6833 + $0x330] sm:$0xff]
      %v6971 = vld [vmem:[%s6833 + $0x338] sm:$0xf]
      %v6972 = vld [vmem:[%s6833 + $0x33c] sm:$0xff]
      %v6973 = vld [vmem:[%s6833 + $0x344] sm:$0xf]
      %v6974 = vld [vmem:[%s6833 + $0x348] sm:$0xff]
      %v6975 = vld [vmem:[%s6833 + $0x350] sm:$0xf]
      %v6976 = vld [vmem:[%s6833 + $0x354] sm:$0xff]
      %v6977 = vld [vmem:[%s6833 + $0x35c] sm:$0xf]
      %v6978 = vld [vmem:[%s6833 + $0x360] sm:$0xff]
      %v6979 = vld [vmem:[%s6833 + $0x368] sm:$0xf]
      %v6980 = vld [vmem:[%s6833 + $0x36c] sm:$0xff]
      %v6981 = vld [vmem:[%s6833 + $0x374] sm:$0xf]
      %v6982 = vld [vmem:[%s6833 + $0x378] sm:$0xff]
      %v6983 = vld [vmem:[%s6833 + $0x380] sm:$0xf]
      %v6984 = vld [vmem:[%s6833 + $0x384] sm:$0xff]
      %v6985 = vld [vmem:[%s6833 + $0x38c] sm:$0xf]
      %v6986 = vld [vmem:[%s6833 + $0x390] sm:$0xff]
      %v6987 = vld [vmem:[%s6833 + $0x398] sm:$0xf]
      %v6988 = vld [vmem:[%s6833 + $0x39c] sm:$0xff]
      %v6989 = vld [vmem:[%s6833 + $0x3a4] sm:$0xf]
      %v6990 = vld [vmem:[%s6833 + $0x3a8] sm:$0xff]
      %v6991 = vld [vmem:[%s6833 + $0x3b0] sm:$0xf]
      %v6992 = vld [vmem:[%s6833 + $0x3b4] sm:$0xff]
      %v6993 = vld [vmem:[%s6833 + $0x3bc] sm:$0xf]
      %v6994 = vld [vmem:[%s6833 + $0x3c0] sm:$0xff]
      %v6995 = vld [vmem:[%s6833 + $0x3c8] sm:$0xf]
      %v6996 = vld [vmem:[%s6833 + $0x3cc] sm:$0xff]
      %v6997 = vld [vmem:[%s6833 + $0x3d4] sm:$0xf]
      %v6998 = vld [vmem:[%s6833 + $0x3d8] sm:$0xff]
      %v6999 = vld [vmem:[%s6833 + $0x3e0] sm:$0xf]
      %v7000 = vld [vmem:[%s6833 + $0x3e4] sm:$0xff]
      %v7001 = vld [vmem:[%s6833 + $0x3ec] sm:$0xf]
      %v7002 = vld [vmem:[%s6833 + $0x3f0] sm:$0xff]
      %v7003 = vld [vmem:[%s6833 + $0x3f8] sm:$0xf]
      %v7004 = vld [vmem:[%s6833 + $0x3fc] sm:$0xff]
      %v7005 = vld [vmem:[%s6833 + $0x404] sm:$0xf]
      %v7006 = vld [vmem:[%s6833 + $0x408] sm:$0xff]
      %v7007 = vld [vmem:[%s6833 + $0x410] sm:$0xf]
      %v7008 = vld [vmem:[%s6833 + $0x414] sm:$0xff]
      %v7009 = vld [vmem:[%s6833 + $0x41c] sm:$0xf]
      %v7010 = vld [vmem:[%s6833 + $0x420] sm:$0xff]
      %v7011 = vld [vmem:[%s6833 + $0x428] sm:$0xf]
      %v7012 = vld [vmem:[%s6833 + $0x42c] sm:$0xff]
      %v7013 = vld [vmem:[%s6833 + $0x434] sm:$0xf]
      %v7014 = vld [vmem:[%s6833 + $0x438] sm:$0xff]
      %v7015 = vld [vmem:[%s6833 + $0x440] sm:$0xf]
      %v7016 = vld [vmem:[%s6833 + $0x444] sm:$0xff]
      %v7017 = vld [vmem:[%s6833 + $0x44c] sm:$0xf]
      %v7018 = vld [vmem:[%s6833 + $0x450] sm:$0xff]
      %v7019 = vld [vmem:[%s6833 + $0x458] sm:$0xf]
      %v7020 = vld [vmem:[%s6833 + $0x45c] sm:$0xff]
      %v7021 = vld [vmem:[%s6833 + $0x464] sm:$0xf]
      %v7022 = vld [vmem:[%s6833 + $0x468] sm:$0xff]
      %v7023 = vld [vmem:[%s6833 + $0x470] sm:$0xf]
      %v7024 = vld [vmem:[%s6833 + $0x474] sm:$0xff]
      %v7025 = vld [vmem:[%s6833 + $0x47c] sm:$0xf]
      %v7026 = vld [vmem:[%s6833 + $0x480] sm:$0xff]
      %v7027 = vld [vmem:[%s6833 + $0x488] sm:$0xf]
      %v7028 = vld [vmem:[%s6833 + $0x48c] sm:$0xff]
      %v7029 = vld [vmem:[%s6833 + $0x494] sm:$0xf]
      %v7030 = vld [vmem:[%s6833 + $0x498] sm:$0xff]
      %v7031 = vld [vmem:[%s6833 + $0x4a0] sm:$0xf]
      %v7032 = vld [vmem:[%s6833 + $0x4a4] sm:$0xff]
      %v7033 = vld [vmem:[%s6833 + $0x4ac] sm:$0xf]
      %v7034 = vld [vmem:[%s6833 + $0x4b0] sm:$0xff]
      %v7035 = vld [vmem:[%s6833 + $0x4b8] sm:$0xf]
      %v7036 = vld [vmem:[%s6833 + $0x4bc] sm:$0xff]
      %v7037 = vld [vmem:[%s6833 + $0x4c4] sm:$0xf]
      %v7038 = vld [vmem:[%s6833 + $0x4c8] sm:$0xff]
      %v7039 = vld [vmem:[%s6833 + $0x4d0] sm:$0xf]
      %v7040 = vld [vmem:[%s6833 + $0x4d4] sm:$0xff]
      %v7041 = vld [vmem:[%s6833 + $0x4dc] sm:$0xf]
      %v7042 = vld [vmem:[%s6833 + $0x4e0] sm:$0xff]
      %v7043 = vld [vmem:[%s6833 + $0x4e8] sm:$0xf]
      %v7044 = vld [vmem:[%s6833 + $0x4ec] sm:$0xff]
      %v7045 = vld [vmem:[%s6833 + $0x4f4] sm:$0xf]
      %v7046 = vld [vmem:[%s6833 + $0x4f8] sm:$0xff]
      %v7047 = vld [vmem:[%s6833 + $0x500] sm:$0xf]
      %v7048 = vld [vmem:[%s6833 + $0x504] sm:$0xff]
      %v7049 = vld [vmem:[%s6833 + $0x50c] sm:$0xf]
      %v7050 = vld [vmem:[%s6833 + $0x510] sm:$0xff]
      %v7051 = vld [vmem:[%s6833 + $0x518] sm:$0xf]
      %v7052 = vld [vmem:[%s6833 + $0x51c] sm:$0xff]
      %v7053 = vld [vmem:[%s6833 + $0x524] sm:$0xf]
      %v7054 = vld [vmem:[%s6833 + $0x528] sm:$0xff]
      %v7055 = vld [vmem:[%s6833 + $0x530] sm:$0xf]
      %v7056 = vld [vmem:[%s6833 + $0x534] sm:$0xff]
      %v7057 = vld [vmem:[%s6833 + $0x53c] sm:$0xf]
      %v7058 = vld [vmem:[%s6833 + $0x540] sm:$0xff]
      %v7059 = vld [vmem:[%s6833 + $0x548] sm:$0xf]
      %v7060 = vld [vmem:[%s6833 + $0x54c] sm:$0xff]
      %v7061 = vld [vmem:[%s6833 + $0x554] sm:$0xf]
      %v7062 = vld [vmem:[%s6833 + $0x558] sm:$0xff]
      %v7063 = vld [vmem:[%s6833 + $0x560] sm:$0xf]
      %v7064 = vld [vmem:[%s6833 + $0x564] sm:$0xff]
      %v7065 = vld [vmem:[%s6833 + $0x56c] sm:$0xf]
      %v7066 = vld [vmem:[%s6833 + $0x570] sm:$0xff]
      %v7067 = vld [vmem:[%s6833 + $0x578] sm:$0xf]
      %v7068 = vld [vmem:[%s6833 + $0x57c] sm:$0xff]
      %v7069 = vld [vmem:[%s6833 + $0x584] sm:$0xf]
      %v7070 = vld [vmem:[%s6833 + $0x588] sm:$0xff]
      %v7071 = vld [vmem:[%s6833 + $0x590] sm:$0xf]
      %v7072 = vld [vmem:[%s6833 + $0x594] sm:$0xff]
      %v7073 = vld [vmem:[%s6833 + $0x59c] sm:$0xf]
      %v7074 = vld [vmem:[%s6833 + $0x5a0] sm:$0xff]
      %v7075 = vld [vmem:[%s6833 + $0x5a8] sm:$0xf]
      %v7076 = vld [vmem:[%s6833 + $0x5ac] sm:$0xff]
      %v7077 = vld [vmem:[%s6833 + $0x5b4] sm:$0xf]
      %v7078 = vld [vmem:[%s6833 + $0x5b8] sm:$0xff]
      %v7079 = vld [vmem:[%s6833 + $0x5c0] sm:$0xf]
      %v7080 = vld [vmem:[%s6833 + $0x5c4] sm:$0xff]
      %v7081 = vld [vmem:[%s6833 + $0x5cc] sm:$0xf]
      %v7082 = vld [vmem:[%s6833 + $0x5d0] sm:$0xff]
      %v7083 = vld [vmem:[%s6833 + $0x5d8] sm:$0xf]
      %v7084 = vld [vmem:[%s6833 + $0x5dc] sm:$0xff]
      %v7085 = vld [vmem:[%s6833 + $0x5e4] sm:$0xf]
      %v7086 = vld [vmem:[%s6833 + $0x5e8] sm:$0xff]
      %v7087 = vld [vmem:[%s6833 + $0x5f0] sm:$0xf]
      %v7088 = vld [vmem:[%s6833 + $0x5f4] sm:$0xff]
      %v7089 = vld [vmem:[%s6833 + $0x5fc] sm:$0xf]
      %v7098 = vunpack.c.l.b16 %v6825
      %v7099 = vunpack.c.l.b16 %v6826
      %v7100 = vunpack.c.l.b16 %v6827
      %v7101 = vunpack.c.l.b16 %v6828
      %v7102 = vunpack.c.l.b16 %v6829
      %v7103 = vunpack.c.l.b16 %v6830
      %v7104 = vunpack.c.l.b16 %v6831
      %v7105 = vunpack.c.l.b16 %v6832
      %v7106 = vrot.slane %v5345, 7
      %v7107 = vsel %vm511, %v7106, %v5337
      %v7108 = vrot.slane %v5353, 6
      %v7109 = vsel %vm514, %v7108, %v7107
      %v7110 = vrot.slane %v5361, 5
      %v7111 = vsel %vm517, %v7110, %v7109
      %v7112 = vrot.slane %v5369, 4
      %v7113 = vsel %vm520, %v7112, %v7111
      %v7114 = vrot.slane %v7098, 3
      %v7115 = vsel %vm523, %v7114, %v7113
      %v7116 = vrot.slane %v5346, 7
      %v7117 = vsel %vm511, %v7116, %v5338
      %v7118 = vrot.slane %v5354, 6
      %v7119 = vsel %vm514, %v7118, %v7117
      %v7120 = vrot.slane %v5362, 5
      %v7121 = vsel %vm517, %v7120, %v7119
      %v7122 = vrot.slane %v5370, 4
      %v7123 = vsel %vm520, %v7122, %v7121
      %v7124 = vrot.slane %v7099, 3
      %v7125 = vsel %vm523, %v7124, %v7123
      %v7126 = vrot.slane %v5347, 7
      %v7127 = vsel %vm511, %v7126, %v5339
      %v7128 = vrot.slane %v5355, 6
      %v7129 = vsel %vm514, %v7128, %v7127
      %v7130 = vrot.slane %v5363, 5
      %v7131 = vsel %vm517, %v7130, %v7129
      %v7132 = vrot.slane %v5371, 4
      %v7133 = vsel %vm520, %v7132, %v7131
      %v7134 = vrot.slane %v7100, 3
      %v7135 = vsel %vm523, %v7134, %v7133
      %v7136 = vrot.slane %v5348, 7
      %v7137 = vsel %vm511, %v7136, %v5340
      %v7138 = vrot.slane %v5356, 6
      %v7139 = vsel %vm514, %v7138, %v7137
      %v7140 = vrot.slane %v5364, 5
      %v7141 = vsel %vm517, %v7140, %v7139
      %v7142 = vrot.slane %v5372, 4
      %v7143 = vsel %vm520, %v7142, %v7141
      %v7144 = vrot.slane %v7101, 3
      %v7145 = vsel %vm523, %v7144, %v7143
      %v7146 = vrot.slane %v5349, 7
      %v7147 = vsel %vm511, %v7146, %v5341
      %v7148 = vrot.slane %v5357, 6
      %v7149 = vsel %vm514, %v7148, %v7147
      %v7150 = vrot.slane %v5365, 5
      %v7151 = vsel %vm517, %v7150, %v7149
      %v7152 = vrot.slane %v5373, 4
      %v7153 = vsel %vm520, %v7152, %v7151
      %v7154 = vrot.slane %v7102, 3
      %v7155 = vsel %vm523, %v7154, %v7153
      %v7156 = vrot.slane %v5350, 7
      %v7157 = vsel %vm511, %v7156, %v5342
      %v7158 = vrot.slane %v5358, 6
      %v7159 = vsel %vm514, %v7158, %v7157
      %v7160 = vrot.slane %v5366, 5
      %v7161 = vsel %vm517, %v7160, %v7159
      %v7162 = vrot.slane %v5374, 4
      %v7163 = vsel %vm520, %v7162, %v7161
      %v7164 = vrot.slane %v7103, 3
      %v7165 = vsel %vm523, %v7164, %v7163
      %v7166 = vrot.slane %v5351, 7
      %v7167 = vsel %vm511, %v7166, %v5343
      %v7168 = vrot.slane %v5359, 6
      %v7169 = vsel %vm514, %v7168, %v7167
      %v7170 = vrot.slane %v5367, 5
      %v7171 = vsel %vm517, %v7170, %v7169
      %v7172 = vrot.slane %v5375, 4
      %v7173 = vsel %vm520, %v7172, %v7171
      %v7174 = vrot.slane %v7104, 3
      %v7175 = vsel %vm523, %v7174, %v7173
      %v7176 = vrot.slane %v5352, 7
      %v7177 = vsel %vm511, %v7176, %v5344
      %v7178 = vrot.slane %v5360, 6
      %v7179 = vsel %vm514, %v7178, %v7177
      %v7180 = vrot.slane %v5368, 5
      %v7181 = vsel %vm517, %v7180, %v7179
      %v7182 = vrot.slane %v5376, 4
      %v7183 = vsel %vm520, %v7182, %v7181
      %v7184 = vrot.slane %v7105, 3
      %v7185 = vsel %vm523, %v7184, %v7183
      %v7186 = vpack.c.b16 %v7115, %v7115
      %v7187 = vpack.c.b16 %v7125, %v7125
      %v7188 = vpack.c.b16 %v7135, %v7135
      %v7189 = vpack.c.b16 %v7145, %v7145
      %v7190 = vpack.c.b16 %v7155, %v7155
      %v7191 = vpack.c.b16 %v7165, %v7165
      %v7192 = vpack.c.b16 %v7175, %v7175
      %v7193 = vpack.c.b16 %v7185, %v7185
      %v7458 = vunpack.c.l.b16 %v6834
      %v7459 = vunpack.c.h.b16 %v6834
      %v7460 = vunpack.c.l.b16 %v6835
      %v7461 = vunpack.c.l.b16 %v6836
      %v7462 = vunpack.c.h.b16 %v6836
      %v7463 = vunpack.c.l.b16 %v6837
      %v7464 = vunpack.c.l.b16 %v6838
      %v7465 = vunpack.c.h.b16 %v6838
      %v7466 = vunpack.c.l.b16 %v6839
      %v7467 = vunpack.c.l.b16 %v6840
      %v7468 = vunpack.c.h.b16 %v6840
      %v7469 = vunpack.c.l.b16 %v6841
      %v7470 = vunpack.c.l.b16 %v6842
      %v7471 = vunpack.c.h.b16 %v6842
      %v7472 = vunpack.c.l.b16 %v6843
      %v7473 = vunpack.c.l.b16 %v6844
      %v7474 = vunpack.c.h.b16 %v6844
      %v7475 = vunpack.c.l.b16 %v6845
      %v7476 = vunpack.c.l.b16 %v6846
      %v7477 = vunpack.c.h.b16 %v6846
      %v7478 = vunpack.c.l.b16 %v6847
      %v7479 = vunpack.c.l.b16 %v6848
      %v7480 = vunpack.c.h.b16 %v6848
      %v7481 = vunpack.c.l.b16 %v6849
      %v7482 = vunpack.c.l.b16 %v6850
      %v7483 = vunpack.c.h.b16 %v6850
      %v7484 = vunpack.c.l.b16 %v6851
      %v7485 = vunpack.c.l.b16 %v6852
      %v7486 = vunpack.c.h.b16 %v6852
      %v7487 = vunpack.c.l.b16 %v6853
      %v7488 = vunpack.c.l.b16 %v6854
      %v7489 = vunpack.c.h.b16 %v6854
      %v7490 = vunpack.c.l.b16 %v6855
      %v7491 = vunpack.c.l.b16 %v6856
      %v7492 = vunpack.c.h.b16 %v6856
      %v7493 = vunpack.c.l.b16 %v6857
      %v7494 = vunpack.c.l.b16 %v6858
      %v7495 = vunpack.c.h.b16 %v6858
      %v7496 = vunpack.c.l.b16 %v6859
      %v7497 = vunpack.c.l.b16 %v6860
      %v7498 = vunpack.c.h.b16 %v6860
      %v7499 = vunpack.c.l.b16 %v6861
      %v7500 = vunpack.c.l.b16 %v6862
      %v7501 = vunpack.c.h.b16 %v6862
      %v7502 = vunpack.c.l.b16 %v6863
      %v7503 = vunpack.c.l.b16 %v6864
      %v7504 = vunpack.c.h.b16 %v6864
      %v7505 = vunpack.c.l.b16 %v6865
      %v7506 = vunpack.c.l.b16 %v6866
      %v7507 = vunpack.c.h.b16 %v6866
      %v7508 = vunpack.c.l.b16 %v6867
      %v7509 = vunpack.c.l.b16 %v6868
      %v7510 = vunpack.c.h.b16 %v6868
      %v7511 = vunpack.c.l.b16 %v6869
      %v7512 = vunpack.c.l.b16 %v6870
      %v7513 = vunpack.c.h.b16 %v6870
      %v7514 = vunpack.c.l.b16 %v6871
      %v7515 = vunpack.c.l.b16 %v6872
      %v7516 = vunpack.c.h.b16 %v6872
      %v7517 = vunpack.c.l.b16 %v6873
      %v7518 = vunpack.c.l.b16 %v6874
      %v7519 = vunpack.c.h.b16 %v6874
      %v7520 = vunpack.c.l.b16 %v6875
      %v7521 = vunpack.c.l.b16 %v6876
      %v7522 = vunpack.c.h.b16 %v6876
      %v7523 = vunpack.c.l.b16 %v6877
      %v7524 = vunpack.c.l.b16 %v6878
      %v7525 = vunpack.c.h.b16 %v6878
      %v7526 = vunpack.c.l.b16 %v6879
      %v7527 = vunpack.c.l.b16 %v6880
      %v7528 = vunpack.c.h.b16 %v6880
      %v7529 = vunpack.c.l.b16 %v6881
      %v7530 = vunpack.c.l.b16 %v6882
      %v7531 = vunpack.c.h.b16 %v6882
      %v7532 = vunpack.c.l.b16 %v6883
      %v7533 = vunpack.c.l.b16 %v6884
      %v7534 = vunpack.c.h.b16 %v6884
      %v7535 = vunpack.c.l.b16 %v6885
      %v7536 = vunpack.c.l.b16 %v6886
      %v7537 = vunpack.c.h.b16 %v6886
      %v7538 = vunpack.c.l.b16 %v6887
      %v7539 = vunpack.c.l.b16 %v6888
      %v7540 = vunpack.c.h.b16 %v6888
      %v7541 = vunpack.c.l.b16 %v6889
      %v7542 = vunpack.c.l.b16 %v6890
      %v7543 = vunpack.c.h.b16 %v6890
      %v7544 = vunpack.c.l.b16 %v6891
      %v7545 = vunpack.c.l.b16 %v6892
      %v7546 = vunpack.c.h.b16 %v6892
      %v7547 = vunpack.c.l.b16 %v6893
      %v7548 = vunpack.c.l.b16 %v6894
      %v7549 = vunpack.c.h.b16 %v6894
      %v7550 = vunpack.c.l.b16 %v6895
      %v7551 = vunpack.c.l.b16 %v6896
      %v7552 = vunpack.c.h.b16 %v6896
      %v7553 = vunpack.c.l.b16 %v6897
      %v7554 = vunpack.c.l.b16 %v6898
      %v7555 = vunpack.c.h.b16 %v6898
      %v7556 = vunpack.c.l.b16 %v6899
      %v7557 = vunpack.c.l.b16 %v6900
      %v7558 = vunpack.c.h.b16 %v6900
      %v7559 = vunpack.c.l.b16 %v6901
      %v7560 = vunpack.c.l.b16 %v6902
      %v7561 = vunpack.c.h.b16 %v6902
      %v7562 = vunpack.c.l.b16 %v6903
      %v7563 = vunpack.c.l.b16 %v6904
      %v7564 = vunpack.c.h.b16 %v6904
      %v7565 = vunpack.c.l.b16 %v6905
      %v7566 = vunpack.c.l.b16 %v6906
      %v7567 = vunpack.c.h.b16 %v6906
      %v7568 = vunpack.c.l.b16 %v6907
      %v7569 = vunpack.c.l.b16 %v6908
      %v7570 = vunpack.c.h.b16 %v6908
      %v7571 = vunpack.c.l.b16 %v6909
      %v7572 = vunpack.c.l.b16 %v6910
      %v7573 = vunpack.c.h.b16 %v6910
      %v7574 = vunpack.c.l.b16 %v6911
      %v7575 = vunpack.c.l.b16 %v6912
      %v7576 = vunpack.c.h.b16 %v6912
      %v7577 = vunpack.c.l.b16 %v6913
      %v7578 = vunpack.c.l.b16 %v6914
      %v7579 = vunpack.c.h.b16 %v6914
      %v7580 = vunpack.c.l.b16 %v6915
      %v7581 = vunpack.c.l.b16 %v6916
      %v7582 = vunpack.c.h.b16 %v6916
      %v7583 = vunpack.c.l.b16 %v6917
      %v7584 = vunpack.c.l.b16 %v6918
      %v7585 = vunpack.c.h.b16 %v6918
      %v7586 = vunpack.c.l.b16 %v6919
      %v7587 = vunpack.c.l.b16 %v6920
      %v7588 = vunpack.c.h.b16 %v6920
      %v7589 = vunpack.c.l.b16 %v6921
      %v7590 = vunpack.c.l.b16 %v6922
      %v7591 = vunpack.c.h.b16 %v6922
      %v7592 = vunpack.c.l.b16 %v6923
      %v7593 = vunpack.c.l.b16 %v6924
      %v7594 = vunpack.c.h.b16 %v6924
      %v7595 = vunpack.c.l.b16 %v6925
      %v7596 = vunpack.c.l.b16 %v6926
      %v7597 = vunpack.c.h.b16 %v6926
      %v7598 = vunpack.c.l.b16 %v6927
      %v7599 = vunpack.c.l.b16 %v6928
      %v7600 = vunpack.c.h.b16 %v6928
      %v7601 = vunpack.c.l.b16 %v6929
      %v7602 = vunpack.c.l.b16 %v6930
      %v7603 = vunpack.c.h.b16 %v6930
      %v7604 = vunpack.c.l.b16 %v6931
      %v7605 = vunpack.c.l.b16 %v6932
      %v7606 = vunpack.c.h.b16 %v6932
      %v7607 = vunpack.c.l.b16 %v6933
      %v7608 = vunpack.c.l.b16 %v6934
      %v7609 = vunpack.c.h.b16 %v6934
      %v7610 = vunpack.c.l.b16 %v6935
      %v7611 = vunpack.c.l.b16 %v6936
      %v7612 = vunpack.c.h.b16 %v6936
      %v7613 = vunpack.c.l.b16 %v6937
      %v7614 = vunpack.c.l.b16 %v6938
      %v7615 = vunpack.c.h.b16 %v6938
      %v7616 = vunpack.c.l.b16 %v6939
      %v7617 = vunpack.c.l.b16 %v6940
      %v7618 = vunpack.c.h.b16 %v6940
      %v7619 = vunpack.c.l.b16 %v6941
      %v7620 = vunpack.c.l.b16 %v6942
      %v7621 = vunpack.c.h.b16 %v6942
      %v7622 = vunpack.c.l.b16 %v6943
      %v7623 = vunpack.c.l.b16 %v6944
      %v7624 = vunpack.c.h.b16 %v6944
      %v7625 = vunpack.c.l.b16 %v6945
      %v7626 = vunpack.c.l.b16 %v6946
      %v7627 = vunpack.c.h.b16 %v6946
      %v7628 = vunpack.c.l.b16 %v6947
      %v7629 = vunpack.c.l.b16 %v6948
      %v7630 = vunpack.c.h.b16 %v6948
      %v7631 = vunpack.c.l.b16 %v6949
      %v7632 = vunpack.c.l.b16 %v6950
      %v7633 = vunpack.c.h.b16 %v6950
      %v7634 = vunpack.c.l.b16 %v6951
      %v7635 = vunpack.c.l.b16 %v6952
      %v7636 = vunpack.c.h.b16 %v6952
      %v7637 = vunpack.c.l.b16 %v6953
      %v7638 = vunpack.c.l.b16 %v6954
      %v7639 = vunpack.c.h.b16 %v6954
      %v7640 = vunpack.c.l.b16 %v6955
      %v7641 = vunpack.c.l.b16 %v6956
      %v7642 = vunpack.c.h.b16 %v6956
      %v7643 = vunpack.c.l.b16 %v6957
      %v7644 = vunpack.c.l.b16 %v6958
      %v7645 = vunpack.c.h.b16 %v6958
      %v7646 = vunpack.c.l.b16 %v6959
      %v7647 = vunpack.c.l.b16 %v6960
      %v7648 = vunpack.c.h.b16 %v6960
      %v7649 = vunpack.c.l.b16 %v6961
      %v7650 = vunpack.c.l.b16 %v6962
      %v7651 = vunpack.c.h.b16 %v6962
      %v7652 = vunpack.c.l.b16 %v6963
      %v7653 = vunpack.c.l.b16 %v6964
      %v7654 = vunpack.c.h.b16 %v6964
      %v7655 = vunpack.c.l.b16 %v6965
      %v7656 = vunpack.c.l.b16 %v6966
      %v7657 = vunpack.c.h.b16 %v6966
      %v7658 = vunpack.c.l.b16 %v6967
      %v7659 = vunpack.c.l.b16 %v6968
      %v7660 = vunpack.c.h.b16 %v6968
      %v7661 = vunpack.c.l.b16 %v6969
      %v7662 = vunpack.c.l.b16 %v6970
      %v7663 = vunpack.c.h.b16 %v6970
      %v7664 = vunpack.c.l.b16 %v6971
      %v7665 = vunpack.c.l.b16 %v6972
      %v7666 = vunpack.c.h.b16 %v6972
      %v7667 = vunpack.c.l.b16 %v6973
      %v7668 = vunpack.c.l.b16 %v6974
      %v7669 = vunpack.c.h.b16 %v6974
      %v7670 = vunpack.c.l.b16 %v6975
      %v7671 = vunpack.c.l.b16 %v6976
      %v7672 = vunpack.c.h.b16 %v6976
      %v7673 = vunpack.c.l.b16 %v6977
      %v7674 = vunpack.c.l.b16 %v6978
      %v7675 = vunpack.c.h.b16 %v6978
      %v7676 = vunpack.c.l.b16 %v6979
      %v7677 = vunpack.c.l.b16 %v6980
      %v7678 = vunpack.c.h.b16 %v6980
      %v7679 = vunpack.c.l.b16 %v6981
      %v7680 = vunpack.c.l.b16 %v6982
      %v7681 = vunpack.c.h.b16 %v6982
      %v7682 = vunpack.c.l.b16 %v6983
      %v7683 = vunpack.c.l.b16 %v6984
      %v7684 = vunpack.c.h.b16 %v6984
      %v7685 = vunpack.c.l.b16 %v6985
      %v7686 = vunpack.c.l.b16 %v6986
      %v7687 = vunpack.c.h.b16 %v6986
      %v7688 = vunpack.c.l.b16 %v6987
      %v7689 = vunpack.c.l.b16 %v6988
      %v7690 = vunpack.c.h.b16 %v6988
      %v7691 = vunpack.c.l.b16 %v6989
      %v7692 = vunpack.c.l.b16 %v6990
      %v7693 = vunpack.c.h.b16 %v6990
      %v7694 = vunpack.c.l.b16 %v6991
      %v7695 = vunpack.c.l.b16 %v6992
      %v7696 = vunpack.c.h.b16 %v6992
      %v7697 = vunpack.c.l.b16 %v6993
      %v7698 = vunpack.c.l.b16 %v6994
      %v7699 = vunpack.c.h.b16 %v6994
      %v7700 = vunpack.c.l.b16 %v6995
      %v7701 = vunpack.c.l.b16 %v6996
      %v7702 = vunpack.c.h.b16 %v6996
      %v7703 = vunpack.c.l.b16 %v6997
      %v7704 = vunpack.c.l.b16 %v6998
      %v7705 = vunpack.c.h.b16 %v6998
      %v7706 = vunpack.c.l.b16 %v6999
      %v7707 = vunpack.c.l.b16 %v7000
      %v7708 = vunpack.c.h.b16 %v7000
      %v7709 = vunpack.c.l.b16 %v7001
      %v7710 = vunpack.c.l.b16 %v7002
      %v7711 = vunpack.c.h.b16 %v7002
      %v7712 = vunpack.c.l.b16 %v7003
      %v7713 = vunpack.c.l.b16 %v7004
      %v7714 = vunpack.c.h.b16 %v7004
      %v7715 = vunpack.c.l.b16 %v7005
      %v7716 = vunpack.c.l.b16 %v7006
      %v7717 = vunpack.c.h.b16 %v7006
      %v7718 = vunpack.c.l.b16 %v7007
      %v7719 = vunpack.c.l.b16 %v7008
      %v7720 = vunpack.c.h.b16 %v7008
      %v7721 = vunpack.c.l.b16 %v7009
      %v7722 = vunpack.c.l.b16 %v7010
      %v7723 = vunpack.c.h.b16 %v7010
      %v7724 = vunpack.c.l.b16 %v7011
      %v7725 = vunpack.c.l.b16 %v7012
      %v7726 = vunpack.c.h.b16 %v7012
      %v7727 = vunpack.c.l.b16 %v7013
      %v7728 = vunpack.c.l.b16 %v7014
      %v7729 = vunpack.c.h.b16 %v7014
      %v7730 = vunpack.c.l.b16 %v7015
      %v7731 = vunpack.c.l.b16 %v7016
      %v7732 = vunpack.c.h.b16 %v7016
      %v7733 = vunpack.c.l.b16 %v7017
      %v7734 = vunpack.c.l.b16 %v7018
      %v7735 = vunpack.c.h.b16 %v7018
      %v7736 = vunpack.c.l.b16 %v7019
      %v7737 = vunpack.c.l.b16 %v7020
      %v7738 = vunpack.c.h.b16 %v7020
      %v7739 = vunpack.c.l.b16 %v7021
      %v7740 = vunpack.c.l.b16 %v7022
      %v7741 = vunpack.c.h.b16 %v7022
      %v7742 = vunpack.c.l.b16 %v7023
      %v7743 = vunpack.c.l.b16 %v7024
      %v7744 = vunpack.c.h.b16 %v7024
      %v7745 = vunpack.c.l.b16 %v7025
      %v7746 = vunpack.c.l.b16 %v7026
      %v7747 = vunpack.c.h.b16 %v7026
      %v7748 = vunpack.c.l.b16 %v7027
      %v7749 = vunpack.c.l.b16 %v7028
      %v7750 = vunpack.c.h.b16 %v7028
      %v7751 = vunpack.c.l.b16 %v7029
      %v7752 = vunpack.c.l.b16 %v7030
      %v7753 = vunpack.c.h.b16 %v7030
      %v7754 = vunpack.c.l.b16 %v7031
      %v7755 = vunpack.c.l.b16 %v7032
      %v7756 = vunpack.c.h.b16 %v7032
      %v7757 = vunpack.c.l.b16 %v7033
      %v7758 = vunpack.c.l.b16 %v7034
      %v7759 = vunpack.c.h.b16 %v7034
      %v7760 = vunpack.c.l.b16 %v7035
      %v7761 = vunpack.c.l.b16 %v7036
      %v7762 = vunpack.c.h.b16 %v7036
      %v7763 = vunpack.c.l.b16 %v7037
      %v7764 = vunpack.c.l.b16 %v7038
      %v7765 = vunpack.c.h.b16 %v7038
      %v7766 = vunpack.c.l.b16 %v7039
      %v7767 = vunpack.c.l.b16 %v7040
      %v7768 = vunpack.c.h.b16 %v7040
      %v7769 = vunpack.c.l.b16 %v7041
      %v7770 = vunpack.c.l.b16 %v7042
      %v7771 = vunpack.c.h.b16 %v7042
      %v7772 = vunpack.c.l.b16 %v7043
      %v7773 = vunpack.c.l.b16 %v7044
      %v7774 = vunpack.c.h.b16 %v7044
      %v7775 = vunpack.c.l.b16 %v7045
      %v7776 = vunpack.c.l.b16 %v7046
      %v7777 = vunpack.c.h.b16 %v7046
      %v7778 = vunpack.c.l.b16 %v7047
      %v7779 = vunpack.c.l.b16 %v7048
      %v7780 = vunpack.c.h.b16 %v7048
      %v7781 = vunpack.c.l.b16 %v7049
      %v7782 = vunpack.c.l.b16 %v7050
      %v7783 = vunpack.c.h.b16 %v7050
      %v7784 = vunpack.c.l.b16 %v7051
      %v7785 = vunpack.c.l.b16 %v7052
      %v7786 = vunpack.c.h.b16 %v7052
      %v7787 = vunpack.c.l.b16 %v7053
      %v7788 = vunpack.c.l.b16 %v7054
      %v7789 = vunpack.c.h.b16 %v7054
      %v7790 = vunpack.c.l.b16 %v7055
      %v7791 = vunpack.c.l.b16 %v7056
      %v7792 = vunpack.c.h.b16 %v7056
      %v7793 = vunpack.c.l.b16 %v7057
      %v7794 = vunpack.c.l.b16 %v7058
      %v7795 = vunpack.c.h.b16 %v7058
      %v7796 = vunpack.c.l.b16 %v7059
      %v7797 = vunpack.c.l.b16 %v7060
      %v7798 = vunpack.c.h.b16 %v7060
      %v7799 = vunpack.c.l.b16 %v7061
      %v7800 = vunpack.c.l.b16 %v7062
      %v7801 = vunpack.c.h.b16 %v7062
      %v7802 = vunpack.c.l.b16 %v7063
      %v7803 = vunpack.c.l.b16 %v7064
      %v7804 = vunpack.c.h.b16 %v7064
      %v7805 = vunpack.c.l.b16 %v7065
      %v7806 = vunpack.c.l.b16 %v7066
      %v7807 = vunpack.c.h.b16 %v7066
      %v7808 = vunpack.c.l.b16 %v7067
      %v7809 = vunpack.c.l.b16 %v7068
      %v7810 = vunpack.c.h.b16 %v7068
      %v7811 = vunpack.c.l.b16 %v7069
      %v7812 = vunpack.c.l.b16 %v7070
      %v7813 = vunpack.c.h.b16 %v7070
      %v7814 = vunpack.c.l.b16 %v7071
      %v7815 = vunpack.c.l.b16 %v7072
      %v7816 = vunpack.c.h.b16 %v7072
      %v7817 = vunpack.c.l.b16 %v7073
      %v7818 = vunpack.c.l.b16 %v7074
      %v7819 = vunpack.c.h.b16 %v7074
      %v7820 = vunpack.c.l.b16 %v7075
      %v7821 = vunpack.c.l.b16 %v7076
      %v7822 = vunpack.c.h.b16 %v7076
      %v7823 = vunpack.c.l.b16 %v7077
      %v7824 = vunpack.c.l.b16 %v7078
      %v7825 = vunpack.c.h.b16 %v7078
      %v7826 = vunpack.c.l.b16 %v7079
      %v7827 = vunpack.c.l.b16 %v7080
      %v7828 = vunpack.c.h.b16 %v7080
      %v7829 = vunpack.c.l.b16 %v7081
      %v7830 = vunpack.c.l.b16 %v7082
      %v7831 = vunpack.c.h.b16 %v7082
      %v7832 = vunpack.c.l.b16 %v7083
      %v7833 = vunpack.c.l.b16 %v7084
      %v7834 = vunpack.c.h.b16 %v7084
      %v7835 = vunpack.c.l.b16 %v7085
      %v7836 = vunpack.c.l.b16 %v7086
      %v7837 = vunpack.c.h.b16 %v7086
      %v7838 = vunpack.c.l.b16 %v7087
      %v7839 = vunpack.c.l.b16 %v7088
      %v7840 = vunpack.c.h.b16 %v7088
      %v7841 = vunpack.c.l.b16 %v7089
      %v7842 = vpack.c.b16 %v7461, %v7458
      %v7843 = vpack.c.b16 %v7462, %v7459
      %v7844 = vpack.c.b16 %v7463, %v7460
      %v7845 = vpack.c.b16 %v7467, %v7464
      %v7846 = vpack.c.b16 %v7468, %v7465
      %v7847 = vpack.c.b16 %v7469, %v7466
      %v7848 = vpack.c.b16 %v7473, %v7470
      %v7849 = vpack.c.b16 %v7474, %v7471
      %v7850 = vpack.c.b16 %v7475, %v7472
      %v7851 = vpack.c.b16 %v7479, %v7476
      %v7852 = vpack.c.b16 %v7480, %v7477
      %v7853 = vpack.c.b16 %v7481, %v7478
      %v7854 = vpack.c.b16 %v7485, %v7482
      %v7855 = vpack.c.b16 %v7486, %v7483
      %v7856 = vpack.c.b16 %v7487, %v7484
      %v7857 = vpack.c.b16 %v7491, %v7488
      %v7858 = vpack.c.b16 %v7492, %v7489
      %v7859 = vpack.c.b16 %v7493, %v7490
      %v7860 = vpack.c.b16 %v7497, %v7494
      %v7861 = vpack.c.b16 %v7498, %v7495
      %v7862 = vpack.c.b16 %v7499, %v7496
      %v7863 = vpack.c.b16 %v7503, %v7500
      %v7864 = vpack.c.b16 %v7504, %v7501
      %v7865 = vpack.c.b16 %v7505, %v7502
      %v7866 = vpack.c.b16 %v7509, %v7506
      %v7867 = vpack.c.b16 %v7510, %v7507
      %v7868 = vpack.c.b16 %v7511, %v7508
      %v7869 = vpack.c.b16 %v7515, %v7512
      %v7870 = vpack.c.b16 %v7516, %v7513
      %v7871 = vpack.c.b16 %v7517, %v7514
      %v7872 = vpack.c.b16 %v7521, %v7518
      %v7873 = vpack.c.b16 %v7522, %v7519
      %v7874 = vpack.c.b16 %v7523, %v7520
      %v7875 = vpack.c.b16 %v7527, %v7524
      %v7876 = vpack.c.b16 %v7528, %v7525
      %v7877 = vpack.c.b16 %v7529, %v7526
      %v7878 = vpack.c.b16 %v7533, %v7530
      %v7879 = vpack.c.b16 %v7534, %v7531
      %v7880 = vpack.c.b16 %v7535, %v7532
      %v7881 = vpack.c.b16 %v7539, %v7536
      %v7882 = vpack.c.b16 %v7540, %v7537
      %v7883 = vpack.c.b16 %v7541, %v7538
      %v7884 = vpack.c.b16 %v7545, %v7542
      %v7885 = vpack.c.b16 %v7546, %v7543
      %v7886 = vpack.c.b16 %v7547, %v7544
      %v7887 = vpack.c.b16 %v7551, %v7548
      %v7888 = vpack.c.b16 %v7552, %v7549
      %v7889 = vpack.c.b16 %v7553, %v7550
      %v7890 = vpack.c.b16 %v7557, %v7554
      %v7891 = vpack.c.b16 %v7558, %v7555
      %v7892 = vpack.c.b16 %v7559, %v7556
      %v7893 = vpack.c.b16 %v7563, %v7560
      %v7894 = vpack.c.b16 %v7564, %v7561
      %v7895 = vpack.c.b16 %v7565, %v7562
      %v7896 = vpack.c.b16 %v7569, %v7566
      %v7897 = vpack.c.b16 %v7570, %v7567
      %v7898 = vpack.c.b16 %v7571, %v7568
      %v7899 = vpack.c.b16 %v7575, %v7572
      %v7900 = vpack.c.b16 %v7576, %v7573
      %v7901 = vpack.c.b16 %v7577, %v7574
      %v7902 = vpack.c.b16 %v7581, %v7578
      %v7903 = vpack.c.b16 %v7582, %v7579
      %v7904 = vpack.c.b16 %v7583, %v7580
      %v7905 = vpack.c.b16 %v7587, %v7584
      %v7906 = vpack.c.b16 %v7588, %v7585
      %v7907 = vpack.c.b16 %v7589, %v7586
      %v7908 = vpack.c.b16 %v7593, %v7590
      %v7909 = vpack.c.b16 %v7594, %v7591
      %v7910 = vpack.c.b16 %v7595, %v7592
      %v7911 = vpack.c.b16 %v7599, %v7596
      %v7912 = vpack.c.b16 %v7600, %v7597
      %v7913 = vpack.c.b16 %v7601, %v7598
      %v7914 = vpack.c.b16 %v7605, %v7602
      %v7915 = vpack.c.b16 %v7606, %v7603
      %v7916 = vpack.c.b16 %v7607, %v7604
      %v7917 = vpack.c.b16 %v7611, %v7608
      %v7918 = vpack.c.b16 %v7612, %v7609
      %v7919 = vpack.c.b16 %v7613, %v7610
      %v7920 = vpack.c.b16 %v7617, %v7614
      %v7921 = vpack.c.b16 %v7618, %v7615
      %v7922 = vpack.c.b16 %v7619, %v7616
      %v7923 = vpack.c.b16 %v7623, %v7620
      %v7924 = vpack.c.b16 %v7624, %v7621
      %v7925 = vpack.c.b16 %v7625, %v7622
      %v7926 = vpack.c.b16 %v7629, %v7626
      %v7927 = vpack.c.b16 %v7630, %v7627
      %v7928 = vpack.c.b16 %v7631, %v7628
      %v7929 = vpack.c.b16 %v7635, %v7632
      %v7930 = vpack.c.b16 %v7636, %v7633
      %v7931 = vpack.c.b16 %v7637, %v7634
      %v7932 = vpack.c.b16 %v7641, %v7638
      %v7933 = vpack.c.b16 %v7642, %v7639
      %v7934 = vpack.c.b16 %v7643, %v7640
      %v7935 = vpack.c.b16 %v7647, %v7644
      %v7936 = vpack.c.b16 %v7648, %v7645
      %v7937 = vpack.c.b16 %v7649, %v7646
      %v7938 = vpack.c.b16 %v7653, %v7650
      %v7939 = vpack.c.b16 %v7654, %v7651
      %v7940 = vpack.c.b16 %v7655, %v7652
      %v7941 = vpack.c.b16 %v7659, %v7656
      %v7942 = vpack.c.b16 %v7660, %v7657
      %v7943 = vpack.c.b16 %v7661, %v7658
      %v7944 = vpack.c.b16 %v7665, %v7662
      %v7945 = vpack.c.b16 %v7666, %v7663
      %v7946 = vpack.c.b16 %v7667, %v7664
      %v7947 = vpack.c.b16 %v7671, %v7668
      %v7948 = vpack.c.b16 %v7672, %v7669
      %v7949 = vpack.c.b16 %v7673, %v7670
      %v7950 = vpack.c.b16 %v7677, %v7674
      %v7951 = vpack.c.b16 %v7678, %v7675
      %v7952 = vpack.c.b16 %v7679, %v7676
      %v7953 = vpack.c.b16 %v7683, %v7680
      %v7954 = vpack.c.b16 %v7684, %v7681
      %v7955 = vpack.c.b16 %v7685, %v7682
      %v7956 = vpack.c.b16 %v7689, %v7686
      %v7957 = vpack.c.b16 %v7690, %v7687
      %v7958 = vpack.c.b16 %v7691, %v7688
      %v7959 = vpack.c.b16 %v7695, %v7692
      %v7960 = vpack.c.b16 %v7696, %v7693
      %v7961 = vpack.c.b16 %v7697, %v7694
      %v7962 = vpack.c.b16 %v7701, %v7698
      %v7963 = vpack.c.b16 %v7702, %v7699
      %v7964 = vpack.c.b16 %v7703, %v7700
      %v7965 = vpack.c.b16 %v7707, %v7704
      %v7966 = vpack.c.b16 %v7708, %v7705
      %v7967 = vpack.c.b16 %v7709, %v7706
      %v7968 = vpack.c.b16 %v7713, %v7710
      %v7969 = vpack.c.b16 %v7714, %v7711
      %v7970 = vpack.c.b16 %v7715, %v7712
      %v7971 = vpack.c.b16 %v7719, %v7716
      %v7972 = vpack.c.b16 %v7720, %v7717
      %v7973 = vpack.c.b16 %v7721, %v7718
      %v7974 = vpack.c.b16 %v7725, %v7722
      %v7975 = vpack.c.b16 %v7726, %v7723
      %v7976 = vpack.c.b16 %v7727, %v7724
      %v7977 = vpack.c.b16 %v7731, %v7728
      %v7978 = vpack.c.b16 %v7732, %v7729
      %v7979 = vpack.c.b16 %v7733, %v7730
      %v7980 = vpack.c.b16 %v7737, %v7734
      %v7981 = vpack.c.b16 %v7738, %v7735
      %v7982 = vpack.c.b16 %v7739, %v7736
      %v7983 = vpack.c.b16 %v7743, %v7740
      %v7984 = vpack.c.b16 %v7744, %v7741
      %v7985 = vpack.c.b16 %v7745, %v7742
      %v7986 = vpack.c.b16 %v7749, %v7746
      %v7987 = vpack.c.b16 %v7750, %v7747
      %v7988 = vpack.c.b16 %v7751, %v7748
      %v7989 = vpack.c.b16 %v7755, %v7752
      %v7990 = vpack.c.b16 %v7756, %v7753
      %v7991 = vpack.c.b16 %v7757, %v7754
      %v7992 = vpack.c.b16 %v7761, %v7758
      %v7993 = vpack.c.b16 %v7762, %v7759
      %v7994 = vpack.c.b16 %v7763, %v7760
      %v7995 = vpack.c.b16 %v7767, %v7764
      %v7996 = vpack.c.b16 %v7768, %v7765
      %v7997 = vpack.c.b16 %v7769, %v7766
      %v7998 = vpack.c.b16 %v7773, %v7770
      %v7999 = vpack.c.b16 %v7774, %v7771
      %v8000 = vpack.c.b16 %v7775, %v7772
      %v8001 = vpack.c.b16 %v7779, %v7776
      %v8002 = vpack.c.b16 %v7780, %v7777
      %v8003 = vpack.c.b16 %v7781, %v7778
      %v8004 = vpack.c.b16 %v7785, %v7782
      %v8005 = vpack.c.b16 %v7786, %v7783
      %v8006 = vpack.c.b16 %v7787, %v7784
      %v8007 = vpack.c.b16 %v7791, %v7788
      %v8008 = vpack.c.b16 %v7792, %v7789
      %v8009 = vpack.c.b16 %v7793, %v7790
      %v8010 = vpack.c.b16 %v7797, %v7794
      %v8011 = vpack.c.b16 %v7798, %v7795
      %v8012 = vpack.c.b16 %v7799, %v7796
      %v8013 = vpack.c.b16 %v7803, %v7800
      %v8014 = vpack.c.b16 %v7804, %v7801
      %v8015 = vpack.c.b16 %v7805, %v7802
      %v8016 = vpack.c.b16 %v7809, %v7806
      %v8017 = vpack.c.b16 %v7810, %v7807
      %v8018 = vpack.c.b16 %v7811, %v7808
      %v8019 = vpack.c.b16 %v7815, %v7812
      %v8020 = vpack.c.b16 %v7816, %v7813
      %v8021 = vpack.c.b16 %v7817, %v7814
      %v8022 = vpack.c.b16 %v7821, %v7818
      %v8023 = vpack.c.b16 %v7822, %v7819
      %v8024 = vpack.c.b16 %v7823, %v7820
      %v8025 = vpack.c.b16 %v7827, %v7824
      %v8026 = vpack.c.b16 %v7828, %v7825
      %v8027 = vpack.c.b16 %v7829, %v7826
      %v8028 = vpack.c.b16 %v7833, %v7830
      %v8029 = vpack.c.b16 %v7834, %v7831
      %v8030 = vpack.c.b16 %v7835, %v7832
      %v8031 = vpack.c.b16 %v7839, %v7836
      %v8032 = vpack.c.b16 %v7840, %v7837
      %v8033 = vpack.c.b16 %v7841, %v7838
      %8226 = vmatpush.bf16.msra.mxu0 %v7863
      %8227 = vmatpush.bf16.msra.mxu0 %v7860
      %8228 = vmatpush.bf16.msra.mxu0 %v7857
      %8229 = vmatpush.bf16.msra.mxu0 %v7854
      %8230 = vmatpush.bf16.msra.mxu0 %v7851
      %8231 = vmatpush.bf16.msra.mxu0 %v7848
      %8232 = vmatpush.bf16.msra.mxu0 %v7845
      %8233 = vmatpush.bf16.msra.mxu0 %v7842
      %8234 = vmatmul.bf16.gmra.mxu0 %v7186
      %v8235 = vpop.f32.mrf.mxu0
      %v8236 = vadd.f32 0.0, %v8235
      %v8237 = vpop.f32.mrf.mxu0
      %8238 = vdwg.mxu0
      %8239 = vmatpush.bf16.msra.mxu0 %v7887
      %8240 = vmatpush.bf16.msra.mxu0 %v7884
      %8241 = vmatpush.bf16.msra.mxu0 %v7881
      %8242 = vmatpush.bf16.msra.mxu0 %v7878
      %8243 = vmatpush.bf16.msra.mxu0 %v7875
      %8244 = vmatpush.bf16.msra.mxu0 %v7872
      %8245 = vmatpush.bf16.msra.mxu0 %v7869
      %8246 = vmatpush.bf16.msra.mxu0 %v7866
      %8247 = vmatmul.bf16.gmra.mxu0 %v7187
      %v8248 = vpop.f32.mrf.mxu0
      %v8249 = vadd.f32 %v8236, %v8248
      %v8250 = vpop.f32.mrf.mxu0
      %8251 = vdwg.mxu0
      %8252 = vmatpush.bf16.msra.mxu0 %v7911
      %8253 = vmatpush.bf16.msra.mxu0 %v7908
      %8254 = vmatpush.bf16.msra.mxu0 %v7905
      %8255 = vmatpush.bf16.msra.mxu0 %v7902
      %8256 = vmatpush.bf16.msra.mxu0 %v7899
      %8257 = vmatpush.bf16.msra.mxu0 %v7896
      %8258 = vmatpush.bf16.msra.mxu0 %v7893
      %8259 = vmatpush.bf16.msra.mxu0 %v7890
      %8260 = vmatmul.bf16.gmra.mxu0 %v7188
      %v8261 = vpop.f32.mrf.mxu0
      %v8262 = vadd.f32 %v8249, %v8261
      %v8263 = vpop.f32.mrf.mxu0
      %8264 = vdwg.mxu0
      %8265 = vmatpush.bf16.msra.mxu0 %v7935
      %8266 = vmatpush.bf16.msra.mxu0 %v7932
      %8267 = vmatpush.bf16.msra.mxu0 %v7929
      %8268 = vmatpush.bf16.msra.mxu0 %v7926
      %8269 = vmatpush.bf16.msra.mxu0 %v7923
      %8270 = vmatpush.bf16.msra.mxu0 %v7920
      %8271 = vmatpush.bf16.msra.mxu0 %v7917
      %8272 = vmatpush.bf16.msra.mxu0 %v7914
      %8273 = vmatmul.bf16.gmra.mxu0 %v7189
      %v8274 = vpop.f32.mrf.mxu0
      %v8275 = vadd.f32 %v8262, %v8274
      %v8276 = vpop.f32.mrf.mxu0
      %8277 = vdwg.mxu0
      %8278 = vmatpush.bf16.msra.mxu0 %v7959
      %8279 = vmatpush.bf16.msra.mxu0 %v7956
      %8280 = vmatpush.bf16.msra.mxu0 %v7953
      %8281 = vmatpush.bf16.msra.mxu0 %v7950
      %8282 = vmatpush.bf16.msra.mxu0 %v7947
      %8283 = vmatpush.bf16.msra.mxu0 %v7944
      %8284 = vmatpush.bf16.msra.mxu0 %v7941
      %8285 = vmatpush.bf16.msra.mxu0 %v7938
      %8286 = vmatmul.bf16.gmra.mxu0 %v7190
      %v8287 = vpop.f32.mrf.mxu0
      %v8288 = vadd.f32 %v8275, %v8287
      %v8289 = vpop.f32.mrf.mxu0
      %8290 = vdwg.mxu0
      %8291 = vmatpush.bf16.msra.mxu0 %v7983
      %8292 = vmatpush.bf16.msra.mxu0 %v7980
      %8293 = vmatpush.bf16.msra.mxu0 %v7977
      %8294 = vmatpush.bf16.msra.mxu0 %v7974
      %8295 = vmatpush.bf16.msra.mxu0 %v7971
      %8296 = vmatpush.bf16.msra.mxu0 %v7968
      %8297 = vmatpush.bf16.msra.mxu0 %v7965
      %8298 = vmatpush.bf16.msra.mxu0 %v7962
      %8299 = vmatmul.bf16.gmra.mxu0 %v7191
      %v8300 = vpop.f32.mrf.mxu0
      %v8301 = vadd.f32 %v8288, %v8300
      %v8302 = vpop.f32.mrf.mxu0
      %8303 = vdwg.mxu0
      %8304 = vmatpush.bf16.msra.mxu0 %v8007
      %8305 = vmatpush.bf16.msra.mxu0 %v8004
      %8306 = vmatpush.bf16.msra.mxu0 %v8001
      %8307 = vmatpush.bf16.msra.mxu0 %v7998
      %8308 = vmatpush.bf16.msra.mxu0 %v7995
      %8309 = vmatpush.bf16.msra.mxu0 %v7992
      %8310 = vmatpush.bf16.msra.mxu0 %v7989
      %8311 = vmatpush.bf16.msra.mxu0 %v7986
      %8312 = vmatmul.bf16.gmra.mxu0 %v7192
      %v8313 = vpop.f32.mrf.mxu0
      %v8314 = vadd.f32 %v8301, %v8313
      %v8315 = vpop.f32.mrf.mxu0
      %8316 = vdwg.mxu0
      %8317 = vmatpush.bf16.msra.mxu0 %v8031
      %8318 = vmatpush.bf16.msra.mxu0 %v8028
      %8319 = vmatpush.bf16.msra.mxu0 %v8025
      %8320 = vmatpush.bf16.msra.mxu0 %v8022
      %8321 = vmatpush.bf16.msra.mxu0 %v8019
      %8322 = vmatpush.bf16.msra.mxu0 %v8016
      %8323 = vmatpush.bf16.msra.mxu0 %v8013
      %8324 = vmatpush.bf16.msra.mxu0 %v8010
      %8325 = vmatmul.bf16.gmra.mxu0 %v7193
      %v8326 = vpop.f32.mrf.mxu0
      %v8327 = vadd.f32 %v8314, %v8326
      %v8328 = vpop.f32.mrf.mxu0
      %8329 = vdwg.mxu0
      %8330 = vmatpush.bf16.msra.mxu0 %v7864
      %8331 = vmatpush.bf16.msra.mxu0 %v7861
      %8332 = vmatpush.bf16.msra.mxu0 %v7858
      %8333 = vmatpush.bf16.msra.mxu0 %v7855
      %8334 = vmatpush.bf16.msra.mxu0 %v7852
      %8335 = vmatpush.bf16.msra.mxu0 %v7849
      %8336 = vmatpush.bf16.msra.mxu0 %v7846
      %8337 = vmatpush.bf16.msra.mxu0 %v7843
      %8338 = vmatmul.bf16.gmra.mxu0 %v7186
      %v8339 = vpop.f32.mrf.mxu0
      %v8340 = vadd.f32 0.0, %v8339
      %v8341 = vpop.f32.mrf.mxu0
      %8342 = vdwg.mxu0
      %8343 = vmatpush.bf16.msra.mxu0 %v7888
      %8344 = vmatpush.bf16.msra.mxu0 %v7885
      %8345 = vmatpush.bf16.msra.mxu0 %v7882
      %8346 = vmatpush.bf16.msra.mxu0 %v7879
      %8347 = vmatpush.bf16.msra.mxu0 %v7876
      %8348 = vmatpush.bf16.msra.mxu0 %v7873
      %8349 = vmatpush.bf16.msra.mxu0 %v7870
      %8350 = vmatpush.bf16.msra.mxu0 %v7867
      %8351 = vmatmul.bf16.gmra.mxu0 %v7187
      %v8352 = vpop.f32.mrf.mxu0
      %v8353 = vadd.f32 %v8340, %v8352
      %v8354 = vpop.f32.mrf.mxu0
      %8355 = vdwg.mxu0
      %8356 = vmatpush.bf16.msra.mxu0 %v7912
      %8357 = vmatpush.bf16.msra.mxu0 %v7909
      %8358 = vmatpush.bf16.msra.mxu0 %v7906
      %8359 = vmatpush.bf16.msra.mxu0 %v7903
      %8360 = vmatpush.bf16.msra.mxu0 %v7900
      %8361 = vmatpush.bf16.msra.mxu0 %v7897
      %8362 = vmatpush.bf16.msra.mxu0 %v7894
      %8363 = vmatpush.bf16.msra.mxu0 %v7891
      %8364 = vmatmul.bf16.gmra.mxu0 %v7188
      %v8365 = vpop.f32.mrf.mxu0
      %v8366 = vadd.f32 %v8353, %v8365
      %v8367 = vpop.f32.mrf.mxu0
      %8368 = vdwg.mxu0
      %8369 = vmatpush.bf16.msra.mxu0 %v7936
      %8370 = vmatpush.bf16.msra.mxu0 %v7933
      %8371 = vmatpush.bf16.msra.mxu0 %v7930
      %8372 = vmatpush.bf16.msra.mxu0 %v7927
      %8373 = vmatpush.bf16.msra.mxu0 %v7924
      %8374 = vmatpush.bf16.msra.mxu0 %v7921
      %8375 = vmatpush.bf16.msra.mxu0 %v7918
      %8376 = vmatpush.bf16.msra.mxu0 %v7915
      %8377 = vmatmul.bf16.gmra.mxu0 %v7189
      %v8378 = vpop.f32.mrf.mxu0
      %v8379 = vadd.f32 %v8366, %v8378
      %v8380 = vpop.f32.mrf.mxu0
      %8381 = vdwg.mxu0
      %8382 = vmatpush.bf16.msra.mxu0 %v7960
      %8383 = vmatpush.bf16.msra.mxu0 %v7957
      %8384 = vmatpush.bf16.msra.mxu0 %v7954
      %8385 = vmatpush.bf16.msra.mxu0 %v7951
      %8386 = vmatpush.bf16.msra.mxu0 %v7948
      %8387 = vmatpush.bf16.msra.mxu0 %v7945
      %8388 = vmatpush.bf16.msra.mxu0 %v7942
      %8389 = vmatpush.bf16.msra.mxu0 %v7939
      %8390 = vmatmul.bf16.gmra.mxu0 %v7190
      %v8391 = vpop.f32.mrf.mxu0
      %v8392 = vadd.f32 %v8379, %v8391
      %v8393 = vpop.f32.mrf.mxu0
      %8394 = vdwg.mxu0
      %8395 = vmatpush.bf16.msra.mxu0 %v7984
      %8396 = vmatpush.bf16.msra.mxu0 %v7981
      %8397 = vmatpush.bf16.msra.mxu0 %v7978
      %8398 = vmatpush.bf16.msra.mxu0 %v7975
      %8399 = vmatpush.bf16.msra.mxu0 %v7972
      %8400 = vmatpush.bf16.msra.mxu0 %v7969
      %8401 = vmatpush.bf16.msra.mxu0 %v7966
      %8402 = vmatpush.bf16.msra.mxu0 %v7963
      %8403 = vmatmul.bf16.gmra.mxu0 %v7191
      %v8404 = vpop.f32.mrf.mxu0
      %v8405 = vadd.f32 %v8392, %v8404
      %v8406 = vpop.f32.mrf.mxu0
      %8407 = vdwg.mxu0
      %8408 = vmatpush.bf16.msra.mxu0 %v8008
      %8409 = vmatpush.bf16.msra.mxu0 %v8005
      %8410 = vmatpush.bf16.msra.mxu0 %v8002
      %8411 = vmatpush.bf16.msra.mxu0 %v7999
      %8412 = vmatpush.bf16.msra.mxu0 %v7996
      %8413 = vmatpush.bf16.msra.mxu0 %v7993
      %8414 = vmatpush.bf16.msra.mxu0 %v7990
      %8415 = vmatpush.bf16.msra.mxu0 %v7987
      %8416 = vmatmul.bf16.gmra.mxu0 %v7192
      %v8417 = vpop.f32.mrf.mxu0
      %v8418 = vadd.f32 %v8405, %v8417
      %v8419 = vpop.f32.mrf.mxu0
      %8420 = vdwg.mxu0
      %8421 = vmatpush.bf16.msra.mxu0 %v8032
      %8422 = vmatpush.bf16.msra.mxu0 %v8029
      %8423 = vmatpush.bf16.msra.mxu0 %v8026
      %8424 = vmatpush.bf16.msra.mxu0 %v8023
      %8425 = vmatpush.bf16.msra.mxu0 %v8020
      %8426 = vmatpush.bf16.msra.mxu0 %v8017
      %8427 = vmatpush.bf16.msra.mxu0 %v8014
      %8428 = vmatpush.bf16.msra.mxu0 %v8011
      %8429 = vmatmul.bf16.gmra.mxu0 %v7193
      %v8430 = vpop.f32.mrf.mxu0
      %v8431 = vadd.f32 %v8418, %v8430
      %v8432 = vpop.f32.mrf.mxu0
      %8433 = vdwg.mxu0
      %8434 = vmatpush.bf16.msra.mxu0 %v7865
      %8435 = vmatpush.bf16.msra.mxu0 %v7862
      %8436 = vmatpush.bf16.msra.mxu0 %v7859
      %8437 = vmatpush.bf16.msra.mxu0 %v7856
      %8438 = vmatpush.bf16.msra.mxu0 %v7853
      %8439 = vmatpush.bf16.msra.mxu0 %v7850
      %8440 = vmatpush.bf16.msra.mxu0 %v7847
      %8441 = vmatpush.bf16.msra.mxu0 %v7844
      %8442 = vmatmul.bf16.gmra.mxu0 %v7186
      %v8443 = vpop.f32.mrf.mxu0
      %v8444 = vadd.f32 0.0, %v8443
      %v8445 = vpop.f32.mrf.mxu0
      %8446 = vdwg.mxu0
      %8447 = vmatpush.bf16.msra.mxu0 %v7889
      %8448 = vmatpush.bf16.msra.mxu0 %v7886
      %8449 = vmatpush.bf16.msra.mxu0 %v7883
      %8450 = vmatpush.bf16.msra.mxu0 %v7880
      %8451 = vmatpush.bf16.msra.mxu0 %v7877
      %8452 = vmatpush.bf16.msra.mxu0 %v7874
      %8453 = vmatpush.bf16.msra.mxu0 %v7871
      %8454 = vmatpush.bf16.msra.mxu0 %v7868
      %8455 = vmatmul.bf16.gmra.mxu0 %v7187
      %v8456 = vpop.f32.mrf.mxu0
      %v8457 = vadd.f32 %v8444, %v8456
      %v8458 = vpop.f32.mrf.mxu0
      %8459 = vdwg.mxu0
      %8460 = vmatpush.bf16.msra.mxu0 %v7913
      %8461 = vmatpush.bf16.msra.mxu0 %v7910
      %8462 = vmatpush.bf16.msra.mxu0 %v7907
      %8463 = vmatpush.bf16.msra.mxu0 %v7904
      %8464 = vmatpush.bf16.msra.mxu0 %v7901
      %8465 = vmatpush.bf16.msra.mxu0 %v7898
      %8466 = vmatpush.bf16.msra.mxu0 %v7895
      %8467 = vmatpush.bf16.msra.mxu0 %v7892
      %8468 = vmatmul.bf16.gmra.mxu0 %v7188
      %v8469 = vpop.f32.mrf.mxu0
      %v8470 = vadd.f32 %v8457, %v8469
      %v8471 = vpop.f32.mrf.mxu0
      %8472 = vdwg.mxu0
      %8473 = vmatpush.bf16.msra.mxu0 %v7937
      %8474 = vmatpush.bf16.msra.mxu0 %v7934
      %8475 = vmatpush.bf16.msra.mxu0 %v7931
      %8476 = vmatpush.bf16.msra.mxu0 %v7928
      %8477 = vmatpush.bf16.msra.mxu0 %v7925
      %8478 = vmatpush.bf16.msra.mxu0 %v7922
      %8479 = vmatpush.bf16.msra.mxu0 %v7919
      %8480 = vmatpush.bf16.msra.mxu0 %v7916
      %8481 = vmatmul.bf16.gmra.mxu0 %v7189
      %v8482 = vpop.f32.mrf.mxu0
      %v8483 = vadd.f32 %v8470, %v8482
      %v8484 = vpop.f32.mrf.mxu0
      %8485 = vdwg.mxu0
      %8486 = vmatpush.bf16.msra.mxu0 %v7961
      %8487 = vmatpush.bf16.msra.mxu0 %v7958
      %8488 = vmatpush.bf16.msra.mxu0 %v7955
      %8489 = vmatpush.bf16.msra.mxu0 %v7952
      %8490 = vmatpush.bf16.msra.mxu0 %v7949
      %8491 = vmatpush.bf16.msra.mxu0 %v7946
      %8492 = vmatpush.bf16.msra.mxu0 %v7943
      %8493 = vmatpush.bf16.msra.mxu0 %v7940
      %8494 = vmatmul.bf16.gmra.mxu0 %v7190
      %v8495 = vpop.f32.mrf.mxu0
      %v8496 = vadd.f32 %v8483, %v8495
      %v8497 = vpop.f32.mrf.mxu0
      %8498 = vdwg.mxu0
      %8499 = vmatpush.bf16.msra.mxu0 %v7985
      %8500 = vmatpush.bf16.msra.mxu0 %v7982
      %8501 = vmatpush.bf16.msra.mxu0 %v7979
      %8502 = vmatpush.bf16.msra.mxu0 %v7976
      %8503 = vmatpush.bf16.msra.mxu0 %v7973
      %8504 = vmatpush.bf16.msra.mxu0 %v7970
      %8505 = vmatpush.bf16.msra.mxu0 %v7967
      %8506 = vmatpush.bf16.msra.mxu0 %v7964
      %8507 = vmatmul.bf16.gmra.mxu0 %v7191
      %v8508 = vpop.f32.mrf.mxu0
      %v8509 = vadd.f32 %v8496, %v8508
      %v8510 = vpop.f32.mrf.mxu0
      %8511 = vdwg.mxu0
      %8512 = vmatpush.bf16.msra.mxu0 %v8009
      %8513 = vmatpush.bf16.msra.mxu0 %v8006
      %8514 = vmatpush.bf16.msra.mxu0 %v8003
      %8515 = vmatpush.bf16.msra.mxu0 %v8000
      %8516 = vmatpush.bf16.msra.mxu0 %v7997
      %8517 = vmatpush.bf16.msra.mxu0 %v7994
      %8518 = vmatpush.bf16.msra.mxu0 %v7991
      %8519 = vmatpush.bf16.msra.mxu0 %v7988
      %8520 = vmatmul.bf16.gmra.mxu0 %v7192
      %v8521 = vpop.f32.mrf.mxu0
      %v8522 = vadd.f32 %v8509, %v8521
      %v8523 = vpop.f32.mrf.mxu0
      %8524 = vdwg.mxu0
      %8525 = vmatpush.bf16.msra.mxu0 %v8033
      %8526 = vmatpush.bf16.msra.mxu0 %v8030
      %8527 = vmatpush.bf16.msra.mxu0 %v8027
      %8528 = vmatpush.bf16.msra.mxu0 %v8024
      %8529 = vmatpush.bf16.msra.mxu0 %v8021
      %8530 = vmatpush.bf16.msra.mxu0 %v8018
      %8531 = vmatpush.bf16.msra.mxu0 %v8015
      %8532 = vmatpush.bf16.msra.mxu0 %v8012
      %8533 = vmatmul.bf16.gmra.mxu0 %v7193
      %v8534 = vpop.f32.mrf.mxu0
      %v8535 = vadd.f32 %v8522, %v8534
      %v8536 = vpop.f32.mrf.mxu0
      %8537 = vdwg.mxu0
      %v8538 = vadd.f32 %v6598, %v8327
      %v8539 = vadd.f32 %v6702, %v8431
      %v8540 = vadd.f32 %v6806, %v8535
      %v8541 = vperm.slane %v2951, 0
      %v8542 = vperm.slane %v2951, 1
      %v8543 = vperm.slane %v2951, 2
      %v8544 = vperm.slane %v2951, 3
      %v8545 = vperm.slane %v2951, 4
      %v8546 = vperm.slane %v2951, 5
      %v8547 = vperm.slane %v2951, 6
      %v8548 = vperm.slane %v2951, 7
      %v8557 = vpack.c.bf16 %v8541, %v8541
      %v8558 = vpack.c.bf16 %v8542, %v8542
      %v8559 = vpack.c.bf16 %v8543, %v8543
      %v8560 = vpack.c.bf16 %v8544, %v8544
      %v8561 = vpack.c.bf16 %v8545, %v8545
      %v8562 = vpack.c.bf16 %v8546, %v8546
      %v8563 = vpack.c.bf16 %v8547, %v8547
      %v8564 = vpack.c.bf16 %v8548, %v8548
      %s8565 = scalar_lea.vmem %s3, 4608
      %v8566 = vld [vmem:[%s8565] sm:$0xff]
      %v8567 = vld [vmem:[%s8565 + $0x8] sm:$0xf]
      %v8568 = vld [vmem:[%s8565 + $0xc] sm:$0xff]
      %v8569 = vld [vmem:[%s8565 + $0x14] sm:$0xf]
      %v8570 = vld [vmem:[%s8565 + $0x18] sm:$0xff]
      %v8571 = vld [vmem:[%s8565 + $0x20] sm:$0xf]
      %v8572 = vld [vmem:[%s8565 + $0x24] sm:$0xff]
      %v8573 = vld [vmem:[%s8565 + $0x2c] sm:$0xf]
      %v8574 = vld [vmem:[%s8565 + $0x30] sm:$0xff]
      %v8575 = vld [vmem:[%s8565 + $0x38] sm:$0xf]
      %v8576 = vld [vmem:[%s8565 + $0x3c] sm:$0xff]
      %v8577 = vld [vmem:[%s8565 + $0x44] sm:$0xf]
      %v8578 = vld [vmem:[%s8565 + $0x48] sm:$0xff]
      %v8579 = vld [vmem:[%s8565 + $0x50] sm:$0xf]
      %v8580 = vld [vmem:[%s8565 + $0x54] sm:$0xff]
      %v8581 = vld [vmem:[%s8565 + $0x5c] sm:$0xf]
      %v8582 = vld [vmem:[%s8565 + $0x60] sm:$0xff]
      %v8583 = vld [vmem:[%s8565 + $0x68] sm:$0xf]
      %v8584 = vld [vmem:[%s8565 + $0x6c] sm:$0xff]
      %v8585 = vld [vmem:[%s8565 + $0x74] sm:$0xf]
      %v8586 = vld [vmem:[%s8565 + $0x78] sm:$0xff]
      %v8587 = vld [vmem:[%s8565 + $0x80] sm:$0xf]
      %v8588 = vld [vmem:[%s8565 + $0x84] sm:$0xff]
      %v8589 = vld [vmem:[%s8565 + $0x8c] sm:$0xf]
      %v8590 = vld [vmem:[%s8565 + $0x90] sm:$0xff]
      %v8591 = vld [vmem:[%s8565 + $0x98] sm:$0xf]
      %v8592 = vld [vmem:[%s8565 + $0x9c] sm:$0xff]
      %v8593 = vld [vmem:[%s8565 + $0xa4] sm:$0xf]
      %v8594 = vld [vmem:[%s8565 + $0xa8] sm:$0xff]
      %v8595 = vld [vmem:[%s8565 + $0xb0] sm:$0xf]
      %v8596 = vld [vmem:[%s8565 + $0xb4] sm:$0xff]
      %v8597 = vld [vmem:[%s8565 + $0xbc] sm:$0xf]
      %v8598 = vld [vmem:[%s8565 + $0xc0] sm:$0xff]
      %v8599 = vld [vmem:[%s8565 + $0xc8] sm:$0xf]
      %v8600 = vld [vmem:[%s8565 + $0xcc] sm:$0xff]
      %v8601 = vld [vmem:[%s8565 + $0xd4] sm:$0xf]
      %v8602 = vld [vmem:[%s8565 + $0xd8] sm:$0xff]
      %v8603 = vld [vmem:[%s8565 + $0xe0] sm:$0xf]
      %v8604 = vld [vmem:[%s8565 + $0xe4] sm:$0xff]
      %v8605 = vld [vmem:[%s8565 + $0xec] sm:$0xf]
      %v8606 = vld [vmem:[%s8565 + $0xf0] sm:$0xff]
      %v8607 = vld [vmem:[%s8565 + $0xf8] sm:$0xf]
      %v8608 = vld [vmem:[%s8565 + $0xfc] sm:$0xff]
      %v8609 = vld [vmem:[%s8565 + $0x104] sm:$0xf]
      %v8610 = vld [vmem:[%s8565 + $0x108] sm:$0xff]
      %v8611 = vld [vmem:[%s8565 + $0x110] sm:$0xf]
      %v8612 = vld [vmem:[%s8565 + $0x114] sm:$0xff]
      %v8613 = vld [vmem:[%s8565 + $0x11c] sm:$0xf]
      %v8614 = vld [vmem:[%s8565 + $0x120] sm:$0xff]
      %v8615 = vld [vmem:[%s8565 + $0x128] sm:$0xf]
      %v8616 = vld [vmem:[%s8565 + $0x12c] sm:$0xff]
      %v8617 = vld [vmem:[%s8565 + $0x134] sm:$0xf]
      %v8618 = vld [vmem:[%s8565 + $0x138] sm:$0xff]
      %v8619 = vld [vmem:[%s8565 + $0x140] sm:$0xf]
      %v8620 = vld [vmem:[%s8565 + $0x144] sm:$0xff]
      %v8621 = vld [vmem:[%s8565 + $0x14c] sm:$0xf]
      %v8622 = vld [vmem:[%s8565 + $0x150] sm:$0xff]
      %v8623 = vld [vmem:[%s8565 + $0x158] sm:$0xf]
      %v8624 = vld [vmem:[%s8565 + $0x15c] sm:$0xff]
      %v8625 = vld [vmem:[%s8565 + $0x164] sm:$0xf]
      %v8626 = vld [vmem:[%s8565 + $0x168] sm:$0xff]
      %v8627 = vld [vmem:[%s8565 + $0x170] sm:$0xf]
      %v8628 = vld [vmem:[%s8565 + $0x174] sm:$0xff]
      %v8629 = vld [vmem:[%s8565 + $0x17c] sm:$0xf]
      %v8630 = vld [vmem:[%s8565 + $0x180] sm:$0xff]
      %v8631 = vld [vmem:[%s8565 + $0x188] sm:$0xf]
      %v8632 = vld [vmem:[%s8565 + $0x18c] sm:$0xff]
      %v8633 = vld [vmem:[%s8565 + $0x194] sm:$0xf]
      %v8634 = vld [vmem:[%s8565 + $0x198] sm:$0xff]
      %v8635 = vld [vmem:[%s8565 + $0x1a0] sm:$0xf]
      %v8636 = vld [vmem:[%s8565 + $0x1a4] sm:$0xff]
      %v8637 = vld [vmem:[%s8565 + $0x1ac] sm:$0xf]
      %v8638 = vld [vmem:[%s8565 + $0x1b0] sm:$0xff]
      %v8639 = vld [vmem:[%s8565 + $0x1b8] sm:$0xf]
      %v8640 = vld [vmem:[%s8565 + $0x1bc] sm:$0xff]
      %v8641 = vld [vmem:[%s8565 + $0x1c4] sm:$0xf]
      %v8642 = vld [vmem:[%s8565 + $0x1c8] sm:$0xff]
      %v8643 = vld [vmem:[%s8565 + $0x1d0] sm:$0xf]
      %v8644 = vld [vmem:[%s8565 + $0x1d4] sm:$0xff]
      %v8645 = vld [vmem:[%s8565 + $0x1dc] sm:$0xf]
      %v8646 = vld [vmem:[%s8565 + $0x1e0] sm:$0xff]
      %v8647 = vld [vmem:[%s8565 + $0x1e8] sm:$0xf]
      %v8648 = vld [vmem:[%s8565 + $0x1ec] sm:$0xff]
      %v8649 = vld [vmem:[%s8565 + $0x1f4] sm:$0xf]
      %v8650 = vld [vmem:[%s8565 + $0x1f8] sm:$0xff]
      %v8651 = vld [vmem:[%s8565 + $0x200] sm:$0xf]
      %v8652 = vld [vmem:[%s8565 + $0x204] sm:$0xff]
      %v8653 = vld [vmem:[%s8565 + $0x20c] sm:$0xf]
      %v8654 = vld [vmem:[%s8565 + $0x210] sm:$0xff]
      %v8655 = vld [vmem:[%s8565 + $0x218] sm:$0xf]
      %v8656 = vld [vmem:[%s8565 + $0x21c] sm:$0xff]
      %v8657 = vld [vmem:[%s8565 + $0x224] sm:$0xf]
      %v8658 = vld [vmem:[%s8565 + $0x228] sm:$0xff]
      %v8659 = vld [vmem:[%s8565 + $0x230] sm:$0xf]
      %v8660 = vld [vmem:[%s8565 + $0x234] sm:$0xff]
      %v8661 = vld [vmem:[%s8565 + $0x23c] sm:$0xf]
      %v8662 = vld [vmem:[%s8565 + $0x240] sm:$0xff]
      %v8663 = vld [vmem:[%s8565 + $0x248] sm:$0xf]
      %v8664 = vld [vmem:[%s8565 + $0x24c] sm:$0xff]
      %v8665 = vld [vmem:[%s8565 + $0x254] sm:$0xf]
      %v8666 = vld [vmem:[%s8565 + $0x258] sm:$0xff]
      %v8667 = vld [vmem:[%s8565 + $0x260] sm:$0xf]
      %v8668 = vld [vmem:[%s8565 + $0x264] sm:$0xff]
      %v8669 = vld [vmem:[%s8565 + $0x26c] sm:$0xf]
      %v8670 = vld [vmem:[%s8565 + $0x270] sm:$0xff]
      %v8671 = vld [vmem:[%s8565 + $0x278] sm:$0xf]
      %v8672 = vld [vmem:[%s8565 + $0x27c] sm:$0xff]
      %v8673 = vld [vmem:[%s8565 + $0x284] sm:$0xf]
      %v8674 = vld [vmem:[%s8565 + $0x288] sm:$0xff]
      %v8675 = vld [vmem:[%s8565 + $0x290] sm:$0xf]
      %v8676 = vld [vmem:[%s8565 + $0x294] sm:$0xff]
      %v8677 = vld [vmem:[%s8565 + $0x29c] sm:$0xf]
      %v8678 = vld [vmem:[%s8565 + $0x2a0] sm:$0xff]
      %v8679 = vld [vmem:[%s8565 + $0x2a8] sm:$0xf]
      %v8680 = vld [vmem:[%s8565 + $0x2ac] sm:$0xff]
      %v8681 = vld [vmem:[%s8565 + $0x2b4] sm:$0xf]
      %v8682 = vld [vmem:[%s8565 + $0x2b8] sm:$0xff]
      %v8683 = vld [vmem:[%s8565 + $0x2c0] sm:$0xf]
      %v8684 = vld [vmem:[%s8565 + $0x2c4] sm:$0xff]
      %v8685 = vld [vmem:[%s8565 + $0x2cc] sm:$0xf]
      %v8686 = vld [vmem:[%s8565 + $0x2d0] sm:$0xff]
      %v8687 = vld [vmem:[%s8565 + $0x2d8] sm:$0xf]
      %v8688 = vld [vmem:[%s8565 + $0x2dc] sm:$0xff]
      %v8689 = vld [vmem:[%s8565 + $0x2e4] sm:$0xf]
      %v8690 = vld [vmem:[%s8565 + $0x2e8] sm:$0xff]
      %v8691 = vld [vmem:[%s8565 + $0x2f0] sm:$0xf]
      %v8692 = vld [vmem:[%s8565 + $0x2f4] sm:$0xff]
      %v8693 = vld [vmem:[%s8565 + $0x2fc] sm:$0xf]
      %v8694 = vld [vmem:[%s8565 + $0x300] sm:$0xff]
      %v8695 = vld [vmem:[%s8565 + $0x308] sm:$0xf]
      %v8696 = vld [vmem:[%s8565 + $0x30c] sm:$0xff]
      %v8697 = vld [vmem:[%s8565 + $0x314] sm:$0xf]
      %v8698 = vld [vmem:[%s8565 + $0x318] sm:$0xff]
      %v8699 = vld [vmem:[%s8565 + $0x320] sm:$0xf]
      %v8700 = vld [vmem:[%s8565 + $0x324] sm:$0xff]
      %v8701 = vld [vmem:[%s8565 + $0x32c] sm:$0xf]
      %v8702 = vld [vmem:[%s8565 + $0x330] sm:$0xff]
      %v8703 = vld [vmem:[%s8565 + $0x338] sm:$0xf]
      %v8704 = vld [vmem:[%s8565 + $0x33c] sm:$0xff]
      %v8705 = vld [vmem:[%s8565 + $0x344] sm:$0xf]
      %v8706 = vld [vmem:[%s8565 + $0x348] sm:$0xff]
      %v8707 = vld [vmem:[%s8565 + $0x350] sm:$0xf]
      %v8708 = vld [vmem:[%s8565 + $0x354] sm:$0xff]
      %v8709 = vld [vmem:[%s8565 + $0x35c] sm:$0xf]
      %v8710 = vld [vmem:[%s8565 + $0x360] sm:$0xff]
      %v8711 = vld [vmem:[%s8565 + $0x368] sm:$0xf]
      %v8712 = vld [vmem:[%s8565 + $0x36c] sm:$0xff]
      %v8713 = vld [vmem:[%s8565 + $0x374] sm:$0xf]
      %v8714 = vld [vmem:[%s8565 + $0x378] sm:$0xff]
      %v8715 = vld [vmem:[%s8565 + $0x380] sm:$0xf]
      %v8716 = vld [vmem:[%s8565 + $0x384] sm:$0xff]
      %v8717 = vld [vmem:[%s8565 + $0x38c] sm:$0xf]
      %v8718 = vld [vmem:[%s8565 + $0x390] sm:$0xff]
      %v8719 = vld [vmem:[%s8565 + $0x398] sm:$0xf]
      %v8720 = vld [vmem:[%s8565 + $0x39c] sm:$0xff]
      %v8721 = vld [vmem:[%s8565 + $0x3a4] sm:$0xf]
      %v8722 = vld [vmem:[%s8565 + $0x3a8] sm:$0xff]
      %v8723 = vld [vmem:[%s8565 + $0x3b0] sm:$0xf]
      %v8724 = vld [vmem:[%s8565 + $0x3b4] sm:$0xff]
      %v8725 = vld [vmem:[%s8565 + $0x3bc] sm:$0xf]
      %v8726 = vld [vmem:[%s8565 + $0x3c0] sm:$0xff]
      %v8727 = vld [vmem:[%s8565 + $0x3c8] sm:$0xf]
      %v8728 = vld [vmem:[%s8565 + $0x3cc] sm:$0xff]
      %v8729 = vld [vmem:[%s8565 + $0x3d4] sm:$0xf]
      %v8730 = vld [vmem:[%s8565 + $0x3d8] sm:$0xff]
      %v8731 = vld [vmem:[%s8565 + $0x3e0] sm:$0xf]
      %v8732 = vld [vmem:[%s8565 + $0x3e4] sm:$0xff]
      %v8733 = vld [vmem:[%s8565 + $0x3ec] sm:$0xf]
      %v8734 = vld [vmem:[%s8565 + $0x3f0] sm:$0xff]
      %v8735 = vld [vmem:[%s8565 + $0x3f8] sm:$0xf]
      %v8736 = vld [vmem:[%s8565 + $0x3fc] sm:$0xff]
      %v8737 = vld [vmem:[%s8565 + $0x404] sm:$0xf]
      %v8738 = vld [vmem:[%s8565 + $0x408] sm:$0xff]
      %v8739 = vld [vmem:[%s8565 + $0x410] sm:$0xf]
      %v8740 = vld [vmem:[%s8565 + $0x414] sm:$0xff]
      %v8741 = vld [vmem:[%s8565 + $0x41c] sm:$0xf]
      %v8742 = vld [vmem:[%s8565 + $0x420] sm:$0xff]
      %v8743 = vld [vmem:[%s8565 + $0x428] sm:$0xf]
      %v8744 = vld [vmem:[%s8565 + $0x42c] sm:$0xff]
      %v8745 = vld [vmem:[%s8565 + $0x434] sm:$0xf]
      %v8746 = vld [vmem:[%s8565 + $0x438] sm:$0xff]
      %v8747 = vld [vmem:[%s8565 + $0x440] sm:$0xf]
      %v8748 = vld [vmem:[%s8565 + $0x444] sm:$0xff]
      %v8749 = vld [vmem:[%s8565 + $0x44c] sm:$0xf]
      %v8750 = vld [vmem:[%s8565 + $0x450] sm:$0xff]
      %v8751 = vld [vmem:[%s8565 + $0x458] sm:$0xf]
      %v8752 = vld [vmem:[%s8565 + $0x45c] sm:$0xff]
      %v8753 = vld [vmem:[%s8565 + $0x464] sm:$0xf]
      %v8754 = vld [vmem:[%s8565 + $0x468] sm:$0xff]
      %v8755 = vld [vmem:[%s8565 + $0x470] sm:$0xf]
      %v8756 = vld [vmem:[%s8565 + $0x474] sm:$0xff]
      %v8757 = vld [vmem:[%s8565 + $0x47c] sm:$0xf]
      %v8758 = vld [vmem:[%s8565 + $0x480] sm:$0xff]
      %v8759 = vld [vmem:[%s8565 + $0x488] sm:$0xf]
      %v8760 = vld [vmem:[%s8565 + $0x48c] sm:$0xff]
      %v8761 = vld [vmem:[%s8565 + $0x494] sm:$0xf]
      %v8762 = vld [vmem:[%s8565 + $0x498] sm:$0xff]
      %v8763 = vld [vmem:[%s8565 + $0x4a0] sm:$0xf]
      %v8764 = vld [vmem:[%s8565 + $0x4a4] sm:$0xff]
      %v8765 = vld [vmem:[%s8565 + $0x4ac] sm:$0xf]
      %v8766 = vld [vmem:[%s8565 + $0x4b0] sm:$0xff]
      %v8767 = vld [vmem:[%s8565 + $0x4b8] sm:$0xf]
      %v8768 = vld [vmem:[%s8565 + $0x4bc] sm:$0xff]
      %v8769 = vld [vmem:[%s8565 + $0x4c4] sm:$0xf]
      %v8770 = vld [vmem:[%s8565 + $0x4c8] sm:$0xff]
      %v8771 = vld [vmem:[%s8565 + $0x4d0] sm:$0xf]
      %v8772 = vld [vmem:[%s8565 + $0x4d4] sm:$0xff]
      %v8773 = vld [vmem:[%s8565 + $0x4dc] sm:$0xf]
      %v8774 = vld [vmem:[%s8565 + $0x4e0] sm:$0xff]
      %v8775 = vld [vmem:[%s8565 + $0x4e8] sm:$0xf]
      %v8776 = vld [vmem:[%s8565 + $0x4ec] sm:$0xff]
      %v8777 = vld [vmem:[%s8565 + $0x4f4] sm:$0xf]
      %v8778 = vld [vmem:[%s8565 + $0x4f8] sm:$0xff]
      %v8779 = vld [vmem:[%s8565 + $0x500] sm:$0xf]
      %v8780 = vld [vmem:[%s8565 + $0x504] sm:$0xff]
      %v8781 = vld [vmem:[%s8565 + $0x50c] sm:$0xf]
      %v8782 = vld [vmem:[%s8565 + $0x510] sm:$0xff]
      %v8783 = vld [vmem:[%s8565 + $0x518] sm:$0xf]
      %v8784 = vld [vmem:[%s8565 + $0x51c] sm:$0xff]
      %v8785 = vld [vmem:[%s8565 + $0x524] sm:$0xf]
      %v8786 = vld [vmem:[%s8565 + $0x528] sm:$0xff]
      %v8787 = vld [vmem:[%s8565 + $0x530] sm:$0xf]
      %v8788 = vld [vmem:[%s8565 + $0x534] sm:$0xff]
      %v8789 = vld [vmem:[%s8565 + $0x53c] sm:$0xf]
      %v8790 = vld [vmem:[%s8565 + $0x540] sm:$0xff]
      %v8791 = vld [vmem:[%s8565 + $0x548] sm:$0xf]
      %v8792 = vld [vmem:[%s8565 + $0x54c] sm:$0xff]
      %v8793 = vld [vmem:[%s8565 + $0x554] sm:$0xf]
      %v8794 = vld [vmem:[%s8565 + $0x558] sm:$0xff]
      %v8795 = vld [vmem:[%s8565 + $0x560] sm:$0xf]
      %v8796 = vld [vmem:[%s8565 + $0x564] sm:$0xff]
      %v8797 = vld [vmem:[%s8565 + $0x56c] sm:$0xf]
      %v8798 = vld [vmem:[%s8565 + $0x570] sm:$0xff]
      %v8799 = vld [vmem:[%s8565 + $0x578] sm:$0xf]
      %v8800 = vld [vmem:[%s8565 + $0x57c] sm:$0xff]
      %v8801 = vld [vmem:[%s8565 + $0x584] sm:$0xf]
      %v8802 = vld [vmem:[%s8565 + $0x588] sm:$0xff]
      %v8803 = vld [vmem:[%s8565 + $0x590] sm:$0xf]
      %v8804 = vld [vmem:[%s8565 + $0x594] sm:$0xff]
      %v8805 = vld [vmem:[%s8565 + $0x59c] sm:$0xf]
      %v8806 = vld [vmem:[%s8565 + $0x5a0] sm:$0xff]
      %v8807 = vld [vmem:[%s8565 + $0x5a8] sm:$0xf]
      %v8808 = vld [vmem:[%s8565 + $0x5ac] sm:$0xff]
      %v8809 = vld [vmem:[%s8565 + $0x5b4] sm:$0xf]
      %v8810 = vld [vmem:[%s8565 + $0x5b8] sm:$0xff]
      %v8811 = vld [vmem:[%s8565 + $0x5c0] sm:$0xf]
      %v8812 = vld [vmem:[%s8565 + $0x5c4] sm:$0xff]
      %v8813 = vld [vmem:[%s8565 + $0x5cc] sm:$0xf]
      %v8814 = vld [vmem:[%s8565 + $0x5d0] sm:$0xff]
      %v8815 = vld [vmem:[%s8565 + $0x5d8] sm:$0xf]
      %v8816 = vld [vmem:[%s8565 + $0x5dc] sm:$0xff]
      %v8817 = vld [vmem:[%s8565 + $0x5e4] sm:$0xf]
      %v8818 = vld [vmem:[%s8565 + $0x5e8] sm:$0xff]
      %v8819 = vld [vmem:[%s8565 + $0x5f0] sm:$0xf]
      %v8820 = vld [vmem:[%s8565 + $0x5f4] sm:$0xff]
      %v8821 = vld [vmem:[%s8565 + $0x5fc] sm:$0xf]
      %v8830 = vunpack.c.l.b16 %v8557
      %v8831 = vunpack.c.l.b16 %v8558
      %v8832 = vunpack.c.l.b16 %v8559
      %v8833 = vunpack.c.l.b16 %v8560
      %v8834 = vunpack.c.l.b16 %v8561
      %v8835 = vunpack.c.l.b16 %v8562
      %v8836 = vunpack.c.l.b16 %v8563
      %v8837 = vunpack.c.l.b16 %v8564
      %v8838 = vrot.slane %v3817, 7
      %v8839 = vsel %vm511, %v8838, %v3809
      %v8840 = vrot.slane %v3825, 6
      %v8841 = vsel %vm514, %v8840, %v8839
      %v8842 = vrot.slane %v3833, 5
      %v8843 = vsel %vm517, %v8842, %v8841
      %v8844 = vrot.slane %v3841, 4
      %v8845 = vsel %vm520, %v8844, %v8843
      %v8846 = vrot.slane %v8830, 3
      %v8847 = vsel %vm523, %v8846, %v8845
      %v8848 = vrot.slane %v3818, 7
      %v8849 = vsel %vm511, %v8848, %v3810
      %v8850 = vrot.slane %v3826, 6
      %v8851 = vsel %vm514, %v8850, %v8849
      %v8852 = vrot.slane %v3834, 5
      %v8853 = vsel %vm517, %v8852, %v8851
      %v8854 = vrot.slane %v3842, 4
      %v8855 = vsel %vm520, %v8854, %v8853
      %v8856 = vrot.slane %v8831, 3
      %v8857 = vsel %vm523, %v8856, %v8855
      %v8858 = vrot.slane %v3819, 7
      %v8859 = vsel %vm511, %v8858, %v3811
      %v8860 = vrot.slane %v3827, 6
      %v8861 = vsel %vm514, %v8860, %v8859
      %v8862 = vrot.slane %v3835, 5
      %v8863 = vsel %vm517, %v8862, %v8861
      %v8864 = vrot.slane %v3843, 4
      %v8865 = vsel %vm520, %v8864, %v8863
      %v8866 = vrot.slane %v8832, 3
      %v8867 = vsel %vm523, %v8866, %v8865
      %v8868 = vrot.slane %v3820, 7
      %v8869 = vsel %vm511, %v8868, %v3812
      %v8870 = vrot.slane %v3828, 6
      %v8871 = vsel %vm514, %v8870, %v8869
      %v8872 = vrot.slane %v3836, 5
      %v8873 = vsel %vm517, %v8872, %v8871
      %v8874 = vrot.slane %v3844, 4
      %v8875 = vsel %vm520, %v8874, %v8873
      %v8876 = vrot.slane %v8833, 3
      %v8877 = vsel %vm523, %v8876, %v8875
      %v8878 = vrot.slane %v3821, 7
      %v8879 = vsel %vm511, %v8878, %v3813
      %v8880 = vrot.slane %v3829, 6
      %v8881 = vsel %vm514, %v8880, %v8879
      %v8882 = vrot.slane %v3837, 5
      %v8883 = vsel %vm517, %v8882, %v8881
      %v8884 = vrot.slane %v3845, 4
      %v8885 = vsel %vm520, %v8884, %v8883
      %v8886 = vrot.slane %v8834, 3
      %v8887 = vsel %vm523, %v8886, %v8885
      %v8888 = vrot.slane %v3822, 7
      %v8889 = vsel %vm511, %v8888, %v3814
      %v8890 = vrot.slane %v3830, 6
      %v8891 = vsel %vm514, %v8890, %v8889
      %v8892 = vrot.slane %v3838, 5
      %v8893 = vsel %vm517, %v8892, %v8891
      %v8894 = vrot.slane %v3846, 4
      %v8895 = vsel %vm520, %v8894, %v8893
      %v8896 = vrot.slane %v8835, 3
      %v8897 = vsel %vm523, %v8896, %v8895
      %v8898 = vrot.slane %v3823, 7
      %v8899 = vsel %vm511, %v8898, %v3815
      %v8900 = vrot.slane %v3831, 6
      %v8901 = vsel %vm514, %v8900, %v8899
      %v8902 = vrot.slane %v3839, 5
      %v8903 = vsel %vm517, %v8902, %v8901
      %v8904 = vrot.slane %v3847, 4
      %v8905 = vsel %vm520, %v8904, %v8903
      %v8906 = vrot.slane %v8836, 3
      %v8907 = vsel %vm523, %v8906, %v8905
      %v8908 = vrot.slane %v3824, 7
      %v8909 = vsel %vm511, %v8908, %v3816
      %v8910 = vrot.slane %v3832, 6
      %v8911 = vsel %vm514, %v8910, %v8909
      %v8912 = vrot.slane %v3840, 5
      %v8913 = vsel %vm517, %v8912, %v8911
      %v8914 = vrot.slane %v3848, 4
      %v8915 = vsel %vm520, %v8914, %v8913
      %v8916 = vrot.slane %v8837, 3
      %v8917 = vsel %vm523, %v8916, %v8915
      %v8918 = vpack.c.b16 %v8847, %v8847
      %v8919 = vpack.c.b16 %v8857, %v8857
      %v8920 = vpack.c.b16 %v8867, %v8867
      %v8921 = vpack.c.b16 %v8877, %v8877
      %v8922 = vpack.c.b16 %v8887, %v8887
      %v8923 = vpack.c.b16 %v8897, %v8897
      %v8924 = vpack.c.b16 %v8907, %v8907
      %v8925 = vpack.c.b16 %v8917, %v8917
      %v9190 = vunpack.c.l.b16 %v8566
      %v9191 = vunpack.c.h.b16 %v8566
      %v9192 = vunpack.c.l.b16 %v8567
      %v9193 = vunpack.c.l.b16 %v8568
      %v9194 = vunpack.c.h.b16 %v8568
      %v9195 = vunpack.c.l.b16 %v8569
      %v9196 = vunpack.c.l.b16 %v8570
      %v9197 = vunpack.c.h.b16 %v8570
      %v9198 = vunpack.c.l.b16 %v8571
      %v9199 = vunpack.c.l.b16 %v8572
      %v9200 = vunpack.c.h.b16 %v8572
      %v9201 = vunpack.c.l.b16 %v8573
      %v9202 = vunpack.c.l.b16 %v8574
      %v9203 = vunpack.c.h.b16 %v8574
      %v9204 = vunpack.c.l.b16 %v8575
      %v9205 = vunpack.c.l.b16 %v8576
      %v9206 = vunpack.c.h.b16 %v8576
      %v9207 = vunpack.c.l.b16 %v8577
      %v9208 = vunpack.c.l.b16 %v8578
      %v9209 = vunpack.c.h.b16 %v8578
      %v9210 = vunpack.c.l.b16 %v8579
      %v9211 = vunpack.c.l.b16 %v8580
      %v9212 = vunpack.c.h.b16 %v8580
      %v9213 = vunpack.c.l.b16 %v8581
      %v9214 = vunpack.c.l.b16 %v8582
      %v9215 = vunpack.c.h.b16 %v8582
      %v9216 = vunpack.c.l.b16 %v8583
      %v9217 = vunpack.c.l.b16 %v8584
      %v9218 = vunpack.c.h.b16 %v8584
      %v9219 = vunpack.c.l.b16 %v8585
      %v9220 = vunpack.c.l.b16 %v8586
      %v9221 = vunpack.c.h.b16 %v8586
      %v9222 = vunpack.c.l.b16 %v8587
      %v9223 = vunpack.c.l.b16 %v8588
      %v9224 = vunpack.c.h.b16 %v8588
      %v9225 = vunpack.c.l.b16 %v8589
      %v9226 = vunpack.c.l.b16 %v8590
      %v9227 = vunpack.c.h.b16 %v8590
      %v9228 = vunpack.c.l.b16 %v8591
      %v9229 = vunpack.c.l.b16 %v8592
      %v9230 = vunpack.c.h.b16 %v8592
      %v9231 = vunpack.c.l.b16 %v8593
      %v9232 = vunpack.c.l.b16 %v8594
      %v9233 = vunpack.c.h.b16 %v8594
      %v9234 = vunpack.c.l.b16 %v8595
      %v9235 = vunpack.c.l.b16 %v8596
      %v9236 = vunpack.c.h.b16 %v8596
      %v9237 = vunpack.c.l.b16 %v8597
      %v9238 = vunpack.c.l.b16 %v8598
      %v9239 = vunpack.c.h.b16 %v8598
      %v9240 = vunpack.c.l.b16 %v8599
      %v9241 = vunpack.c.l.b16 %v8600
      %v9242 = vunpack.c.h.b16 %v8600
      %v9243 = vunpack.c.l.b16 %v8601
      %v9244 = vunpack.c.l.b16 %v8602
      %v9245 = vunpack.c.h.b16 %v8602
      %v9246 = vunpack.c.l.b16 %v8603
      %v9247 = vunpack.c.l.b16 %v8604
      %v9248 = vunpack.c.h.b16 %v8604
      %v9249 = vunpack.c.l.b16 %v8605
      %v9250 = vunpack.c.l.b16 %v8606
      %v9251 = vunpack.c.h.b16 %v8606
      %v9252 = vunpack.c.l.b16 %v8607
      %v9253 = vunpack.c.l.b16 %v8608
      %v9254 = vunpack.c.h.b16 %v8608
      %v9255 = vunpack.c.l.b16 %v8609
      %v9256 = vunpack.c.l.b16 %v8610
      %v9257 = vunpack.c.h.b16 %v8610
      %v9258 = vunpack.c.l.b16 %v8611
      %v9259 = vunpack.c.l.b16 %v8612
      %v9260 = vunpack.c.h.b16 %v8612
      %v9261 = vunpack.c.l.b16 %v8613
      %v9262 = vunpack.c.l.b16 %v8614
      %v9263 = vunpack.c.h.b16 %v8614
      %v9264 = vunpack.c.l.b16 %v8615
      %v9265 = vunpack.c.l.b16 %v8616
      %v9266 = vunpack.c.h.b16 %v8616
      %v9267 = vunpack.c.l.b16 %v8617
      %v9268 = vunpack.c.l.b16 %v8618
      %v9269 = vunpack.c.h.b16 %v8618
      %v9270 = vunpack.c.l.b16 %v8619
      %v9271 = vunpack.c.l.b16 %v8620
      %v9272 = vunpack.c.h.b16 %v8620
      %v9273 = vunpack.c.l.b16 %v8621
      %v9274 = vunpack.c.l.b16 %v8622
      %v9275 = vunpack.c.h.b16 %v8622
      %v9276 = vunpack.c.l.b16 %v8623
      %v9277 = vunpack.c.l.b16 %v8624
      %v9278 = vunpack.c.h.b16 %v8624
      %v9279 = vunpack.c.l.b16 %v8625
      %v9280 = vunpack.c.l.b16 %v8626
      %v9281 = vunpack.c.h.b16 %v8626
      %v9282 = vunpack.c.l.b16 %v8627
      %v9283 = vunpack.c.l.b16 %v8628
      %v9284 = vunpack.c.h.b16 %v8628
      %v9285 = vunpack.c.l.b16 %v8629
      %v9286 = vunpack.c.l.b16 %v8630
      %v9287 = vunpack.c.h.b16 %v8630
      %v9288 = vunpack.c.l.b16 %v8631
      %v9289 = vunpack.c.l.b16 %v8632
      %v9290 = vunpack.c.h.b16 %v8632
      %v9291 = vunpack.c.l.b16 %v8633
      %v9292 = vunpack.c.l.b16 %v8634
      %v9293 = vunpack.c.h.b16 %v8634
      %v9294 = vunpack.c.l.b16 %v8635
      %v9295 = vunpack.c.l.b16 %v8636
      %v9296 = vunpack.c.h.b16 %v8636
      %v9297 = vunpack.c.l.b16 %v8637
      %v9298 = vunpack.c.l.b16 %v8638
      %v9299 = vunpack.c.h.b16 %v8638
      %v9300 = vunpack.c.l.b16 %v8639
      %v9301 = vunpack.c.l.b16 %v8640
      %v9302 = vunpack.c.h.b16 %v8640
      %v9303 = vunpack.c.l.b16 %v8641
      %v9304 = vunpack.c.l.b16 %v8642
      %v9305 = vunpack.c.h.b16 %v8642
      %v9306 = vunpack.c.l.b16 %v8643
      %v9307 = vunpack.c.l.b16 %v8644
      %v9308 = vunpack.c.h.b16 %v8644
      %v9309 = vunpack.c.l.b16 %v8645
      %v9310 = vunpack.c.l.b16 %v8646
      %v9311 = vunpack.c.h.b16 %v8646
      %v9312 = vunpack.c.l.b16 %v8647
      %v9313 = vunpack.c.l.b16 %v8648
      %v9314 = vunpack.c.h.b16 %v8648
      %v9315 = vunpack.c.l.b16 %v8649
      %v9316 = vunpack.c.l.b16 %v8650
      %v9317 = vunpack.c.h.b16 %v8650
      %v9318 = vunpack.c.l.b16 %v8651
      %v9319 = vunpack.c.l.b16 %v8652
      %v9320 = vunpack.c.h.b16 %v8652
      %v9321 = vunpack.c.l.b16 %v8653
      %v9322 = vunpack.c.l.b16 %v8654
      %v9323 = vunpack.c.h.b16 %v8654
      %v9324 = vunpack.c.l.b16 %v8655
      %v9325 = vunpack.c.l.b16 %v8656
      %v9326 = vunpack.c.h.b16 %v8656
      %v9327 = vunpack.c.l.b16 %v8657
      %v9328 = vunpack.c.l.b16 %v8658
      %v9329 = vunpack.c.h.b16 %v8658
      %v9330 = vunpack.c.l.b16 %v8659
      %v9331 = vunpack.c.l.b16 %v8660
      %v9332 = vunpack.c.h.b16 %v8660
      %v9333 = vunpack.c.l.b16 %v8661
      %v9334 = vunpack.c.l.b16 %v8662
      %v9335 = vunpack.c.h.b16 %v8662
      %v9336 = vunpack.c.l.b16 %v8663
      %v9337 = vunpack.c.l.b16 %v8664
      %v9338 = vunpack.c.h.b16 %v8664
      %v9339 = vunpack.c.l.b16 %v8665
      %v9340 = vunpack.c.l.b16 %v8666
      %v9341 = vunpack.c.h.b16 %v8666
      %v9342 = vunpack.c.l.b16 %v8667
      %v9343 = vunpack.c.l.b16 %v8668
      %v9344 = vunpack.c.h.b16 %v8668
      %v9345 = vunpack.c.l.b16 %v8669
      %v9346 = vunpack.c.l.b16 %v8670
      %v9347 = vunpack.c.h.b16 %v8670
      %v9348 = vunpack.c.l.b16 %v8671
      %v9349 = vunpack.c.l.b16 %v8672
      %v9350 = vunpack.c.h.b16 %v8672
      %v9351 = vunpack.c.l.b16 %v8673
      %v9352 = vunpack.c.l.b16 %v8674
      %v9353 = vunpack.c.h.b16 %v8674
      %v9354 = vunpack.c.l.b16 %v8675
      %v9355 = vunpack.c.l.b16 %v8676
      %v9356 = vunpack.c.h.b16 %v8676
      %v9357 = vunpack.c.l.b16 %v8677
      %v9358 = vunpack.c.l.b16 %v8678
      %v9359 = vunpack.c.h.b16 %v8678
      %v9360 = vunpack.c.l.b16 %v8679
      %v9361 = vunpack.c.l.b16 %v8680
      %v9362 = vunpack.c.h.b16 %v8680
      %v9363 = vunpack.c.l.b16 %v8681
      %v9364 = vunpack.c.l.b16 %v8682
      %v9365 = vunpack.c.h.b16 %v8682
      %v9366 = vunpack.c.l.b16 %v8683
      %v9367 = vunpack.c.l.b16 %v8684
      %v9368 = vunpack.c.h.b16 %v8684
      %v9369 = vunpack.c.l.b16 %v8685
      %v9370 = vunpack.c.l.b16 %v8686
      %v9371 = vunpack.c.h.b16 %v8686
      %v9372 = vunpack.c.l.b16 %v8687
      %v9373 = vunpack.c.l.b16 %v8688
      %v9374 = vunpack.c.h.b16 %v8688
      %v9375 = vunpack.c.l.b16 %v8689
      %v9376 = vunpack.c.l.b16 %v8690
      %v9377 = vunpack.c.h.b16 %v8690
      %v9378 = vunpack.c.l.b16 %v8691
      %v9379 = vunpack.c.l.b16 %v8692
      %v9380 = vunpack.c.h.b16 %v8692
      %v9381 = vunpack.c.l.b16 %v8693
      %v9382 = vunpack.c.l.b16 %v8694
      %v9383 = vunpack.c.h.b16 %v8694
      %v9384 = vunpack.c.l.b16 %v8695
      %v9385 = vunpack.c.l.b16 %v8696
      %v9386 = vunpack.c.h.b16 %v8696
      %v9387 = vunpack.c.l.b16 %v8697
      %v9388 = vunpack.c.l.b16 %v8698
      %v9389 = vunpack.c.h.b16 %v8698
      %v9390 = vunpack.c.l.b16 %v8699
      %v9391 = vunpack.c.l.b16 %v8700
      %v9392 = vunpack.c.h.b16 %v8700
      %v9393 = vunpack.c.l.b16 %v8701
      %v9394 = vunpack.c.l.b16 %v8702
      %v9395 = vunpack.c.h.b16 %v8702
      %v9396 = vunpack.c.l.b16 %v8703
      %v9397 = vunpack.c.l.b16 %v8704
      %v9398 = vunpack.c.h.b16 %v8704
      %v9399 = vunpack.c.l.b16 %v8705
      %v9400 = vunpack.c.l.b16 %v8706
      %v9401 = vunpack.c.h.b16 %v8706
      %v9402 = vunpack.c.l.b16 %v8707
      %v9403 = vunpack.c.l.b16 %v8708
      %v9404 = vunpack.c.h.b16 %v8708
      %v9405 = vunpack.c.l.b16 %v8709
      %v9406 = vunpack.c.l.b16 %v8710
      %v9407 = vunpack.c.h.b16 %v8710
      %v9408 = vunpack.c.l.b16 %v8711
      %v9409 = vunpack.c.l.b16 %v8712
      %v9410 = vunpack.c.h.b16 %v8712
      %v9411 = vunpack.c.l.b16 %v8713
      %v9412 = vunpack.c.l.b16 %v8714
      %v9413 = vunpack.c.h.b16 %v8714
      %v9414 = vunpack.c.l.b16 %v8715
      %v9415 = vunpack.c.l.b16 %v8716
      %v9416 = vunpack.c.h.b16 %v8716
      %v9417 = vunpack.c.l.b16 %v8717
      %v9418 = vunpack.c.l.b16 %v8718
      %v9419 = vunpack.c.h.b16 %v8718
      %v9420 = vunpack.c.l.b16 %v8719
      %v9421 = vunpack.c.l.b16 %v8720
      %v9422 = vunpack.c.h.b16 %v8720
      %v9423 = vunpack.c.l.b16 %v8721
      %v9424 = vunpack.c.l.b16 %v8722
      %v9425 = vunpack.c.h.b16 %v8722
      %v9426 = vunpack.c.l.b16 %v8723
      %v9427 = vunpack.c.l.b16 %v8724
      %v9428 = vunpack.c.h.b16 %v8724
      %v9429 = vunpack.c.l.b16 %v8725
      %v9430 = vunpack.c.l.b16 %v8726
      %v9431 = vunpack.c.h.b16 %v8726
      %v9432 = vunpack.c.l.b16 %v8727
      %v9433 = vunpack.c.l.b16 %v8728
      %v9434 = vunpack.c.h.b16 %v8728
      %v9435 = vunpack.c.l.b16 %v8729
      %v9436 = vunpack.c.l.b16 %v8730
      %v9437 = vunpack.c.h.b16 %v8730
      %v9438 = vunpack.c.l.b16 %v8731
      %v9439 = vunpack.c.l.b16 %v8732
      %v9440 = vunpack.c.h.b16 %v8732
      %v9441 = vunpack.c.l.b16 %v8733
      %v9442 = vunpack.c.l.b16 %v8734
      %v9443 = vunpack.c.h.b16 %v8734
      %v9444 = vunpack.c.l.b16 %v8735
      %v9445 = vunpack.c.l.b16 %v8736
      %v9446 = vunpack.c.h.b16 %v8736
      %v9447 = vunpack.c.l.b16 %v8737
      %v9448 = vunpack.c.l.b16 %v8738
      %v9449 = vunpack.c.h.b16 %v8738
      %v9450 = vunpack.c.l.b16 %v8739
      %v9451 = vunpack.c.l.b16 %v8740
      %v9452 = vunpack.c.h.b16 %v8740
      %v9453 = vunpack.c.l.b16 %v8741
      %v9454 = vunpack.c.l.b16 %v8742
      %v9455 = vunpack.c.h.b16 %v8742
      %v9456 = vunpack.c.l.b16 %v8743
      %v9457 = vunpack.c.l.b16 %v8744
      %v9458 = vunpack.c.h.b16 %v8744
      %v9459 = vunpack.c.l.b16 %v8745
      %v9460 = vunpack.c.l.b16 %v8746
      %v9461 = vunpack.c.h.b16 %v8746
      %v9462 = vunpack.c.l.b16 %v8747
      %v9463 = vunpack.c.l.b16 %v8748
      %v9464 = vunpack.c.h.b16 %v8748
      %v9465 = vunpack.c.l.b16 %v8749
      %v9466 = vunpack.c.l.b16 %v8750
      %v9467 = vunpack.c.h.b16 %v8750
      %v9468 = vunpack.c.l.b16 %v8751
      %v9469 = vunpack.c.l.b16 %v8752
      %v9470 = vunpack.c.h.b16 %v8752
      %v9471 = vunpack.c.l.b16 %v8753
      %v9472 = vunpack.c.l.b16 %v8754
      %v9473 = vunpack.c.h.b16 %v8754
      %v9474 = vunpack.c.l.b16 %v8755
      %v9475 = vunpack.c.l.b16 %v8756
      %v9476 = vunpack.c.h.b16 %v8756
      %v9477 = vunpack.c.l.b16 %v8757
      %v9478 = vunpack.c.l.b16 %v8758
      %v9479 = vunpack.c.h.b16 %v8758
      %v9480 = vunpack.c.l.b16 %v8759
      %v9481 = vunpack.c.l.b16 %v8760
      %v9482 = vunpack.c.h.b16 %v8760
      %v9483 = vunpack.c.l.b16 %v8761
      %v9484 = vunpack.c.l.b16 %v8762
      %v9485 = vunpack.c.h.b16 %v8762
      %v9486 = vunpack.c.l.b16 %v8763
      %v9487 = vunpack.c.l.b16 %v8764
      %v9488 = vunpack.c.h.b16 %v8764
      %v9489 = vunpack.c.l.b16 %v8765
      %v9490 = vunpack.c.l.b16 %v8766
      %v9491 = vunpack.c.h.b16 %v8766
      %v9492 = vunpack.c.l.b16 %v8767
      %v9493 = vunpack.c.l.b16 %v8768
      %v9494 = vunpack.c.h.b16 %v8768
      %v9495 = vunpack.c.l.b16 %v8769
      %v9496 = vunpack.c.l.b16 %v8770
      %v9497 = vunpack.c.h.b16 %v8770
      %v9498 = vunpack.c.l.b16 %v8771
      %v9499 = vunpack.c.l.b16 %v8772
      %v9500 = vunpack.c.h.b16 %v8772
      %v9501 = vunpack.c.l.b16 %v8773
      %v9502 = vunpack.c.l.b16 %v8774
      %v9503 = vunpack.c.h.b16 %v8774
      %v9504 = vunpack.c.l.b16 %v8775
      %v9505 = vunpack.c.l.b16 %v8776
      %v9506 = vunpack.c.h.b16 %v8776
      %v9507 = vunpack.c.l.b16 %v8777
      %v9508 = vunpack.c.l.b16 %v8778
      %v9509 = vunpack.c.h.b16 %v8778
      %v9510 = vunpack.c.l.b16 %v8779
      %v9511 = vunpack.c.l.b16 %v8780
      %v9512 = vunpack.c.h.b16 %v8780
      %v9513 = vunpack.c.l.b16 %v8781
      %v9514 = vunpack.c.l.b16 %v8782
      %v9515 = vunpack.c.h.b16 %v8782
      %v9516 = vunpack.c.l.b16 %v8783
      %v9517 = vunpack.c.l.b16 %v8784
      %v9518 = vunpack.c.h.b16 %v8784
      %v9519 = vunpack.c.l.b16 %v8785
      %v9520 = vunpack.c.l.b16 %v8786
      %v9521 = vunpack.c.h.b16 %v8786
      %v9522 = vunpack.c.l.b16 %v8787
      %v9523 = vunpack.c.l.b16 %v8788
      %v9524 = vunpack.c.h.b16 %v8788
      %v9525 = vunpack.c.l.b16 %v8789
      %v9526 = vunpack.c.l.b16 %v8790
      %v9527 = vunpack.c.h.b16 %v8790
      %v9528 = vunpack.c.l.b16 %v8791
      %v9529 = vunpack.c.l.b16 %v8792
      %v9530 = vunpack.c.h.b16 %v8792
      %v9531 = vunpack.c.l.b16 %v8793
      %v9532 = vunpack.c.l.b16 %v8794
      %v9533 = vunpack.c.h.b16 %v8794
      %v9534 = vunpack.c.l.b16 %v8795
      %v9535 = vunpack.c.l.b16 %v8796
      %v9536 = vunpack.c.h.b16 %v8796
      %v9537 = vunpack.c.l.b16 %v8797
      %v9538 = vunpack.c.l.b16 %v8798
      %v9539 = vunpack.c.h.b16 %v8798
      %v9540 = vunpack.c.l.b16 %v8799
      %v9541 = vunpack.c.l.b16 %v8800
      %v9542 = vunpack.c.h.b16 %v8800
      %v9543 = vunpack.c.l.b16 %v8801
      %v9544 = vunpack.c.l.b16 %v8802
      %v9545 = vunpack.c.h.b16 %v8802
      %v9546 = vunpack.c.l.b16 %v8803
      %v9547 = vunpack.c.l.b16 %v8804
      %v9548 = vunpack.c.h.b16 %v8804
      %v9549 = vunpack.c.l.b16 %v8805
      %v9550 = vunpack.c.l.b16 %v8806
      %v9551 = vunpack.c.h.b16 %v8806
      %v9552 = vunpack.c.l.b16 %v8807
      %v9553 = vunpack.c.l.b16 %v8808
      %v9554 = vunpack.c.h.b16 %v8808
      %v9555 = vunpack.c.l.b16 %v8809
      %v9556 = vunpack.c.l.b16 %v8810
      %v9557 = vunpack.c.h.b16 %v8810
      %v9558 = vunpack.c.l.b16 %v8811
      %v9559 = vunpack.c.l.b16 %v8812
      %v9560 = vunpack.c.h.b16 %v8812
      %v9561 = vunpack.c.l.b16 %v8813
      %v9562 = vunpack.c.l.b16 %v8814
      %v9563 = vunpack.c.h.b16 %v8814
      %v9564 = vunpack.c.l.b16 %v8815
      %v9565 = vunpack.c.l.b16 %v8816
      %v9566 = vunpack.c.h.b16 %v8816
      %v9567 = vunpack.c.l.b16 %v8817
      %v9568 = vunpack.c.l.b16 %v8818
      %v9569 = vunpack.c.h.b16 %v8818
      %v9570 = vunpack.c.l.b16 %v8819
      %v9571 = vunpack.c.l.b16 %v8820
      %v9572 = vunpack.c.h.b16 %v8820
      %v9573 = vunpack.c.l.b16 %v8821
      %v9574 = vpack.c.b16 %v9193, %v9190
      %v9575 = vpack.c.b16 %v9194, %v9191
      %v9576 = vpack.c.b16 %v9195, %v9192
      %v9577 = vpack.c.b16 %v9199, %v9196
      %v9578 = vpack.c.b16 %v9200, %v9197
      %v9579 = vpack.c.b16 %v9201, %v9198
      %v9580 = vpack.c.b16 %v9205, %v9202
      %v9581 = vpack.c.b16 %v9206, %v9203
      %v9582 = vpack.c.b16 %v9207, %v9204
      %v9583 = vpack.c.b16 %v9211, %v9208
      %v9584 = vpack.c.b16 %v9212, %v9209
      %v9585 = vpack.c.b16 %v9213, %v9210
      %v9586 = vpack.c.b16 %v9217, %v9214
      %v9587 = vpack.c.b16 %v9218, %v9215
      %v9588 = vpack.c.b16 %v9219, %v9216
      %v9589 = vpack.c.b16 %v9223, %v9220
      %v9590 = vpack.c.b16 %v9224, %v9221
      %v9591 = vpack.c.b16 %v9225, %v9222
      %v9592 = vpack.c.b16 %v9229, %v9226
      %v9593 = vpack.c.b16 %v9230, %v9227
      %v9594 = vpack.c.b16 %v9231, %v9228
      %v9595 = vpack.c.b16 %v9235, %v9232
      %v9596 = vpack.c.b16 %v9236, %v9233
      %v9597 = vpack.c.b16 %v9237, %v9234
      %v9598 = vpack.c.b16 %v9241, %v9238
      %v9599 = vpack.c.b16 %v9242, %v9239
      %v9600 = vpack.c.b16 %v9243, %v9240
      %v9601 = vpack.c.b16 %v9247, %v9244
      %v9602 = vpack.c.b16 %v9248, %v9245
      %v9603 = vpack.c.b16 %v9249, %v9246
      %v9604 = vpack.c.b16 %v9253, %v9250
      %v9605 = vpack.c.b16 %v9254, %v9251
      %v9606 = vpack.c.b16 %v9255, %v9252
      %v9607 = vpack.c.b16 %v9259, %v9256
      %v9608 = vpack.c.b16 %v9260, %v9257
      %v9609 = vpack.c.b16 %v9261, %v9258
      %v9610 = vpack.c.b16 %v9265, %v9262
      %v9611 = vpack.c.b16 %v9266, %v9263
      %v9612 = vpack.c.b16 %v9267, %v9264
      %v9613 = vpack.c.b16 %v9271, %v9268
      %v9614 = vpack.c.b16 %v9272, %v9269
      %v9615 = vpack.c.b16 %v9273, %v9270
      %v9616 = vpack.c.b16 %v9277, %v9274
      %v9617 = vpack.c.b16 %v9278, %v9275
      %v9618 = vpack.c.b16 %v9279, %v9276
      %v9619 = vpack.c.b16 %v9283, %v9280
      %v9620 = vpack.c.b16 %v9284, %v9281
      %v9621 = vpack.c.b16 %v9285, %v9282
      %v9622 = vpack.c.b16 %v9289, %v9286
      %v9623 = vpack.c.b16 %v9290, %v9287
      %v9624 = vpack.c.b16 %v9291, %v9288
      %v9625 = vpack.c.b16 %v9295, %v9292
      %v9626 = vpack.c.b16 %v9296, %v9293
      %v9627 = vpack.c.b16 %v9297, %v9294
      %v9628 = vpack.c.b16 %v9301, %v9298
      %v9629 = vpack.c.b16 %v9302, %v9299
      %v9630 = vpack.c.b16 %v9303, %v9300
      %v9631 = vpack.c.b16 %v9307, %v9304
      %v9632 = vpack.c.b16 %v9308, %v9305
      %v9633 = vpack.c.b16 %v9309, %v9306
      %v9634 = vpack.c.b16 %v9313, %v9310
      %v9635 = vpack.c.b16 %v9314, %v9311
      %v9636 = vpack.c.b16 %v9315, %v9312
      %v9637 = vpack.c.b16 %v9319, %v9316
      %v9638 = vpack.c.b16 %v9320, %v9317
      %v9639 = vpack.c.b16 %v9321, %v9318
      %v9640 = vpack.c.b16 %v9325, %v9322
      %v9641 = vpack.c.b16 %v9326, %v9323
      %v9642 = vpack.c.b16 %v9327, %v9324
      %v9643 = vpack.c.b16 %v9331, %v9328
      %v9644 = vpack.c.b16 %v9332, %v9329
      %v9645 = vpack.c.b16 %v9333, %v9330
      %v9646 = vpack.c.b16 %v9337, %v9334
      %v9647 = vpack.c.b16 %v9338, %v9335
      %v9648 = vpack.c.b16 %v9339, %v9336
      %v9649 = vpack.c.b16 %v9343, %v9340
      %v9650 = vpack.c.b16 %v9344, %v9341
      %v9651 = vpack.c.b16 %v9345, %v9342
      %v9652 = vpack.c.b16 %v9349, %v9346
      %v9653 = vpack.c.b16 %v9350, %v9347
      %v9654 = vpack.c.b16 %v9351, %v9348
      %v9655 = vpack.c.b16 %v9355, %v9352
      %v9656 = vpack.c.b16 %v9356, %v9353
      %v9657 = vpack.c.b16 %v9357, %v9354
      %v9658 = vpack.c.b16 %v9361, %v9358
      %v9659 = vpack.c.b16 %v9362, %v9359
      %v9660 = vpack.c.b16 %v9363, %v9360
      %v9661 = vpack.c.b16 %v9367, %v9364
      %v9662 = vpack.c.b16 %v9368, %v9365
      %v9663 = vpack.c.b16 %v9369, %v9366
      %v9664 = vpack.c.b16 %v9373, %v9370
      %v9665 = vpack.c.b16 %v9374, %v9371
      %v9666 = vpack.c.b16 %v9375, %v9372
      %v9667 = vpack.c.b16 %v9379, %v9376
      %v9668 = vpack.c.b16 %v9380, %v9377
      %v9669 = vpack.c.b16 %v9381, %v9378
      %v9670 = vpack.c.b16 %v9385, %v9382
      %v9671 = vpack.c.b16 %v9386, %v9383
      %v9672 = vpack.c.b16 %v9387, %v9384
      %v9673 = vpack.c.b16 %v9391, %v9388
      %v9674 = vpack.c.b16 %v9392, %v9389
      %v9675 = vpack.c.b16 %v9393, %v9390
      %v9676 = vpack.c.b16 %v9397, %v9394
      %v9677 = vpack.c.b16 %v9398, %v9395
      %v9678 = vpack.c.b16 %v9399, %v9396
      %v9679 = vpack.c.b16 %v9403, %v9400
      %v9680 = vpack.c.b16 %v9404, %v9401
      %v9681 = vpack.c.b16 %v9405, %v9402
      %v9682 = vpack.c.b16 %v9409, %v9406
      %v9683 = vpack.c.b16 %v9410, %v9407
      %v9684 = vpack.c.b16 %v9411, %v9408
      %v9685 = vpack.c.b16 %v9415, %v9412
      %v9686 = vpack.c.b16 %v9416, %v9413
      %v9687 = vpack.c.b16 %v9417, %v9414
      %v9688 = vpack.c.b16 %v9421, %v9418
      %v9689 = vpack.c.b16 %v9422, %v9419
      %v9690 = vpack.c.b16 %v9423, %v9420
      %v9691 = vpack.c.b16 %v9427, %v9424
      %v9692 = vpack.c.b16 %v9428, %v9425
      %v9693 = vpack.c.b16 %v9429, %v9426
      %v9694 = vpack.c.b16 %v9433, %v9430
      %v9695 = vpack.c.b16 %v9434, %v9431
      %v9696 = vpack.c.b16 %v9435, %v9432
      %v9697 = vpack.c.b16 %v9439, %v9436
      %v9698 = vpack.c.b16 %v9440, %v9437
      %v9699 = vpack.c.b16 %v9441, %v9438
      %v9700 = vpack.c.b16 %v9445, %v9442
      %v9701 = vpack.c.b16 %v9446, %v9443
      %v9702 = vpack.c.b16 %v9447, %v9444
      %v9703 = vpack.c.b16 %v9451, %v9448
      %v9704 = vpack.c.b16 %v9452, %v9449
      %v9705 = vpack.c.b16 %v9453, %v9450
      %v9706 = vpack.c.b16 %v9457, %v9454
      %v9707 = vpack.c.b16 %v9458, %v9455
      %v9708 = vpack.c.b16 %v9459, %v9456
      %v9709 = vpack.c.b16 %v9463, %v9460
      %v9710 = vpack.c.b16 %v9464, %v9461
      %v9711 = vpack.c.b16 %v9465, %v9462
      %v9712 = vpack.c.b16 %v9469, %v9466
      %v9713 = vpack.c.b16 %v9470, %v9467
      %v9714 = vpack.c.b16 %v9471, %v9468
      %v9715 = vpack.c.b16 %v9475, %v9472
      %v9716 = vpack.c.b16 %v9476, %v9473
      %v9717 = vpack.c.b16 %v9477, %v9474
      %v9718 = vpack.c.b16 %v9481, %v9478
      %v9719 = vpack.c.b16 %v9482, %v9479
      %v9720 = vpack.c.b16 %v9483, %v9480
      %v9721 = vpack.c.b16 %v9487, %v9484
      %v9722 = vpack.c.b16 %v9488, %v9485
      %v9723 = vpack.c.b16 %v9489, %v9486
      %v9724 = vpack.c.b16 %v9493, %v9490
      %v9725 = vpack.c.b16 %v9494, %v9491
      %v9726 = vpack.c.b16 %v9495, %v9492
      %v9727 = vpack.c.b16 %v9499, %v9496
      %v9728 = vpack.c.b16 %v9500, %v9497
      %v9729 = vpack.c.b16 %v9501, %v9498
      %v9730 = vpack.c.b16 %v9505, %v9502
      %v9731 = vpack.c.b16 %v9506, %v9503
      %v9732 = vpack.c.b16 %v9507, %v9504
      %v9733 = vpack.c.b16 %v9511, %v9508
      %v9734 = vpack.c.b16 %v9512, %v9509
      %v9735 = vpack.c.b16 %v9513, %v9510
      %v9736 = vpack.c.b16 %v9517, %v9514
      %v9737 = vpack.c.b16 %v9518, %v9515
      %v9738 = vpack.c.b16 %v9519, %v9516
      %v9739 = vpack.c.b16 %v9523, %v9520
      %v9740 = vpack.c.b16 %v9524, %v9521
      %v9741 = vpack.c.b16 %v9525, %v9522
      %v9742 = vpack.c.b16 %v9529, %v9526
      %v9743 = vpack.c.b16 %v9530, %v9527
      %v9744 = vpack.c.b16 %v9531, %v9528
      %v9745 = vpack.c.b16 %v9535, %v9532
      %v9746 = vpack.c.b16 %v9536, %v9533
      %v9747 = vpack.c.b16 %v9537, %v9534
      %v9748 = vpack.c.b16 %v9541, %v9538
      %v9749 = vpack.c.b16 %v9542, %v9539
      %v9750 = vpack.c.b16 %v9543, %v9540
      %v9751 = vpack.c.b16 %v9547, %v9544
      %v9752 = vpack.c.b16 %v9548, %v9545
      %v9753 = vpack.c.b16 %v9549, %v9546
      %v9754 = vpack.c.b16 %v9553, %v9550
      %v9755 = vpack.c.b16 %v9554, %v9551
      %v9756 = vpack.c.b16 %v9555, %v9552
      %v9757 = vpack.c.b16 %v9559, %v9556
      %v9758 = vpack.c.b16 %v9560, %v9557
      %v9759 = vpack.c.b16 %v9561, %v9558
      %v9760 = vpack.c.b16 %v9565, %v9562
      %v9761 = vpack.c.b16 %v9566, %v9563
      %v9762 = vpack.c.b16 %v9567, %v9564
      %v9763 = vpack.c.b16 %v9571, %v9568
      %v9764 = vpack.c.b16 %v9572, %v9569
      %v9765 = vpack.c.b16 %v9573, %v9570
      %9958 = vmatpush.bf16.msra.mxu0 %v9595
      %9959 = vmatpush.bf16.msra.mxu0 %v9592
      %9960 = vmatpush.bf16.msra.mxu0 %v9589
      %9961 = vmatpush.bf16.msra.mxu0 %v9586
      %9962 = vmatpush.bf16.msra.mxu0 %v9583
      %9963 = vmatpush.bf16.msra.mxu0 %v9580
      %9964 = vmatpush.bf16.msra.mxu0 %v9577
      %9965 = vmatpush.bf16.msra.mxu0 %v9574
      %9966 = vmatmul.bf16.gmra.mxu0 %v8918
      %v9967 = vpop.f32.mrf.mxu0
      %v9968 = vadd.f32 0.0, %v9967
      %v9969 = vpop.f32.mrf.mxu0
      %9970 = vdwg.mxu0
      %9971 = vmatpush.bf16.msra.mxu0 %v9619
      %9972 = vmatpush.bf16.msra.mxu0 %v9616
      %9973 = vmatpush.bf16.msra.mxu0 %v9613
      %9974 = vmatpush.bf16.msra.mxu0 %v9610
      %9975 = vmatpush.bf16.msra.mxu0 %v9607
      %9976 = vmatpush.bf16.msra.mxu0 %v9604
      %9977 = vmatpush.bf16.msra.mxu0 %v9601
      %9978 = vmatpush.bf16.msra.mxu0 %v9598
      %9979 = vmatmul.bf16.gmra.mxu0 %v8919
      %v9980 = vpop.f32.mrf.mxu0
      %v9981 = vadd.f32 %v9968, %v9980
      %v9982 = vpop.f32.mrf.mxu0
      %9983 = vdwg.mxu0
      %9984 = vmatpush.bf16.msra.mxu0 %v9643
      %9985 = vmatpush.bf16.msra.mxu0 %v9640
      %9986 = vmatpush.bf16.msra.mxu0 %v9637
      %9987 = vmatpush.bf16.msra.mxu0 %v9634
      %9988 = vmatpush.bf16.msra.mxu0 %v9631
      %9989 = vmatpush.bf16.msra.mxu0 %v9628
      %9990 = vmatpush.bf16.msra.mxu0 %v9625
      %9991 = vmatpush.bf16.msra.mxu0 %v9622
      %9992 = vmatmul.bf16.gmra.mxu0 %v8920
      %v9993 = vpop.f32.mrf.mxu0
      %v9994 = vadd.f32 %v9981, %v9993
      %v9995 = vpop.f32.mrf.mxu0
      %9996 = vdwg.mxu0
      %9997 = vmatpush.bf16.msra.mxu0 %v9667
      %9998 = vmatpush.bf16.msra.mxu0 %v9664
      %9999 = vmatpush.bf16.msra.mxu0 %v9661
      %10000 = vmatpush.bf16.msra.mxu0 %v9658
      %10001 = vmatpush.bf16.msra.mxu0 %v9655
      %10002 = vmatpush.bf16.msra.mxu0 %v9652
      %10003 = vmatpush.bf16.msra.mxu0 %v9649
      %10004 = vmatpush.bf16.msra.mxu0 %v9646
      %10005 = vmatmul.bf16.gmra.mxu0 %v8921
      %v10006 = vpop.f32.mrf.mxu0
      %v10007 = vadd.f32 %v9994, %v10006
      %v10008 = vpop.f32.mrf.mxu0
      %10009 = vdwg.mxu0
      %10010 = vmatpush.bf16.msra.mxu0 %v9691
      %10011 = vmatpush.bf16.msra.mxu0 %v9688
      %10012 = vmatpush.bf16.msra.mxu0 %v9685
      %10013 = vmatpush.bf16.msra.mxu0 %v9682
      %10014 = vmatpush.bf16.msra.mxu0 %v9679
      %10015 = vmatpush.bf16.msra.mxu0 %v9676
      %10016 = vmatpush.bf16.msra.mxu0 %v9673
      %10017 = vmatpush.bf16.msra.mxu0 %v9670
      %10018 = vmatmul.bf16.gmra.mxu0 %v8922
      %v10019 = vpop.f32.mrf.mxu0
      %v10020 = vadd.f32 %v10007, %v10019
      %v10021 = vpop.f32.mrf.mxu0
      %10022 = vdwg.mxu0
      %10023 = vmatpush.bf16.msra.mxu0 %v9715
      %10024 = vmatpush.bf16.msra.mxu0 %v9712
      %10025 = vmatpush.bf16.msra.mxu0 %v9709
      %10026 = vmatpush.bf16.msra.mxu0 %v9706
      %10027 = vmatpush.bf16.msra.mxu0 %v9703
      %10028 = vmatpush.bf16.msra.mxu0 %v9700
      %10029 = vmatpush.bf16.msra.mxu0 %v9697
      %10030 = vmatpush.bf16.msra.mxu0 %v9694
      %10031 = vmatmul.bf16.gmra.mxu0 %v8923
      %v10032 = vpop.f32.mrf.mxu0
      %v10033 = vadd.f32 %v10020, %v10032
      %v10034 = vpop.f32.mrf.mxu0
      %10035 = vdwg.mxu0
      %10036 = vmatpush.bf16.msra.mxu0 %v9739
      %10037 = vmatpush.bf16.msra.mxu0 %v9736
      %10038 = vmatpush.bf16.msra.mxu0 %v9733
      %10039 = vmatpush.bf16.msra.mxu0 %v9730
      %10040 = vmatpush.bf16.msra.mxu0 %v9727
      %10041 = vmatpush.bf16.msra.mxu0 %v9724
      %10042 = vmatpush.bf16.msra.mxu0 %v9721
      %10043 = vmatpush.bf16.msra.mxu0 %v9718
      %10044 = vmatmul.bf16.gmra.mxu0 %v8924
      %v10045 = vpop.f32.mrf.mxu0
      %v10046 = vadd.f32 %v10033, %v10045
      %v10047 = vpop.f32.mrf.mxu0
      %10048 = vdwg.mxu0
      %10049 = vmatpush.bf16.msra.mxu0 %v9763
      %10050 = vmatpush.bf16.msra.mxu0 %v9760
      %10051 = vmatpush.bf16.msra.mxu0 %v9757
      %10052 = vmatpush.bf16.msra.mxu0 %v9754
      %10053 = vmatpush.bf16.msra.mxu0 %v9751
      %10054 = vmatpush.bf16.msra.mxu0 %v9748
      %10055 = vmatpush.bf16.msra.mxu0 %v9745
      %10056 = vmatpush.bf16.msra.mxu0 %v9742
      %10057 = vmatmul.bf16.gmra.mxu0 %v8925
      %v10058 = vpop.f32.mrf.mxu0
      %v10059 = vadd.f32 %v10046, %v10058
      %v10060 = vpop.f32.mrf.mxu0
      %10061 = vdwg.mxu0
      %10062 = vmatpush.bf16.msra.mxu0 %v9596
      %10063 = vmatpush.bf16.msra.mxu0 %v9593
      %10064 = vmatpush.bf16.msra.mxu0 %v9590
      %10065 = vmatpush.bf16.msra.mxu0 %v9587
      %10066 = vmatpush.bf16.msra.mxu0 %v9584
      %10067 = vmatpush.bf16.msra.mxu0 %v9581
      %10068 = vmatpush.bf16.msra.mxu0 %v9578
      %10069 = vmatpush.bf16.msra.mxu0 %v9575
      %10070 = vmatmul.bf16.gmra.mxu0 %v8918
      %v10071 = vpop.f32.mrf.mxu0
      %v10072 = vadd.f32 0.0, %v10071
      %v10073 = vpop.f32.mrf.mxu0
      %10074 = vdwg.mxu0
      %10075 = vmatpush.bf16.msra.mxu0 %v9620
      %10076 = vmatpush.bf16.msra.mxu0 %v9617
      %10077 = vmatpush.bf16.msra.mxu0 %v9614
      %10078 = vmatpush.bf16.msra.mxu0 %v9611
      %10079 = vmatpush.bf16.msra.mxu0 %v9608
      %10080 = vmatpush.bf16.msra.mxu0 %v9605
      %10081 = vmatpush.bf16.msra.mxu0 %v9602
      %10082 = vmatpush.bf16.msra.mxu0 %v9599
      %10083 = vmatmul.bf16.gmra.mxu0 %v8919
      %v10084 = vpop.f32.mrf.mxu0
      %v10085 = vadd.f32 %v10072, %v10084
      %v10086 = vpop.f32.mrf.mxu0
      %10087 = vdwg.mxu0
      %10088 = vmatpush.bf16.msra.mxu0 %v9644
      %10089 = vmatpush.bf16.msra.mxu0 %v9641
      %10090 = vmatpush.bf16.msra.mxu0 %v9638
      %10091 = vmatpush.bf16.msra.mxu0 %v9635
      %10092 = vmatpush.bf16.msra.mxu0 %v9632
      %10093 = vmatpush.bf16.msra.mxu0 %v9629
      %10094 = vmatpush.bf16.msra.mxu0 %v9626
      %10095 = vmatpush.bf16.msra.mxu0 %v9623
      %10096 = vmatmul.bf16.gmra.mxu0 %v8920
      %v10097 = vpop.f32.mrf.mxu0
      %v10098 = vadd.f32 %v10085, %v10097
      %v10099 = vpop.f32.mrf.mxu0
      %10100 = vdwg.mxu0
      %10101 = vmatpush.bf16.msra.mxu0 %v9668
      %10102 = vmatpush.bf16.msra.mxu0 %v9665
      %10103 = vmatpush.bf16.msra.mxu0 %v9662
      %10104 = vmatpush.bf16.msra.mxu0 %v9659
      %10105 = vmatpush.bf16.msra.mxu0 %v9656
      %10106 = vmatpush.bf16.msra.mxu0 %v9653
      %10107 = vmatpush.bf16.msra.mxu0 %v9650
      %10108 = vmatpush.bf16.msra.mxu0 %v9647
      %10109 = vmatmul.bf16.gmra.mxu0 %v8921
      %v10110 = vpop.f32.mrf.mxu0
      %v10111 = vadd.f32 %v10098, %v10110
      %v10112 = vpop.f32.mrf.mxu0
      %10113 = vdwg.mxu0
      %10114 = vmatpush.bf16.msra.mxu0 %v9692
      %10115 = vmatpush.bf16.msra.mxu0 %v9689
      %10116 = vmatpush.bf16.msra.mxu0 %v9686
      %10117 = vmatpush.bf16.msra.mxu0 %v9683
      %10118 = vmatpush.bf16.msra.mxu0 %v9680
      %10119 = vmatpush.bf16.msra.mxu0 %v9677
      %10120 = vmatpush.bf16.msra.mxu0 %v9674
      %10121 = vmatpush.bf16.msra.mxu0 %v9671
      %10122 = vmatmul.bf16.gmra.mxu0 %v8922
      %v10123 = vpop.f32.mrf.mxu0
      %v10124 = vadd.f32 %v10111, %v10123
      %v10125 = vpop.f32.mrf.mxu0
      %10126 = vdwg.mxu0
      %10127 = vmatpush.bf16.msra.mxu0 %v9716
      %10128 = vmatpush.bf16.msra.mxu0 %v9713
      %10129 = vmatpush.bf16.msra.mxu0 %v9710
      %10130 = vmatpush.bf16.msra.mxu0 %v9707
      %10131 = vmatpush.bf16.msra.mxu0 %v9704
      %10132 = vmatpush.bf16.msra.mxu0 %v9701
      %10133 = vmatpush.bf16.msra.mxu0 %v9698
      %10134 = vmatpush.bf16.msra.mxu0 %v9695
      %10135 = vmatmul.bf16.gmra.mxu0 %v8923
      %v10136 = vpop.f32.mrf.mxu0
      %v10137 = vadd.f32 %v10124, %v10136
      %v10138 = vpop.f32.mrf.mxu0
      %10139 = vdwg.mxu0
      %10140 = vmatpush.bf16.msra.mxu0 %v9740
      %10141 = vmatpush.bf16.msra.mxu0 %v9737
      %10142 = vmatpush.bf16.msra.mxu0 %v9734
      %10143 = vmatpush.bf16.msra.mxu0 %v9731
      %10144 = vmatpush.bf16.msra.mxu0 %v9728
      %10145 = vmatpush.bf16.msra.mxu0 %v9725
      %10146 = vmatpush.bf16.msra.mxu0 %v9722
      %10147 = vmatpush.bf16.msra.mxu0 %v9719
      %10148 = vmatmul.bf16.gmra.mxu0 %v8924
      %v10149 = vpop.f32.mrf.mxu0
      %v10150 = vadd.f32 %v10137, %v10149
      %v10151 = vpop.f32.mrf.mxu0
      %10152 = vdwg.mxu0
      %10153 = vmatpush.bf16.msra.mxu0 %v9764
      %10154 = vmatpush.bf16.msra.mxu0 %v9761
      %10155 = vmatpush.bf16.msra.mxu0 %v9758
      %10156 = vmatpush.bf16.msra.mxu0 %v9755
      %10157 = vmatpush.bf16.msra.mxu0 %v9752
      %10158 = vmatpush.bf16.msra.mxu0 %v9749
      %10159 = vmatpush.bf16.msra.mxu0 %v9746
      %10160 = vmatpush.bf16.msra.mxu0 %v9743
      %10161 = vmatmul.bf16.gmra.mxu0 %v8925
      %v10162 = vpop.f32.mrf.mxu0
      %v10163 = vadd.f32 %v10150, %v10162
      %v10164 = vpop.f32.mrf.mxu0
      %10165 = vdwg.mxu0
      %10166 = vmatpush.bf16.msra.mxu0 %v9597
      %10167 = vmatpush.bf16.msra.mxu0 %v9594
      %10168 = vmatpush.bf16.msra.mxu0 %v9591
      %10169 = vmatpush.bf16.msra.mxu0 %v9588
      %10170 = vmatpush.bf16.msra.mxu0 %v9585
      %10171 = vmatpush.bf16.msra.mxu0 %v9582
      %10172 = vmatpush.bf16.msra.mxu0 %v9579
      %10173 = vmatpush.bf16.msra.mxu0 %v9576
      %10174 = vmatmul.bf16.gmra.mxu0 %v8918
      %v10175 = vpop.f32.mrf.mxu0
      %v10176 = vadd.f32 0.0, %v10175
      %v10177 = vpop.f32.mrf.mxu0
      %10178 = vdwg.mxu0
      %10179 = vmatpush.bf16.msra.mxu0 %v9621
      %10180 = vmatpush.bf16.msra.mxu0 %v9618
      %10181 = vmatpush.bf16.msra.mxu0 %v9615
      %10182 = vmatpush.bf16.msra.mxu0 %v9612
      %10183 = vmatpush.bf16.msra.mxu0 %v9609
      %10184 = vmatpush.bf16.msra.mxu0 %v9606
      %10185 = vmatpush.bf16.msra.mxu0 %v9603
      %10186 = vmatpush.bf16.msra.mxu0 %v9600
      %10187 = vmatmul.bf16.gmra.mxu0 %v8919
      %v10188 = vpop.f32.mrf.mxu0
      %v10189 = vadd.f32 %v10176, %v10188
      %v10190 = vpop.f32.mrf.mxu0
      %10191 = vdwg.mxu0
      %10192 = vmatpush.bf16.msra.mxu0 %v9645
      %10193 = vmatpush.bf16.msra.mxu0 %v9642
      %10194 = vmatpush.bf16.msra.mxu0 %v9639
      %10195 = vmatpush.bf16.msra.mxu0 %v9636
      %10196 = vmatpush.bf16.msra.mxu0 %v9633
      %10197 = vmatpush.bf16.msra.mxu0 %v9630
      %10198 = vmatpush.bf16.msra.mxu0 %v9627
      %10199 = vmatpush.bf16.msra.mxu0 %v9624
      %10200 = vmatmul.bf16.gmra.mxu0 %v8920
      %v10201 = vpop.f32.mrf.mxu0
      %v10202 = vadd.f32 %v10189, %v10201
      %v10203 = vpop.f32.mrf.mxu0
      %10204 = vdwg.mxu0
      %10205 = vmatpush.bf16.msra.mxu0 %v9669
      %10206 = vmatpush.bf16.msra.mxu0 %v9666
      %10207 = vmatpush.bf16.msra.mxu0 %v9663
      %10208 = vmatpush.bf16.msra.mxu0 %v9660
      %10209 = vmatpush.bf16.msra.mxu0 %v9657
      %10210 = vmatpush.bf16.msra.mxu0 %v9654
      %10211 = vmatpush.bf16.msra.mxu0 %v9651
      %10212 = vmatpush.bf16.msra.mxu0 %v9648
      %10213 = vmatmul.bf16.gmra.mxu0 %v8921
      %v10214 = vpop.f32.mrf.mxu0
      %v10215 = vadd.f32 %v10202, %v10214
      %v10216 = vpop.f32.mrf.mxu0
      %10217 = vdwg.mxu0
      %10218 = vmatpush.bf16.msra.mxu0 %v9693
      %10219 = vmatpush.bf16.msra.mxu0 %v9690
      %10220 = vmatpush.bf16.msra.mxu0 %v9687
      %10221 = vmatpush.bf16.msra.mxu0 %v9684
      %10222 = vmatpush.bf16.msra.mxu0 %v9681
      %10223 = vmatpush.bf16.msra.mxu0 %v9678
      %10224 = vmatpush.bf16.msra.mxu0 %v9675
      %10225 = vmatpush.bf16.msra.mxu0 %v9672
      %10226 = vmatmul.bf16.gmra.mxu0 %v8922
      %v10227 = vpop.f32.mrf.mxu0
      %v10228 = vadd.f32 %v10215, %v10227
      %v10229 = vpop.f32.mrf.mxu0
      %10230 = vdwg.mxu0
      %10231 = vmatpush.bf16.msra.mxu0 %v9717
      %10232 = vmatpush.bf16.msra.mxu0 %v9714
      %10233 = vmatpush.bf16.msra.mxu0 %v9711
      %10234 = vmatpush.bf16.msra.mxu0 %v9708
      %10235 = vmatpush.bf16.msra.mxu0 %v9705
      %10236 = vmatpush.bf16.msra.mxu0 %v9702
      %10237 = vmatpush.bf16.msra.mxu0 %v9699
      %10238 = vmatpush.bf16.msra.mxu0 %v9696
      %10239 = vmatmul.bf16.gmra.mxu0 %v8923
      %v10240 = vpop.f32.mrf.mxu0
      %v10241 = vadd.f32 %v10228, %v10240
      %v10242 = vpop.f32.mrf.mxu0
      %10243 = vdwg.mxu0
      %10244 = vmatpush.bf16.msra.mxu0 %v9741
      %10245 = vmatpush.bf16.msra.mxu0 %v9738
      %10246 = vmatpush.bf16.msra.mxu0 %v9735
      %10247 = vmatpush.bf16.msra.mxu0 %v9732
      %10248 = vmatpush.bf16.msra.mxu0 %v9729
      %10249 = vmatpush.bf16.msra.mxu0 %v9726
      %10250 = vmatpush.bf16.msra.mxu0 %v9723
      %10251 = vmatpush.bf16.msra.mxu0 %v9720
      %10252 = vmatmul.bf16.gmra.mxu0 %v8924
      %v10253 = vpop.f32.mrf.mxu0
      %v10254 = vadd.f32 %v10241, %v10253
      %v10255 = vpop.f32.mrf.mxu0
      %10256 = vdwg.mxu0
      %10257 = vmatpush.bf16.msra.mxu0 %v9765
      %10258 = vmatpush.bf16.msra.mxu0 %v9762
      %10259 = vmatpush.bf16.msra.mxu0 %v9759
      %10260 = vmatpush.bf16.msra.mxu0 %v9756
      %10261 = vmatpush.bf16.msra.mxu0 %v9753
      %10262 = vmatpush.bf16.msra.mxu0 %v9750
      %10263 = vmatpush.bf16.msra.mxu0 %v9747
      %10264 = vmatpush.bf16.msra.mxu0 %v9744
      %10265 = vmatmul.bf16.gmra.mxu0 %v8925
      %v10266 = vpop.f32.mrf.mxu0
      %v10267 = vadd.f32 %v10254, %v10266
      %v10268 = vpop.f32.mrf.mxu0
      %10269 = vdwg.mxu0
      %v10270 = vadd.f32 %v8538, %v10059
      %v10271 = vadd.f32 %v8539, %v10163
      %v10272 = vadd.f32 %v8540, %v10267
      %v10273 = vld [vmem:[%s4] sm:$0x7]
      %v10275 = vperm.slane %v10273, 0
      %v10276 = vperm.slane %v10273, 1
      %v10277 = vperm.slane %v10273, 2
      %v10281 = vadd.f32 %v10270, %v10275
      %v10282 = vadd.f32 %v10271, %v10276
      %v10283 = vadd.f32 %v10272, %v10277
      %vm10284 = vcmp.ge.f32.partialorder %v10281, 0.0
      %vm10285 = vcmp.ge.f32.partialorder %v10282, 0.0
      %vm10286 = vcmp.ge.f32.partialorder %v10283, 0.0
      %v10287 = vmul.f32 %v10281, 0.2
      %v10288 = vmul.f32 %v10282, 0.2
      %v10289 = vmul.f32 %v10283, 0.2
      %v10290 = vsel %vm10284, %v10281, %v10287
      %v10291 = vsel %vm10285, %v10282, %v10288
      %v10292 = vsel %vm10286, %v10283, %v10289
      %v10296 = vrot.slane %v10291, 7
      %v10297 = vrot.slane %v10292, 6
      %v10298 = vsel %vm2828, %v10290, %v10296
      %v10299 = vsel %vm2831, %v10298, %v10297
      %v10300 = vsel %vm511, %v10290, %v10296
      %v10301 = vsel %vm2841, %v10300, %v10297
      %v10302 = vrot.slane %v10301, 1
      %v10303 = vsel %vm514, %v10290, %v10296
      %v10304 = vsel %vm2853, %v10303, %v10297
      %v10305 = vrot.slane %v10304, 2
      %v10306 = vsel %vm517, %v10290, %v10296
      %v10307 = vsel %vm2864, %v10306, %v10297
      %v10308 = vrot.slane %v10307, 3
      %v10309 = vsel %vm520, %v10290, %v10296
      %v10310 = vsel %vm2835, %v10309, %v10297
      %v10311 = vrot.slane %v10310, 4
      %v10312 = vsel %vm523, %v10290, %v10296
      %v10313 = vsel %vm2846, %v10312, %v10297
      %v10314 = vrot.slane %v10313, 5
      %v10315 = vperm.slane %v10299, 0
      %v10316 = vperm.slane %v10299, 1
      %v10317 = vperm.slane %v10299, 2
      %v10318 = vperm.slane %v10305, 0
      %v10319 = vperm.slane %v10305, 1
      %v10320 = vperm.slane %v10305, 2
      %v10327 = vpack.c.bf16 %v10315, %v10315
      %v10328 = vpack.c.bf16 %v10316, %v10316
      %v10329 = vpack.c.bf16 %v10317, %v10317
      %v10330 = vpack.c.bf16 %v10318, %v10318
      %v10331 = vpack.c.bf16 %v10319, %v10319
      %v10332 = vpack.c.bf16 %v10320, %v10320
      %v10333 = vld [vmem:[%s5] sm:$0xf]
      %v10334 = vld [vmem:[%s5 + $0x4] sm:$0xf]
      %v10335 = vld [vmem:[%s5 + $0x8] sm:$0xf]
      %v10336 = vld [vmem:[%s5 + $0xc] sm:$0xf]
      %v10337 = vld [vmem:[%s5 + $0x10] sm:$0xf]
      %v10338 = vld [vmem:[%s5 + $0x14] sm:$0xf]
      %v10339 = vld [vmem:[%s5 + $0x18] sm:$0xf]
      %v10340 = vld [vmem:[%s5 + $0x1c] sm:$0xf]
      %v10341 = vld [vmem:[%s5 + $0x20] sm:$0xf]
      %v10342 = vld [vmem:[%s5 + $0x24] sm:$0xf]
      %v10343 = vld [vmem:[%s5 + $0x28] sm:$0xf]
      %v10344 = vld [vmem:[%s5 + $0x2c] sm:$0xf]
      %v10345 = vld [vmem:[%s5 + $0x30] sm:$0xf]
      %v10346 = vld [vmem:[%s5 + $0x34] sm:$0xf]
      %v10347 = vld [vmem:[%s5 + $0x38] sm:$0xf]
      %v10348 = vld [vmem:[%s5 + $0x3c] sm:$0xf]
      %v10349 = vld [vmem:[%s5 + $0x40] sm:$0xf]
      %v10350 = vld [vmem:[%s5 + $0x44] sm:$0xf]
      %v10351 = vld [vmem:[%s5 + $0x48] sm:$0xf]
      %v10352 = vld [vmem:[%s5 + $0x4c] sm:$0xf]
      %v10353 = vld [vmem:[%s5 + $0x50] sm:$0xf]
      %v10354 = vld [vmem:[%s5 + $0x54] sm:$0xf]
      %v10355 = vld [vmem:[%s5 + $0x58] sm:$0xf]
      %v10356 = vld [vmem:[%s5 + $0x5c] sm:$0xf]
      %v10357 = vld [vmem:[%s5 + $0x60] sm:$0xf]
      %v10358 = vld [vmem:[%s5 + $0x64] sm:$0xf]
      %v10359 = vld [vmem:[%s5 + $0x68] sm:$0xf]
      %v10360 = vld [vmem:[%s5 + $0x6c] sm:$0xf]
      %v10361 = vld [vmem:[%s5 + $0x70] sm:$0xf]
      %v10362 = vld [vmem:[%s5 + $0x74] sm:$0xf]
      %v10363 = vld [vmem:[%s5 + $0x78] sm:$0xf]
      %v10364 = vld [vmem:[%s5 + $0x7c] sm:$0xf]
      %v10365 = vld [vmem:[%s5 + $0x80] sm:$0xf]
      %v10366 = vld [vmem:[%s5 + $0x84] sm:$0xf]
      %v10367 = vld [vmem:[%s5 + $0x88] sm:$0xf]
      %v10368 = vld [vmem:[%s5 + $0x8c] sm:$0xf]
      %v10369 = vld [vmem:[%s5 + $0x90] sm:$0xf]
      %v10370 = vld [vmem:[%s5 + $0x94] sm:$0xf]
      %v10371 = vld [vmem:[%s5 + $0x98] sm:$0xf]
      %v10372 = vld [vmem:[%s5 + $0x9c] sm:$0xf]
      %v10373 = vld [vmem:[%s5 + $0xa0] sm:$0xf]
      %v10374 = vld [vmem:[%s5 + $0xa4] sm:$0xf]
      %v10375 = vld [vmem:[%s5 + $0xa8] sm:$0xf]
      %v10376 = vld [vmem:[%s5 + $0xac] sm:$0xf]
      %v10377 = vld [vmem:[%s5 + $0xb0] sm:$0xf]
      %v10378 = vld [vmem:[%s5 + $0xb4] sm:$0xf]
      %v10379 = vld [vmem:[%s5 + $0xb8] sm:$0xf]
      %v10380 = vld [vmem:[%s5 + $0xbc] sm:$0xf]
      %v10381 = vperm.slane %v10302, 0
      %v10382 = vperm.slane %v10302, 1
      %v10383 = vperm.slane %v10302, 2
      %v10384 = vperm.slane %v10308, 0
      %v10385 = vperm.slane %v10308, 1
      %v10386 = vperm.slane %v10308, 2
      %v10393 = vpack.c.bf16 %v10381, %v10381
      %v10394 = vpack.c.bf16 %v10382, %v10382
      %v10395 = vpack.c.bf16 %v10383, %v10383
      %v10396 = vpack.c.bf16 %v10384, %v10384
      %v10397 = vpack.c.bf16 %v10385, %v10385
      %v10398 = vpack.c.bf16 %v10386, %v10386
      %s10399 = scalar_lea.vmem %s5, 192
      %v10400 = vld [vmem:[%s10399] sm:$0xf]
      %v10401 = vld [vmem:[%s10399 + $0x4] sm:$0xf]
      %v10402 = vld [vmem:[%s10399 + $0x8] sm:$0xf]
      %v10403 = vld [vmem:[%s10399 + $0xc] sm:$0xf]
      %v10404 = vld [vmem:[%s10399 + $0x10] sm:$0xf]
      %v10405 = vld [vmem:[%s10399 + $0x14] sm:$0xf]
      %v10406 = vld [vmem:[%s10399 + $0x18] sm:$0xf]
      %v10407 = vld [vmem:[%s10399 + $0x1c] sm:$0xf]
      %v10408 = vld [vmem:[%s10399 + $0x20] sm:$0xf]
      %v10409 = vld [vmem:[%s10399 + $0x24] sm:$0xf]
      %v10410 = vld [vmem:[%s10399 + $0x28] sm:$0xf]
      %v10411 = vld [vmem:[%s10399 + $0x2c] sm:$0xf]
      %v10412 = vld [vmem:[%s10399 + $0x30] sm:$0xf]
      %v10413 = vld [vmem:[%s10399 + $0x34] sm:$0xf]
      %v10414 = vld [vmem:[%s10399 + $0x38] sm:$0xf]
      %v10415 = vld [vmem:[%s10399 + $0x3c] sm:$0xf]
      %v10416 = vld [vmem:[%s10399 + $0x40] sm:$0xf]
      %v10417 = vld [vmem:[%s10399 + $0x44] sm:$0xf]
      %v10418 = vld [vmem:[%s10399 + $0x48] sm:$0xf]
      %v10419 = vld [vmem:[%s10399 + $0x4c] sm:$0xf]
      %v10420 = vld [vmem:[%s10399 + $0x50] sm:$0xf]
      %v10421 = vld [vmem:[%s10399 + $0x54] sm:$0xf]
      %v10422 = vld [vmem:[%s10399 + $0x58] sm:$0xf]
      %v10423 = vld [vmem:[%s10399 + $0x5c] sm:$0xf]
      %v10424 = vld [vmem:[%s10399 + $0x60] sm:$0xf]
      %v10425 = vld [vmem:[%s10399 + $0x64] sm:$0xf]
      %v10426 = vld [vmem:[%s10399 + $0x68] sm:$0xf]
      %v10427 = vld [vmem:[%s10399 + $0x6c] sm:$0xf]
      %v10428 = vld [vmem:[%s10399 + $0x70] sm:$0xf]
      %v10429 = vld [vmem:[%s10399 + $0x74] sm:$0xf]
      %v10430 = vld [vmem:[%s10399 + $0x78] sm:$0xf]
      %v10431 = vld [vmem:[%s10399 + $0x7c] sm:$0xf]
      %v10432 = vld [vmem:[%s10399 + $0x80] sm:$0xf]
      %v10433 = vld [vmem:[%s10399 + $0x84] sm:$0xf]
      %v10434 = vld [vmem:[%s10399 + $0x88] sm:$0xf]
      %v10435 = vld [vmem:[%s10399 + $0x8c] sm:$0xf]
      %v10436 = vld [vmem:[%s10399 + $0x90] sm:$0xf]
      %v10437 = vld [vmem:[%s10399 + $0x94] sm:$0xf]
      %v10438 = vld [vmem:[%s10399 + $0x98] sm:$0xf]
      %v10439 = vld [vmem:[%s10399 + $0x9c] sm:$0xf]
      %v10440 = vld [vmem:[%s10399 + $0xa0] sm:$0xf]
      %v10441 = vld [vmem:[%s10399 + $0xa4] sm:$0xf]
      %v10442 = vld [vmem:[%s10399 + $0xa8] sm:$0xf]
      %v10443 = vld [vmem:[%s10399 + $0xac] sm:$0xf]
      %v10444 = vld [vmem:[%s10399 + $0xb0] sm:$0xf]
      %v10445 = vld [vmem:[%s10399 + $0xb4] sm:$0xf]
      %v10446 = vld [vmem:[%s10399 + $0xb8] sm:$0xf]
      %v10447 = vld [vmem:[%s10399 + $0xbc] sm:$0xf]
      %v10454 = vunpack.c.l.b16 %v10393
      %v10455 = vunpack.c.l.b16 %v10394
      %v10456 = vunpack.c.l.b16 %v10395
      %v10457 = vunpack.c.l.b16 %v10396
      %v10458 = vunpack.c.l.b16 %v10397
      %v10459 = vunpack.c.l.b16 %v10398
      %v10460 = vrot.slane %v10457, 7
      %v10461 = vsel %vm511, %v10460, %v10454
      %v10462 = vrot.slane %v10458, 7
      %v10463 = vsel %vm511, %v10462, %v10455
      %v10464 = vrot.slane %v10459, 7
      %v10465 = vsel %vm511, %v10464, %v10456
      %v10466 = vpack.c.b16 %v10461, %v10461
      %v10467 = vpack.c.b16 %v10463, %v10463
      %v10468 = vpack.c.b16 %v10465, %v10465
      %v10520 = vunpack.c.l.b16 %v10400
      %v10521 = vunpack.c.l.b16 %v10401
      %v10522 = vunpack.c.l.b16 %v10402
      %v10523 = vunpack.c.l.b16 %v10403
      %v10524 = vunpack.c.l.b16 %v10404
      %v10525 = vunpack.c.l.b16 %v10405
      %v10526 = vunpack.c.l.b16 %v10406
      %v10527 = vunpack.c.l.b16 %v10407
      %v10528 = vunpack.c.l.b16 %v10408
      %v10529 = vunpack.c.l.b16 %v10409
      %v10530 = vunpack.c.l.b16 %v10410
      %v10531 = vunpack.c.l.b16 %v10411
      %v10532 = vunpack.c.l.b16 %v10412
      %v10533 = vunpack.c.l.b16 %v10413
      %v10534 = vunpack.c.l.b16 %v10414
      %v10535 = vunpack.c.l.b16 %v10415
      %v10536 = vunpack.c.l.b16 %v10416
      %v10537 = vunpack.c.l.b16 %v10417
      %v10538 = vunpack.c.l.b16 %v10418
      %v10539 = vunpack.c.l.b16 %v10419
      %v10540 = vunpack.c.l.b16 %v10420
      %v10541 = vunpack.c.l.b16 %v10421
      %v10542 = vunpack.c.l.b16 %v10422
      %v10543 = vunpack.c.l.b16 %v10423
      %v10544 = vunpack.c.l.b16 %v10424
      %v10545 = vunpack.c.l.b16 %v10425
      %v10546 = vunpack.c.l.b16 %v10426
      %v10547 = vunpack.c.l.b16 %v10427
      %v10548 = vunpack.c.l.b16 %v10428
      %v10549 = vunpack.c.l.b16 %v10429
      %v10550 = vunpack.c.l.b16 %v10430
      %v10551 = vunpack.c.l.b16 %v10431
      %v10552 = vunpack.c.l.b16 %v10432
      %v10553 = vunpack.c.l.b16 %v10433
      %v10554 = vunpack.c.l.b16 %v10434
      %v10555 = vunpack.c.l.b16 %v10435
      %v10556 = vunpack.c.l.b16 %v10436
      %v10557 = vunpack.c.l.b16 %v10437
      %v10558 = vunpack.c.l.b16 %v10438
      %v10559 = vunpack.c.l.b16 %v10439
      %v10560 = vunpack.c.l.b16 %v10440
      %v10561 = vunpack.c.l.b16 %v10441
      %v10562 = vunpack.c.l.b16 %v10442
      %v10563 = vunpack.c.l.b16 %v10443
      %v10564 = vunpack.c.l.b16 %v10444
      %v10565 = vunpack.c.l.b16 %v10445
      %v10566 = vunpack.c.l.b16 %v10446
      %v10567 = vunpack.c.l.b16 %v10447
      %v10568 = vpack.c.b16 %v10521, %v10520
      %v10569 = vpack.c.b16 %v10523, %v10522
      %v10570 = vpack.c.b16 %v10525, %v10524
      %v10571 = vpack.c.b16 %v10527, %v10526
      %v10572 = vpack.c.b16 %v10529, %v10528
      %v10573 = vpack.c.b16 %v10531, %v10530
      %v10574 = vpack.c.b16 %v10533, %v10532
      %v10575 = vpack.c.b16 %v10535, %v10534
      %v10576 = vpack.c.b16 %v10537, %v10536
      %v10577 = vpack.c.b16 %v10539, %v10538
      %v10578 = vpack.c.b16 %v10541, %v10540
      %v10579 = vpack.c.b16 %v10543, %v10542
      %v10580 = vpack.c.b16 %v10545, %v10544
      %v10581 = vpack.c.b16 %v10547, %v10546
      %v10582 = vpack.c.b16 %v10549, %v10548
      %v10583 = vpack.c.b16 %v10551, %v10550
      %v10584 = vpack.c.b16 %v10553, %v10552
      %v10585 = vpack.c.b16 %v10555, %v10554
      %v10586 = vpack.c.b16 %v10557, %v10556
      %v10587 = vpack.c.b16 %v10559, %v10558
      %v10588 = vpack.c.b16 %v10561, %v10560
      %v10589 = vpack.c.b16 %v10563, %v10562
      %v10590 = vpack.c.b16 %v10565, %v10564
      %v10591 = vpack.c.b16 %v10567, %v10566
      %10616 = vmatpush.bf16.msra.mxu0 %v10575
      %10617 = vmatpush.bf16.msra.mxu0 %v10574
      %10618 = vmatpush.bf16.msra.mxu0 %v10573
      %10619 = vmatpush.bf16.msra.mxu0 %v10572
      %10620 = vmatpush.bf16.msra.mxu0 %v10571
      %10621 = vmatpush.bf16.msra.mxu0 %v10570
      %10622 = vmatpush.bf16.msra.mxu0 %v10569
      %10623 = vmatpush.bf16.msra.mxu0 %v10568
      %10624 = vmatmul.bf16.gmra.mxu0 %v10466
      %v10625 = vpop.f32.mrf.mxu0
      %v10626 = vadd.f32 0.0, %v10625
      %v10627 = vpop.f32.mrf.mxu0
      %10628 = vdwg.mxu0
      %10629 = vmatpush.bf16.msra.mxu0 %v10583
      %10630 = vmatpush.bf16.msra.mxu0 %v10582
      %10631 = vmatpush.bf16.msra.mxu0 %v10581
      %10632 = vmatpush.bf16.msra.mxu0 %v10580
      %10633 = vmatpush.bf16.msra.mxu0 %v10579
      %10634 = vmatpush.bf16.msra.mxu0 %v10578
      %10635 = vmatpush.bf16.msra.mxu0 %v10577
      %10636 = vmatpush.bf16.msra.mxu0 %v10576
      %10637 = vmatmul.bf16.gmra.mxu0 %v10467
      %v10638 = vpop.f32.mrf.mxu0
      %v10639 = vadd.f32 %v10626, %v10638
      %v10640 = vpop.f32.mrf.mxu0
      %10641 = vdwg.mxu0
      %10642 = vmatpush.bf16.msra.mxu0 %v10591
      %10643 = vmatpush.bf16.msra.mxu0 %v10590
      %10644 = vmatpush.bf16.msra.mxu0 %v10589
      %10645 = vmatpush.bf16.msra.mxu0 %v10588
      %10646 = vmatpush.bf16.msra.mxu0 %v10587
      %10647 = vmatpush.bf16.msra.mxu0 %v10586
      %10648 = vmatpush.bf16.msra.mxu0 %v10585
      %10649 = vmatpush.bf16.msra.mxu0 %v10584
      %10650 = vmatmul.bf16.gmra.mxu0 %v10468
      %v10651 = vpop.f32.mrf.mxu0
      %v10652 = vadd.f32 %v10639, %v10651
      %v10653 = vpop.f32.mrf.mxu0
      %10654 = vdwg.mxu0
      %v10661 = vunpack.c.l.b16 %v10327
      %v10662 = vunpack.c.l.b16 %v10328
      %v10663 = vunpack.c.l.b16 %v10329
      %v10664 = vunpack.c.l.b16 %v10330
      %v10665 = vunpack.c.l.b16 %v10331
      %v10666 = vunpack.c.l.b16 %v10332
      %v10667 = vrot.slane %v10664, 7
      %v10668 = vsel %vm511, %v10667, %v10661
      %v10669 = vrot.slane %v10665, 7
      %v10670 = vsel %vm511, %v10669, %v10662
      %v10671 = vrot.slane %v10666, 7
      %v10672 = vsel %vm511, %v10671, %v10663
      %v10673 = vpack.c.b16 %v10668, %v10668
      %v10674 = vpack.c.b16 %v10670, %v10670
      %v10675 = vpack.c.b16 %v10672, %v10672
      %v10727 = vunpack.c.l.b16 %v10333
      %v10728 = vunpack.c.l.b16 %v10334
      %v10729 = vunpack.c.l.b16 %v10335
      %v10730 = vunpack.c.l.b16 %v10336
      %v10731 = vunpack.c.l.b16 %v10337
      %v10732 = vunpack.c.l.b16 %v10338
      %v10733 = vunpack.c.l.b16 %v10339
      %v10734 = vunpack.c.l.b16 %v10340
      %v10735 = vunpack.c.l.b16 %v10341
      %v10736 = vunpack.c.l.b16 %v10342
      %v10737 = vunpack.c.l.b16 %v10343
      %v10738 = vunpack.c.l.b16 %v10344
      %v10739 = vunpack.c.l.b16 %v10345
      %v10740 = vunpack.c.l.b16 %v10346
      %v10741 = vunpack.c.l.b16 %v10347
      %v10742 = vunpack.c.l.b16 %v10348
      %v10743 = vunpack.c.l.b16 %v10349
      %v10744 = vunpack.c.l.b16 %v10350
      %v10745 = vunpack.c.l.b16 %v10351
      %v10746 = vunpack.c.l.b16 %v10352
      %v10747 = vunpack.c.l.b16 %v10353
      %v10748 = vunpack.c.l.b16 %v10354
      %v10749 = vunpack.c.l.b16 %v10355
      %v10750 = vunpack.c.l.b16 %v10356
      %v10751 = vunpack.c.l.b16 %v10357
      %v10752 = vunpack.c.l.b16 %v10358
      %v10753 = vunpack.c.l.b16 %v10359
      %v10754 = vunpack.c.l.b16 %v10360
      %v10755 = vunpack.c.l.b16 %v10361
      %v10756 = vunpack.c.l.b16 %v10362
      %v10757 = vunpack.c.l.b16 %v10363
      %v10758 = vunpack.c.l.b16 %v10364
      %v10759 = vunpack.c.l.b16 %v10365
      %v10760 = vunpack.c.l.b16 %v10366
      %v10761 = vunpack.c.l.b16 %v10367
      %v10762 = vunpack.c.l.b16 %v10368
      %v10763 = vunpack.c.l.b16 %v10369
      %v10764 = vunpack.c.l.b16 %v10370
      %v10765 = vunpack.c.l.b16 %v10371
      %v10766 = vunpack.c.l.b16 %v10372
      %v10767 = vunpack.c.l.b16 %v10373
      %v10768 = vunpack.c.l.b16 %v10374
      %v10769 = vunpack.c.l.b16 %v10375
      %v10770 = vunpack.c.l.b16 %v10376
      %v10771 = vunpack.c.l.b16 %v10377
      %v10772 = vunpack.c.l.b16 %v10378
      %v10773 = vunpack.c.l.b16 %v10379
      %v10774 = vunpack.c.l.b16 %v10380
      %v10775 = vpack.c.b16 %v10728, %v10727
      %v10776 = vpack.c.b16 %v10730, %v10729
      %v10777 = vpack.c.b16 %v10732, %v10731
      %v10778 = vpack.c.b16 %v10734, %v10733
      %v10779 = vpack.c.b16 %v10736, %v10735
      %v10780 = vpack.c.b16 %v10738, %v10737
      %v10781 = vpack.c.b16 %v10740, %v10739
      %v10782 = vpack.c.b16 %v10742, %v10741
      %v10783 = vpack.c.b16 %v10744, %v10743
      %v10784 = vpack.c.b16 %v10746, %v10745
      %v10785 = vpack.c.b16 %v10748, %v10747
      %v10786 = vpack.c.b16 %v10750, %v10749
      %v10787 = vpack.c.b16 %v10752, %v10751
      %v10788 = vpack.c.b16 %v10754, %v10753
      %v10789 = vpack.c.b16 %v10756, %v10755
      %v10790 = vpack.c.b16 %v10758, %v10757
      %v10791 = vpack.c.b16 %v10760, %v10759
      %v10792 = vpack.c.b16 %v10762, %v10761
      %v10793 = vpack.c.b16 %v10764, %v10763
      %v10794 = vpack.c.b16 %v10766, %v10765
      %v10795 = vpack.c.b16 %v10768, %v10767
      %v10796 = vpack.c.b16 %v10770, %v10769
      %v10797 = vpack.c.b16 %v10772, %v10771
      %v10798 = vpack.c.b16 %v10774, %v10773
      %10823 = vmatpush.bf16.msra.mxu0 %v10782
      %10824 = vmatpush.bf16.msra.mxu0 %v10781
      %10825 = vmatpush.bf16.msra.mxu0 %v10780
      %10826 = vmatpush.bf16.msra.mxu0 %v10779
      %10827 = vmatpush.bf16.msra.mxu0 %v10778
      %10828 = vmatpush.bf16.msra.mxu0 %v10777
      %10829 = vmatpush.bf16.msra.mxu0 %v10776
      %10830 = vmatpush.bf16.msra.mxu0 %v10775
      %10831 = vmatmul.bf16.gmra.mxu0 %v10673
      %v10832 = vpop.f32.mrf.mxu0
      %v10833 = vadd.f32 %v10652, %v10832
      %v10834 = vpop.f32.mrf.mxu0
      %10835 = vdwg.mxu0
      %10836 = vmatpush.bf16.msra.mxu0 %v10790
      %10837 = vmatpush.bf16.msra.mxu0 %v10789
      %10838 = vmatpush.bf16.msra.mxu0 %v10788
      %10839 = vmatpush.bf16.msra.mxu0 %v10787
      %10840 = vmatpush.bf16.msra.mxu0 %v10786
      %10841 = vmatpush.bf16.msra.mxu0 %v10785
      %10842 = vmatpush.bf16.msra.mxu0 %v10784
      %10843 = vmatpush.bf16.msra.mxu0 %v10783
      %10844 = vmatmul.bf16.gmra.mxu0 %v10674
      %v10845 = vpop.f32.mrf.mxu0
      %v10846 = vadd.f32 %v10833, %v10845
      %v10847 = vpop.f32.mrf.mxu0
      %10848 = vdwg.mxu0
      %10849 = vmatpush.bf16.msra.mxu0 %v10798
      %10850 = vmatpush.bf16.msra.mxu0 %v10797
      %10851 = vmatpush.bf16.msra.mxu0 %v10796
      %10852 = vmatpush.bf16.msra.mxu0 %v10795
      %10853 = vmatpush.bf16.msra.mxu0 %v10794
      %10854 = vmatpush.bf16.msra.mxu0 %v10793
      %10855 = vmatpush.bf16.msra.mxu0 %v10792
      %10856 = vmatpush.bf16.msra.mxu0 %v10791
      %10857 = vmatmul.bf16.gmra.mxu0 %v10675
      %v10858 = vpop.f32.mrf.mxu0
      %v10859 = vadd.f32 %v10846, %v10858
      %v10860 = vpop.f32.mrf.mxu0
      %10861 = vdwg.mxu0
      %v10862 = vperm.slane %v10311, 0
      %v10863 = vperm.slane %v10311, 1
      %v10864 = vperm.slane %v10311, 2
      %v10868 = vpack.c.bf16 %v10862, %v10862
      %v10869 = vpack.c.bf16 %v10863, %v10863
      %v10870 = vpack.c.bf16 %v10864, %v10864
      %s10871 = scalar_lea.vmem %s5, 384
      %v10872 = vld [vmem:[%s10871] sm:$0xf]
      %v10873 = vld [vmem:[%s10871 + $0x4] sm:$0xf]
      %v10874 = vld [vmem:[%s10871 + $0x8] sm:$0xf]
      %v10875 = vld [vmem:[%s10871 + $0xc] sm:$0xf]
      %v10876 = vld [vmem:[%s10871 + $0x10] sm:$0xf]
      %v10877 = vld [vmem:[%s10871 + $0x14] sm:$0xf]
      %v10878 = vld [vmem:[%s10871 + $0x18] sm:$0xf]
      %v10879 = vld [vmem:[%s10871 + $0x1c] sm:$0xf]
      %v10880 = vld [vmem:[%s10871 + $0x20] sm:$0xf]
      %v10881 = vld [vmem:[%s10871 + $0x24] sm:$0xf]
      %v10882 = vld [vmem:[%s10871 + $0x28] sm:$0xf]
      %v10883 = vld [vmem:[%s10871 + $0x2c] sm:$0xf]
      %v10884 = vld [vmem:[%s10871 + $0x30] sm:$0xf]
      %v10885 = vld [vmem:[%s10871 + $0x34] sm:$0xf]
      %v10886 = vld [vmem:[%s10871 + $0x38] sm:$0xf]
      %v10887 = vld [vmem:[%s10871 + $0x3c] sm:$0xf]
      %v10888 = vld [vmem:[%s10871 + $0x40] sm:$0xf]
      %v10889 = vld [vmem:[%s10871 + $0x44] sm:$0xf]
      %v10890 = vld [vmem:[%s10871 + $0x48] sm:$0xf]
      %v10891 = vld [vmem:[%s10871 + $0x4c] sm:$0xf]
      %v10892 = vld [vmem:[%s10871 + $0x50] sm:$0xf]
      %v10893 = vld [vmem:[%s10871 + $0x54] sm:$0xf]
      %v10894 = vld [vmem:[%s10871 + $0x58] sm:$0xf]
      %v10895 = vld [vmem:[%s10871 + $0x5c] sm:$0xf]
      %v10896 = vld [vmem:[%s10871 + $0x60] sm:$0xf]
      %v10897 = vld [vmem:[%s10871 + $0x64] sm:$0xf]
      %v10898 = vld [vmem:[%s10871 + $0x68] sm:$0xf]
      %v10899 = vld [vmem:[%s10871 + $0x6c] sm:$0xf]
      %v10900 = vld [vmem:[%s10871 + $0x70] sm:$0xf]
      %v10901 = vld [vmem:[%s10871 + $0x74] sm:$0xf]
      %v10902 = vld [vmem:[%s10871 + $0x78] sm:$0xf]
      %v10903 = vld [vmem:[%s10871 + $0x7c] sm:$0xf]
      %v10904 = vld [vmem:[%s10871 + $0x80] sm:$0xf]
      %v10905 = vld [vmem:[%s10871 + $0x84] sm:$0xf]
      %v10906 = vld [vmem:[%s10871 + $0x88] sm:$0xf]
      %v10907 = vld [vmem:[%s10871 + $0x8c] sm:$0xf]
      %v10908 = vld [vmem:[%s10871 + $0x90] sm:$0xf]
      %v10909 = vld [vmem:[%s10871 + $0x94] sm:$0xf]
      %v10910 = vld [vmem:[%s10871 + $0x98] sm:$0xf]
      %v10911 = vld [vmem:[%s10871 + $0x9c] sm:$0xf]
      %v10912 = vld [vmem:[%s10871 + $0xa0] sm:$0xf]
      %v10913 = vld [vmem:[%s10871 + $0xa4] sm:$0xf]
      %v10914 = vld [vmem:[%s10871 + $0xa8] sm:$0xf]
      %v10915 = vld [vmem:[%s10871 + $0xac] sm:$0xf]
      %v10916 = vld [vmem:[%s10871 + $0xb0] sm:$0xf]
      %v10917 = vld [vmem:[%s10871 + $0xb4] sm:$0xf]
      %v10918 = vld [vmem:[%s10871 + $0xb8] sm:$0xf]
      %v10919 = vld [vmem:[%s10871 + $0xbc] sm:$0xf]
      %v10923 = vunpack.c.l.b16 %v10868
      %v10924 = vunpack.c.l.b16 %v10869
      %v10925 = vunpack.c.l.b16 %v10870
      %v10926 = vrot.slane %v10923, 7
      %v10927 = vsel %vm511, %v10926, %v10664
      %v10928 = vrot.slane %v10924, 7
      %v10929 = vsel %vm511, %v10928, %v10665
      %v10930 = vrot.slane %v10925, 7
      %v10931 = vsel %vm511, %v10930, %v10666
      %v10932 = vpack.c.b16 %v10927, %v10927
      %v10933 = vpack.c.b16 %v10929, %v10929
      %v10934 = vpack.c.b16 %v10931, %v10931
      %v10986 = vunpack.c.l.b16 %v10872
      %v10987 = vunpack.c.l.b16 %v10873
      %v10988 = vunpack.c.l.b16 %v10874
      %v10989 = vunpack.c.l.b16 %v10875
      %v10990 = vunpack.c.l.b16 %v10876
      %v10991 = vunpack.c.l.b16 %v10877
      %v10992 = vunpack.c.l.b16 %v10878
      %v10993 = vunpack.c.l.b16 %v10879
      %v10994 = vunpack.c.l.b16 %v10880
      %v10995 = vunpack.c.l.b16 %v10881
      %v10996 = vunpack.c.l.b16 %v10882
      %v10997 = vunpack.c.l.b16 %v10883
      %v10998 = vunpack.c.l.b16 %v10884
      %v10999 = vunpack.c.l.b16 %v10885
      %v11000 = vunpack.c.l.b16 %v10886
      %v11001 = vunpack.c.l.b16 %v10887
      %v11002 = vunpack.c.l.b16 %v10888
      %v11003 = vunpack.c.l.b16 %v10889
      %v11004 = vunpack.c.l.b16 %v10890
      %v11005 = vunpack.c.l.b16 %v10891
      %v11006 = vunpack.c.l.b16 %v10892
      %v11007 = vunpack.c.l.b16 %v10893
      %v11008 = vunpack.c.l.b16 %v10894
      %v11009 = vunpack.c.l.b16 %v10895
      %v11010 = vunpack.c.l.b16 %v10896
      %v11011 = vunpack.c.l.b16 %v10897
      %v11012 = vunpack.c.l.b16 %v10898
      %v11013 = vunpack.c.l.b16 %v10899
      %v11014 = vunpack.c.l.b16 %v10900
      %v11015 = vunpack.c.l.b16 %v10901
      %v11016 = vunpack.c.l.b16 %v10902
      %v11017 = vunpack.c.l.b16 %v10903
      %v11018 = vunpack.c.l.b16 %v10904
      %v11019 = vunpack.c.l.b16 %v10905
      %v11020 = vunpack.c.l.b16 %v10906
      %v11021 = vunpack.c.l.b16 %v10907
      %v11022 = vunpack.c.l.b16 %v10908
      %v11023 = vunpack.c.l.b16 %v10909
      %v11024 = vunpack.c.l.b16 %v10910
      %v11025 = vunpack.c.l.b16 %v10911
      %v11026 = vunpack.c.l.b16 %v10912
      %v11027 = vunpack.c.l.b16 %v10913
      %v11028 = vunpack.c.l.b16 %v10914
      %v11029 = vunpack.c.l.b16 %v10915
      %v11030 = vunpack.c.l.b16 %v10916
      %v11031 = vunpack.c.l.b16 %v10917
      %v11032 = vunpack.c.l.b16 %v10918
      %v11033 = vunpack.c.l.b16 %v10919
      %v11034 = vpack.c.b16 %v10987, %v10986
      %v11035 = vpack.c.b16 %v10989, %v10988
      %v11036 = vpack.c.b16 %v10991, %v10990
      %v11037 = vpack.c.b16 %v10993, %v10992
      %v11038 = vpack.c.b16 %v10995, %v10994
      %v11039 = vpack.c.b16 %v10997, %v10996
      %v11040 = vpack.c.b16 %v10999, %v10998
      %v11041 = vpack.c.b16 %v11001, %v11000
      %v11042 = vpack.c.b16 %v11003, %v11002
      %v11043 = vpack.c.b16 %v11005, %v11004
      %v11044 = vpack.c.b16 %v11007, %v11006
      %v11045 = vpack.c.b16 %v11009, %v11008
      %v11046 = vpack.c.b16 %v11011, %v11010
      %v11047 = vpack.c.b16 %v11013, %v11012
      %v11048 = vpack.c.b16 %v11015, %v11014
      %v11049 = vpack.c.b16 %v11017, %v11016
      %v11050 = vpack.c.b16 %v11019, %v11018
      %v11051 = vpack.c.b16 %v11021, %v11020
      %v11052 = vpack.c.b16 %v11023, %v11022
      %v11053 = vpack.c.b16 %v11025, %v11024
      %v11054 = vpack.c.b16 %v11027, %v11026
      %v11055 = vpack.c.b16 %v11029, %v11028
      %v11056 = vpack.c.b16 %v11031, %v11030
      %v11057 = vpack.c.b16 %v11033, %v11032
      %11082 = vmatpush.bf16.msra.mxu0 %v11041
      %11083 = vmatpush.bf16.msra.mxu0 %v11040
      %11084 = vmatpush.bf16.msra.mxu0 %v11039
      %11085 = vmatpush.bf16.msra.mxu0 %v11038
      %11086 = vmatpush.bf16.msra.mxu0 %v11037
      %11087 = vmatpush.bf16.msra.mxu0 %v11036
      %11088 = vmatpush.bf16.msra.mxu0 %v11035
      %11089 = vmatpush.bf16.msra.mxu0 %v11034
      %11090 = vmatmul.bf16.gmra.mxu0 %v10932
      %v11091 = vpop.f32.mrf.mxu0
      %v11092 = vadd.f32 0.0, %v11091
      %v11093 = vpop.f32.mrf.mxu0
      %11094 = vdwg.mxu0
      %11095 = vmatpush.bf16.msra.mxu0 %v11049
      %11096 = vmatpush.bf16.msra.mxu0 %v11048
      %11097 = vmatpush.bf16.msra.mxu0 %v11047
      %11098 = vmatpush.bf16.msra.mxu0 %v11046
      %11099 = vmatpush.bf16.msra.mxu0 %v11045
      %11100 = vmatpush.bf16.msra.mxu0 %v11044
      %11101 = vmatpush.bf16.msra.mxu0 %v11043
      %11102 = vmatpush.bf16.msra.mxu0 %v11042
      %11103 = vmatmul.bf16.gmra.mxu0 %v10933
      %v11104 = vpop.f32.mrf.mxu0
      %v11105 = vadd.f32 %v11092, %v11104
      %v11106 = vpop.f32.mrf.mxu0
      %11107 = vdwg.mxu0
      %11108 = vmatpush.bf16.msra.mxu0 %v11057
      %11109 = vmatpush.bf16.msra.mxu0 %v11056
      %11110 = vmatpush.bf16.msra.mxu0 %v11055
      %11111 = vmatpush.bf16.msra.mxu0 %v11054
      %11112 = vmatpush.bf16.msra.mxu0 %v11053
      %11113 = vmatpush.bf16.msra.mxu0 %v11052
      %11114 = vmatpush.bf16.msra.mxu0 %v11051
      %11115 = vmatpush.bf16.msra.mxu0 %v11050
      %11116 = vmatmul.bf16.gmra.mxu0 %v10934
      %v11117 = vpop.f32.mrf.mxu0
      %v11118 = vadd.f32 %v11105, %v11117
      %v11119 = vpop.f32.mrf.mxu0
      %11120 = vdwg.mxu0
      %v11121 = vadd.f32 %v10859, %v11118
      %v11122 = vperm.slane %v10314, 0
      %v11123 = vperm.slane %v10314, 1
      %v11124 = vperm.slane %v10314, 2
      %v11128 = vpack.c.bf16 %v11122, %v11122
      %v11129 = vpack.c.bf16 %v11123, %v11123
      %v11130 = vpack.c.bf16 %v11124, %v11124
      %s11131 = scalar_lea.vmem %s5, 576
      %v11132 = vld [vmem:[%s11131] sm:$0xf]
      %v11133 = vld [vmem:[%s11131 + $0x4] sm:$0xf]
      %v11134 = vld [vmem:[%s11131 + $0x8] sm:$0xf]
      %v11135 = vld [vmem:[%s11131 + $0xc] sm:$0xf]
      %v11136 = vld [vmem:[%s11131 + $0x10] sm:$0xf]
      %v11137 = vld [vmem:[%s11131 + $0x14] sm:$0xf]
      %v11138 = vld [vmem:[%s11131 + $0x18] sm:$0xf]
      %v11139 = vld [vmem:[%s11131 + $0x1c] sm:$0xf]
      %v11140 = vld [vmem:[%s11131 + $0x20] sm:$0xf]
      %v11141 = vld [vmem:[%s11131 + $0x24] sm:$0xf]
      %v11142 = vld [vmem:[%s11131 + $0x28] sm:$0xf]
      %v11143 = vld [vmem:[%s11131 + $0x2c] sm:$0xf]
      %v11144 = vld [vmem:[%s11131 + $0x30] sm:$0xf]
      %v11145 = vld [vmem:[%s11131 + $0x34] sm:$0xf]
      %v11146 = vld [vmem:[%s11131 + $0x38] sm:$0xf]
      %v11147 = vld [vmem:[%s11131 + $0x3c] sm:$0xf]
      %v11148 = vld [vmem:[%s11131 + $0x40] sm:$0xf]
      %v11149 = vld [vmem:[%s11131 + $0x44] sm:$0xf]
      %v11150 = vld [vmem:[%s11131 + $0x48] sm:$0xf]
      %v11151 = vld [vmem:[%s11131 + $0x4c] sm:$0xf]
      %v11152 = vld [vmem:[%s11131 + $0x50] sm:$0xf]
      %v11153 = vld [vmem:[%s11131 + $0x54] sm:$0xf]
      %v11154 = vld [vmem:[%s11131 + $0x58] sm:$0xf]
      %v11155 = vld [vmem:[%s11131 + $0x5c] sm:$0xf]
      %v11156 = vld [vmem:[%s11131 + $0x60] sm:$0xf]
      %v11157 = vld [vmem:[%s11131 + $0x64] sm:$0xf]
      %v11158 = vld [vmem:[%s11131 + $0x68] sm:$0xf]
      %v11159 = vld [vmem:[%s11131 + $0x6c] sm:$0xf]
      %v11160 = vld [vmem:[%s11131 + $0x70] sm:$0xf]
      %v11161 = vld [vmem:[%s11131 + $0x74] sm:$0xf]
      %v11162 = vld [vmem:[%s11131 + $0x78] sm:$0xf]
      %v11163 = vld [vmem:[%s11131 + $0x7c] sm:$0xf]
      %v11164 = vld [vmem:[%s11131 + $0x80] sm:$0xf]
      %v11165 = vld [vmem:[%s11131 + $0x84] sm:$0xf]
      %v11166 = vld [vmem:[%s11131 + $0x88] sm:$0xf]
      %v11167 = vld [vmem:[%s11131 + $0x8c] sm:$0xf]
      %v11168 = vld [vmem:[%s11131 + $0x90] sm:$0xf]
      %v11169 = vld [vmem:[%s11131 + $0x94] sm:$0xf]
      %v11170 = vld [vmem:[%s11131 + $0x98] sm:$0xf]
      %v11171 = vld [vmem:[%s11131 + $0x9c] sm:$0xf]
      %v11172 = vld [vmem:[%s11131 + $0xa0] sm:$0xf]
      %v11173 = vld [vmem:[%s11131 + $0xa4] sm:$0xf]
      %v11174 = vld [vmem:[%s11131 + $0xa8] sm:$0xf]
      %v11175 = vld [vmem:[%s11131 + $0xac] sm:$0xf]
      %v11176 = vld [vmem:[%s11131 + $0xb0] sm:$0xf]
      %v11177 = vld [vmem:[%s11131 + $0xb4] sm:$0xf]
      %v11178 = vld [vmem:[%s11131 + $0xb8] sm:$0xf]
      %v11179 = vld [vmem:[%s11131 + $0xbc] sm:$0xf]
      %v11183 = vunpack.c.l.b16 %v11128
      %v11184 = vunpack.c.l.b16 %v11129
      %v11185 = vunpack.c.l.b16 %v11130
      %v11186 = vrot.slane %v11183, 7
      %v11187 = vsel %vm511, %v11186, %v10457
      %v11188 = vrot.slane %v11184, 7
      %v11189 = vsel %vm511, %v11188, %v10458
      %v11190 = vrot.slane %v11185, 7
      %v11191 = vsel %vm511, %v11190, %v10459
      %v11192 = vpack.c.b16 %v11187, %v11187
      %v11193 = vpack.c.b16 %v11189, %v11189
      %v11194 = vpack.c.b16 %v11191, %v11191
      %v11246 = vunpack.c.l.b16 %v11132
      %v11247 = vunpack.c.l.b16 %v11133
      %v11248 = vunpack.c.l.b16 %v11134
      %v11249 = vunpack.c.l.b16 %v11135
      %v11250 = vunpack.c.l.b16 %v11136
      %v11251 = vunpack.c.l.b16 %v11137
      %v11252 = vunpack.c.l.b16 %v11138
      %v11253 = vunpack.c.l.b16 %v11139
      %v11254 = vunpack.c.l.b16 %v11140
      %v11255 = vunpack.c.l.b16 %v11141
      %v11256 = vunpack.c.l.b16 %v11142
      %v11257 = vunpack.c.l.b16 %v11143
      %v11258 = vunpack.c.l.b16 %v11144
      %v11259 = vunpack.c.l.b16 %v11145
      %v11260 = vunpack.c.l.b16 %v11146
      %v11261 = vunpack.c.l.b16 %v11147
      %v11262 = vunpack.c.l.b16 %v11148
      %v11263 = vunpack.c.l.b16 %v11149
      %v11264 = vunpack.c.l.b16 %v11150
      %v11265 = vunpack.c.l.b16 %v11151
      %v11266 = vunpack.c.l.b16 %v11152
      %v11267 = vunpack.c.l.b16 %v11153
      %v11268 = vunpack.c.l.b16 %v11154
      %v11269 = vunpack.c.l.b16 %v11155
      %v11270 = vunpack.c.l.b16 %v11156
      %v11271 = vunpack.c.l.b16 %v11157
      %v11272 = vunpack.c.l.b16 %v11158
      %v11273 = vunpack.c.l.b16 %v11159
      %v11274 = vunpack.c.l.b16 %v11160
      %v11275 = vunpack.c.l.b16 %v11161
      %v11276 = vunpack.c.l.b16 %v11162
      %v11277 = vunpack.c.l.b16 %v11163
      %v11278 = vunpack.c.l.b16 %v11164
      %v11279 = vunpack.c.l.b16 %v11165
      %v11280 = vunpack.c.l.b16 %v11166
      %v11281 = vunpack.c.l.b16 %v11167
      %v11282 = vunpack.c.l.b16 %v11168
      %v11283 = vunpack.c.l.b16 %v11169
      %v11284 = vunpack.c.l.b16 %v11170
      %v11285 = vunpack.c.l.b16 %v11171
      %v11286 = vunpack.c.l.b16 %v11172
      %v11287 = vunpack.c.l.b16 %v11173
      %v11288 = vunpack.c.l.b16 %v11174
      %v11289 = vunpack.c.l.b16 %v11175
      %v11290 = vunpack.c.l.b16 %v11176
      %v11291 = vunpack.c.l.b16 %v11177
      %v11292 = vunpack.c.l.b16 %v11178
      %v11293 = vunpack.c.l.b16 %v11179
      %v11294 = vpack.c.b16 %v11247, %v11246
      %v11295 = vpack.c.b16 %v11249, %v11248
      %v11296 = vpack.c.b16 %v11251, %v11250
      %v11297 = vpack.c.b16 %v11253, %v11252
      %v11298 = vpack.c.b16 %v11255, %v11254
      %v11299 = vpack.c.b16 %v11257, %v11256
      %v11300 = vpack.c.b16 %v11259, %v11258
      %v11301 = vpack.c.b16 %v11261, %v11260
      %v11302 = vpack.c.b16 %v11263, %v11262
      %v11303 = vpack.c.b16 %v11265, %v11264
      %v11304 = vpack.c.b16 %v11267, %v11266
      %v11305 = vpack.c.b16 %v11269, %v11268
      %v11306 = vpack.c.b16 %v11271, %v11270
      %v11307 = vpack.c.b16 %v11273, %v11272
      %v11308 = vpack.c.b16 %v11275, %v11274
      %v11309 = vpack.c.b16 %v11277, %v11276
      %v11310 = vpack.c.b16 %v11279, %v11278
      %v11311 = vpack.c.b16 %v11281, %v11280
      %v11312 = vpack.c.b16 %v11283, %v11282
      %v11313 = vpack.c.b16 %v11285, %v11284
      %v11314 = vpack.c.b16 %v11287, %v11286
      %v11315 = vpack.c.b16 %v11289, %v11288
      %v11316 = vpack.c.b16 %v11291, %v11290
      %v11317 = vpack.c.b16 %v11293, %v11292
      %11342 = vmatpush.bf16.msra.mxu0 %v11301
      %11343 = vmatpush.bf16.msra.mxu0 %v11300
      %11344 = vmatpush.bf16.msra.mxu0 %v11299
      %11345 = vmatpush.bf16.msra.mxu0 %v11298
      %11346 = vmatpush.bf16.msra.mxu0 %v11297
      %11347 = vmatpush.bf16.msra.mxu0 %v11296
      %11348 = vmatpush.bf16.msra.mxu0 %v11295
      %11349 = vmatpush.bf16.msra.mxu0 %v11294
      %11350 = vmatmul.bf16.gmra.mxu0 %v11192
      %v11351 = vpop.f32.mrf.mxu0
      %v11352 = vadd.f32 0.0, %v11351
      %v11353 = vpop.f32.mrf.mxu0
      %11354 = vdwg.mxu0
      %11355 = vmatpush.bf16.msra.mxu0 %v11309
      %11356 = vmatpush.bf16.msra.mxu0 %v11308
      %11357 = vmatpush.bf16.msra.mxu0 %v11307
      %11358 = vmatpush.bf16.msra.mxu0 %v11306
      %11359 = vmatpush.bf16.msra.mxu0 %v11305
      %11360 = vmatpush.bf16.msra.mxu0 %v11304
      %11361 = vmatpush.bf16.msra.mxu0 %v11303
      %11362 = vmatpush.bf16.msra.mxu0 %v11302
      %11363 = vmatmul.bf16.gmra.mxu0 %v11193
      %v11364 = vpop.f32.mrf.mxu0
      %v11365 = vadd.f32 %v11352, %v11364
      %v11366 = vpop.f32.mrf.mxu0
      %11367 = vdwg.mxu0
      %11368 = vmatpush.bf16.msra.mxu0 %v11317
      %11369 = vmatpush.bf16.msra.mxu0 %v11316
      %11370 = vmatpush.bf16.msra.mxu0 %v11315
      %11371 = vmatpush.bf16.msra.mxu0 %v11314
      %11372 = vmatpush.bf16.msra.mxu0 %v11313
      %11373 = vmatpush.bf16.msra.mxu0 %v11312
      %11374 = vmatpush.bf16.msra.mxu0 %v11311
      %11375 = vmatpush.bf16.msra.mxu0 %v11310
      %11376 = vmatmul.bf16.gmra.mxu0 %v11194
      %v11377 = vpop.f32.mrf.mxu0
      %v11378 = vadd.f32 %v11365, %v11377
      %v11379 = vpop.f32.mrf.mxu0
      %11380 = vdwg.mxu0
      %v11381 = vadd.f32 %v11121, %v11378
      %v11382 = vld [vmem:[%s6] sm:$0x1]
      %v11384 = vperm.slane %v11382, 0
      %v11386 = vadd.f32 %v11381, %v11384
      %11387 = vst [vmem:[%s273] sm:$0x3] %v11386
      %p11388 = scmp.lt.s32.totalorder %s18, 1
      %s11389 = scalar_select %p11388, %s18, 1
      %s11390 = smul.addr %s11389, 2
      %s11391 = scalar_lea.vmem %s7, %s11390
      // Predicated region
      $region49: #{basic_d_forward.3} parent=47 // pred_check
        %p11392 = pneg %p188
      $region50: #{basic_d_forward.3} parent=47 // pred_check_branch
        %11394 = sbr.rel (%p11392) target = $region52
      $region51: #{basic_d_forward.3} parent=47 // pred_region
        _
      $region52: #{basic_d_forward.3} parent=47 // pred_fallthru
        _
    $region48: #{basic_d_forward.3} parent=5 // pred_fallthru
      _
    %p11395 = scmp.le.s32.totalorder 2, %s13
    // Predicated region
    $region53: #{basic_d_forward.3} parent=5 // pred_check
      %p11396 = pneg %p11395
    $region54: #{basic_d_forward.3} parent=5 // pred_check_branch
      %11398 = sbr.rel (%p11396) target = $region56
    $region55: #{basic_d_forward.3} parent=5 // pred_region
      %s11399 = ssub.s32 %s13, 2
      // Predicated region
      $region57: #{basic_d_forward.3} parent=55 // pred_check
        %p11400 = pneg %p194
      $region58: #{basic_d_forward.3} parent=55 // pred_check_branch
        %11402 = sbr.rel (%p11400) target = $region60
      $region59: #{basic_d_forward.3} parent=55 // pred_region
        %p11403 = scmp.lt.s32.totalorder %s19, 1
        %s11404 = scalar_select %p11403, %s19, 1
        %s11405 = smul.addr %s11404, 2
        %s11406 = scalar_lea.vmem %s7, %s11405
      $region60: #{basic_d_forward.3} parent=55 // pred_fallthru
        _
    $region56: #{basic_d_forward.3} parent=5 // pred_fallthru
      _
  $region6: #{basic_d_forward.3} parent=0 // loop_footer
    %s17 = sadd.s32 1, %s13
  $region7: #{basic_d_forward.3} parent=0 // loop_footer_branch
    %12 = sbr.rel target = $region3
  $region8: #{basic_d_forward.3} parent=0 // loop_exit
    _

</llo_original>
